<compile_context>
chip_gen: v5e
topology: v5e:2x2
jax: 0.10.0
libtpu: 0.0.40
codegen_flags: <defaults>
</compile_context>

<pallas_src>
import math
import jax
import jax.numpy as jnp
from jax.experimental import pallas as pl
from jax.experimental.pallas import tpu as pltpu


# ----------------------------- helpers --------------------------------------

def _round_up(n, m):
    return ((n + m - 1) // m) * m


def _row_tiling(n, tm):
    """Effective row tile (multiple of 8) and padded row count."""
    tm_eff = min(tm, _round_up(n, 8))
    n_pad = _round_up(n, tm_eff)
    return tm_eff, n_pad


def _pad_rows(x, n_pad):
    n = x.shape[0]
    if n_pad == n:
        return x
    return jnp.pad(x, ((0, n_pad - n),) + ((0, 0),) * (x.ndim - 1))


def _compiler_params(vmem_need):
    kw = dict(dimension_semantics=("parallel",))
    if vmem_need > (24 << 20):
        # v7x physical VMEM per TensorCore is 64 MiB: keep headroom.
        kw["vmem_limit_bytes"] = int(min(2 * vmem_need, 56 << 20))
    return pltpu.CompilerParams(**kw)


# ------------------- in-kernel Lorentz projection helpers --------------------

def _lorentz_scale(y, exp_scale):
    """time (tm,1) and spatial rescale s (tm,1) of the Lorentz projection of y (f32)."""
    t0 = y[:, 0:1]
    time = jax.nn.sigmoid(t0) * exp_scale + 1.1
    # sum over columns >= 1 without a lane slice: sum(y^2) - y0^2
    sq = jnp.maximum(jnp.sum(y * y, axis=-1, keepdims=True) - t0 * t0, 1e-8)
    s = jnp.sqrt(time * time - 1.0) * jax.lax.rsqrt(sq)      # EUP rsqrt, no divide
    return time, s


def _lorentz_value(y, exp_scale, time_sign=1.0):
    """Projection as an in-register value (feeds another matmul). Pure VPU select."""
    time, s = _lorentz_scale(y, exp_scale)
    col = jax.lax.broadcasted_iota(jnp.int32, y.shape, 1)
    return jnp.where(col == 0, time_sign * time, y * s)


def _lorentz_store(o_ref, y, exp_scale):
    """Projection stored to an output ref: full-block store + narrow col-0 overwrite."""
    time, s = _lorentz_scale(y, exp_scale)
    o_ref[...] = (y * s).astype(o_ref.dtype)
    o_ref[:, 0:1] = time.astype(o_ref.dtype)


# ---------------- kernel A: fused proj -> assign-linear, and key -------------

def fused_embed_kernel(sc_ref, x_ref, wp_ref, wa_ref, wk_ref, bk_ref, h_ref, k_ref):
    # sc_ref SMEM (3,): exp(scale_proj), exp(scale_assign), exp(scale_key)
    x = x_ref[...]
    # --- proj (bias=False) ---
    y1 = jnp.dot(x, wp_ref[...], preferred_element_type=jnp.float32)
    h1 = _lorentz_value(y1, sc_ref[0])
    # --- assign linear (bias=False) ---
    y2 = jnp.dot(h1.astype(wa_ref.dtype), wa_ref[...], preferred_element_type=jnp.float32)
    _lorentz_store(h_ref, y2, sc_ref[1])
    # --- key linear (bias=True) ---
    yk = jnp.dot(x, wk_ref[...], preferred_element_type=jnp.float32)
    yk = yk + bk_ref[...].astype(jnp.float32)
    _lorentz_store(k_ref, yk, sc_ref[2])


def fused_embed(x, wp, scale_p, wa, scale_a, wk, bk, scale_k, *, tm=256):
    n, d_in = x.shape
    hdim = wp.shape[1]
    a1 = wa.shape[1]
    tm_eff, n_pad = _row_tiling(n, tm)
    x_p = _pad_rows(x, n_pad)
    scales = jnp.exp(jnp.stack([scale_p, scale_a, scale_k])).astype(jnp.float32)
    bk2 = bk.reshape(1, d_in).astype(jnp.float32)

    it = jnp.dtype(x.dtype).itemsize
    vmem_need = 2 * it * (tm_eff * (2 * d_in + a1)
                          + d_in * hdim + hdim * a1 + d_in * d_in + d_in)
    h, k = pl.pallas_call(
        fused_embed_kernel,
        out_shape=(jax.ShapeDtypeStruct((n_pad, a1), x.dtype),
                   jax.ShapeDtypeStruct((n_pad, d_in), x.dtype)),
        grid_spec=pl.GridSpec(
            grid=(n_pad // tm_eff,),
            in_specs=[
                pl.BlockSpec(memory_space=pltpu.MemorySpace.SMEM),   # exp(scales)
                pl.BlockSpec((tm_eff, d_in), lambda i: (i, 0)),      # x rows
                pl.BlockSpec((d_in, hdim), lambda i: (0, 0)),        # W_proj   (resident)
                pl.BlockSpec((hdim, a1), lambda i: (0, 0)),          # W_assign (resident)
                pl.BlockSpec((d_in, d_in), lambda i: (0, 0)),        # W_key    (resident)
                pl.BlockSpec((1, d_in), lambda i: (0, 0)),           # b_key
            ],
            out_specs=(pl.BlockSpec((tm_eff, a1), lambda i: (i, 0)),
                       pl.BlockSpec((tm_eff, d_in), lambda i: (i, 0))),
        ),
        compiler_params=_compiler_params(vmem_need),
    )(scales, x_p, wp, wa, wk, bk2)
    return h[:n], k[:n]


# ------------------------- kernel B: Lorentz aggregation ---------------------

def lorentz_agg_kernel(adj_ref, h_ref, o_ref):
    # adj_ref: (tm, N)  h_ref: (N, A+1)  o_ref: (tm, A+1)
    support = jnp.dot(adj_ref[...], h_ref[...], preferred_element_type=jnp.float32)
    t0 = support[:, 0:1]
    sq_rest = jnp.sum(support * support, axis=-1, keepdims=True) - t0 * t0
    denorm_sq = jnp.maximum(jnp.abs(t0 * t0 - sq_rest), 1e-8)   # | -<s,s>_L | clamped
    o_ref[...] = (support * jax.lax.rsqrt(denorm_sq)).astype(o_ref.dtype)


def lorentz_agg(h, adj, *, tm=256):
    n, a1 = h.shape
    tm_eff, n_pad = _row_tiling(adj.shape[0], tm)
    adj_p = _pad_rows(adj, n_pad)
    it = jnp.dtype(h.dtype).itemsize
    vmem_need = 2 * it * (tm_eff * n + n * a1 + tm_eff * a1)
    out = pl.pallas_call(
        lorentz_agg_kernel,
        out_shape=jax.ShapeDtypeStruct((n_pad, a1), h.dtype),
        grid_spec=pl.GridSpec(
            grid=(n_pad // tm_eff,),
            in_specs=[
                pl.BlockSpec((tm_eff, n), lambda i: (i, 0)),   # adj rows
                pl.BlockSpec((n, a1), lambda i: (0, 0)),       # h (resident)
            ],
            out_specs=pl.BlockSpec((tm_eff, a1), lambda i: (i, 0)),
        ),
        compiler_params=_compiler_params(vmem_need),
    )(adj_p, h)
    return out[:adj.shape[0]]


# -------------- kernel C: query + cinner attention + log_softmax -------------

def assign_att_kernel(sc_ref, x_ref, wq_ref, bq_ref, kt_ref, adj_ref, ass_ref, o_ref):
    # sc_ref SMEM (3,): exp(scale_query), coef_a = 2/scale, coef_b = 2/scale + bias
    x = x_ref[...]
    yq = jnp.dot(x, wq_ref[...], preferred_element_type=jnp.float32)
    yq = yq + bq_ref[...].astype(jnp.float32)
    # Query projection with the time column pre-negated: q_neg @ k^T == Lorentz cinner.
    q_neg = _lorentz_value(yq, sc_ref[0], time_sign=-1.0)
    cin = jnp.dot(q_neg.astype(kt_ref.dtype), kt_ref[...],
                  preferred_element_type=jnp.float32)                       # (tm, N)
    att = jax.nn.sigmoid(sc_ref[1] * cin + sc_ref[2]) * adj_ref[...].astype(jnp.float32)
    out = jnp.dot(att, ass_ref[...].astype(jnp.float32),
                  preferred_element_type=jnp.float32)                       # (tm, A)
    # log_softmax along the assignment axis
    m = jnp.max(out, axis=-1, keepdims=True)
    z = out - m
    lse = jnp.log(jnp.sum(jnp.exp(z), axis=-1, keepdims=True))
    o_ref[...] = (z - lse).astype(o_ref.dtype)


def assign_attention(x, wq, bq, scale_q, k, adj, ass, att_scale, att_bias, *, tm=256):
    n, d = x.shape
    a = ass.shape[-1]
    tm_eff, n_pad = _row_tiling(n, tm)
    x_p = _pad_rows(x, n_pad)
    adj_p = _pad_rows(adj, n_pad)
    kt = k.T                             # (D, N): one-off layout plumbing in the wrapper
    coef_a = 2.0 / att_scale
    sc = jnp.stack([jnp.exp(scale_q), coef_a, coef_a + att_bias]).astype(jnp.float32)
    bq2 = bq.reshape(1, d).astype(jnp.float32)

    it = jnp.dtype(x.dtype).itemsize
    vmem_need = (2 * it * (tm_eff * (d + n + a) + d * n + n * a)
                 + 2 * 4 * (d * d + d))
    out = pl.pallas_call(
        assign_att_kernel,
        out_shape=jax.ShapeDtypeStruct((n_pad, a), x.dtype),
        grid_spec=pl.GridSpec(
            grid=(n_pad // tm_eff,),
            in_specs=[
                pl.BlockSpec(memory_space=pltpu.MemorySpace.SMEM),   # scalars
                pl.BlockSpec((tm_eff, d), lambda i: (i, 0)),         # x rows
                pl.BlockSpec((d, d), lambda i: (0, 0)),              # W_query (resident)
                pl.BlockSpec((1, d), lambda i: (0, 0)),              # b_query
                pl.BlockSpec((d, n), lambda i: (0, 0)),              # k^T (resident)
                pl.BlockSpec((tm_eff, n), lambda i: (i, 0)),         # adj rows
                pl.BlockSpec((n, a), lambda i: (0, 0)),              # ass (resident)
            ],
            out_specs=pl.BlockSpec((tm_eff, a), lambda i: (i, 0)),
        ),
        compiler_params=_compiler_params(vmem_need),
    )(sc, x_p, wq, bq2, kt, adj_p, ass)
    return out[:n]


# ------------------------- full module forward -------------------------------

def lorentz_assignment(x, adj, params, *, tm=256):
    """LorentzAssignment.forward(x, adj) at inference time."""
    h, k = fused_embed(x, params["proj_w"], params["proj_scale"],
                       params["assign_w"], params["assign_scale"],
                       params["key_w"], params["key_b"], params["key_scale"], tm=tm)
    ass_full = lorentz_agg(h, adj, tm=tm)
    ass = ass_full[:, 1:]                                   # narrow(-1, 1, num_assign)
    return assign_attention(x, params["query_w"], params["query_b"],
                            params["query_scale"], k, adj, ass,
                            params["att_scale"], params["att_bias"], tm=tm)


# ------------------------- parameter init (mirrors PyTorch) ------------------

def init_lorentz_linear(key, in_features, out_features, bias=True, scale_init=10.0):
    stdv = 1.0 / math.sqrt(out_features)
    # PyTorch weight is (out, in); we store the transpose (in, out).
    w = jax.random.uniform(key, (in_features, out_features),
                           minval=-stdv, maxval=stdv, dtype=jnp.float32)
    w = w.at[0, :].set(0.0)          # weight[:, 0] = 0  -> zero input-feature row 0
    b = jnp.zeros((out_features,), jnp.float32) if bias else None
    scale = jnp.array(math.log(scale_init), jnp.float32)
    return w, b, scale


def init_lorentz_assignment(key, in_features, hidden_features, num_assign):
    keys = jax.random.split(key, 4)
    proj_w, _, proj_scale = init_lorentz_linear(keys[0], in_features, hidden_features, bias=False)
    assign_w, _, assign_scale = init_lorentz_linear(keys[1], hidden_features, num_assign + 1, bias=False)
    query_w, query_b, query_scale = init_lorentz_linear(keys[2], in_features, in_features, bias=True)
    key_w, key_b, key_scale = init_lorentz_linear(keys[3], in_features, in_features, bias=True)
    return dict(
        proj_w=proj_w, proj_scale=proj_scale,
        assign_w=assign_w, assign_scale=assign_scale,
        query_w=query_w, query_b=query_b, query_scale=query_scale,
        key_w=key_w, key_b=key_b, key_scale=key_scale,
        att_scale=jnp.array(math.sqrt(hidden_features), jnp.float32),
        att_bias=jnp.array(20.0, jnp.float32),
    )


# ------------------------- pure-JAX reference --------------------------------

def _mm(a, b):
    return jnp.dot(a, b, precision=jax.lax.Precision.HIGHEST)


def ref_lorentz_linear(x, w, b, scale):
    y = _mm(x, w)
    if b is not None:
        y = y + b
    time = jax.nn.sigmoid(y[..., 0:1]) * jnp.exp(scale) + 1.1
    narrow = y[..., 1:]
    sq = jnp.maximum(jnp.sum(narrow * narrow, axis=-1, keepdims=True), 1e-8)
    s = (time * time - 1.0) / sq
    return jnp.concatenate([time, narrow * jnp.sqrt(s)], axis=-1)


def ref_lorentz_assignment(x, adj, params):
    h = ref_lorentz_linear(x, params["proj_w"], None, params["proj_scale"])
    h = ref_lorentz_linear(h, params["assign_w"], None, params["assign_scale"])
    support = _mm(adj, h)
    inner = -support[..., 0:1] ** 2 + jnp.sum(support[..., 1:] ** 2, axis=-1, keepdims=True)
    denorm = jnp.sqrt(jnp.maximum(jnp.abs(-inner), 1e-8))
    ass = (support / denorm)[..., 1:]
    q = ref_lorentz_linear(x, params["query_w"], params["query_b"], params["query_scale"])
    k = ref_lorentz_linear(x, params["key_w"], params["key_b"], params["key_scale"])
    q_neg = q.at[..., 0].multiply(-1.0)
    att_adj = 2.0 + 2.0 * _mm(q_neg, k.T)
    att_adj = att_adj / params["att_scale"] + params["att_bias"]
    att = jax.nn.sigmoid(att_adj) * adj
    out = _mm(att, ass)
    return jax.nn.log_softmax(out, axis=-1)


# ------------------------- demo / self-test ----------------------------------

if __name__ == "__main__":
    key = jax.random.PRNGKey(0)
    k_par, k_x, k_adj = jax.random.split(key, 3)

    num_nodes = 200          # deliberately not a multiple of the row tile (ragged N)
    in_features = 32
    hidden_features = 32
    num_assign = 8

    params = init_lorentz_assignment(k_par, in_features, hidden_features, num_assign)
    x = jax.random.normal(k_x, (num_nodes, in_features), jnp.float32)

    # dense symmetric 0/1 adjacency with self loops
    probs = jax.random.uniform(k_adj, (num_nodes, num_nodes))
    adj = (probs < 0.1).astype(jnp.float32)
    adj = jnp.maximum(adj, adj.T)
    adj = jnp.maximum(adj, jnp.eye(num_nodes, dtype=jnp.float32))

    fwd = jax.jit(lambda xx, aa: lorentz_assignment(xx, aa, params, tm=256))
    logits = fwd(x, adj)
    logits = jax.block_until_ready(logits)
    assert logits.shape == (num_nodes, num_assign)

    ref = ref_lorentz_assignment(x, adj, params)
    assert jnp.allclose(logits, ref, atol=5e-3, rtol=5e-3), (
        "mismatch vs reference: max abs diff = "
        f"{float(jnp.max(jnp.abs(logits - ref)))}")
    # rows are valid log-probabilities
    assert jnp.allclose(jnp.sum(jnp.exp(logits), axis=-1), 1.0, atol=1e-4)

    print("KERNEL_OK")
</pallas_src>

<mosaic_0001>
module attributes {stable_mosaic.version = 11 : i64} {
  func.func @fused_embed_kernel(%arg0: i32, %arg1: memref<3xf32, #tpu.memory_space<smem>>, %arg2: memref<200x32xf32, #tpu.memory_space<vmem>>, %arg3: memref<32x32xf32, #tpu.memory_space<vmem>>, %arg4: memref<32x9xf32, #tpu.memory_space<vmem>>, %arg5: memref<32x32xf32, #tpu.memory_space<vmem>>, %arg6: memref<1x32xf32, #tpu.memory_space<vmem>>, %arg7: memref<200x9xf32, #tpu.memory_space<vmem>>, %arg8: memref<200x32xf32, #tpu.memory_space<vmem>>) attributes {dimension_semantics = [#tpu.dimension_semantics<parallel>], iteration_bounds = array<i64: 1>, scalar_prefetch = 0 : i64, scratch_operands = 0 : i64, tpu.core_type = #tpu.core_type<tc>, window_params = [{transform_indices = @transform_0, window_bounds = array<i64: 3>}, {transform_indices = @transform_1, window_bounds = array<i64: 200, 32>}, {pipeline_mode = #tpu.pipeline_mode<synchronous>, transform_indices = @transform_2, window_bounds = array<i64: 32, 32>}, {pipeline_mode = #tpu.pipeline_mode<synchronous>, transform_indices = @transform_3, window_bounds = array<i64: 32, 9>}, {pipeline_mode = #tpu.pipeline_mode<synchronous>, transform_indices = @transform_4, window_bounds = array<i64: 32, 32>}, {pipeline_mode = #tpu.pipeline_mode<synchronous>, transform_indices = @transform_5, window_bounds = array<i64: 1, 32>}, {transform_indices = @transform_6, window_bounds = array<i64: 200, 9>}, {transform_indices = @transform_7, window_bounds = array<i64: 200, 32>}]} {
    %c0 = arith.constant 0 : index
    %c0_0 = arith.constant 0 : index
    %0 = vector.load %arg2[%c0, %c0_0] : memref<200x32xf32, #tpu.memory_space<vmem>>, vector<200x32xf32>
    %c0_1 = arith.constant 0 : index
    %c0_2 = arith.constant 0 : index
    %1 = vector.load %arg3[%c0_1, %c0_2] : memref<32x32xf32, #tpu.memory_space<vmem>>, vector<32x32xf32>
    %cst = arith.constant dense<0.000000e+00> : vector<200x32xf32>
    %2 = tpu.matmul %0, %1, %cst {dimension_numbers = #tpu.dot_dimension_numbers<[1], [0], [0], [1], [0, 0, 1, 1], [], []>} : vector<200x32xf32>, vector<32x32xf32>, vector<200x32xf32> -> vector<200x32xf32>
    %c0_3 = arith.constant 0 : index
    %3 = memref.load %arg1[%c0_3] : memref<3xf32, #tpu.memory_space<smem>>
    %4 = vector.extract_strided_slice %2 {offsets = [0, 0], sizes = [200, 1], strides = [1, 1]} : vector<200x32xf32> to vector<200x1xf32>
    %5 = arith.negf %4 : vector<200x1xf32>
    %6 = math.exp %5 : vector<200x1xf32>
    %cst_4 = arith.constant 1.000000e+00 : f32
    %7 = vector.broadcast %cst_4 : f32 to vector<200x1xf32>
    %8 = arith.addf %7, %6 : vector<200x1xf32>
    %9 = arith.divf %7, %8 : vector<200x1xf32>
    %10 = vector.broadcast %3 : f32 to vector<200x1xf32>
    %11 = arith.mulf %9, %10 : vector<200x1xf32>
    %cst_5 = arith.constant 1.100000e+00 : f32
    %12 = vector.broadcast %cst_5 : f32 to vector<200x1xf32>
    %13 = arith.addf %11, %12 : vector<200x1xf32>
    %14 = arith.mulf %2, %2 : vector<200x32xf32>
    %cst_6 = arith.constant dense<0.000000e+00> : vector<200xf32>
    %15 = vector.multi_reduction <add>, %14, %cst_6 [1] : vector<200x32xf32> to vector<200xf32>
    %16 = vector.shape_cast %15 : vector<200xf32> to vector<200x1xf32>
    %17 = arith.mulf %4, %4 : vector<200x1xf32>
    %18 = arith.subf %16, %17 : vector<200x1xf32>
    %cst_7 = arith.constant 9.99999993E-9 : f32
    %19 = vector.broadcast %cst_7 : f32 to vector<200x1xf32>
    %20 = arith.maximumf %18, %19 : vector<200x1xf32>
    %21 = arith.mulf %13, %13 : vector<200x1xf32>
    %cst_8 = arith.constant 1.000000e+00 : f32
    %22 = vector.broadcast %cst_8 : f32 to vector<200x1xf32>
    %23 = arith.subf %21, %22 : vector<200x1xf32>
    %24 = math.sqrt %23 : vector<200x1xf32>
    %25 = math.rsqrt %20 : vector<200x1xf32>
    %26 = arith.mulf %24, %25 : vector<200x1xf32>
    %27 = tpu.iota {dimensions = array<i32: 1>} : vector<200x32xi32>
    %c0_i32 = arith.constant 0 : i32
    %28 = vector.broadcast %c0_i32 : i32 to vector<200x32xi32>
    %29 = arith.cmpi eq, %27, %28 : vector<200x32xi32>
    %cst_9 = arith.constant 1.000000e+00 : f32
    %30 = vector.broadcast %cst_9 : f32 to vector<200x1xf32>
    %31 = arith.mulf %30, %13 : vector<200x1xf32>
    %32 = vector.broadcast %26 : vector<200x1xf32> to vector<200x32xf32>
    %33 = arith.mulf %2, %32 : vector<200x32xf32>
    %34 = vector.shape_cast %31 : vector<200x1xf32> to vector<200x1xf32>
    %35 = vector.broadcast %34 : vector<200x1xf32> to vector<200x32xf32>
    %36 = arith.select %29, %35, %33 : vector<200x32xi1>, vector<200x32xf32>
    %c0_10 = arith.constant 0 : index
    %c0_11 = arith.constant 0 : index
    %37 = vector.load %arg4[%c0_10, %c0_11] : memref<32x9xf32, #tpu.memory_space<vmem>>, vector<32x9xf32>
    %cst_12 = arith.constant dense<0.000000e+00> : vector<200x9xf32>
    %38 = tpu.matmul %36, %37, %cst_12 {dimension_numbers = #tpu.dot_dimension_numbers<[1], [0], [0], [1], [0, 0, 1, 1], [], []>} : vector<200x32xf32>, vector<32x9xf32>, vector<200x9xf32> -> vector<200x9xf32>
    %c1 = arith.constant 1 : index
    %39 = memref.load %arg1[%c1] : memref<3xf32, #tpu.memory_space<smem>>
    %40 = vector.extract_strided_slice %38 {offsets = [0, 0], sizes = [200, 1], strides = [1, 1]} : vector<200x9xf32> to vector<200x1xf32>
    %41 = arith.negf %40 : vector<200x1xf32>
    %42 = math.exp %41 : vector<200x1xf32>
    %cst_13 = arith.constant 1.000000e+00 : f32
    %43 = vector.broadcast %cst_13 : f32 to vector<200x1xf32>
    %44 = arith.addf %43, %42 : vector<200x1xf32>
    %45 = arith.divf %43, %44 : vector<200x1xf32>
    %46 = vector.broadcast %39 : f32 to vector<200x1xf32>
    %47 = arith.mulf %45, %46 : vector<200x1xf32>
    %cst_14 = arith.constant 1.100000e+00 : f32
    %48 = vector.broadcast %cst_14 : f32 to vector<200x1xf32>
    %49 = arith.addf %47, %48 : vector<200x1xf32>
    %50 = arith.mulf %38, %38 : vector<200x9xf32>
    %cst_15 = arith.constant dense<0.000000e+00> : vector<200xf32>
    %51 = vector.multi_reduction <add>, %50, %cst_15 [1] : vector<200x9xf32> to vector<200xf32>
    %52 = vector.shape_cast %51 : vector<200xf32> to vector<200x1xf32>
    %53 = arith.mulf %40, %40 : vector<200x1xf32>
    %54 = arith.subf %52, %53 : vector<200x1xf32>
    %cst_16 = arith.constant 9.99999993E-9 : f32
    %55 = vector.broadcast %cst_16 : f32 to vector<200x1xf32>
    %56 = arith.maximumf %54, %55 : vector<200x1xf32>
    %57 = arith.mulf %49, %49 : vector<200x1xf32>
    %cst_17 = arith.constant 1.000000e+00 : f32
    %58 = vector.broadcast %cst_17 : f32 to vector<200x1xf32>
    %59 = arith.subf %57, %58 : vector<200x1xf32>
    %60 = math.sqrt %59 : vector<200x1xf32>
    %61 = math.rsqrt %56 : vector<200x1xf32>
    %62 = arith.mulf %60, %61 : vector<200x1xf32>
    %63 = vector.broadcast %62 : vector<200x1xf32> to vector<200x9xf32>
    %64 = arith.mulf %38, %63 : vector<200x9xf32>
    %c0_18 = arith.constant 0 : index
    %c0_19 = arith.constant 0 : index
    %65 = vector.load %arg7[%c0_18, %c0_19] : memref<200x9xf32, #tpu.memory_space<vmem>>, vector<200x9xf32>
    tpu.vector_store %arg7[%c0_18, %c0_19], %64 {strides = array<i32>} : memref<200x9xf32, #tpu.memory_space<vmem>>, vector<200x9xf32>,
    %c0_20 = arith.constant 0 : index
    %c0_21 = arith.constant 0 : index
    %66 = vector.load %arg7[%c0_20, %c0_21] : memref<200x9xf32, #tpu.memory_space<vmem>>, vector<200x1xf32>
    tpu.vector_store %arg7[%c0_20, %c0_21], %49 {strides = array<i32>} : memref<200x9xf32, #tpu.memory_space<vmem>>, vector<200x1xf32>,
    %c0_22 = arith.constant 0 : index
    %c0_23 = arith.constant 0 : index
    %67 = vector.load %arg5[%c0_22, %c0_23] : memref<32x32xf32, #tpu.memory_space<vmem>>, vector<32x32xf32>
    %cst_24 = arith.constant dense<0.000000e+00> : vector<200x32xf32>
    %68 = tpu.matmul %0, %67, %cst_24 {dimension_numbers = #tpu.dot_dimension_numbers<[1], [0], [0], [1], [0, 0, 1, 1], [], []>} : vector<200x32xf32>, vector<32x32xf32>, vector<200x32xf32> -> vector<200x32xf32>
    %c0_25 = arith.constant 0 : index
    %c0_26 = arith.constant 0 : index
    %69 = vector.load %arg6[%c0_25, %c0_26] : memref<1x32xf32, #tpu.memory_space<vmem>>, vector<1x32xf32>
    %70 = vector.broadcast %69 : vector<1x32xf32> to vector<200x32xf32>
    %71 = arith.addf %68, %70 : vector<200x32xf32>
    %c2 = arith.constant 2 : index
    %72 = memref.load %arg1[%c2] : memref<3xf32, #tpu.memory_space<smem>>
    %73 = vector.extract_strided_slice %71 {offsets = [0, 0], sizes = [200, 1], strides = [1, 1]} : vector<200x32xf32> to vector<200x1xf32>
    %74 = arith.negf %73 : vector<200x1xf32>
    %75 = math.exp %74 : vector<200x1xf32>
    %cst_27 = arith.constant 1.000000e+00 : f32
    %76 = vector.broadcast %cst_27 : f32 to vector<200x1xf32>
    %77 = arith.addf %76, %75 : vector<200x1xf32>
    %78 = arith.divf %76, %77 : vector<200x1xf32>
    %79 = vector.broadcast %72 : f32 to vector<200x1xf32>
    %80 = arith.mulf %78, %79 : vector<200x1xf32>
    %cst_28 = arith.constant 1.100000e+00 : f32
    %81 = vector.broadcast %cst_28 : f32 to vector<200x1xf32>
    %82 = arith.addf %80, %81 : vector<200x1xf32>
    %83 = arith.mulf %71, %71 : vector<200x32xf32>
    %cst_29 = arith.constant dense<0.000000e+00> : vector<200xf32>
    %84 = vector.multi_reduction <add>, %83, %cst_29 [1] : vector<200x32xf32> to vector<200xf32>
    %85 = vector.shape_cast %84 : vector<200xf32> to vector<200x1xf32>
    %86 = arith.mulf %73, %73 : vector<200x1xf32>
    %87 = arith.subf %85, %86 : vector<200x1xf32>
    %cst_30 = arith.constant 9.99999993E-9 : f32
    %88 = vector.broadcast %cst_30 : f32 to vector<200x1xf32>
    %89 = arith.maximumf %87, %88 : vector<200x1xf32>
    %90 = arith.mulf %82, %82 : vector<200x1xf32>
    %cst_31 = arith.constant 1.000000e+00 : f32
    %91 = vector.broadcast %cst_31 : f32 to vector<200x1xf32>
    %92 = arith.subf %90, %91 : vector<200x1xf32>
    %93 = math.sqrt %92 : vector<200x1xf32>
    %94 = math.rsqrt %89 : vector<200x1xf32>
    %95 = arith.mulf %93, %94 : vector<200x1xf32>
    %96 = vector.broadcast %95 : vector<200x1xf32> to vector<200x32xf32>
    %97 = arith.mulf %71, %96 : vector<200x32xf32>
    %c0_32 = arith.constant 0 : index
    %c0_33 = arith.constant 0 : index
    %98 = vector.load %arg8[%c0_32, %c0_33] : memref<200x32xf32, #tpu.memory_space<vmem>>, vector<200x32xf32>
    tpu.vector_store %arg8[%c0_32, %c0_33], %97 {strides = array<i32>} : memref<200x32xf32, #tpu.memory_space<vmem>>, vector<200x32xf32>,
    %c0_34 = arith.constant 0 : index
    %c0_35 = arith.constant 0 : index
    %99 = vector.load %arg8[%c0_34, %c0_35] : memref<200x32xf32, #tpu.memory_space<vmem>>, vector<200x1xf32>
    tpu.vector_store %arg8[%c0_34, %c0_35], %82 {strides = array<i32>} : memref<200x32xf32, #tpu.memory_space<vmem>>, vector<200x1xf32>,
    return
  }
  func.func @transform_0(%arg0: i32) -> i32 {
    %c0_i32 = arith.constant 0 : i32
    %c0_i32_0 = arith.constant 0 : i32
    return %c0_i32 : i32
  }
  func.func @transform_1(%arg0: i32) -> (i32, i32) {
    %c0_i32 = arith.constant 0 : i32
    %c0_i32_0 = arith.constant 0 : i32
    return %arg0, %c0_i32 : i32, i32
  }
  func.func @transform_2(%arg0: i32) -> (i32, i32) {
    %c0_i32 = arith.constant 0 : i32
    %c0_i32_0 = arith.constant 0 : i32
    %c0_i32_1 = arith.constant 0 : i32
    return %c0_i32, %c0_i32_0 : i32, i32
  }
  func.func @transform_3(%arg0: i32) -> (i32, i32) {
    %c0_i32 = arith.constant 0 : i32
    %c0_i32_0 = arith.constant 0 : i32
    %c0_i32_1 = arith.constant 0 : i32
    return %c0_i32, %c0_i32_0 : i32, i32
  }
  func.func @transform_4(%arg0: i32) -> (i32, i32) {
    %c0_i32 = arith.constant 0 : i32
    %c0_i32_0 = arith.constant 0 : i32
    %c0_i32_1 = arith.constant 0 : i32
    return %c0_i32, %c0_i32_0 : i32, i32
  }
  func.func @transform_5(%arg0: i32) -> (i32, i32) {
    %c0_i32 = arith.constant 0 : i32
    %c0_i32_0 = arith.constant 0 : i32
    %c0_i32_1 = arith.constant 0 : i32
    return %c0_i32, %c0_i32_0 : i32, i32
  }
  func.func @transform_6(%arg0: i32) -> (i32, i32) {
    %c0_i32 = arith.constant 0 : i32
    %c0_i32_0 = arith.constant 0 : i32
    return %arg0, %c0_i32 : i32, i32
  }
  func.func @transform_7(%arg0: i32) -> (i32, i32) {
    %c0_i32 = arith.constant 0 : i32
    %c0_i32_0 = arith.constant 0 : i32
    return %arg0, %c0_i32 : i32, i32
  }
}

module attributes {stable_mosaic.version = 11 : i64} {
  func.func @lorentz_agg_kernel(%arg0: i32, %arg1: memref<200x200xf32, #tpu.memory_space<vmem>>, %arg2: memref<200x9xf32, #tpu.memory_space<vmem>>, %arg3: memref<200x9xf32, #tpu.memory_space<vmem>>) attributes {dimension_semantics = [#tpu.dimension_semantics<parallel>], iteration_bounds = array<i64: 1>, scalar_prefetch = 0 : i64, scratch_operands = 0 : i64, tpu.core_type = #tpu.core_type<tc>, window_params = [{transform_indices = @transform_0, window_bounds = array<i64: 200, 200>}, {pipeline_mode = #tpu.pipeline_mode<synchronous>, transform_indices = @transform_1, window_bounds = array<i64: 200, 9>}, {transform_indices = @transform_2, window_bounds = array<i64: 200, 9>}]} {
    %c0 = arith.constant 0 : index
    %c0_0 = arith.constant 0 : index
    %0 = vector.load %arg1[%c0, %c0_0] : memref<200x200xf32, #tpu.memory_space<vmem>>, vector<200x200xf32>
    %c0_1 = arith.constant 0 : index
    %c0_2 = arith.constant 0 : index
    %1 = vector.load %arg2[%c0_1, %c0_2] : memref<200x9xf32, #tpu.memory_space<vmem>>, vector<200x9xf32>
    %cst = arith.constant dense<0.000000e+00> : vector<200x9xf32>
    %2 = tpu.matmul %0, %1, %cst {dimension_numbers = #tpu.dot_dimension_numbers<[1], [0], [0], [1], [0, 0, 1, 1], [], []>} : vector<200x200xf32>, vector<200x9xf32>, vector<200x9xf32> -> vector<200x9xf32>
    %3 = vector.extract_strided_slice %2 {offsets = [0, 0], sizes = [200, 1], strides = [1, 1]} : vector<200x9xf32> to vector<200x1xf32>
    %4 = arith.mulf %2, %2 : vector<200x9xf32>
    %cst_3 = arith.constant dense<0.000000e+00> : vector<200xf32>
    %5 = vector.multi_reduction <add>, %4, %cst_3 [1] : vector<200x9xf32> to vector<200xf32>
    %6 = vector.shape_cast %5 : vector<200xf32> to vector<200x1xf32>
    %7 = arith.mulf %3, %3 : vector<200x1xf32>
    %8 = arith.subf %6, %7 : vector<200x1xf32>
    %9 = arith.mulf %3, %3 : vector<200x1xf32>
    %10 = arith.subf %9, %8 : vector<200x1xf32>
    %11 = math.absf %10 : vector<200x1xf32>
    %cst_4 = arith.constant 9.99999993E-9 : f32
    %12 = vector.broadcast %cst_4 : f32 to vector<200x1xf32>
    %13 = arith.maximumf %11, %12 : vector<200x1xf32>
    %14 = math.rsqrt %13 : vector<200x1xf32>
    %15 = vector.broadcast %14 : vector<200x1xf32> to vector<200x9xf32>
    %16 = arith.mulf %2, %15 : vector<200x9xf32>
    %c0_5 = arith.constant 0 : index
    %c0_6 = arith.constant 0 : index
    %17 = vector.load %arg3[%c0_5, %c0_6] : memref<200x9xf32, #tpu.memory_space<vmem>>, vector<200x9xf32>
    tpu.vector_store %arg3[%c0_5, %c0_6], %16 {strides = array<i32>} : memref<200x9xf32, #tpu.memory_space<vmem>>, vector<200x9xf32>,
    return
  }
  func.func @transform_0(%arg0: i32) -> (i32, i32) {
    %c0_i32 = arith.constant 0 : i32
    %c0_i32_0 = arith.constant 0 : i32
    return %arg0, %c0_i32 : i32, i32
  }
  func.func @transform_1(%arg0: i32) -> (i32, i32) {
    %c0_i32 = arith.constant 0 : i32
    %c0_i32_0 = arith.constant 0 : i32
    %c0_i32_1 = arith.constant 0 : i32
    return %c0_i32, %c0_i32_0 : i32, i32
  }
  func.func @transform_2(%arg0: i32) -> (i32, i32) {
    %c0_i32 = arith.constant 0 : i32
    %c0_i32_0 = arith.constant 0 : i32
    return %arg0, %c0_i32 : i32, i32
  }
}

module attributes {stable_mosaic.version = 11 : i64} {
  func.func @assign_att_kernel(%arg0: i32, %arg1: memref<3xf32, #tpu.memory_space<smem>>, %arg2: memref<200x32xf32, #tpu.memory_space<vmem>>, %arg3: memref<32x32xf32, #tpu.memory_space<vmem>>, %arg4: memref<1x32xf32, #tpu.memory_space<vmem>>, %arg5: memref<32x200xf32, #tpu.memory_space<vmem>>, %arg6: memref<200x200xf32, #tpu.memory_space<vmem>>, %arg7: memref<200x8xf32, #tpu.memory_space<vmem>>, %arg8: memref<200x8xf32, #tpu.memory_space<vmem>>) attributes {dimension_semantics = [#tpu.dimension_semantics<parallel>], iteration_bounds = array<i64: 1>, scalar_prefetch = 0 : i64, scratch_operands = 0 : i64, tpu.core_type = #tpu.core_type<tc>, window_params = [{transform_indices = @transform_0, window_bounds = array<i64: 3>}, {transform_indices = @transform_1, window_bounds = array<i64: 200, 32>}, {pipeline_mode = #tpu.pipeline_mode<synchronous>, transform_indices = @transform_2, window_bounds = array<i64: 32, 32>}, {pipeline_mode = #tpu.pipeline_mode<synchronous>, transform_indices = @transform_3, window_bounds = array<i64: 1, 32>}, {pipeline_mode = #tpu.pipeline_mode<synchronous>, transform_indices = @transform_4, window_bounds = array<i64: 32, 200>}, {transform_indices = @transform_5, window_bounds = array<i64: 200, 200>}, {pipeline_mode = #tpu.pipeline_mode<synchronous>, transform_indices = @transform_6, window_bounds = array<i64: 200, 8>}, {transform_indices = @transform_7, window_bounds = array<i64: 200, 8>}]} {
    %c0 = arith.constant 0 : index
    %c0_0 = arith.constant 0 : index
    %0 = vector.load %arg2[%c0, %c0_0] : memref<200x32xf32, #tpu.memory_space<vmem>>, vector<200x32xf32>
    %c0_1 = arith.constant 0 : index
    %c0_2 = arith.constant 0 : index
    %1 = vector.load %arg3[%c0_1, %c0_2] : memref<32x32xf32, #tpu.memory_space<vmem>>, vector<32x32xf32>
    %cst = arith.constant dense<0.000000e+00> : vector<200x32xf32>
    %2 = tpu.matmul %0, %1, %cst {dimension_numbers = #tpu.dot_dimension_numbers<[1], [0], [0], [1], [0, 0, 1, 1], [], []>} : vector<200x32xf32>, vector<32x32xf32>, vector<200x32xf32> -> vector<200x32xf32>
    %c0_3 = arith.constant 0 : index
    %c0_4 = arith.constant 0 : index
    %3 = vector.load %arg4[%c0_3, %c0_4] : memref<1x32xf32, #tpu.memory_space<vmem>>, vector<1x32xf32>
    %4 = vector.broadcast %3 : vector<1x32xf32> to vector<200x32xf32>
    %5 = arith.addf %2, %4 : vector<200x32xf32>
    %c0_5 = arith.constant 0 : index
    %6 = memref.load %arg1[%c0_5] : memref<3xf32, #tpu.memory_space<smem>>
    %7 = vector.extract_strided_slice %5 {offsets = [0, 0], sizes = [200, 1], strides = [1, 1]} : vector<200x32xf32> to vector<200x1xf32>
    %8 = arith.negf %7 : vector<200x1xf32>
    %9 = math.exp %8 : vector<200x1xf32>
    %cst_6 = arith.constant 1.000000e+00 : f32
    %10 = vector.broadcast %cst_6 : f32 to vector<200x1xf32>
    %11 = arith.addf %10, %9 : vector<200x1xf32>
    %12 = arith.divf %10, %11 : vector<200x1xf32>
    %13 = vector.broadcast %6 : f32 to vector<200x1xf32>
    %14 = arith.mulf %12, %13 : vector<200x1xf32>
    %cst_7 = arith.constant 1.100000e+00 : f32
    %15 = vector.broadcast %cst_7 : f32 to vector<200x1xf32>
    %16 = arith.addf %14, %15 : vector<200x1xf32>
    %17 = arith.mulf %5, %5 : vector<200x32xf32>
    %cst_8 = arith.constant dense<0.000000e+00> : vector<200xf32>
    %18 = vector.multi_reduction <add>, %17, %cst_8 [1] : vector<200x32xf32> to vector<200xf32>
    %19 = vector.shape_cast %18 : vector<200xf32> to vector<200x1xf32>
    %20 = arith.mulf %7, %7 : vector<200x1xf32>
    %21 = arith.subf %19, %20 : vector<200x1xf32>
    %cst_9 = arith.constant 9.99999993E-9 : f32
    %22 = vector.broadcast %cst_9 : f32 to vector<200x1xf32>
    %23 = arith.maximumf %21, %22 : vector<200x1xf32>
    %24 = arith.mulf %16, %16 : vector<200x1xf32>
    %cst_10 = arith.constant 1.000000e+00 : f32
    %25 = vector.broadcast %cst_10 : f32 to vector<200x1xf32>
    %26 = arith.subf %24, %25 : vector<200x1xf32>
    %27 = math.sqrt %26 : vector<200x1xf32>
    %28 = math.rsqrt %23 : vector<200x1xf32>
    %29 = arith.mulf %27, %28 : vector<200x1xf32>
    %30 = tpu.iota {dimensions = array<i32: 1>} : vector<200x32xi32>
    %c0_i32 = arith.constant 0 : i32
    %31 = vector.broadcast %c0_i32 : i32 to vector<200x32xi32>
    %32 = arith.cmpi eq, %30, %31 : vector<200x32xi32>
    %cst_11 = arith.constant -1.000000e+00 : f32
    %33 = vector.broadcast %cst_11 : f32 to vector<200x1xf32>
    %34 = arith.mulf %33, %16 : vector<200x1xf32>
    %35 = vector.broadcast %29 : vector<200x1xf32> to vector<200x32xf32>
    %36 = arith.mulf %5, %35 : vector<200x32xf32>
    %37 = vector.shape_cast %34 : vector<200x1xf32> to vector<200x1xf32>
    %38 = vector.broadcast %37 : vector<200x1xf32> to vector<200x32xf32>
    %39 = arith.select %32, %38, %36 : vector<200x32xi1>, vector<200x32xf32>
    %c0_12 = arith.constant 0 : index
    %c0_13 = arith.constant 0 : index
    %40 = vector.load %arg5[%c0_12, %c0_13] : memref<32x200xf32, #tpu.memory_space<vmem>>, vector<32x200xf32>
    %cst_14 = arith.constant dense<0.000000e+00> : vector<200x200xf32>
    %41 = tpu.matmul %39, %40, %cst_14 {dimension_numbers = #tpu.dot_dimension_numbers<[1], [0], [0], [1], [0, 0, 1, 1], [], []>} : vector<200x32xf32>, vector<32x200xf32>, vector<200x200xf32> -> vector<200x200xf32>
    %c1 = arith.constant 1 : index
    %42 = memref.load %arg1[%c1] : memref<3xf32, #tpu.memory_space<smem>>
    %43 = vector.broadcast %42 : f32 to vector<200x200xf32>
    %44 = arith.mulf %43, %41 : vector<200x200xf32>
    %c2 = arith.constant 2 : index
    %45 = memref.load %arg1[%c2] : memref<3xf32, #tpu.memory_space<smem>>
    %46 = vector.broadcast %45 : f32 to vector<200x200xf32>
    %47 = arith.addf %44, %46 : vector<200x200xf32>
    %48 = arith.negf %47 : vector<200x200xf32>
    %49 = math.exp %48 : vector<200x200xf32>
    %cst_15 = arith.constant 1.000000e+00 : f32
    %50 = vector.broadcast %cst_15 : f32 to vector<200x200xf32>
    %51 = arith.addf %50, %49 : vector<200x200xf32>
    %52 = arith.divf %50, %51 : vector<200x200xf32>
    %c0_16 = arith.constant 0 : index
    %c0_17 = arith.constant 0 : index
    %53 = vector.load %arg6[%c0_16, %c0_17] : memref<200x200xf32, #tpu.memory_space<vmem>>, vector<200x200xf32>
    %54 = arith.mulf %52, %53 : vector<200x200xf32>
    %c0_18 = arith.constant 0 : index
    %c0_19 = arith.constant 0 : index
    %55 = vector.load %arg7[%c0_18, %c0_19] : memref<200x8xf32, #tpu.memory_space<vmem>>, vector<200x8xf32>
    %cst_20 = arith.constant dense<0.000000e+00> : vector<200x8xf32>
    %56 = tpu.matmul %54, %55, %cst_20 {dimension_numbers = #tpu.dot_dimension_numbers<[1], [0], [0], [1], [0, 0, 1, 1], [], []>} : vector<200x200xf32>, vector<200x8xf32>, vector<200x8xf32> -> vector<200x8xf32>
    %cst_21 = arith.constant dense<0xFF800000> : vector<200xf32>
    %57 = vector.multi_reduction <maximumf>, %56, %cst_21 [1] : vector<200x8xf32> to vector<200xf32>
    %58 = vector.shape_cast %57 : vector<200xf32> to vector<200x1xf32>
    %59 = vector.broadcast %58 : vector<200x1xf32> to vector<200x8xf32>
    %60 = arith.subf %56, %59 : vector<200x8xf32>
    %61 = math.exp %60 : vector<200x8xf32>
    %cst_22 = arith.constant dense<0.000000e+00> : vector<200xf32>
    %62 = vector.multi_reduction <add>, %61, %cst_22 [1] : vector<200x8xf32> to vector<200xf32>
    %63 = vector.shape_cast %62 : vector<200xf32> to vector<200x1xf32>
    %64 = math.log %63 : vector<200x1xf32>
    %65 = vector.broadcast %64 : vector<200x1xf32> to vector<200x8xf32>
    %66 = arith.subf %60, %65 : vector<200x8xf32>
    %c0_23 = arith.constant 0 : index
    %c0_24 = arith.constant 0 : index
    %67 = vector.load %arg8[%c0_23, %c0_24] : memref<200x8xf32, #tpu.memory_space<vmem>>, vector<200x8xf32>
    tpu.vector_store %arg8[%c0_23, %c0_24], %66 {strides = array<i32>} : memref<200x8xf32, #tpu.memory_space<vmem>>, vector<200x8xf32>,
    return
  }
  func.func @transform_0(%arg0: i32) -> i32 {
    %c0_i32 = arith.constant 0 : i32
    %c0_i32_0 = arith.constant 0 : i32
    return %c0_i32 : i32
  }
  func.func @transform_1(%arg0: i32) -> (i32, i32) {
    %c0_i32 = arith.constant 0 : i32
    %c0_i32_0 = arith.constant 0 : i32
    return %arg0, %c0_i32 : i32, i32
  }
  func.func @transform_2(%arg0: i32) -> (i32, i32) {
    %c0_i32 = arith.constant 0 : i32
    %c0_i32_0 = arith.constant 0 : i32
    %c0_i32_1 = arith.constant 0 : i32
    return %c0_i32, %c0_i32_0 : i32, i32
  }
  func.func @transform_3(%arg0: i32) -> (i32, i32) {
    %c0_i32 = arith.constant 0 : i32
    %c0_i32_0 = arith.constant 0 : i32
    %c0_i32_1 = arith.constant 0 : i32
    return %c0_i32, %c0_i32_0 : i32, i32
  }
  func.func @transform_4(%arg0: i32) -> (i32, i32) {
    %c0_i32 = arith.constant 0 : i32
    %c0_i32_0 = arith.constant 0 : i32
    %c0_i32_1 = arith.constant 0 : i32
    return %c0_i32, %c0_i32_0 : i32, i32
  }
  func.func @transform_5(%arg0: i32) -> (i32, i32) {
    %c0_i32 = arith.constant 0 : i32
    %c0_i32_0 = arith.constant 0 : i32
    return %arg0, %c0_i32 : i32, i32
  }
  func.func @transform_6(%arg0: i32) -> (i32, i32) {
    %c0_i32 = arith.constant 0 : i32
    %c0_i32_0 = arith.constant 0 : i32
    %c0_i32_1 = arith.constant 0 : i32
    return %c0_i32, %c0_i32_0 : i32, i32
  }
  func.func @transform_7(%arg0: i32) -> (i32, i32) {
    %c0_i32 = arith.constant 0 : i32
    %c0_i32_0 = arith.constant 0 : i32
    return %arg0, %c0_i32 : i32, i32
  }
}

</mosaic_0001>

<llo_original>
// kernel: _lambda_.4
$region0: #{_lambda_.4}
  #allocation0 [shape = 'u32[]', space=smem, size = 0x4, offset = 0x4, fixed_abs, tag = 'smem constant byte address 0x4 - core index']
  #allocation1 [shape = 'u32[72,128]{1,0:T(1,128)}', space=vmem, size = 0x9000, scoped, tag = 'internal scratch']
  %s0 = inlined_call_operand.vmem [shape: f32[200,200], index: 0, kind: input, shape index: {}]
  %s1 = inlined_call_operand.vmem [shape: f32[200,9], index: 1, kind: input, shape index: {}]
  %s2 = inlined_call_operand.vmem [shape: f32[200,9], index: 2, kind: output, shape index: {}]
  %s3 = sld [smem:[#allocation0]]
  $region18: #{_lambda_.4} parent=0
    _
  %s5 = ssub.s32 1, %s3
  %s6 = scalar_select 0, %s5, %s3
  // Predicated region
  $region2: #{_lambda_.4} parent=0 // pred_check
    _
  $region3: #{_lambda_.4} parent=0 // pred_check_branch
    %8 = sbr.rel (0) target = $region5
  $region4: #{_lambda_.4} parent=0 // pred_region
    _
  $region5: #{_lambda_.4} parent=0 // pred_fallthru
    _
  // Predicated region
  $region6: #{_lambda_.4} parent=0 // pred_check
    _
  $region7: #{_lambda_.4} parent=0 // pred_check_branch
    %10 = sbr.rel (0) target = $region9
  $region8: #{_lambda_.4} parent=0 // pred_region
    _
  $region9: #{_lambda_.4} parent=0 // pred_fallthru
    _
  %v11 = vld [vmem:[%s0] sm:$0xff]
  %v12 = vld [vmem:[%s0 + $0x8] sm:$0xff]
  %v13 = vld [vmem:[%s0 + $0x10] sm:$0xff]
  %v14 = vld [vmem:[%s0 + $0x18] sm:$0xff]
  %v15 = vld [vmem:[%s0 + $0x20] sm:$0xff]
  %v16 = vld [vmem:[%s0 + $0x28] sm:$0xff]
  %v17 = vld [vmem:[%s0 + $0x30] sm:$0xff]
  %v18 = vld [vmem:[%s0 + $0x38] sm:$0xff]
  %v19 = vld [vmem:[%s0 + $0x40] sm:$0xff]
  %v20 = vld [vmem:[%s0 + $0x48] sm:$0xff]
  %v21 = vld [vmem:[%s0 + $0x50] sm:$0xff]
  %v22 = vld [vmem:[%s0 + $0x58] sm:$0xff]
  %v23 = vld [vmem:[%s0 + $0x60] sm:$0xff]
  %v24 = vld [vmem:[%s0 + $0x68] sm:$0xff]
  %v25 = vld [vmem:[%s0 + $0x70] sm:$0xff]
  %v26 = vld [vmem:[%s0 + $0x78] sm:$0xff]
  %v27 = vld [vmem:[%s0 + $0x80] sm:$0xff]
  %v28 = vld [vmem:[%s0 + $0x88] sm:$0xff]
  %v29 = vld [vmem:[%s0 + $0x90] sm:$0xff]
  %v30 = vld [vmem:[%s0 + $0x98] sm:$0xff]
  %v31 = vld [vmem:[%s0 + $0xa0] sm:$0xff]
  %v32 = vld [vmem:[%s0 + $0xa8] sm:$0xff]
  %v33 = vld [vmem:[%s0 + $0xb0] sm:$0xff]
  %v34 = vld [vmem:[%s0 + $0xb8] sm:$0xff]
  %v35 = vld [vmem:[%s0 + $0xc0] sm:$0xff]
  %v36 = vld [vmem:[%s0 + $0xc8] sm:$0xff]
  %v37 = vld [vmem:[%s0 + $0xd0] sm:$0xff]
  %v38 = vld [vmem:[%s0 + $0xd8] sm:$0xff]
  %v39 = vld [vmem:[%s0 + $0xe0] sm:$0xff]
  %v40 = vld [vmem:[%s0 + $0xe8] sm:$0xff]
  %v41 = vld [vmem:[%s0 + $0xf0] sm:$0xff]
  %v42 = vld [vmem:[%s0 + $0xf8] sm:$0xff]
  %v43 = vld [vmem:[%s0 + $0x100] sm:$0xff]
  %v44 = vld [vmem:[%s0 + $0x108] sm:$0xff]
  %v45 = vld [vmem:[%s0 + $0x110] sm:$0xff]
  %v46 = vld [vmem:[%s0 + $0x118] sm:$0xff]
  %v47 = vld [vmem:[%s0 + $0x120] sm:$0xff]
  %v48 = vld [vmem:[%s0 + $0x128] sm:$0xff]
  %v49 = vld [vmem:[%s0 + $0x130] sm:$0xff]
  %v50 = vld [vmem:[%s0 + $0x138] sm:$0xff]
  %v51 = vld [vmem:[%s0 + $0x140] sm:$0xff]
  %v52 = vld [vmem:[%s0 + $0x148] sm:$0xff]
  %v53 = vld [vmem:[%s0 + $0x150] sm:$0xff]
  %v54 = vld [vmem:[%s0 + $0x158] sm:$0xff]
  %v55 = vld [vmem:[%s0 + $0x160] sm:$0xff]
  %v56 = vld [vmem:[%s0 + $0x168] sm:$0xff]
  %v57 = vld [vmem:[%s0 + $0x170] sm:$0xff]
  %v58 = vld [vmem:[%s0 + $0x178] sm:$0xff]
  %v59 = vld [vmem:[%s0 + $0x180] sm:$0xff]
  %v60 = vld [vmem:[%s0 + $0x188] sm:$0xff]
  %v61 = vld [vmem:[%s1] sm:$0xff]
  %v62 = vld [vmem:[%s1 + $0x8] sm:$0xff]
  %v63 = vld [vmem:[%s1 + $0x10] sm:$0xff]
  %v64 = vld [vmem:[%s1 + $0x18] sm:$0xff]
  %v65 = vld [vmem:[%s1 + $0x20] sm:$0xff]
  %v66 = vld [vmem:[%s1 + $0x28] sm:$0xff]
  %v67 = vld [vmem:[%s1 + $0x30] sm:$0xff]
  %v68 = vld [vmem:[%s1 + $0x38] sm:$0xff]
  %v69 = vld [vmem:[%s1 + $0x40] sm:$0xff]
  %v70 = vld [vmem:[%s1 + $0x48] sm:$0xff]
  %v71 = vld [vmem:[%s1 + $0x50] sm:$0xff]
  %v72 = vld [vmem:[%s1 + $0x58] sm:$0xff]
  %v73 = vld [vmem:[%s1 + $0x60] sm:$0xff]
  %v74 = vld [vmem:[%s1 + $0x68] sm:$0xff]
  %v75 = vld [vmem:[%s1 + $0x70] sm:$0xff]
  %v76 = vld [vmem:[%s1 + $0x78] sm:$0xff]
  %v77 = vld [vmem:[%s1 + $0x80] sm:$0xff]
  %v78 = vld [vmem:[%s1 + $0x88] sm:$0xff]
  %v79 = vld [vmem:[%s1 + $0x90] sm:$0xff]
  %v80 = vld [vmem:[%s1 + $0x98] sm:$0xff]
  %v81 = vld [vmem:[%s1 + $0xa0] sm:$0xff]
  %v82 = vld [vmem:[%s1 + $0xa8] sm:$0xff]
  %v83 = vld [vmem:[%s1 + $0xb0] sm:$0xff]
  %v84 = vld [vmem:[%s1 + $0xb8] sm:$0xff]
  %v85 = vld [vmem:[%s1 + $0xc0] sm:$0xff]
  %vm86 = vcmask 588800
  %v88 = vsel %vm86, %v12, 0
  %v91 = vsel %vm86, %v14, 0
  %v94 = vsel %vm86, %v16, 0
  %v97 = vsel %vm86, %v18, 0
  %v100 = vsel %vm86, %v20, 0
  %v103 = vsel %vm86, %v22, 0
  %v106 = vsel %vm86, %v24, 0
  %v109 = vsel %vm86, %v26, 0
  %v112 = vsel %vm86, %v28, 0
  %v115 = vsel %vm86, %v30, 0
  %v118 = vsel %vm86, %v32, 0
  %v121 = vsel %vm86, %v34, 0
  %v124 = vsel %vm86, %v36, 0
  %v127 = vsel %vm86, %v38, 0
  %v130 = vsel %vm86, %v40, 0
  %v133 = vsel %vm86, %v42, 0
  %v136 = vsel %vm86, %v44, 0
  %v139 = vsel %vm86, %v46, 0
  %v142 = vsel %vm86, %v48, 0
  %v145 = vsel %vm86, %v50, 0
  %v148 = vsel %vm86, %v52, 0
  %v151 = vsel %vm86, %v54, 0
  %v154 = vsel %vm86, %v56, 0
  %v157 = vsel %vm86, %v58, 0
  %v160 = vsel %vm86, %v60, 0
  %162 = vmatpush.msra.mxu0 %v76
  %163 = vmatpush.msra.mxu0 %v75
  %164 = vmatpush.msra.mxu0 %v74
  %165 = vmatpush.msra.mxu0 %v73
  %166 = vmatpush.msra.mxu0 %v72
  %167 = vmatpush.msra.mxu0 %v71
  %168 = vmatpush.msra.mxu0 %v70
  %169 = vmatpush.msra.mxu0 %v69
  %170 = vmatpush.msra.mxu0 %v68
  %171 = vmatpush.msra.mxu0 %v67
  %172 = vmatpush.msra.mxu0 %v66
  %173 = vmatpush.msra.mxu0 %v65
  %174 = vmatpush.msra.mxu0 %v64
  %175 = vmatpush.msra.mxu0 %v63
  %176 = vmatpush.msra.mxu0 %v62
  %177 = vmatpush.msra.mxu0 %v61
  %178 = vmatmul.f32.gmra.mxu0 %v11
  %v179 = vpop.f32.mrf.mxu0
  %v180 = vadd.f32 0.0, %v179
  %181 = vmatmul.f32.gmra.mxu0 %v13
  %v182 = vpop.f32.mrf.mxu0
  %v183 = vadd.f32 0.0, %v182
  %184 = vmatmul.f32.gmra.mxu0 %v15
  %v185 = vpop.f32.mrf.mxu0
  %v186 = vadd.f32 0.0, %v185
  %187 = vmatmul.f32.gmra.mxu0 %v17
  %v188 = vpop.f32.mrf.mxu0
  %v189 = vadd.f32 0.0, %v188
  %190 = vmatmul.f32.gmra.mxu0 %v19
  %v191 = vpop.f32.mrf.mxu0
  %v192 = vadd.f32 0.0, %v191
  %193 = vmatmul.f32.gmra.mxu0 %v21
  %v194 = vpop.f32.mrf.mxu0
  %v195 = vadd.f32 0.0, %v194
  %196 = vmatmul.f32.gmra.mxu0 %v23
  %v197 = vpop.f32.mrf.mxu0
  %v198 = vadd.f32 0.0, %v197
  %199 = vmatmul.f32.gmra.mxu0 %v25
  %v200 = vpop.f32.mrf.mxu0
  %v201 = vadd.f32 0.0, %v200
  %202 = vmatmul.f32.gmra.mxu0 %v27
  %v203 = vpop.f32.mrf.mxu0
  %v204 = vadd.f32 0.0, %v203
  %205 = vmatmul.f32.gmra.mxu0 %v29
  %v206 = vpop.f32.mrf.mxu0
  %v207 = vadd.f32 0.0, %v206
  %208 = vmatmul.f32.gmra.mxu0 %v31
  %v209 = vpop.f32.mrf.mxu0
  %v210 = vadd.f32 0.0, %v209
  %211 = vmatmul.f32.gmra.mxu0 %v33
  %v212 = vpop.f32.mrf.mxu0
  %v213 = vadd.f32 0.0, %v212
  %214 = vmatmul.f32.gmra.mxu0 %v35
  %v215 = vpop.f32.mrf.mxu0
  %v216 = vadd.f32 0.0, %v215
  %217 = vmatmul.f32.gmra.mxu0 %v37
  %v218 = vpop.f32.mrf.mxu0
  %v219 = vadd.f32 0.0, %v218
  %220 = vmatmul.f32.gmra.mxu0 %v39
  %v221 = vpop.f32.mrf.mxu0
  %v222 = vadd.f32 0.0, %v221
  %223 = vmatmul.f32.gmra.mxu0 %v41
  %v224 = vpop.f32.mrf.mxu0
  %v225 = vadd.f32 0.0, %v224
  %226 = vmatmul.f32.gmra.mxu0 %v43
  %v227 = vpop.f32.mrf.mxu0
  %v228 = vadd.f32 0.0, %v227
  %229 = vmatmul.f32.gmra.mxu0 %v45
  %v230 = vpop.f32.mrf.mxu0
  %v231 = vadd.f32 0.0, %v230
  %232 = vmatmul.f32.gmra.mxu0 %v47
  %v233 = vpop.f32.mrf.mxu0
  %v234 = vadd.f32 0.0, %v233
  %235 = vmatmul.f32.gmra.mxu0 %v49
  %v236 = vpop.f32.mrf.mxu0
  %v237 = vadd.f32 0.0, %v236
  %238 = vmatmul.f32.gmra.mxu0 %v51
  %v239 = vpop.f32.mrf.mxu0
  %v240 = vadd.f32 0.0, %v239
  %241 = vmatmul.f32.gmra.mxu0 %v53
  %v242 = vpop.f32.mrf.mxu0
  %v243 = vadd.f32 0.0, %v242
  %244 = vmatmul.f32.gmra.mxu0 %v55
  %v245 = vpop.f32.mrf.mxu0
  %v246 = vadd.f32 0.0, %v245
  %247 = vmatmul.f32.gmra.mxu0 %v57
  %v248 = vpop.f32.mrf.mxu0
  %v249 = vadd.f32 0.0, %v248
  %250 = vmatmul.f32.gmra.mxu0 %v59
  %v251 = vpop.f32.mrf.mxu0
  %v252 = vadd.f32 0.0, %v251
  %253 = vdwg.mxu0
  %254 = vmatpush.msra.mxu0 0.0
  %255 = vmatpush.msra.mxu0 0.0
  %256 = vmatpush.msra.mxu0 0.0
  %257 = vmatpush.msra.mxu0 0.0
  %258 = vmatpush.msra.mxu0 0.0
  %259 = vmatpush.msra.mxu0 0.0
  %260 = vmatpush.msra.mxu0 0.0
  %261 = vmatpush.msra.mxu0 %v85
  %262 = vmatpush.msra.mxu0 %v84
  %263 = vmatpush.msra.mxu0 %v83
  %264 = vmatpush.msra.mxu0 %v82
  %265 = vmatpush.msra.mxu0 %v81
  %266 = vmatpush.msra.mxu0 %v80
  %267 = vmatpush.msra.mxu0 %v79
  %268 = vmatpush.msra.mxu0 %v78
  %269 = vmatpush.msra.mxu0 %v77
  %270 = vmatmul.f32.gmra.mxu0 %v88
  %v271 = vpop.f32.mrf.mxu0
  %v272 = vadd.f32 %v180, %v271
  %273 = vmatmul.f32.gmra.mxu0 %v91
  %v274 = vpop.f32.mrf.mxu0
  %v275 = vadd.f32 %v183, %v274
  %276 = vmatmul.f32.gmra.mxu0 %v94
  %v277 = vpop.f32.mrf.mxu0
  %v278 = vadd.f32 %v186, %v277
  %279 = vmatmul.f32.gmra.mxu0 %v97
  %v280 = vpop.f32.mrf.mxu0
  %v281 = vadd.f32 %v189, %v280
  %282 = vmatmul.f32.gmra.mxu0 %v100
  %v283 = vpop.f32.mrf.mxu0
  %v284 = vadd.f32 %v192, %v283
  %285 = vmatmul.f32.gmra.mxu0 %v103
  %v286 = vpop.f32.mrf.mxu0
  %v287 = vadd.f32 %v195, %v286
  %288 = vmatmul.f32.gmra.mxu0 %v106
  %v289 = vpop.f32.mrf.mxu0
  %v290 = vadd.f32 %v198, %v289
  %291 = vmatmul.f32.gmra.mxu0 %v109
  %v292 = vpop.f32.mrf.mxu0
  %v293 = vadd.f32 %v201, %v292
  %294 = vmatmul.f32.gmra.mxu0 %v112
  %v295 = vpop.f32.mrf.mxu0
  %v296 = vadd.f32 %v204, %v295
  %297 = vmatmul.f32.gmra.mxu0 %v115
  %v298 = vpop.f32.mrf.mxu0
  %v299 = vadd.f32 %v207, %v298
  %300 = vmatmul.f32.gmra.mxu0 %v118
  %v301 = vpop.f32.mrf.mxu0
  %v302 = vadd.f32 %v210, %v301
  %303 = vmatmul.f32.gmra.mxu0 %v121
  %v304 = vpop.f32.mrf.mxu0
  %v305 = vadd.f32 %v213, %v304
  %306 = vmatmul.f32.gmra.mxu0 %v124
  %v307 = vpop.f32.mrf.mxu0
  %v308 = vadd.f32 %v216, %v307
  %309 = vmatmul.f32.gmra.mxu0 %v127
  %v310 = vpop.f32.mrf.mxu0
  %v311 = vadd.f32 %v219, %v310
  %312 = vmatmul.f32.gmra.mxu0 %v130
  %v313 = vpop.f32.mrf.mxu0
  %v314 = vadd.f32 %v222, %v313
  %315 = vmatmul.f32.gmra.mxu0 %v133
  %v316 = vpop.f32.mrf.mxu0
  %v317 = vadd.f32 %v225, %v316
  %318 = vmatmul.f32.gmra.mxu0 %v136
  %v319 = vpop.f32.mrf.mxu0
  %v320 = vadd.f32 %v228, %v319
  %321 = vmatmul.f32.gmra.mxu0 %v139
  %v322 = vpop.f32.mrf.mxu0
  %v323 = vadd.f32 %v231, %v322
  %324 = vmatmul.f32.gmra.mxu0 %v142
  %v325 = vpop.f32.mrf.mxu0
  %v326 = vadd.f32 %v234, %v325
  %327 = vmatmul.f32.gmra.mxu0 %v145
  %v328 = vpop.f32.mrf.mxu0
  %v329 = vadd.f32 %v237, %v328
  %330 = vmatmul.f32.gmra.mxu0 %v148
  %v331 = vpop.f32.mrf.mxu0
  %v332 = vadd.f32 %v240, %v331
  %333 = vmatmul.f32.gmra.mxu0 %v151
  %v334 = vpop.f32.mrf.mxu0
  %v335 = vadd.f32 %v243, %v334
  %336 = vmatmul.f32.gmra.mxu0 %v154
  %v337 = vpop.f32.mrf.mxu0
  %v338 = vadd.f32 %v246, %v337
  %339 = vmatmul.f32.gmra.mxu0 %v157
  %v340 = vpop.f32.mrf.mxu0
  %v341 = vadd.f32 %v249, %v340
  %342 = vmatmul.f32.gmra.mxu0 %v160
  %v343 = vpop.f32.mrf.mxu0
  %v344 = vadd.f32 %v252, %v343
  %345 = vdwg.mxu0
  %v346 = vmul.f32 %v272, %v272
  %v347 = vmul.f32 %v275, %v275
  %v348 = vmul.f32 %v278, %v278
  %v349 = vmul.f32 %v281, %v281
  %v350 = vmul.f32 %v284, %v284
  %v351 = vmul.f32 %v287, %v287
  %v352 = vmul.f32 %v290, %v290
  %v353 = vmul.f32 %v293, %v293
  %v354 = vmul.f32 %v296, %v296
  %v355 = vmul.f32 %v299, %v299
  %v356 = vmul.f32 %v302, %v302
  %v357 = vmul.f32 %v305, %v305
  %v358 = vmul.f32 %v308, %v308
  %v359 = vmul.f32 %v311, %v311
  %v360 = vmul.f32 %v314, %v314
  %v361 = vmul.f32 %v317, %v317
  %v362 = vmul.f32 %v320, %v320
  %v363 = vmul.f32 %v323, %v323
  %v364 = vmul.f32 %v326, %v326
  %v365 = vmul.f32 %v329, %v329
  %v366 = vmul.f32 %v332, %v332
  %v367 = vmul.f32 %v335, %v335
  %v368 = vmul.f32 %v338, %v338
  %v369 = vmul.f32 %v341, %v341
  %v370 = vmul.f32 %v344, %v344
  %vm371 = vcmask 72704
  %v372 = vsel %vm371, %v346, 0.0
  %373 = vadd.xlane.f32.xlu0 %v372
  %v374 = vpop.xlane.xlu0 %373
  %v375 = vsel %vm371, %v347, 0.0
  %376 = vadd.xlane.f32.xlu0 %v375
  %v377 = vpop.xlane.xlu0 %376
  %v378 = vsel %vm371, %v348, 0.0
  %379 = vadd.xlane.f32.xlu0 %v378
  %v380 = vpop.xlane.xlu0 %379
  %v381 = vsel %vm371, %v349, 0.0
  %382 = vadd.xlane.f32.xlu0 %v381
  %v383 = vpop.xlane.xlu0 %382
  %v384 = vsel %vm371, %v350, 0.0
  %385 = vadd.xlane.f32.xlu0 %v384
  %v386 = vpop.xlane.xlu0 %385
  %v387 = vsel %vm371, %v351, 0.0
  %388 = vadd.xlane.f32.xlu0 %v387
  %v389 = vpop.xlane.xlu0 %388
  %v390 = vsel %vm371, %v352, 0.0
  %391 = vadd.xlane.f32.xlu0 %v390
  %v392 = vpop.xlane.xlu0 %391
  %v393 = vsel %vm371, %v353, 0.0
  %394 = vadd.xlane.f32.xlu0 %v393
  %v395 = vpop.xlane.xlu0 %394
  %v396 = vsel %vm371, %v354, 0.0
  %397 = vadd.xlane.f32.xlu0 %v396
  %v398 = vpop.xlane.xlu0 %397
  %v399 = vsel %vm371, %v355, 0.0
  %400 = vadd.xlane.f32.xlu0 %v399
  %v401 = vpop.xlane.xlu0 %400
  %v402 = vsel %vm371, %v356, 0.0
  %403 = vadd.xlane.f32.xlu0 %v402
  %v404 = vpop.xlane.xlu0 %403
  %v405 = vsel %vm371, %v357, 0.0
  %406 = vadd.xlane.f32.xlu0 %v405
  %v407 = vpop.xlane.xlu0 %406
  %v408 = vsel %vm371, %v358, 0.0
  %409 = vadd.xlane.f32.xlu0 %v408
  %v410 = vpop.xlane.xlu0 %409
  %v411 = vsel %vm371, %v359, 0.0
  %412 = vadd.xlane.f32.xlu0 %v411
  %v413 = vpop.xlane.xlu0 %412
  %v414 = vsel %vm371, %v360, 0.0
  %415 = vadd.xlane.f32.xlu0 %v414
  %v416 = vpop.xlane.xlu0 %415
  %v417 = vsel %vm371, %v361, 0.0
  %418 = vadd.xlane.f32.xlu0 %v417
  %v419 = vpop.xlane.xlu0 %418
  %v420 = vsel %vm371, %v362, 0.0
  %421 = vadd.xlane.f32.xlu0 %v420
  %v422 = vpop.xlane.xlu0 %421
  %v423 = vsel %vm371, %v363, 0.0
  %424 = vadd.xlane.f32.xlu0 %v423
  %v425 = vpop.xlane.xlu0 %424
  %v426 = vsel %vm371, %v364, 0.0
  %427 = vadd.xlane.f32.xlu0 %v426
  %v428 = vpop.xlane.xlu0 %427
  %v429 = vsel %vm371, %v365, 0.0
  %430 = vadd.xlane.f32.xlu0 %v429
  %v431 = vpop.xlane.xlu0 %430
  %v432 = vsel %vm371, %v366, 0.0
  %433 = vadd.xlane.f32.xlu0 %v432
  %v434 = vpop.xlane.xlu0 %433
  %v435 = vsel %vm371, %v367, 0.0
  %436 = vadd.xlane.f32.xlu0 %v435
  %v437 = vpop.xlane.xlu0 %436
  %v438 = vsel %vm371, %v368, 0.0
  %439 = vadd.xlane.f32.xlu0 %v438
  %v440 = vpop.xlane.xlu0 %439
  %v441 = vsel %vm371, %v369, 0.0
  %442 = vadd.xlane.f32.xlu0 %v441
  %v443 = vpop.xlane.xlu0 %442
  %v444 = vsel %vm371, %v370, 0.0
  %445 = vadd.xlane.f32.xlu0 %v444
  %v446 = vpop.xlane.xlu0 %445
  %v447 = vsub.f32 %v374, %v346
  %v448 = vsub.f32 %v377, %v347
  %v449 = vsub.f32 %v380, %v348
  %v450 = vsub.f32 %v383, %v349
  %v451 = vsub.f32 %v386, %v350
  %v452 = vsub.f32 %v389, %v351
  %v453 = vsub.f32 %v392, %v352
  %v454 = vsub.f32 %v395, %v353
  %v455 = vsub.f32 %v398, %v354
  %v456 = vsub.f32 %v401, %v355
  %v457 = vsub.f32 %v404, %v356
  %v458 = vsub.f32 %v407, %v357
  %v459 = vsub.f32 %v410, %v358
  %v460 = vsub.f32 %v413, %v359
  %v461 = vsub.f32 %v416, %v360
  %v462 = vsub.f32 %v419, %v361
  %v463 = vsub.f32 %v422, %v362
  %v464 = vsub.f32 %v425, %v363
  %v465 = vsub.f32 %v428, %v364
  %v466 = vsub.f32 %v431, %v365
  %v467 = vsub.f32 %v434, %v366
  %v468 = vsub.f32 %v437, %v367
  %v469 = vsub.f32 %v440, %v368
  %v470 = vsub.f32 %v443, %v369
  %v471 = vsub.f32 %v446, %v370
  %v472 = vsub.f32 %v346, %v447
  %v473 = vsub.f32 %v347, %v448
  %v474 = vsub.f32 %v348, %v449
  %v475 = vsub.f32 %v349, %v450
  %v476 = vsub.f32 %v350, %v451
  %v477 = vsub.f32 %v351, %v452
  %v478 = vsub.f32 %v352, %v453
  %v479 = vsub.f32 %v353, %v454
  %v480 = vsub.f32 %v354, %v455
  %v481 = vsub.f32 %v355, %v456
  %v482 = vsub.f32 %v356, %v457
  %v483 = vsub.f32 %v357, %v458
  %v484 = vsub.f32 %v358, %v459
  %v485 = vsub.f32 %v359, %v460
  %v486 = vsub.f32 %v360, %v461
  %v487 = vsub.f32 %v361, %v462
  %v488 = vsub.f32 %v362, %v463
  %v489 = vsub.f32 %v363, %v464
  %v490 = vsub.f32 %v364, %v465
  %v491 = vsub.f32 %v365, %v466
  %v492 = vsub.f32 %v366, %v467
  %v493 = vsub.f32 %v367, %v468
  %v494 = vsub.f32 %v368, %v469
  %v495 = vsub.f32 %v369, %v470
  %v496 = vsub.f32 %v370, %v471
  %v497 = vand.u32 2147483647, %v472
  %v498 = vand.u32 2147483647, %v473
  %v499 = vand.u32 2147483647, %v474
  %v500 = vand.u32 2147483647, %v475
  %v501 = vand.u32 2147483647, %v476
  %v502 = vand.u32 2147483647, %v477
  %v503 = vand.u32 2147483647, %v478
  %v504 = vand.u32 2147483647, %v479
  %v505 = vand.u32 2147483647, %v480
  %v506 = vand.u32 2147483647, %v481
  %v507 = vand.u32 2147483647, %v482
  %v508 = vand.u32 2147483647, %v483
  %v509 = vand.u32 2147483647, %v484
  %v510 = vand.u32 2147483647, %v485
  %v511 = vand.u32 2147483647, %v486
  %v512 = vand.u32 2147483647, %v487
  %v513 = vand.u32 2147483647, %v488
  %v514 = vand.u32 2147483647, %v489
  %v515 = vand.u32 2147483647, %v490
  %v516 = vand.u32 2147483647, %v491
  %v517 = vand.u32 2147483647, %v492
  %v518 = vand.u32 2147483647, %v493
  %v519 = vand.u32 2147483647, %v494
  %v520 = vand.u32 2147483647, %v495
  %v521 = vand.u32 2147483647, %v496
  %v522 = vmax.f32 %v497, 1e-08
  %v523 = vmax.f32 %v498, 1e-08
  %v524 = vmax.f32 %v499, 1e-08
  %v525 = vmax.f32 %v500, 1e-08
  %v526 = vmax.f32 %v501, 1e-08
  %v527 = vmax.f32 %v502, 1e-08
  %v528 = vmax.f32 %v503, 1e-08
  %v529 = vmax.f32 %v504, 1e-08
  %v530 = vmax.f32 %v505, 1e-08
  %v531 = vmax.f32 %v506, 1e-08
  %v532 = vmax.f32 %v507, 1e-08
  %v533 = vmax.f32 %v508, 1e-08
  %v534 = vmax.f32 %v509, 1e-08
  %v535 = vmax.f32 %v510, 1e-08
  %v536 = vmax.f32 %v511, 1e-08
  %v537 = vmax.f32 %v512, 1e-08
  %v538 = vmax.f32 %v513, 1e-08
  %v539 = vmax.f32 %v514, 1e-08
  %v540 = vmax.f32 %v515, 1e-08
  %v541 = vmax.f32 %v516, 1e-08
  %v542 = vmax.f32 %v517, 1e-08
  %v543 = vmax.f32 %v518, 1e-08
  %v544 = vmax.f32 %v519, 1e-08
  %v545 = vmax.f32 %v520, 1e-08
  %v546 = vmax.f32 %v521, 1e-08
  %v547 = vrsqrt.pop %v522
  %v548 = vmul.f32 %v547, %v522
  %v549 = vmul.f32 %v548, %v547
  %v550 = vmul.f32 0.5, %v549
  %v551 = vsub.f32 1.5, %v550
  %v552 = vmul.f32 %v547, %v551
  %vm553 = vweird.f32 %v522
  %vm554 = vweird.f32 %v547
  %vm555 = vmor %vm553, %vm554
  %v556 = vsel %vm555, %v547, %v552
  %v557 = vrsqrt.pop %v523
  %v558 = vmul.f32 %v557, %v523
  %v559 = vmul.f32 %v558, %v557
  %v560 = vmul.f32 0.5, %v559
  %v561 = vsub.f32 1.5, %v560
  %v562 = vmul.f32 %v557, %v561
  %vm563 = vweird.f32 %v523
  %vm564 = vweird.f32 %v557
  %vm565 = vmor %vm563, %vm564
  %v566 = vsel %vm565, %v557, %v562
  %v567 = vrsqrt.pop %v524
  %v568 = vmul.f32 %v567, %v524
  %v569 = vmul.f32 %v568, %v567
  %v570 = vmul.f32 0.5, %v569
  %v571 = vsub.f32 1.5, %v570
  %v572 = vmul.f32 %v567, %v571
  %vm573 = vweird.f32 %v524
  %vm574 = vweird.f32 %v567
  %vm575 = vmor %vm573, %vm574
  %v576 = vsel %vm575, %v567, %v572
  %v577 = vrsqrt.pop %v525
  %v578 = vmul.f32 %v577, %v525
  %v579 = vmul.f32 %v578, %v577
  %v580 = vmul.f32 0.5, %v579
  %v581 = vsub.f32 1.5, %v580
  %v582 = vmul.f32 %v577, %v581
  %vm583 = vweird.f32 %v525
  %vm584 = vweird.f32 %v577
  %vm585 = vmor %vm583, %vm584
  %v586 = vsel %vm585, %v577, %v582
  %v587 = vrsqrt.pop %v526
  %v588 = vmul.f32 %v587, %v526
  %v589 = vmul.f32 %v588, %v587
  %v590 = vmul.f32 0.5, %v589
  %v591 = vsub.f32 1.5, %v590
  %v592 = vmul.f32 %v587, %v591
  %vm593 = vweird.f32 %v526
  %vm594 = vweird.f32 %v587
  %vm595 = vmor %vm593, %vm594
  %v596 = vsel %vm595, %v587, %v592
  %v597 = vrsqrt.pop %v527
  %v598 = vmul.f32 %v597, %v527
  %v599 = vmul.f32 %v598, %v597
  %v600 = vmul.f32 0.5, %v599
  %v601 = vsub.f32 1.5, %v600
  %v602 = vmul.f32 %v597, %v601
  %vm603 = vweird.f32 %v527
  %vm604 = vweird.f32 %v597
  %vm605 = vmor %vm603, %vm604
  %v606 = vsel %vm605, %v597, %v602
  %v607 = vrsqrt.pop %v528
  %v608 = vmul.f32 %v607, %v528
  %v609 = vmul.f32 %v608, %v607
  %v610 = vmul.f32 0.5, %v609
  %v611 = vsub.f32 1.5, %v610
  %v612 = vmul.f32 %v607, %v611
  %vm613 = vweird.f32 %v528
  %vm614 = vweird.f32 %v607
  %vm615 = vmor %vm613, %vm614
  %v616 = vsel %vm615, %v607, %v612
  %v617 = vrsqrt.pop %v529
  %v618 = vmul.f32 %v617, %v529
  %v619 = vmul.f32 %v618, %v617
  %v620 = vmul.f32 0.5, %v619
  %v621 = vsub.f32 1.5, %v620
  %v622 = vmul.f32 %v617, %v621
  %vm623 = vweird.f32 %v529
  %vm624 = vweird.f32 %v617
  %vm625 = vmor %vm623, %vm624
  %v626 = vsel %vm625, %v617, %v622
  %v627 = vrsqrt.pop %v530
  %v628 = vmul.f32 %v627, %v530
  %v629 = vmul.f32 %v628, %v627
  %v630 = vmul.f32 0.5, %v629
  %v631 = vsub.f32 1.5, %v630
  %v632 = vmul.f32 %v627, %v631
  %vm633 = vweird.f32 %v530
  %vm634 = vweird.f32 %v627
  %vm635 = vmor %vm633, %vm634
  %v636 = vsel %vm635, %v627, %v632
  %v637 = vrsqrt.pop %v531
  %v638 = vmul.f32 %v637, %v531
  %v639 = vmul.f32 %v638, %v637
  %v640 = vmul.f32 0.5, %v639
  %v641 = vsub.f32 1.5, %v640
  %v642 = vmul.f32 %v637, %v641
  %vm643 = vweird.f32 %v531
  %vm644 = vweird.f32 %v637
  %vm645 = vmor %vm643, %vm644
  %v646 = vsel %vm645, %v637, %v642
  %v647 = vrsqrt.pop %v532
  %v648 = vmul.f32 %v647, %v532
  %v649 = vmul.f32 %v648, %v647
  %v650 = vmul.f32 0.5, %v649
  %v651 = vsub.f32 1.5, %v650
  %v652 = vmul.f32 %v647, %v651
  %vm653 = vweird.f32 %v532
  %vm654 = vweird.f32 %v647
  %vm655 = vmor %vm653, %vm654
  %v656 = vsel %vm655, %v647, %v652
  %v657 = vrsqrt.pop %v533
  %v658 = vmul.f32 %v657, %v533
  %v659 = vmul.f32 %v658, %v657
  %v660 = vmul.f32 0.5, %v659
  %v661 = vsub.f32 1.5, %v660
  %v662 = vmul.f32 %v657, %v661
  %vm663 = vweird.f32 %v533
  %vm664 = vweird.f32 %v657
  %vm665 = vmor %vm663, %vm664
  %v666 = vsel %vm665, %v657, %v662
  %v667 = vrsqrt.pop %v534
  %v668 = vmul.f32 %v667, %v534
  %v669 = vmul.f32 %v668, %v667
  %v670 = vmul.f32 0.5, %v669
  %v671 = vsub.f32 1.5, %v670
  %v672 = vmul.f32 %v667, %v671
  %vm673 = vweird.f32 %v534
  %vm674 = vweird.f32 %v667
  %vm675 = vmor %vm673, %vm674
  %v676 = vsel %vm675, %v667, %v672
  %v677 = vrsqrt.pop %v535
  %v678 = vmul.f32 %v677, %v535
  %v679 = vmul.f32 %v678, %v677
  %v680 = vmul.f32 0.5, %v679
  %v681 = vsub.f32 1.5, %v680
  %v682 = vmul.f32 %v677, %v681
  %vm683 = vweird.f32 %v535
  %vm684 = vweird.f32 %v677
  %vm685 = vmor %vm683, %vm684
  %v686 = vsel %vm685, %v677, %v682
  %v687 = vrsqrt.pop %v536
  %v688 = vmul.f32 %v687, %v536
  %v689 = vmul.f32 %v688, %v687
  %v690 = vmul.f32 0.5, %v689
  %v691 = vsub.f32 1.5, %v690
  %v692 = vmul.f32 %v687, %v691
  %vm693 = vweird.f32 %v536
  %vm694 = vweird.f32 %v687
  %vm695 = vmor %vm693, %vm694
  %v696 = vsel %vm695, %v687, %v692
  %v697 = vrsqrt.pop %v537
  %v698 = vmul.f32 %v697, %v537
  %v699 = vmul.f32 %v698, %v697
  %v700 = vmul.f32 0.5, %v699
  %v701 = vsub.f32 1.5, %v700
  %v702 = vmul.f32 %v697, %v701
  %vm703 = vweird.f32 %v537
  %vm704 = vweird.f32 %v697
  %vm705 = vmor %vm703, %vm704
  %v706 = vsel %vm705, %v697, %v702
  %v707 = vrsqrt.pop %v538
  %v708 = vmul.f32 %v707, %v538
  %v709 = vmul.f32 %v708, %v707
  %v710 = vmul.f32 0.5, %v709
  %v711 = vsub.f32 1.5, %v710
  %v712 = vmul.f32 %v707, %v711
  %vm713 = vweird.f32 %v538
  %vm714 = vweird.f32 %v707
  %vm715 = vmor %vm713, %vm714
  %v716 = vsel %vm715, %v707, %v712
  %v717 = vrsqrt.pop %v539
  %v718 = vmul.f32 %v717, %v539
  %v719 = vmul.f32 %v718, %v717
  %v720 = vmul.f32 0.5, %v719
  %v721 = vsub.f32 1.5, %v720
  %v722 = vmul.f32 %v717, %v721
  %vm723 = vweird.f32 %v539
  %vm724 = vweird.f32 %v717
  %vm725 = vmor %vm723, %vm724
  %v726 = vsel %vm725, %v717, %v722
  %v727 = vrsqrt.pop %v540
  %v728 = vmul.f32 %v727, %v540
  %v729 = vmul.f32 %v728, %v727
  %v730 = vmul.f32 0.5, %v729
  %v731 = vsub.f32 1.5, %v730
  %v732 = vmul.f32 %v727, %v731
  %vm733 = vweird.f32 %v540
  %vm734 = vweird.f32 %v727
  %vm735 = vmor %vm733, %vm734
  %v736 = vsel %vm735, %v727, %v732
  %v737 = vrsqrt.pop %v541
  %v738 = vmul.f32 %v737, %v541
  %v739 = vmul.f32 %v738, %v737
  %v740 = vmul.f32 0.5, %v739
  %v741 = vsub.f32 1.5, %v740
  %v742 = vmul.f32 %v737, %v741
  %vm743 = vweird.f32 %v541
  %vm744 = vweird.f32 %v737
  %vm745 = vmor %vm743, %vm744
  %v746 = vsel %vm745, %v737, %v742
  %v747 = vrsqrt.pop %v542
  %v748 = vmul.f32 %v747, %v542
  %v749 = vmul.f32 %v748, %v747
  %v750 = vmul.f32 0.5, %v749
  %v751 = vsub.f32 1.5, %v750
  %v752 = vmul.f32 %v747, %v751
  %vm753 = vweird.f32 %v542
  %vm754 = vweird.f32 %v747
  %vm755 = vmor %vm753, %vm754
  %v756 = vsel %vm755, %v747, %v752
  %v757 = vrsqrt.pop %v543
  %v758 = vmul.f32 %v757, %v543
  %v759 = vmul.f32 %v758, %v757
  %v760 = vmul.f32 0.5, %v759
  %v761 = vsub.f32 1.5, %v760
  %v762 = vmul.f32 %v757, %v761
  %vm763 = vweird.f32 %v543
  %vm764 = vweird.f32 %v757
  %vm765 = vmor %vm763, %vm764
  %v766 = vsel %vm765, %v757, %v762
  %v767 = vrsqrt.pop %v544
  %v768 = vmul.f32 %v767, %v544
  %v769 = vmul.f32 %v768, %v767
  %v770 = vmul.f32 0.5, %v769
  %v771 = vsub.f32 1.5, %v770
  %v772 = vmul.f32 %v767, %v771
  %vm773 = vweird.f32 %v544
  %vm774 = vweird.f32 %v767
  %vm775 = vmor %vm773, %vm774
  %v776 = vsel %vm775, %v767, %v772
  %v777 = vrsqrt.pop %v545
  %v778 = vmul.f32 %v777, %v545
  %v779 = vmul.f32 %v778, %v777
  %v780 = vmul.f32 0.5, %v779
  %v781 = vsub.f32 1.5, %v780
  %v782 = vmul.f32 %v777, %v781
  %vm783 = vweird.f32 %v545
  %vm784 = vweird.f32 %v777
  %vm785 = vmor %vm783, %vm784
  %v786 = vsel %vm785, %v777, %v782
  %v787 = vrsqrt.pop %v546
  %v788 = vmul.f32 %v787, %v546
  %v789 = vmul.f32 %v788, %v787
  %v790 = vmul.f32 0.5, %v789
  %v791 = vsub.f32 1.5, %v790
  %v792 = vmul.f32 %v787, %v791
  %vm793 = vweird.f32 %v546
  %vm794 = vweird.f32 %v787
  %vm795 = vmor %vm793, %vm794
  %v796 = vsel %vm795, %v787, %v792
  %798 = vset.pattern.permute.xlu0 0
  %799 = vperm.xlu0 %798, %v556
  %v800 = vpop.permute.xlu0 %799
  %803 = vset.pattern.permute.xlu0 0
  %804 = vperm.xlu0 %803, %v566
  %v805 = vpop.permute.xlu0 %804
  %808 = vset.pattern.permute.xlu0 0
  %809 = vperm.xlu0 %808, %v576
  %v810 = vpop.permute.xlu0 %809
  %813 = vset.pattern.permute.xlu0 0
  %814 = vperm.xlu0 %813, %v586
  %v815 = vpop.permute.xlu0 %814
  %818 = vset.pattern.permute.xlu0 0
  %819 = vperm.xlu0 %818, %v596
  %v820 = vpop.permute.xlu0 %819
  %823 = vset.pattern.permute.xlu0 0
  %824 = vperm.xlu0 %823, %v606
  %v825 = vpop.permute.xlu0 %824
  %828 = vset.pattern.permute.xlu0 0
  %829 = vperm.xlu0 %828, %v616
  %v830 = vpop.permute.xlu0 %829
  %833 = vset.pattern.permute.xlu0 0
  %834 = vperm.xlu0 %833, %v626
  %v835 = vpop.permute.xlu0 %834
  %838 = vset.pattern.permute.xlu0 0
  %839 = vperm.xlu0 %838, %v636
  %v840 = vpop.permute.xlu0 %839
  %843 = vset.pattern.permute.xlu0 0
  %844 = vperm.xlu0 %843, %v646
  %v845 = vpop.permute.xlu0 %844
  %848 = vset.pattern.permute.xlu0 0
  %849 = vperm.xlu0 %848, %v656
  %v850 = vpop.permute.xlu0 %849
  %853 = vset.pattern.permute.xlu0 0
  %854 = vperm.xlu0 %853, %v666
  %v855 = vpop.permute.xlu0 %854
  %858 = vset.pattern.permute.xlu0 0
  %859 = vperm.xlu0 %858, %v676
  %v860 = vpop.permute.xlu0 %859
  %863 = vset.pattern.permute.xlu0 0
  %864 = vperm.xlu0 %863, %v686
  %v865 = vpop.permute.xlu0 %864
  %868 = vset.pattern.permute.xlu0 0
  %869 = vperm.xlu0 %868, %v696
  %v870 = vpop.permute.xlu0 %869
  %873 = vset.pattern.permute.xlu0 0
  %874 = vperm.xlu0 %873, %v706
  %v875 = vpop.permute.xlu0 %874
  %878 = vset.pattern.permute.xlu0 0
  %879 = vperm.xlu0 %878, %v716
  %v880 = vpop.permute.xlu0 %879
  %883 = vset.pattern.permute.xlu0 0
  %884 = vperm.xlu0 %883, %v726
  %v885 = vpop.permute.xlu0 %884
  %888 = vset.pattern.permute.xlu0 0
  %889 = vperm.xlu0 %888, %v736
  %v890 = vpop.permute.xlu0 %889
  %893 = vset.pattern.permute.xlu0 0
  %894 = vperm.xlu0 %893, %v746
  %v895 = vpop.permute.xlu0 %894
  %898 = vset.pattern.permute.xlu0 0
  %899 = vperm.xlu0 %898, %v756
  %v900 = vpop.permute.xlu0 %899
  %903 = vset.pattern.permute.xlu0 0
  %904 = vperm.xlu0 %903, %v766
  %v905 = vpop.permute.xlu0 %904
  %908 = vset.pattern.permute.xlu0 0
  %909 = vperm.xlu0 %908, %v776
  %v910 = vpop.permute.xlu0 %909
  %913 = vset.pattern.permute.xlu0 0
  %914 = vperm.xlu0 %913, %v786
  %v915 = vpop.permute.xlu0 %914
  %918 = vset.pattern.permute.xlu0 0
  %919 = vperm.xlu0 %918, %v796
  %v920 = vpop.permute.xlu0 %919
  %v922 = vmul.f32 %v272, %v800
  %v923 = vmul.f32 %v275, %v805
  %v924 = vmul.f32 %v278, %v810
  %v925 = vmul.f32 %v281, %v815
  %v926 = vmul.f32 %v284, %v820
  %v927 = vmul.f32 %v287, %v825
  %v928 = vmul.f32 %v290, %v830
  %v929 = vmul.f32 %v293, %v835
  %v930 = vmul.f32 %v296, %v840
  %v931 = vmul.f32 %v299, %v845
  %v932 = vmul.f32 %v302, %v850
  %v933 = vmul.f32 %v305, %v855
  %v934 = vmul.f32 %v308, %v860
  %v935 = vmul.f32 %v311, %v865
  %v936 = vmul.f32 %v314, %v870
  %v937 = vmul.f32 %v317, %v875
  %v938 = vmul.f32 %v320, %v880
  %v939 = vmul.f32 %v323, %v885
  %v940 = vmul.f32 %v326, %v890
  %v941 = vmul.f32 %v329, %v895
  %v942 = vmul.f32 %v332, %v900
  %v943 = vmul.f32 %v335, %v905
  %v944 = vmul.f32 %v338, %v910
  %v945 = vmul.f32 %v341, %v915
  %v946 = vmul.f32 %v344, %v920
  %947 = vst.msk [vmem:[%s2] sm:$0xff] %vm371, %v922
  %948 = vst.msk [vmem:[%s2 + $0x8] sm:$0xff] %vm371, %v923
  %949 = vst.msk [vmem:[%s2 + $0x10] sm:$0xff] %vm371, %v924
  %950 = vst.msk [vmem:[%s2 + $0x18] sm:$0xff] %vm371, %v925
  %951 = vst.msk [vmem:[%s2 + $0x20] sm:$0xff] %vm371, %v926
  %952 = vst.msk [vmem:[%s2 + $0x28] sm:$0xff] %vm371, %v927
  %953 = vst.msk [vmem:[%s2 + $0x30] sm:$0xff] %vm371, %v928
  %954 = vst.msk [vmem:[%s2 + $0x38] sm:$0xff] %vm371, %v929
  %955 = vst.msk [vmem:[%s2 + $0x40] sm:$0xff] %vm371, %v930
  %956 = vst.msk [vmem:[%s2 + $0x48] sm:$0xff] %vm371, %v931
  %957 = vst.msk [vmem:[%s2 + $0x50] sm:$0xff] %vm371, %v932
  %958 = vst.msk [vmem:[%s2 + $0x58] sm:$0xff] %vm371, %v933
  %959 = vst.msk [vmem:[%s2 + $0x60] sm:$0xff] %vm371, %v934
  %960 = vst.msk [vmem:[%s2 + $0x68] sm:$0xff] %vm371, %v935
  %961 = vst.msk [vmem:[%s2 + $0x70] sm:$0xff] %vm371, %v936
  %962 = vst.msk [vmem:[%s2 + $0x78] sm:$0xff] %vm371, %v937
  %963 = vst.msk [vmem:[%s2 + $0x80] sm:$0xff] %vm371, %v938
  %964 = vst.msk [vmem:[%s2 + $0x88] sm:$0xff] %vm371, %v939
  %965 = vst.msk [vmem:[%s2 + $0x90] sm:$0xff] %vm371, %v940
  %966 = vst.msk [vmem:[%s2 + $0x98] sm:$0xff] %vm371, %v941
  %967 = vst.msk [vmem:[%s2 + $0xa0] sm:$0xff] %vm371, %v942
  %968 = vst.msk [vmem:[%s2 + $0xa8] sm:$0xff] %vm371, %v943
  %969 = vst.msk [vmem:[%s2 + $0xb0] sm:$0xff] %vm371, %v944
  %970 = vst.msk [vmem:[%s2 + $0xb8] sm:$0xff] %vm371, %v945
  %971 = vst.msk [vmem:[%s2 + $0xc0] sm:$0xff] %vm371, %v946
  // Predicated region
  $region10: #{_lambda_.4} parent=0 // pred_check
    _
  $region11: #{_lambda_.4} parent=0 // pred_check_branch
    %973 = sbr.rel (0) target = $region13
  $region12: #{_lambda_.4} parent=0 // pred_region
    _
  $region13: #{_lambda_.4} parent=0 // pred_fallthru
    _
  // Predicated region
  $region14: #{_lambda_.4} parent=0 // pred_check
    _
  $region15: #{_lambda_.4} parent=0 // pred_check_branch
    %975 = sbr.rel (0) target = $region17
  $region16: #{_lambda_.4} parent=0 // pred_region
    _
  $region17: #{_lambda_.4} parent=0 // pred_fallthru
    _

// kernel: _lambda_.5
$region0: #{_lambda_.5}
  #allocation0 [shape = 'u32[]', space=smem, size = 0x4, offset = 0x4, fixed_abs, tag = 'smem constant byte address 0x4 - core index']
  #allocation1 [shape = 'u32[72,128]{1,0:T(1,128)}', space=vmem, size = 0x9000, scoped, tag = 'internal scratch']
  %s0 = inlined_call_operand.vmem [shape: f32[3], index: 0, kind: input, shape index: {}]
  %s1 = inlined_call_operand.vmem [shape: f32[200,32], index: 1, kind: input, shape index: {}]
  %s2 = inlined_call_operand.vmem [shape: f32[32,32], index: 2, kind: input, shape index: {}]
  %s3 = inlined_call_operand.vmem [shape: f32[1,32], index: 3, kind: input, shape index: {}]
  %s4 = inlined_call_operand.vmem [shape: f32[32,200], index: 4, kind: input, shape index: {}]
  %s5 = inlined_call_operand.vmem [shape: f32[200,200], index: 5, kind: input, shape index: {}]
  %s6 = inlined_call_operand.vmem [shape: f32[200,8], index: 6, kind: input, shape index: {}]
  %s7 = inlined_call_operand.vmem [shape: f32[200,8], index: 7, kind: output, shape index: {}]
  %s8 = sld [smem:[#allocation0]]
  $region42: #{_lambda_.5} parent=0
    _
  %s10 = ssub.s32 1, %s8
  %s11 = scalar_select 0, %s10, %s8
  $region1: #{_lambda_.5} parent=0
    #allocation2 [shape = 'u8[512]{0}', space=smem, size = 0x200, scoped, tag = 'input window, operand 0, single buffered']
    #allocation3 [shape = 's32[1]{0}', space=sflag, size = 0x4, scoped, tag = 'scoped memory for _lambda_.5']
    %12 = vsyncpa [#allocation3], 0
    // Predicated region
    $region2: #{_lambda_.5} parent=1 // pred_check
      _
    $region3: #{_lambda_.5} parent=1 // pred_check_branch
      %14 = sbr.rel (0) target = $region5
    $region4: #{_lambda_.5} parent=1 // pred_region
      %16 = vsyncadd [#allocation3], 0
      %s18 = sshll.u32 %s0, 4
      %s19 = int_to_ptr.vmem [resolvable:$true] %s18
      %21 = dma.vmem_to_smem %s19, 16, [#allocation2], [#allocation3]
    $region5: #{_lambda_.5} parent=1 // pred_fallthru
      _
    // Predicated region
    $region6: #{_lambda_.5} parent=1 // pred_check
      _
    $region7: #{_lambda_.5} parent=1 // pred_check_branch
      %23 = sbr.rel (0) target = $region9
    $region8: #{_lambda_.5} parent=1 // pred_region
      _
    $region9: #{_lambda_.5} parent=1 // pred_fallthru
      _
    // Predicated region
    $region10: #{_lambda_.5} parent=1 // pred_check
      _
    $region11: #{_lambda_.5} parent=1 // pred_check_branch
      %25 = sbr.rel (0) target = $region13
    $region12: #{_lambda_.5} parent=1 // pred_region
      _
    $region13: #{_lambda_.5} parent=1 // pred_fallthru
      _
    // Predicated region
    $region14: #{_lambda_.5} parent=1 // pred_check
      _
    $region15: #{_lambda_.5} parent=1 // pred_check_branch
      %27 = sbr.rel (0) target = $region17
    $region16: #{_lambda_.5} parent=1 // pred_region
      _
    $region17: #{_lambda_.5} parent=1 // pred_fallthru
      _
    // Predicated region
    $region18: #{_lambda_.5} parent=1 // pred_check
      _
    $region19: #{_lambda_.5} parent=1 // pred_check_branch
      %29 = sbr.rel (0) target = $region21
    $region20: #{_lambda_.5} parent=1 // pred_region
      _
    $region21: #{_lambda_.5} parent=1 // pred_fallthru
      _
    // Predicated region
    $region22: #{_lambda_.5} parent=1 // pred_check
      _
    $region23: #{_lambda_.5} parent=1 // pred_check_branch
      %31 = sbr.rel (0) target = $region25
    $region24: #{_lambda_.5} parent=1 // pred_region
      _
    $region25: #{_lambda_.5} parent=1 // pred_fallthru
      _
    // Predicated region
    $region26: #{_lambda_.5} parent=1 // pred_check
      _
    $region27: #{_lambda_.5} parent=1 // pred_check_branch
      %33 = sbr.rel (0) target = $region29
    $region28: #{_lambda_.5} parent=1 // pred_region
      _
    $region29: #{_lambda_.5} parent=1 // pred_fallthru
      _
    // Predicated region
    $region30: #{_lambda_.5} parent=1 // pred_check
      _
    $region31: #{_lambda_.5} parent=1 // pred_check_branch
      %35 = sbr.rel (0) target = $region33
    $region32: #{_lambda_.5} parent=1 // pred_region
      %37 = dma.done [#allocation3], 16
    $region33: #{_lambda_.5} parent=1 // pred_fallthru
      _
    %38 = sfence
    %v39 = vld [vmem:[%s1] sm:$0xff]
    %v40 = vld [vmem:[%s1 + $0x8] sm:$0xff]
    %v41 = vld [vmem:[%s1 + $0x10] sm:$0xff]
    %v42 = vld [vmem:[%s1 + $0x18] sm:$0xff]
    %v43 = vld [vmem:[%s1 + $0x20] sm:$0xff]
    %v44 = vld [vmem:[%s1 + $0x28] sm:$0xff]
    %v45 = vld [vmem:[%s1 + $0x30] sm:$0xff]
    %v46 = vld [vmem:[%s1 + $0x38] sm:$0xff]
    %v47 = vld [vmem:[%s1 + $0x40] sm:$0xff]
    %v48 = vld [vmem:[%s1 + $0x48] sm:$0xff]
    %v49 = vld [vmem:[%s1 + $0x50] sm:$0xff]
    %v50 = vld [vmem:[%s1 + $0x58] sm:$0xff]
    %v51 = vld [vmem:[%s1 + $0x60] sm:$0xff]
    %v52 = vld [vmem:[%s1 + $0x68] sm:$0xff]
    %v53 = vld [vmem:[%s1 + $0x70] sm:$0xff]
    %v54 = vld [vmem:[%s1 + $0x78] sm:$0xff]
    %v55 = vld [vmem:[%s1 + $0x80] sm:$0xff]
    %v56 = vld [vmem:[%s1 + $0x88] sm:$0xff]
    %v57 = vld [vmem:[%s1 + $0x90] sm:$0xff]
    %v58 = vld [vmem:[%s1 + $0x98] sm:$0xff]
    %v59 = vld [vmem:[%s1 + $0xa0] sm:$0xff]
    %v60 = vld [vmem:[%s1 + $0xa8] sm:$0xff]
    %v61 = vld [vmem:[%s1 + $0xb0] sm:$0xff]
    %v62 = vld [vmem:[%s1 + $0xb8] sm:$0xff]
    %v63 = vld [vmem:[%s1 + $0xc0] sm:$0xff]
    %v64 = vld [vmem:[%s2] sm:$0xff]
    %v65 = vld [vmem:[%s2 + $0x8] sm:$0xff]
    %v66 = vld [vmem:[%s2 + $0x10] sm:$0xff]
    %v67 = vld [vmem:[%s2 + $0x18] sm:$0xff]
    %v68 = vld [vmem:[%s3] sm:$0x1]
    %v70 = vperm.slane %v68, 0
    %vm72 = vcmask 261120
    %v74 = vsel %vm72, %v39, 0
    %v77 = vsel %vm72, %v40, 0
    %v80 = vsel %vm72, %v41, 0
    %v83 = vsel %vm72, %v42, 0
    %v86 = vsel %vm72, %v43, 0
    %v89 = vsel %vm72, %v44, 0
    %v92 = vsel %vm72, %v45, 0
    %v95 = vsel %vm72, %v46, 0
    %v98 = vsel %vm72, %v47, 0
    %v101 = vsel %vm72, %v48, 0
    %v104 = vsel %vm72, %v49, 0
    %v107 = vsel %vm72, %v50, 0
    %v110 = vsel %vm72, %v51, 0
    %v113 = vsel %vm72, %v52, 0
    %v116 = vsel %vm72, %v53, 0
    %v119 = vsel %vm72, %v54, 0
    %v122 = vsel %vm72, %v55, 0
    %v125 = vsel %vm72, %v56, 0
    %v128 = vsel %vm72, %v57, 0
    %v131 = vsel %vm72, %v58, 0
    %v134 = vsel %vm72, %v59, 0
    %v137 = vsel %vm72, %v60, 0
    %v140 = vsel %vm72, %v61, 0
    %v143 = vsel %vm72, %v62, 0
    %v146 = vsel %vm72, %v63, 0
    %148 = vmatpush.msra.mxu0 0.0
    %149 = vmatpush.msra.mxu0 0.0
    %150 = vmatpush.msra.mxu0 0.0
    %151 = vmatpush.msra.mxu0 0.0
    %152 = vmatpush.msra.mxu0 0.0
    %153 = vmatpush.msra.mxu0 0.0
    %154 = vmatpush.msra.mxu0 0.0
    %155 = vmatpush.msra.mxu0 0.0
    %156 = vmatpush.msra.mxu0 0.0
    %157 = vmatpush.msra.mxu0 0.0
    %158 = vmatpush.msra.mxu0 0.0
    %159 = vmatpush.msra.mxu0 0.0
    %160 = vmatpush.msra.mxu0 %v67
    %161 = vmatpush.msra.mxu0 %v66
    %162 = vmatpush.msra.mxu0 %v65
    %163 = vmatpush.msra.mxu0 %v64
    %164 = vmatmul.f32.gmra.mxu0 %v74
    %v165 = vpop.f32.mrf.mxu0
    %v166 = vadd.f32 %v70, %v165
    %167 = vmatmul.f32.gmra.mxu0 %v77
    %v168 = vpop.f32.mrf.mxu0
    %v169 = vadd.f32 %v70, %v168
    %170 = vmatmul.f32.gmra.mxu0 %v80
    %v171 = vpop.f32.mrf.mxu0
    %v172 = vadd.f32 %v70, %v171
    %173 = vmatmul.f32.gmra.mxu0 %v83
    %v174 = vpop.f32.mrf.mxu0
    %v175 = vadd.f32 %v70, %v174
    %176 = vmatmul.f32.gmra.mxu0 %v86
    %v177 = vpop.f32.mrf.mxu0
    %v178 = vadd.f32 %v70, %v177
    %179 = vmatmul.f32.gmra.mxu0 %v89
    %v180 = vpop.f32.mrf.mxu0
    %v181 = vadd.f32 %v70, %v180
    %182 = vmatmul.f32.gmra.mxu0 %v92
    %v183 = vpop.f32.mrf.mxu0
    %v184 = vadd.f32 %v70, %v183
    %185 = vmatmul.f32.gmra.mxu0 %v95
    %v186 = vpop.f32.mrf.mxu0
    %v187 = vadd.f32 %v70, %v186
    %188 = vmatmul.f32.gmra.mxu0 %v98
    %v189 = vpop.f32.mrf.mxu0
    %v190 = vadd.f32 %v70, %v189
    %191 = vmatmul.f32.gmra.mxu0 %v101
    %v192 = vpop.f32.mrf.mxu0
    %v193 = vadd.f32 %v70, %v192
    %194 = vmatmul.f32.gmra.mxu0 %v104
    %v195 = vpop.f32.mrf.mxu0
    %v196 = vadd.f32 %v70, %v195
    %197 = vmatmul.f32.gmra.mxu0 %v107
    %v198 = vpop.f32.mrf.mxu0
    %v199 = vadd.f32 %v70, %v198
    %200 = vmatmul.f32.gmra.mxu0 %v110
    %v201 = vpop.f32.mrf.mxu0
    %v202 = vadd.f32 %v70, %v201
    %203 = vmatmul.f32.gmra.mxu0 %v113
    %v204 = vpop.f32.mrf.mxu0
    %v205 = vadd.f32 %v70, %v204
    %206 = vmatmul.f32.gmra.mxu0 %v116
    %v207 = vpop.f32.mrf.mxu0
    %v208 = vadd.f32 %v70, %v207
    %209 = vmatmul.f32.gmra.mxu0 %v119
    %v210 = vpop.f32.mrf.mxu0
    %v211 = vadd.f32 %v70, %v210
    %212 = vmatmul.f32.gmra.mxu0 %v122
    %v213 = vpop.f32.mrf.mxu0
    %v214 = vadd.f32 %v70, %v213
    %215 = vmatmul.f32.gmra.mxu0 %v125
    %v216 = vpop.f32.mrf.mxu0
    %v217 = vadd.f32 %v70, %v216
    %218 = vmatmul.f32.gmra.mxu0 %v128
    %v219 = vpop.f32.mrf.mxu0
    %v220 = vadd.f32 %v70, %v219
    %221 = vmatmul.f32.gmra.mxu0 %v131
    %v222 = vpop.f32.mrf.mxu0
    %v223 = vadd.f32 %v70, %v222
    %224 = vmatmul.f32.gmra.mxu0 %v134
    %v225 = vpop.f32.mrf.mxu0
    %v226 = vadd.f32 %v70, %v225
    %227 = vmatmul.f32.gmra.mxu0 %v137
    %v228 = vpop.f32.mrf.mxu0
    %v229 = vadd.f32 %v70, %v228
    %230 = vmatmul.f32.gmra.mxu0 %v140
    %v231 = vpop.f32.mrf.mxu0
    %v232 = vadd.f32 %v70, %v231
    %233 = vmatmul.f32.gmra.mxu0 %v143
    %v234 = vpop.f32.mrf.mxu0
    %v235 = vadd.f32 %v70, %v234
    %236 = vmatmul.f32.gmra.mxu0 %v146
    %v237 = vpop.f32.mrf.mxu0
    %v238 = vadd.f32 %v70, %v237
    %239 = vdwg.mxu0
    %s240 = sld [smem:[#allocation2]]
    %v241 = vxor.u32 %v166, 2147483648
    %v242 = vxor.u32 %v169, 2147483648
    %v243 = vxor.u32 %v172, 2147483648
    %v244 = vxor.u32 %v175, 2147483648
    %v245 = vxor.u32 %v178, 2147483648
    %v246 = vxor.u32 %v181, 2147483648
    %v247 = vxor.u32 %v184, 2147483648
    %v248 = vxor.u32 %v187, 2147483648
    %v249 = vxor.u32 %v190, 2147483648
    %v250 = vxor.u32 %v193, 2147483648
    %v251 = vxor.u32 %v196, 2147483648
    %v252 = vxor.u32 %v199, 2147483648
    %v253 = vxor.u32 %v202, 2147483648
    %v254 = vxor.u32 %v205, 2147483648
    %v255 = vxor.u32 %v208, 2147483648
    %v256 = vxor.u32 %v211, 2147483648
    %v257 = vxor.u32 %v214, 2147483648
    %v258 = vxor.u32 %v217, 2147483648
    %v259 = vxor.u32 %v220, 2147483648
    %v260 = vxor.u32 %v223, 2147483648
    %v261 = vxor.u32 %v226, 2147483648
    %v262 = vxor.u32 %v229, 2147483648
    %v263 = vxor.u32 %v232, 2147483648
    %v264 = vxor.u32 %v235, 2147483648
    %v265 = vxor.u32 %v238, 2147483648
    %v266 = vmul.f32 %v241, 1.442695
    %v267 = vpow.pop %v266
    %v268 = vmul.f32 %v242, 1.442695
    %v269 = vpow.pop %v268
    %v270 = vmul.f32 %v243, 1.442695
    %v271 = vpow.pop %v270
    %v272 = vmul.f32 %v244, 1.442695
    %v273 = vpow.pop %v272
    %v274 = vmul.f32 %v245, 1.442695
    %v275 = vpow.pop %v274
    %v276 = vmul.f32 %v246, 1.442695
    %v277 = vpow.pop %v276
    %v278 = vmul.f32 %v247, 1.442695
    %v279 = vpow.pop %v278
    %v280 = vmul.f32 %v248, 1.442695
    %v281 = vpow.pop %v280
    %v282 = vmul.f32 %v249, 1.442695
    %v283 = vpow.pop %v282
    %v284 = vmul.f32 %v250, 1.442695
    %v285 = vpow.pop %v284
    %v286 = vmul.f32 %v251, 1.442695
    %v287 = vpow.pop %v286
    %v288 = vmul.f32 %v252, 1.442695
    %v289 = vpow.pop %v288
    %v290 = vmul.f32 %v253, 1.442695
    %v291 = vpow.pop %v290
    %v292 = vmul.f32 %v254, 1.442695
    %v293 = vpow.pop %v292
    %v294 = vmul.f32 %v255, 1.442695
    %v295 = vpow.pop %v294
    %v296 = vmul.f32 %v256, 1.442695
    %v297 = vpow.pop %v296
    %v298 = vmul.f32 %v257, 1.442695
    %v299 = vpow.pop %v298
    %v300 = vmul.f32 %v258, 1.442695
    %v301 = vpow.pop %v300
    %v302 = vmul.f32 %v259, 1.442695
    %v303 = vpow.pop %v302
    %v304 = vmul.f32 %v260, 1.442695
    %v305 = vpow.pop %v304
    %v306 = vmul.f32 %v261, 1.442695
    %v307 = vpow.pop %v306
    %v308 = vmul.f32 %v262, 1.442695
    %v309 = vpow.pop %v308
    %v310 = vmul.f32 %v263, 1.442695
    %v311 = vpow.pop %v310
    %v312 = vmul.f32 %v264, 1.442695
    %v313 = vpow.pop %v312
    %v314 = vmul.f32 %v265, 1.442695
    %v315 = vpow.pop %v314
    %v316 = vadd.f32 %v267, 1.0
    %v317 = vadd.f32 %v269, 1.0
    %v318 = vadd.f32 %v271, 1.0
    %v319 = vadd.f32 %v273, 1.0
    %v320 = vadd.f32 %v275, 1.0
    %v321 = vadd.f32 %v277, 1.0
    %v322 = vadd.f32 %v279, 1.0
    %v323 = vadd.f32 %v281, 1.0
    %v324 = vadd.f32 %v283, 1.0
    %v325 = vadd.f32 %v285, 1.0
    %v326 = vadd.f32 %v287, 1.0
    %v327 = vadd.f32 %v289, 1.0
    %v328 = vadd.f32 %v291, 1.0
    %v329 = vadd.f32 %v293, 1.0
    %v330 = vadd.f32 %v295, 1.0
    %v331 = vadd.f32 %v297, 1.0
    %v332 = vadd.f32 %v299, 1.0
    %v333 = vadd.f32 %v301, 1.0
    %v334 = vadd.f32 %v303, 1.0
    %v335 = vadd.f32 %v305, 1.0
    %v336 = vadd.f32 %v307, 1.0
    %v337 = vadd.f32 %v309, 1.0
    %v338 = vadd.f32 %v311, 1.0
    %v339 = vadd.f32 %v313, 1.0
    %v340 = vadd.f32 %v315, 1.0
    %v341 = vrcp.pop %v316
    %v342 = vmul.f32 %v316, %v341
    %v343 = vsub.f32 1.0, %v342
    %v344 = vmul.f32 %v341, %v343
    %v345 = vadd.f32 %v341, %v344
    %vm346 = vweird.f32 %v316
    %vm347 = vweird.f32 %v341
    %vm348 = vmor %vm346, %vm347
    %v349 = vsel %vm348, %v341, %v345
    %v350 = vand.u32 2147483647, %v316
    %vm351 = vcmp.eq.f32.partialorder %v350, 8.507059e+37
    %v352 = vand.u32 %v316, 2147483648
    %v353 = vor.u32 1.1754944e-38, %v352
    %v354 = vsel %vm351, %v353, %v349
    %v355 = vmul.f32 1.0, %v354
    %v356 = vrcp.pop %v317
    %v357 = vmul.f32 %v317, %v356
    %v358 = vsub.f32 1.0, %v357
    %v359 = vmul.f32 %v356, %v358
    %v360 = vadd.f32 %v356, %v359
    %vm361 = vweird.f32 %v317
    %vm362 = vweird.f32 %v356
    %vm363 = vmor %vm361, %vm362
    %v364 = vsel %vm363, %v356, %v360
    %v365 = vand.u32 2147483647, %v317
    %vm366 = vcmp.eq.f32.partialorder %v365, 8.507059e+37
    %v367 = vand.u32 %v317, 2147483648
    %v368 = vor.u32 1.1754944e-38, %v367
    %v369 = vsel %vm366, %v368, %v364
    %v370 = vmul.f32 1.0, %v369
    %v371 = vrcp.pop %v318
    %v372 = vmul.f32 %v318, %v371
    %v373 = vsub.f32 1.0, %v372
    %v374 = vmul.f32 %v371, %v373
    %v375 = vadd.f32 %v371, %v374
    %vm376 = vweird.f32 %v318
    %vm377 = vweird.f32 %v371
    %vm378 = vmor %vm376, %vm377
    %v379 = vsel %vm378, %v371, %v375
    %v380 = vand.u32 2147483647, %v318
    %vm381 = vcmp.eq.f32.partialorder %v380, 8.507059e+37
    %v382 = vand.u32 %v318, 2147483648
    %v383 = vor.u32 1.1754944e-38, %v382
    %v384 = vsel %vm381, %v383, %v379
    %v385 = vmul.f32 1.0, %v384
    %v386 = vrcp.pop %v319
    %v387 = vmul.f32 %v319, %v386
    %v388 = vsub.f32 1.0, %v387
    %v389 = vmul.f32 %v386, %v388
    %v390 = vadd.f32 %v386, %v389
    %vm391 = vweird.f32 %v319
    %vm392 = vweird.f32 %v386
    %vm393 = vmor %vm391, %vm392
    %v394 = vsel %vm393, %v386, %v390
    %v395 = vand.u32 2147483647, %v319
    %vm396 = vcmp.eq.f32.partialorder %v395, 8.507059e+37
    %v397 = vand.u32 %v319, 2147483648
    %v398 = vor.u32 1.1754944e-38, %v397
    %v399 = vsel %vm396, %v398, %v394
    %v400 = vmul.f32 1.0, %v399
    %v401 = vrcp.pop %v320
    %v402 = vmul.f32 %v320, %v401
    %v403 = vsub.f32 1.0, %v402
    %v404 = vmul.f32 %v401, %v403
    %v405 = vadd.f32 %v401, %v404
    %vm406 = vweird.f32 %v320
    %vm407 = vweird.f32 %v401
    %vm408 = vmor %vm406, %vm407
    %v409 = vsel %vm408, %v401, %v405
    %v410 = vand.u32 2147483647, %v320
    %vm411 = vcmp.eq.f32.partialorder %v410, 8.507059e+37
    %v412 = vand.u32 %v320, 2147483648
    %v413 = vor.u32 1.1754944e-38, %v412
    %v414 = vsel %vm411, %v413, %v409
    %v415 = vmul.f32 1.0, %v414
    %v416 = vrcp.pop %v321
    %v417 = vmul.f32 %v321, %v416
    %v418 = vsub.f32 1.0, %v417
    %v419 = vmul.f32 %v416, %v418
    %v420 = vadd.f32 %v416, %v419
    %vm421 = vweird.f32 %v321
    %vm422 = vweird.f32 %v416
    %vm423 = vmor %vm421, %vm422
    %v424 = vsel %vm423, %v416, %v420
    %v425 = vand.u32 2147483647, %v321
    %vm426 = vcmp.eq.f32.partialorder %v425, 8.507059e+37
    %v427 = vand.u32 %v321, 2147483648
    %v428 = vor.u32 1.1754944e-38, %v427
    %v429 = vsel %vm426, %v428, %v424
    %v430 = vmul.f32 1.0, %v429
    %v431 = vrcp.pop %v322
    %v432 = vmul.f32 %v322, %v431
    %v433 = vsub.f32 1.0, %v432
    %v434 = vmul.f32 %v431, %v433
    %v435 = vadd.f32 %v431, %v434
    %vm436 = vweird.f32 %v322
    %vm437 = vweird.f32 %v431
    %vm438 = vmor %vm436, %vm437
    %v439 = vsel %vm438, %v431, %v435
    %v440 = vand.u32 2147483647, %v322
    %vm441 = vcmp.eq.f32.partialorder %v440, 8.507059e+37
    %v442 = vand.u32 %v322, 2147483648
    %v443 = vor.u32 1.1754944e-38, %v442
    %v444 = vsel %vm441, %v443, %v439
    %v445 = vmul.f32 1.0, %v444
    %v446 = vrcp.pop %v323
    %v447 = vmul.f32 %v323, %v446
    %v448 = vsub.f32 1.0, %v447
    %v449 = vmul.f32 %v446, %v448
    %v450 = vadd.f32 %v446, %v449
    %vm451 = vweird.f32 %v323
    %vm452 = vweird.f32 %v446
    %vm453 = vmor %vm451, %vm452
    %v454 = vsel %vm453, %v446, %v450
    %v455 = vand.u32 2147483647, %v323
    %vm456 = vcmp.eq.f32.partialorder %v455, 8.507059e+37
    %v457 = vand.u32 %v323, 2147483648
    %v458 = vor.u32 1.1754944e-38, %v457
    %v459 = vsel %vm456, %v458, %v454
    %v460 = vmul.f32 1.0, %v459
    %v461 = vrcp.pop %v324
    %v462 = vmul.f32 %v324, %v461
    %v463 = vsub.f32 1.0, %v462
    %v464 = vmul.f32 %v461, %v463
    %v465 = vadd.f32 %v461, %v464
    %vm466 = vweird.f32 %v324
    %vm467 = vweird.f32 %v461
    %vm468 = vmor %vm466, %vm467
    %v469 = vsel %vm468, %v461, %v465
    %v470 = vand.u32 2147483647, %v324
    %vm471 = vcmp.eq.f32.partialorder %v470, 8.507059e+37
    %v472 = vand.u32 %v324, 2147483648
    %v473 = vor.u32 1.1754944e-38, %v472
    %v474 = vsel %vm471, %v473, %v469
    %v475 = vmul.f32 1.0, %v474
    %v476 = vrcp.pop %v325
    %v477 = vmul.f32 %v325, %v476
    %v478 = vsub.f32 1.0, %v477
    %v479 = vmul.f32 %v476, %v478
    %v480 = vadd.f32 %v476, %v479
    %vm481 = vweird.f32 %v325
    %vm482 = vweird.f32 %v476
    %vm483 = vmor %vm481, %vm482
    %v484 = vsel %vm483, %v476, %v480
    %v485 = vand.u32 2147483647, %v325
    %vm486 = vcmp.eq.f32.partialorder %v485, 8.507059e+37
    %v487 = vand.u32 %v325, 2147483648
    %v488 = vor.u32 1.1754944e-38, %v487
    %v489 = vsel %vm486, %v488, %v484
    %v490 = vmul.f32 1.0, %v489
    %v491 = vrcp.pop %v326
    %v492 = vmul.f32 %v326, %v491
    %v493 = vsub.f32 1.0, %v492
    %v494 = vmul.f32 %v491, %v493
    %v495 = vadd.f32 %v491, %v494
    %vm496 = vweird.f32 %v326
    %vm497 = vweird.f32 %v491
    %vm498 = vmor %vm496, %vm497
    %v499 = vsel %vm498, %v491, %v495
    %v500 = vand.u32 2147483647, %v326
    %vm501 = vcmp.eq.f32.partialorder %v500, 8.507059e+37
    %v502 = vand.u32 %v326, 2147483648
    %v503 = vor.u32 1.1754944e-38, %v502
    %v504 = vsel %vm501, %v503, %v499
    %v505 = vmul.f32 1.0, %v504
    %v506 = vrcp.pop %v327
    %v507 = vmul.f32 %v327, %v506
    %v508 = vsub.f32 1.0, %v507
    %v509 = vmul.f32 %v506, %v508
    %v510 = vadd.f32 %v506, %v509
    %vm511 = vweird.f32 %v327
    %vm512 = vweird.f32 %v506
    %vm513 = vmor %vm511, %vm512
    %v514 = vsel %vm513, %v506, %v510
    %v515 = vand.u32 2147483647, %v327
    %vm516 = vcmp.eq.f32.partialorder %v515, 8.507059e+37
    %v517 = vand.u32 %v327, 2147483648
    %v518 = vor.u32 1.1754944e-38, %v517
    %v519 = vsel %vm516, %v518, %v514
    %v520 = vmul.f32 1.0, %v519
    %v521 = vrcp.pop %v328
    %v522 = vmul.f32 %v328, %v521
    %v523 = vsub.f32 1.0, %v522
    %v524 = vmul.f32 %v521, %v523
    %v525 = vadd.f32 %v521, %v524
    %vm526 = vweird.f32 %v328
    %vm527 = vweird.f32 %v521
    %vm528 = vmor %vm526, %vm527
    %v529 = vsel %vm528, %v521, %v525
    %v530 = vand.u32 2147483647, %v328
    %vm531 = vcmp.eq.f32.partialorder %v530, 8.507059e+37
    %v532 = vand.u32 %v328, 2147483648
    %v533 = vor.u32 1.1754944e-38, %v532
    %v534 = vsel %vm531, %v533, %v529
    %v535 = vmul.f32 1.0, %v534
    %v536 = vrcp.pop %v329
    %v537 = vmul.f32 %v329, %v536
    %v538 = vsub.f32 1.0, %v537
    %v539 = vmul.f32 %v536, %v538
    %v540 = vadd.f32 %v536, %v539
    %vm541 = vweird.f32 %v329
    %vm542 = vweird.f32 %v536
    %vm543 = vmor %vm541, %vm542
    %v544 = vsel %vm543, %v536, %v540
    %v545 = vand.u32 2147483647, %v329
    %vm546 = vcmp.eq.f32.partialorder %v545, 8.507059e+37
    %v547 = vand.u32 %v329, 2147483648
    %v548 = vor.u32 1.1754944e-38, %v547
    %v549 = vsel %vm546, %v548, %v544
    %v550 = vmul.f32 1.0, %v549
    %v551 = vrcp.pop %v330
    %v552 = vmul.f32 %v330, %v551
    %v553 = vsub.f32 1.0, %v552
    %v554 = vmul.f32 %v551, %v553
    %v555 = vadd.f32 %v551, %v554
    %vm556 = vweird.f32 %v330
    %vm557 = vweird.f32 %v551
    %vm558 = vmor %vm556, %vm557
    %v559 = vsel %vm558, %v551, %v555
    %v560 = vand.u32 2147483647, %v330
    %vm561 = vcmp.eq.f32.partialorder %v560, 8.507059e+37
    %v562 = vand.u32 %v330, 2147483648
    %v563 = vor.u32 1.1754944e-38, %v562
    %v564 = vsel %vm561, %v563, %v559
    %v565 = vmul.f32 1.0, %v564
    %v566 = vrcp.pop %v331
    %v567 = vmul.f32 %v331, %v566
    %v568 = vsub.f32 1.0, %v567
    %v569 = vmul.f32 %v566, %v568
    %v570 = vadd.f32 %v566, %v569
    %vm571 = vweird.f32 %v331
    %vm572 = vweird.f32 %v566
    %vm573 = vmor %vm571, %vm572
    %v574 = vsel %vm573, %v566, %v570
    %v575 = vand.u32 2147483647, %v331
    %vm576 = vcmp.eq.f32.partialorder %v575, 8.507059e+37
    %v577 = vand.u32 %v331, 2147483648
    %v578 = vor.u32 1.1754944e-38, %v577
    %v579 = vsel %vm576, %v578, %v574
    %v580 = vmul.f32 1.0, %v579
    %v581 = vrcp.pop %v332
    %v582 = vmul.f32 %v332, %v581
    %v583 = vsub.f32 1.0, %v582
    %v584 = vmul.f32 %v581, %v583
    %v585 = vadd.f32 %v581, %v584
    %vm586 = vweird.f32 %v332
    %vm587 = vweird.f32 %v581
    %vm588 = vmor %vm586, %vm587
    %v589 = vsel %vm588, %v581, %v585
    %v590 = vand.u32 2147483647, %v332
    %vm591 = vcmp.eq.f32.partialorder %v590, 8.507059e+37
    %v592 = vand.u32 %v332, 2147483648
    %v593 = vor.u32 1.1754944e-38, %v592
    %v594 = vsel %vm591, %v593, %v589
    %v595 = vmul.f32 1.0, %v594
    %v596 = vrcp.pop %v333
    %v597 = vmul.f32 %v333, %v596
    %v598 = vsub.f32 1.0, %v597
    %v599 = vmul.f32 %v596, %v598
    %v600 = vadd.f32 %v596, %v599
    %vm601 = vweird.f32 %v333
    %vm602 = vweird.f32 %v596
    %vm603 = vmor %vm601, %vm602
    %v604 = vsel %vm603, %v596, %v600
    %v605 = vand.u32 2147483647, %v333
    %vm606 = vcmp.eq.f32.partialorder %v605, 8.507059e+37
    %v607 = vand.u32 %v333, 2147483648
    %v608 = vor.u32 1.1754944e-38, %v607
    %v609 = vsel %vm606, %v608, %v604
    %v610 = vmul.f32 1.0, %v609
    %v611 = vrcp.pop %v334
    %v612 = vmul.f32 %v334, %v611
    %v613 = vsub.f32 1.0, %v612
    %v614 = vmul.f32 %v611, %v613
    %v615 = vadd.f32 %v611, %v614
    %vm616 = vweird.f32 %v334
    %vm617 = vweird.f32 %v611
    %vm618 = vmor %vm616, %vm617
    %v619 = vsel %vm618, %v611, %v615
    %v620 = vand.u32 2147483647, %v334
    %vm621 = vcmp.eq.f32.partialorder %v620, 8.507059e+37
    %v622 = vand.u32 %v334, 2147483648
    %v623 = vor.u32 1.1754944e-38, %v622
    %v624 = vsel %vm621, %v623, %v619
    %v625 = vmul.f32 1.0, %v624
    %v626 = vrcp.pop %v335
    %v627 = vmul.f32 %v335, %v626
    %v628 = vsub.f32 1.0, %v627
    %v629 = vmul.f32 %v626, %v628
    %v630 = vadd.f32 %v626, %v629
    %vm631 = vweird.f32 %v335
    %vm632 = vweird.f32 %v626
    %vm633 = vmor %vm631, %vm632
    %v634 = vsel %vm633, %v626, %v630
    %v635 = vand.u32 2147483647, %v335
    %vm636 = vcmp.eq.f32.partialorder %v635, 8.507059e+37
    %v637 = vand.u32 %v335, 2147483648
    %v638 = vor.u32 1.1754944e-38, %v637
    %v639 = vsel %vm636, %v638, %v634
    %v640 = vmul.f32 1.0, %v639
    %v641 = vrcp.pop %v336
    %v642 = vmul.f32 %v336, %v641
    %v643 = vsub.f32 1.0, %v642
    %v644 = vmul.f32 %v641, %v643
    %v645 = vadd.f32 %v641, %v644
    %vm646 = vweird.f32 %v336
    %vm647 = vweird.f32 %v641
    %vm648 = vmor %vm646, %vm647
    %v649 = vsel %vm648, %v641, %v645
    %v650 = vand.u32 2147483647, %v336
    %vm651 = vcmp.eq.f32.partialorder %v650, 8.507059e+37
    %v652 = vand.u32 %v336, 2147483648
    %v653 = vor.u32 1.1754944e-38, %v652
    %v654 = vsel %vm651, %v653, %v649
    %v655 = vmul.f32 1.0, %v654
    %v656 = vrcp.pop %v337
    %v657 = vmul.f32 %v337, %v656
    %v658 = vsub.f32 1.0, %v657
    %v659 = vmul.f32 %v656, %v658
    %v660 = vadd.f32 %v656, %v659
    %vm661 = vweird.f32 %v337
    %vm662 = vweird.f32 %v656
    %vm663 = vmor %vm661, %vm662
    %v664 = vsel %vm663, %v656, %v660
    %v665 = vand.u32 2147483647, %v337
    %vm666 = vcmp.eq.f32.partialorder %v665, 8.507059e+37
    %v667 = vand.u32 %v337, 2147483648
    %v668 = vor.u32 1.1754944e-38, %v667
    %v669 = vsel %vm666, %v668, %v664
    %v670 = vmul.f32 1.0, %v669
    %v671 = vrcp.pop %v338
    %v672 = vmul.f32 %v338, %v671
    %v673 = vsub.f32 1.0, %v672
    %v674 = vmul.f32 %v671, %v673
    %v675 = vadd.f32 %v671, %v674
    %vm676 = vweird.f32 %v338
    %vm677 = vweird.f32 %v671
    %vm678 = vmor %vm676, %vm677
    %v679 = vsel %vm678, %v671, %v675
    %v680 = vand.u32 2147483647, %v338
    %vm681 = vcmp.eq.f32.partialorder %v680, 8.507059e+37
    %v682 = vand.u32 %v338, 2147483648
    %v683 = vor.u32 1.1754944e-38, %v682
    %v684 = vsel %vm681, %v683, %v679
    %v685 = vmul.f32 1.0, %v684
    %v686 = vrcp.pop %v339
    %v687 = vmul.f32 %v339, %v686
    %v688 = vsub.f32 1.0, %v687
    %v689 = vmul.f32 %v686, %v688
    %v690 = vadd.f32 %v686, %v689
    %vm691 = vweird.f32 %v339
    %vm692 = vweird.f32 %v686
    %vm693 = vmor %vm691, %vm692
    %v694 = vsel %vm693, %v686, %v690
    %v695 = vand.u32 2147483647, %v339
    %vm696 = vcmp.eq.f32.partialorder %v695, 8.507059e+37
    %v697 = vand.u32 %v339, 2147483648
    %v698 = vor.u32 1.1754944e-38, %v697
    %v699 = vsel %vm696, %v698, %v694
    %v700 = vmul.f32 1.0, %v699
    %v701 = vrcp.pop %v340
    %v702 = vmul.f32 %v340, %v701
    %v703 = vsub.f32 1.0, %v702
    %v704 = vmul.f32 %v701, %v703
    %v705 = vadd.f32 %v701, %v704
    %vm706 = vweird.f32 %v340
    %vm707 = vweird.f32 %v701
    %vm708 = vmor %vm706, %vm707
    %v709 = vsel %vm708, %v701, %v705
    %v710 = vand.u32 2147483647, %v340
    %vm711 = vcmp.eq.f32.partialorder %v710, 8.507059e+37
    %v712 = vand.u32 %v340, 2147483648
    %v713 = vor.u32 1.1754944e-38, %v712
    %v714 = vsel %vm711, %v713, %v709
    %v715 = vmul.f32 1.0, %v714
    %v716 = vstv %s240
    %v717 = vmul.f32 %v355, %v716
    %v718 = vmul.f32 %v370, %v716
    %v719 = vmul.f32 %v385, %v716
    %v720 = vmul.f32 %v400, %v716
    %v721 = vmul.f32 %v415, %v716
    %v722 = vmul.f32 %v430, %v716
    %v723 = vmul.f32 %v445, %v716
    %v724 = vmul.f32 %v460, %v716
    %v725 = vmul.f32 %v475, %v716
    %v726 = vmul.f32 %v490, %v716
    %v727 = vmul.f32 %v505, %v716
    %v728 = vmul.f32 %v520, %v716
    %v729 = vmul.f32 %v535, %v716
    %v730 = vmul.f32 %v550, %v716
    %v731 = vmul.f32 %v565, %v716
    %v732 = vmul.f32 %v580, %v716
    %v733 = vmul.f32 %v595, %v716
    %v734 = vmul.f32 %v610, %v716
    %v735 = vmul.f32 %v625, %v716
    %v736 = vmul.f32 %v640, %v716
    %v737 = vmul.f32 %v655, %v716
    %v738 = vmul.f32 %v670, %v716
    %v739 = vmul.f32 %v685, %v716
    %v740 = vmul.f32 %v700, %v716
    %v741 = vmul.f32 %v715, %v716
    %v742 = vadd.f32 %v717, 1.1
    %v743 = vadd.f32 %v718, 1.1
    %v744 = vadd.f32 %v719, 1.1
    %v745 = vadd.f32 %v720, 1.1
    %v746 = vadd.f32 %v721, 1.1
    %v747 = vadd.f32 %v722, 1.1
    %v748 = vadd.f32 %v723, 1.1
    %v749 = vadd.f32 %v724, 1.1
    %v750 = vadd.f32 %v725, 1.1
    %v751 = vadd.f32 %v726, 1.1
    %v752 = vadd.f32 %v727, 1.1
    %v753 = vadd.f32 %v728, 1.1
    %v754 = vadd.f32 %v729, 1.1
    %v755 = vadd.f32 %v730, 1.1
    %v756 = vadd.f32 %v731, 1.1
    %v757 = vadd.f32 %v732, 1.1
    %v758 = vadd.f32 %v733, 1.1
    %v759 = vadd.f32 %v734, 1.1
    %v760 = vadd.f32 %v735, 1.1
    %v761 = vadd.f32 %v736, 1.1
    %v762 = vadd.f32 %v737, 1.1
    %v763 = vadd.f32 %v738, 1.1
    %v764 = vadd.f32 %v739, 1.1
    %v765 = vadd.f32 %v740, 1.1
    %v766 = vadd.f32 %v741, 1.1
    %v767 = vmul.f32 %v166, %v166
    %v768 = vmul.f32 %v169, %v169
    %v769 = vmul.f32 %v172, %v172
    %v770 = vmul.f32 %v175, %v175
    %v771 = vmul.f32 %v178, %v178
    %v772 = vmul.f32 %v181, %v181
    %v773 = vmul.f32 %v184, %v184
    %v774 = vmul.f32 %v187, %v187
    %v775 = vmul.f32 %v190, %v190
    %v776 = vmul.f32 %v193, %v193
    %v777 = vmul.f32 %v196, %v196
    %v778 = vmul.f32 %v199, %v199
    %v779 = vmul.f32 %v202, %v202
    %v780 = vmul.f32 %v205, %v205
    %v781 = vmul.f32 %v208, %v208
    %v782 = vmul.f32 %v211, %v211
    %v783 = vmul.f32 %v214, %v214
    %v784 = vmul.f32 %v217, %v217
    %v785 = vmul.f32 %v220, %v220
    %v786 = vmul.f32 %v223, %v223
    %v787 = vmul.f32 %v226, %v226
    %v788 = vmul.f32 %v229, %v229
    %v789 = vmul.f32 %v232, %v232
    %v790 = vmul.f32 %v235, %v235
    %v791 = vmul.f32 %v238, %v238
    %v792 = vsel %vm72, %v767, 0.0
    %793 = vadd.xlane.f32.xlu0 %v792
    %v794 = vpop.xlane.xlu0 %793
    %v795 = vsel %vm72, %v768, 0.0
    %796 = vadd.xlane.f32.xlu0 %v795
    %v797 = vpop.xlane.xlu0 %796
    %v798 = vsel %vm72, %v769, 0.0
    %799 = vadd.xlane.f32.xlu0 %v798
    %v800 = vpop.xlane.xlu0 %799
    %v801 = vsel %vm72, %v770, 0.0
    %802 = vadd.xlane.f32.xlu0 %v801
    %v803 = vpop.xlane.xlu0 %802
    %v804 = vsel %vm72, %v771, 0.0
    %805 = vadd.xlane.f32.xlu0 %v804
    %v806 = vpop.xlane.xlu0 %805
    %v807 = vsel %vm72, %v772, 0.0
    %808 = vadd.xlane.f32.xlu0 %v807
    %v809 = vpop.xlane.xlu0 %808
    %v810 = vsel %vm72, %v773, 0.0
    %811 = vadd.xlane.f32.xlu0 %v810
    %v812 = vpop.xlane.xlu0 %811
    %v813 = vsel %vm72, %v774, 0.0
    %814 = vadd.xlane.f32.xlu0 %v813
    %v815 = vpop.xlane.xlu0 %814
    %v816 = vsel %vm72, %v775, 0.0
    %817 = vadd.xlane.f32.xlu0 %v816
    %v818 = vpop.xlane.xlu0 %817
    %v819 = vsel %vm72, %v776, 0.0
    %820 = vadd.xlane.f32.xlu0 %v819
    %v821 = vpop.xlane.xlu0 %820
    %v822 = vsel %vm72, %v777, 0.0
    %823 = vadd.xlane.f32.xlu0 %v822
    %v824 = vpop.xlane.xlu0 %823
    %v825 = vsel %vm72, %v778, 0.0
    %826 = vadd.xlane.f32.xlu0 %v825
    %v827 = vpop.xlane.xlu0 %826
    %v828 = vsel %vm72, %v779, 0.0
    %829 = vadd.xlane.f32.xlu0 %v828
    %v830 = vpop.xlane.xlu0 %829
    %v831 = vsel %vm72, %v780, 0.0
    %832 = vadd.xlane.f32.xlu0 %v831
    %v833 = vpop.xlane.xlu0 %832
    %v834 = vsel %vm72, %v781, 0.0
    %835 = vadd.xlane.f32.xlu0 %v834
    %v836 = vpop.xlane.xlu0 %835
    %v837 = vsel %vm72, %v782, 0.0
    %838 = vadd.xlane.f32.xlu0 %v837
    %v839 = vpop.xlane.xlu0 %838
    %v840 = vsel %vm72, %v783, 0.0
    %841 = vadd.xlane.f32.xlu0 %v840
    %v842 = vpop.xlane.xlu0 %841
    %v843 = vsel %vm72, %v784, 0.0
    %844 = vadd.xlane.f32.xlu0 %v843
    %v845 = vpop.xlane.xlu0 %844
    %v846 = vsel %vm72, %v785, 0.0
    %847 = vadd.xlane.f32.xlu0 %v846
    %v848 = vpop.xlane.xlu0 %847
    %v849 = vsel %vm72, %v786, 0.0
    %850 = vadd.xlane.f32.xlu0 %v849
    %v851 = vpop.xlane.xlu0 %850
    %v852 = vsel %vm72, %v787, 0.0
    %853 = vadd.xlane.f32.xlu0 %v852
    %v854 = vpop.xlane.xlu0 %853
    %v855 = vsel %vm72, %v788, 0.0
    %856 = vadd.xlane.f32.xlu0 %v855
    %v857 = vpop.xlane.xlu0 %856
    %v858 = vsel %vm72, %v789, 0.0
    %859 = vadd.xlane.f32.xlu0 %v858
    %v860 = vpop.xlane.xlu0 %859
    %v861 = vsel %vm72, %v790, 0.0
    %862 = vadd.xlane.f32.xlu0 %v861
    %v863 = vpop.xlane.xlu0 %862
    %v864 = vsel %vm72, %v791, 0.0
    %865 = vadd.xlane.f32.xlu0 %v864
    %v866 = vpop.xlane.xlu0 %865
    %v867 = vsub.f32 %v794, %v767
    %v868 = vsub.f32 %v797, %v768
    %v869 = vsub.f32 %v800, %v769
    %v870 = vsub.f32 %v803, %v770
    %v871 = vsub.f32 %v806, %v771
    %v872 = vsub.f32 %v809, %v772
    %v873 = vsub.f32 %v812, %v773
    %v874 = vsub.f32 %v815, %v774
    %v875 = vsub.f32 %v818, %v775
    %v876 = vsub.f32 %v821, %v776
    %v877 = vsub.f32 %v824, %v777
    %v878 = vsub.f32 %v827, %v778
    %v879 = vsub.f32 %v830, %v779
    %v880 = vsub.f32 %v833, %v780
    %v881 = vsub.f32 %v836, %v781
    %v882 = vsub.f32 %v839, %v782
    %v883 = vsub.f32 %v842, %v783
    %v884 = vsub.f32 %v845, %v784
    %v885 = vsub.f32 %v848, %v785
    %v886 = vsub.f32 %v851, %v786
    %v887 = vsub.f32 %v854, %v787
    %v888 = vsub.f32 %v857, %v788
    %v889 = vsub.f32 %v860, %v789
    %v890 = vsub.f32 %v863, %v790
    %v891 = vsub.f32 %v866, %v791
    %v892 = vmax.f32 %v867, 1e-08
    %v893 = vmax.f32 %v868, 1e-08
    %v894 = vmax.f32 %v869, 1e-08
    %v895 = vmax.f32 %v870, 1e-08
    %v896 = vmax.f32 %v871, 1e-08
    %v897 = vmax.f32 %v872, 1e-08
    %v898 = vmax.f32 %v873, 1e-08
    %v899 = vmax.f32 %v874, 1e-08
    %v900 = vmax.f32 %v875, 1e-08
    %v901 = vmax.f32 %v876, 1e-08
    %v902 = vmax.f32 %v877, 1e-08
    %v903 = vmax.f32 %v878, 1e-08
    %v904 = vmax.f32 %v879, 1e-08
    %v905 = vmax.f32 %v880, 1e-08
    %v906 = vmax.f32 %v881, 1e-08
    %v907 = vmax.f32 %v882, 1e-08
    %v908 = vmax.f32 %v883, 1e-08
    %v909 = vmax.f32 %v884, 1e-08
    %v910 = vmax.f32 %v885, 1e-08
    %v911 = vmax.f32 %v886, 1e-08
    %v912 = vmax.f32 %v887, 1e-08
    %v913 = vmax.f32 %v888, 1e-08
    %v914 = vmax.f32 %v889, 1e-08
    %v915 = vmax.f32 %v890, 1e-08
    %v916 = vmax.f32 %v891, 1e-08
    %v917 = vmul.f32 %v742, %v742
    %v918 = vmul.f32 %v743, %v743
    %v919 = vmul.f32 %v744, %v744
    %v920 = vmul.f32 %v745, %v745
    %v921 = vmul.f32 %v746, %v746
    %v922 = vmul.f32 %v747, %v747
    %v923 = vmul.f32 %v748, %v748
    %v924 = vmul.f32 %v749, %v749
    %v925 = vmul.f32 %v750, %v750
    %v926 = vmul.f32 %v751, %v751
    %v927 = vmul.f32 %v752, %v752
    %v928 = vmul.f32 %v753, %v753
    %v929 = vmul.f32 %v754, %v754
    %v930 = vmul.f32 %v755, %v755
    %v931 = vmul.f32 %v756, %v756
    %v932 = vmul.f32 %v757, %v757
    %v933 = vmul.f32 %v758, %v758
    %v934 = vmul.f32 %v759, %v759
    %v935 = vmul.f32 %v760, %v760
    %v936 = vmul.f32 %v761, %v761
    %v937 = vmul.f32 %v762, %v762
    %v938 = vmul.f32 %v763, %v763
    %v939 = vmul.f32 %v764, %v764
    %v940 = vmul.f32 %v765, %v765
    %v941 = vmul.f32 %v766, %v766
    %v942 = vsub.f32 %v917, 1.0
    %v943 = vsub.f32 %v918, 1.0
    %v944 = vsub.f32 %v919, 1.0
    %v945 = vsub.f32 %v920, 1.0
    %v946 = vsub.f32 %v921, 1.0
    %v947 = vsub.f32 %v922, 1.0
    %v948 = vsub.f32 %v923, 1.0
    %v949 = vsub.f32 %v924, 1.0
    %v950 = vsub.f32 %v925, 1.0
    %v951 = vsub.f32 %v926, 1.0
    %v952 = vsub.f32 %v927, 1.0
    %v953 = vsub.f32 %v928, 1.0
    %v954 = vsub.f32 %v929, 1.0
    %v955 = vsub.f32 %v930, 1.0
    %v956 = vsub.f32 %v931, 1.0
    %v957 = vsub.f32 %v932, 1.0
    %v958 = vsub.f32 %v933, 1.0
    %v959 = vsub.f32 %v934, 1.0
    %v960 = vsub.f32 %v935, 1.0
    %v961 = vsub.f32 %v936, 1.0
    %v962 = vsub.f32 %v937, 1.0
    %v963 = vsub.f32 %v938, 1.0
    %v964 = vsub.f32 %v939, 1.0
    %v965 = vsub.f32 %v940, 1.0
    %v966 = vsub.f32 %v941, 1.0
    %v967 = vrsqrt.pop %v942
    %v968 = vmul.f32 %v967, %v942
    %v969 = vmul.f32 %v968, %v967
    %v970 = vmul.f32 0.5, %v969
    %v971 = vsub.f32 1.5, %v970
    %v972 = vmul.f32 %v967, %v971
    %v973 = vmul.f32 %v942, %v972
    %vm974 = vcmp.eq.f32.partialorder %v942, inf
    %v975 = vsel %vm974, %v942, %v973
    %vm976 = vcmp.eq.f32.partialorder %v942, 0.0
    %v977 = vand.u32 %v942, 2147483648
    %v978 = vsel %vm976, %v977, %v975
    %v979 = vrsqrt.pop %v943
    %v980 = vmul.f32 %v979, %v943
    %v981 = vmul.f32 %v980, %v979
    %v982 = vmul.f32 0.5, %v981
    %v983 = vsub.f32 1.5, %v982
    %v984 = vmul.f32 %v979, %v983
    %v985 = vmul.f32 %v943, %v984
    %vm986 = vcmp.eq.f32.partialorder %v943, inf
    %v987 = vsel %vm986, %v943, %v985
    %vm988 = vcmp.eq.f32.partialorder %v943, 0.0
    %v989 = vand.u32 %v943, 2147483648
    %v990 = vsel %vm988, %v989, %v987
    %v991 = vrsqrt.pop %v944
    %v992 = vmul.f32 %v991, %v944
    %v993 = vmul.f32 %v992, %v991
    %v994 = vmul.f32 0.5, %v993
    %v995 = vsub.f32 1.5, %v994
    %v996 = vmul.f32 %v991, %v995
    %v997 = vmul.f32 %v944, %v996
    %vm998 = vcmp.eq.f32.partialorder %v944, inf
    %v999 = vsel %vm998, %v944, %v997
    %vm1000 = vcmp.eq.f32.partialorder %v944, 0.0
    %v1001 = vand.u32 %v944, 2147483648
    %v1002 = vsel %vm1000, %v1001, %v999
    %v1003 = vrsqrt.pop %v945
    %v1004 = vmul.f32 %v1003, %v945
    %v1005 = vmul.f32 %v1004, %v1003
    %v1006 = vmul.f32 0.5, %v1005
    %v1007 = vsub.f32 1.5, %v1006
    %v1008 = vmul.f32 %v1003, %v1007
    %v1009 = vmul.f32 %v945, %v1008
    %vm1010 = vcmp.eq.f32.partialorder %v945, inf
    %v1011 = vsel %vm1010, %v945, %v1009
    %vm1012 = vcmp.eq.f32.partialorder %v945, 0.0
    %v1013 = vand.u32 %v945, 2147483648
    %v1014 = vsel %vm1012, %v1013, %v1011
    %v1015 = vrsqrt.pop %v946
    %v1016 = vmul.f32 %v1015, %v946
    %v1017 = vmul.f32 %v1016, %v1015
    %v1018 = vmul.f32 0.5, %v1017
    %v1019 = vsub.f32 1.5, %v1018
    %v1020 = vmul.f32 %v1015, %v1019
    %v1021 = vmul.f32 %v946, %v1020
    %vm1022 = vcmp.eq.f32.partialorder %v946, inf
    %v1023 = vsel %vm1022, %v946, %v1021
    %vm1024 = vcmp.eq.f32.partialorder %v946, 0.0
    %v1025 = vand.u32 %v946, 2147483648
    %v1026 = vsel %vm1024, %v1025, %v1023
    %v1027 = vrsqrt.pop %v947
    %v1028 = vmul.f32 %v1027, %v947
    %v1029 = vmul.f32 %v1028, %v1027
    %v1030 = vmul.f32 0.5, %v1029
    %v1031 = vsub.f32 1.5, %v1030
    %v1032 = vmul.f32 %v1027, %v1031
    %v1033 = vmul.f32 %v947, %v1032
    %vm1034 = vcmp.eq.f32.partialorder %v947, inf
    %v1035 = vsel %vm1034, %v947, %v1033
    %vm1036 = vcmp.eq.f32.partialorder %v947, 0.0
    %v1037 = vand.u32 %v947, 2147483648
    %v1038 = vsel %vm1036, %v1037, %v1035
    %v1039 = vrsqrt.pop %v948
    %v1040 = vmul.f32 %v1039, %v948
    %v1041 = vmul.f32 %v1040, %v1039
    %v1042 = vmul.f32 0.5, %v1041
    %v1043 = vsub.f32 1.5, %v1042
    %v1044 = vmul.f32 %v1039, %v1043
    %v1045 = vmul.f32 %v948, %v1044
    %vm1046 = vcmp.eq.f32.partialorder %v948, inf
    %v1047 = vsel %vm1046, %v948, %v1045
    %vm1048 = vcmp.eq.f32.partialorder %v948, 0.0
    %v1049 = vand.u32 %v948, 2147483648
    %v1050 = vsel %vm1048, %v1049, %v1047
    %v1051 = vrsqrt.pop %v949
    %v1052 = vmul.f32 %v1051, %v949
    %v1053 = vmul.f32 %v1052, %v1051
    %v1054 = vmul.f32 0.5, %v1053
    %v1055 = vsub.f32 1.5, %v1054
    %v1056 = vmul.f32 %v1051, %v1055
    %v1057 = vmul.f32 %v949, %v1056
    %vm1058 = vcmp.eq.f32.partialorder %v949, inf
    %v1059 = vsel %vm1058, %v949, %v1057
    %vm1060 = vcmp.eq.f32.partialorder %v949, 0.0
    %v1061 = vand.u32 %v949, 2147483648
    %v1062 = vsel %vm1060, %v1061, %v1059
    %v1063 = vrsqrt.pop %v950
    %v1064 = vmul.f32 %v1063, %v950
    %v1065 = vmul.f32 %v1064, %v1063
    %v1066 = vmul.f32 0.5, %v1065
    %v1067 = vsub.f32 1.5, %v1066
    %v1068 = vmul.f32 %v1063, %v1067
    %v1069 = vmul.f32 %v950, %v1068
    %vm1070 = vcmp.eq.f32.partialorder %v950, inf
    %v1071 = vsel %vm1070, %v950, %v1069
    %vm1072 = vcmp.eq.f32.partialorder %v950, 0.0
    %v1073 = vand.u32 %v950, 2147483648
    %v1074 = vsel %vm1072, %v1073, %v1071
    %v1075 = vrsqrt.pop %v951
    %v1076 = vmul.f32 %v1075, %v951
    %v1077 = vmul.f32 %v1076, %v1075
    %v1078 = vmul.f32 0.5, %v1077
    %v1079 = vsub.f32 1.5, %v1078
    %v1080 = vmul.f32 %v1075, %v1079
    %v1081 = vmul.f32 %v951, %v1080
    %vm1082 = vcmp.eq.f32.partialorder %v951, inf
    %v1083 = vsel %vm1082, %v951, %v1081
    %vm1084 = vcmp.eq.f32.partialorder %v951, 0.0
    %v1085 = vand.u32 %v951, 2147483648
    %v1086 = vsel %vm1084, %v1085, %v1083
    %v1087 = vrsqrt.pop %v952
    %v1088 = vmul.f32 %v1087, %v952
    %v1089 = vmul.f32 %v1088, %v1087
    %v1090 = vmul.f32 0.5, %v1089
    %v1091 = vsub.f32 1.5, %v1090
    %v1092 = vmul.f32 %v1087, %v1091
    %v1093 = vmul.f32 %v952, %v1092
    %vm1094 = vcmp.eq.f32.partialorder %v952, inf
    %v1095 = vsel %vm1094, %v952, %v1093
    %vm1096 = vcmp.eq.f32.partialorder %v952, 0.0
    %v1097 = vand.u32 %v952, 2147483648
    %v1098 = vsel %vm1096, %v1097, %v1095
    %v1099 = vrsqrt.pop %v953
    %v1100 = vmul.f32 %v1099, %v953
    %v1101 = vmul.f32 %v1100, %v1099
    %v1102 = vmul.f32 0.5, %v1101
    %v1103 = vsub.f32 1.5, %v1102
    %v1104 = vmul.f32 %v1099, %v1103
    %v1105 = vmul.f32 %v953, %v1104
    %vm1106 = vcmp.eq.f32.partialorder %v953, inf
    %v1107 = vsel %vm1106, %v953, %v1105
    %vm1108 = vcmp.eq.f32.partialorder %v953, 0.0
    %v1109 = vand.u32 %v953, 2147483648
    %v1110 = vsel %vm1108, %v1109, %v1107
    %v1111 = vrsqrt.pop %v954
    %v1112 = vmul.f32 %v1111, %v954
    %v1113 = vmul.f32 %v1112, %v1111
    %v1114 = vmul.f32 0.5, %v1113
    %v1115 = vsub.f32 1.5, %v1114
    %v1116 = vmul.f32 %v1111, %v1115
    %v1117 = vmul.f32 %v954, %v1116
    %vm1118 = vcmp.eq.f32.partialorder %v954, inf
    %v1119 = vsel %vm1118, %v954, %v1117
    %vm1120 = vcmp.eq.f32.partialorder %v954, 0.0
    %v1121 = vand.u32 %v954, 2147483648
    %v1122 = vsel %vm1120, %v1121, %v1119
    %v1123 = vrsqrt.pop %v955
    %v1124 = vmul.f32 %v1123, %v955
    %v1125 = vmul.f32 %v1124, %v1123
    %v1126 = vmul.f32 0.5, %v1125
    %v1127 = vsub.f32 1.5, %v1126
    %v1128 = vmul.f32 %v1123, %v1127
    %v1129 = vmul.f32 %v955, %v1128
    %vm1130 = vcmp.eq.f32.partialorder %v955, inf
    %v1131 = vsel %vm1130, %v955, %v1129
    %vm1132 = vcmp.eq.f32.partialorder %v955, 0.0
    %v1133 = vand.u32 %v955, 2147483648
    %v1134 = vsel %vm1132, %v1133, %v1131
    %v1135 = vrsqrt.pop %v956
    %v1136 = vmul.f32 %v1135, %v956
    %v1137 = vmul.f32 %v1136, %v1135
    %v1138 = vmul.f32 0.5, %v1137
    %v1139 = vsub.f32 1.5, %v1138
    %v1140 = vmul.f32 %v1135, %v1139
    %v1141 = vmul.f32 %v956, %v1140
    %vm1142 = vcmp.eq.f32.partialorder %v956, inf
    %v1143 = vsel %vm1142, %v956, %v1141
    %vm1144 = vcmp.eq.f32.partialorder %v956, 0.0
    %v1145 = vand.u32 %v956, 2147483648
    %v1146 = vsel %vm1144, %v1145, %v1143
    %v1147 = vrsqrt.pop %v957
    %v1148 = vmul.f32 %v1147, %v957
    %v1149 = vmul.f32 %v1148, %v1147
    %v1150 = vmul.f32 0.5, %v1149
    %v1151 = vsub.f32 1.5, %v1150
    %v1152 = vmul.f32 %v1147, %v1151
    %v1153 = vmul.f32 %v957, %v1152
    %vm1154 = vcmp.eq.f32.partialorder %v957, inf
    %v1155 = vsel %vm1154, %v957, %v1153
    %vm1156 = vcmp.eq.f32.partialorder %v957, 0.0
    %v1157 = vand.u32 %v957, 2147483648
    %v1158 = vsel %vm1156, %v1157, %v1155
    %v1159 = vrsqrt.pop %v958
    %v1160 = vmul.f32 %v1159, %v958
    %v1161 = vmul.f32 %v1160, %v1159
    %v1162 = vmul.f32 0.5, %v1161
    %v1163 = vsub.f32 1.5, %v1162
    %v1164 = vmul.f32 %v1159, %v1163
    %v1165 = vmul.f32 %v958, %v1164
    %vm1166 = vcmp.eq.f32.partialorder %v958, inf
    %v1167 = vsel %vm1166, %v958, %v1165
    %vm1168 = vcmp.eq.f32.partialorder %v958, 0.0
    %v1169 = vand.u32 %v958, 2147483648
    %v1170 = vsel %vm1168, %v1169, %v1167
    %v1171 = vrsqrt.pop %v959
    %v1172 = vmul.f32 %v1171, %v959
    %v1173 = vmul.f32 %v1172, %v1171
    %v1174 = vmul.f32 0.5, %v1173
    %v1175 = vsub.f32 1.5, %v1174
    %v1176 = vmul.f32 %v1171, %v1175
    %v1177 = vmul.f32 %v959, %v1176
    %vm1178 = vcmp.eq.f32.partialorder %v959, inf
    %v1179 = vsel %vm1178, %v959, %v1177
    %vm1180 = vcmp.eq.f32.partialorder %v959, 0.0
    %v1181 = vand.u32 %v959, 2147483648
    %v1182 = vsel %vm1180, %v1181, %v1179
    %v1183 = vrsqrt.pop %v960
    %v1184 = vmul.f32 %v1183, %v960
    %v1185 = vmul.f32 %v1184, %v1183
    %v1186 = vmul.f32 0.5, %v1185
    %v1187 = vsub.f32 1.5, %v1186
    %v1188 = vmul.f32 %v1183, %v1187
    %v1189 = vmul.f32 %v960, %v1188
    %vm1190 = vcmp.eq.f32.partialorder %v960, inf
    %v1191 = vsel %vm1190, %v960, %v1189
    %vm1192 = vcmp.eq.f32.partialorder %v960, 0.0
    %v1193 = vand.u32 %v960, 2147483648
    %v1194 = vsel %vm1192, %v1193, %v1191
    %v1195 = vrsqrt.pop %v961
    %v1196 = vmul.f32 %v1195, %v961
    %v1197 = vmul.f32 %v1196, %v1195
    %v1198 = vmul.f32 0.5, %v1197
    %v1199 = vsub.f32 1.5, %v1198
    %v1200 = vmul.f32 %v1195, %v1199
    %v1201 = vmul.f32 %v961, %v1200
    %vm1202 = vcmp.eq.f32.partialorder %v961, inf
    %v1203 = vsel %vm1202, %v961, %v1201
    %vm1204 = vcmp.eq.f32.partialorder %v961, 0.0
    %v1205 = vand.u32 %v961, 2147483648
    %v1206 = vsel %vm1204, %v1205, %v1203
    %v1207 = vrsqrt.pop %v962
    %v1208 = vmul.f32 %v1207, %v962
    %v1209 = vmul.f32 %v1208, %v1207
    %v1210 = vmul.f32 0.5, %v1209
    %v1211 = vsub.f32 1.5, %v1210
    %v1212 = vmul.f32 %v1207, %v1211
    %v1213 = vmul.f32 %v962, %v1212
    %vm1214 = vcmp.eq.f32.partialorder %v962, inf
    %v1215 = vsel %vm1214, %v962, %v1213
    %vm1216 = vcmp.eq.f32.partialorder %v962, 0.0
    %v1217 = vand.u32 %v962, 2147483648
    %v1218 = vsel %vm1216, %v1217, %v1215
    %v1219 = vrsqrt.pop %v963
    %v1220 = vmul.f32 %v1219, %v963
    %v1221 = vmul.f32 %v1220, %v1219
    %v1222 = vmul.f32 0.5, %v1221
    %v1223 = vsub.f32 1.5, %v1222
    %v1224 = vmul.f32 %v1219, %v1223
    %v1225 = vmul.f32 %v963, %v1224
    %vm1226 = vcmp.eq.f32.partialorder %v963, inf
    %v1227 = vsel %vm1226, %v963, %v1225
    %vm1228 = vcmp.eq.f32.partialorder %v963, 0.0
    %v1229 = vand.u32 %v963, 2147483648
    %v1230 = vsel %vm1228, %v1229, %v1227
    %v1231 = vrsqrt.pop %v964
    %v1232 = vmul.f32 %v1231, %v964
    %v1233 = vmul.f32 %v1232, %v1231
    %v1234 = vmul.f32 0.5, %v1233
    %v1235 = vsub.f32 1.5, %v1234
    %v1236 = vmul.f32 %v1231, %v1235
    %v1237 = vmul.f32 %v964, %v1236
    %vm1238 = vcmp.eq.f32.partialorder %v964, inf
    %v1239 = vsel %vm1238, %v964, %v1237
    %vm1240 = vcmp.eq.f32.partialorder %v964, 0.0
    %v1241 = vand.u32 %v964, 2147483648
    %v1242 = vsel %vm1240, %v1241, %v1239
    %v1243 = vrsqrt.pop %v965
    %v1244 = vmul.f32 %v1243, %v965
    %v1245 = vmul.f32 %v1244, %v1243
    %v1246 = vmul.f32 0.5, %v1245
    %v1247 = vsub.f32 1.5, %v1246
    %v1248 = vmul.f32 %v1243, %v1247
    %v1249 = vmul.f32 %v965, %v1248
    %vm1250 = vcmp.eq.f32.partialorder %v965, inf
    %v1251 = vsel %vm1250, %v965, %v1249
    %vm1252 = vcmp.eq.f32.partialorder %v965, 0.0
    %v1253 = vand.u32 %v965, 2147483648
    %v1254 = vsel %vm1252, %v1253, %v1251
    %v1255 = vrsqrt.pop %v966
    %v1256 = vmul.f32 %v1255, %v966
    %v1257 = vmul.f32 %v1256, %v1255
    %v1258 = vmul.f32 0.5, %v1257
    %v1259 = vsub.f32 1.5, %v1258
    %v1260 = vmul.f32 %v1255, %v1259
    %v1261 = vmul.f32 %v966, %v1260
    %vm1262 = vcmp.eq.f32.partialorder %v966, inf
    %v1263 = vsel %vm1262, %v966, %v1261
    %vm1264 = vcmp.eq.f32.partialorder %v966, 0.0
    %v1265 = vand.u32 %v966, 2147483648
    %v1266 = vsel %vm1264, %v1265, %v1263
    %v1267 = vrsqrt.pop %v892
    %v1268 = vmul.f32 %v1267, %v892
    %v1269 = vmul.f32 %v1268, %v1267
    %v1270 = vmul.f32 0.5, %v1269
    %v1271 = vsub.f32 1.5, %v1270
    %v1272 = vmul.f32 %v1267, %v1271
    %vm1273 = vweird.f32 %v892
    %vm1274 = vweird.f32 %v1267
    %vm1275 = vmor %vm1273, %vm1274
    %v1276 = vsel %vm1275, %v1267, %v1272
    %v1277 = vrsqrt.pop %v893
    %v1278 = vmul.f32 %v1277, %v893
    %v1279 = vmul.f32 %v1278, %v1277
    %v1280 = vmul.f32 0.5, %v1279
    %v1281 = vsub.f32 1.5, %v1280
    %v1282 = vmul.f32 %v1277, %v1281
    %vm1283 = vweird.f32 %v893
    %vm1284 = vweird.f32 %v1277
    %vm1285 = vmor %vm1283, %vm1284
    %v1286 = vsel %vm1285, %v1277, %v1282
    %v1287 = vrsqrt.pop %v894
    %v1288 = vmul.f32 %v1287, %v894
    %v1289 = vmul.f32 %v1288, %v1287
    %v1290 = vmul.f32 0.5, %v1289
    %v1291 = vsub.f32 1.5, %v1290
    %v1292 = vmul.f32 %v1287, %v1291
    %vm1293 = vweird.f32 %v894
    %vm1294 = vweird.f32 %v1287
    %vm1295 = vmor %vm1293, %vm1294
    %v1296 = vsel %vm1295, %v1287, %v1292
    %v1297 = vrsqrt.pop %v895
    %v1298 = vmul.f32 %v1297, %v895
    %v1299 = vmul.f32 %v1298, %v1297
    %v1300 = vmul.f32 0.5, %v1299
    %v1301 = vsub.f32 1.5, %v1300
    %v1302 = vmul.f32 %v1297, %v1301
    %vm1303 = vweird.f32 %v895
    %vm1304 = vweird.f32 %v1297
    %vm1305 = vmor %vm1303, %vm1304
    %v1306 = vsel %vm1305, %v1297, %v1302
    %v1307 = vrsqrt.pop %v896
    %v1308 = vmul.f32 %v1307, %v896
    %v1309 = vmul.f32 %v1308, %v1307
    %v1310 = vmul.f32 0.5, %v1309
    %v1311 = vsub.f32 1.5, %v1310
    %v1312 = vmul.f32 %v1307, %v1311
    %vm1313 = vweird.f32 %v896
    %vm1314 = vweird.f32 %v1307
    %vm1315 = vmor %vm1313, %vm1314
    %v1316 = vsel %vm1315, %v1307, %v1312
    %v1317 = vrsqrt.pop %v897
    %v1318 = vmul.f32 %v1317, %v897
    %v1319 = vmul.f32 %v1318, %v1317
    %v1320 = vmul.f32 0.5, %v1319
    %v1321 = vsub.f32 1.5, %v1320
    %v1322 = vmul.f32 %v1317, %v1321
    %vm1323 = vweird.f32 %v897
    %vm1324 = vweird.f32 %v1317
    %vm1325 = vmor %vm1323, %vm1324
    %v1326 = vsel %vm1325, %v1317, %v1322
    %v1327 = vrsqrt.pop %v898
    %v1328 = vmul.f32 %v1327, %v898
    %v1329 = vmul.f32 %v1328, %v1327
    %v1330 = vmul.f32 0.5, %v1329
    %v1331 = vsub.f32 1.5, %v1330
    %v1332 = vmul.f32 %v1327, %v1331
    %vm1333 = vweird.f32 %v898
    %vm1334 = vweird.f32 %v1327
    %vm1335 = vmor %vm1333, %vm1334
    %v1336 = vsel %vm1335, %v1327, %v1332
    %v1337 = vrsqrt.pop %v899
    %v1338 = vmul.f32 %v1337, %v899
    %v1339 = vmul.f32 %v1338, %v1337
    %v1340 = vmul.f32 0.5, %v1339
    %v1341 = vsub.f32 1.5, %v1340
    %v1342 = vmul.f32 %v1337, %v1341
    %vm1343 = vweird.f32 %v899
    %vm1344 = vweird.f32 %v1337
    %vm1345 = vmor %vm1343, %vm1344
    %v1346 = vsel %vm1345, %v1337, %v1342
    %v1347 = vrsqrt.pop %v900
    %v1348 = vmul.f32 %v1347, %v900
    %v1349 = vmul.f32 %v1348, %v1347
    %v1350 = vmul.f32 0.5, %v1349
    %v1351 = vsub.f32 1.5, %v1350
    %v1352 = vmul.f32 %v1347, %v1351
    %vm1353 = vweird.f32 %v900
    %vm1354 = vweird.f32 %v1347
    %vm1355 = vmor %vm1353, %vm1354
    %v1356 = vsel %vm1355, %v1347, %v1352
    %v1357 = vrsqrt.pop %v901
    %v1358 = vmul.f32 %v1357, %v901
    %v1359 = vmul.f32 %v1358, %v1357
    %v1360 = vmul.f32 0.5, %v1359
    %v1361 = vsub.f32 1.5, %v1360
    %v1362 = vmul.f32 %v1357, %v1361
    %vm1363 = vweird.f32 %v901
    %vm1364 = vweird.f32 %v1357
    %vm1365 = vmor %vm1363, %vm1364
    %v1366 = vsel %vm1365, %v1357, %v1362
    %v1367 = vrsqrt.pop %v902
    %v1368 = vmul.f32 %v1367, %v902
    %v1369 = vmul.f32 %v1368, %v1367
    %v1370 = vmul.f32 0.5, %v1369
    %v1371 = vsub.f32 1.5, %v1370
    %v1372 = vmul.f32 %v1367, %v1371
    %vm1373 = vweird.f32 %v902
    %vm1374 = vweird.f32 %v1367
    %vm1375 = vmor %vm1373, %vm1374
    %v1376 = vsel %vm1375, %v1367, %v1372
    %v1377 = vrsqrt.pop %v903
    %v1378 = vmul.f32 %v1377, %v903
    %v1379 = vmul.f32 %v1378, %v1377
    %v1380 = vmul.f32 0.5, %v1379
    %v1381 = vsub.f32 1.5, %v1380
    %v1382 = vmul.f32 %v1377, %v1381
    %vm1383 = vweird.f32 %v903
    %vm1384 = vweird.f32 %v1377
    %vm1385 = vmor %vm1383, %vm1384
    %v1386 = vsel %vm1385, %v1377, %v1382
    %v1387 = vrsqrt.pop %v904
    %v1388 = vmul.f32 %v1387, %v904
    %v1389 = vmul.f32 %v1388, %v1387
    %v1390 = vmul.f32 0.5, %v1389
    %v1391 = vsub.f32 1.5, %v1390
    %v1392 = vmul.f32 %v1387, %v1391
    %vm1393 = vweird.f32 %v904
    %vm1394 = vweird.f32 %v1387
    %vm1395 = vmor %vm1393, %vm1394
    %v1396 = vsel %vm1395, %v1387, %v1392
    %v1397 = vrsqrt.pop %v905
    %v1398 = vmul.f32 %v1397, %v905
    %v1399 = vmul.f32 %v1398, %v1397
    %v1400 = vmul.f32 0.5, %v1399
    %v1401 = vsub.f32 1.5, %v1400
    %v1402 = vmul.f32 %v1397, %v1401
    %vm1403 = vweird.f32 %v905
    %vm1404 = vweird.f32 %v1397
    %vm1405 = vmor %vm1403, %vm1404
    %v1406 = vsel %vm1405, %v1397, %v1402
    %v1407 = vrsqrt.pop %v906
    %v1408 = vmul.f32 %v1407, %v906
    %v1409 = vmul.f32 %v1408, %v1407
    %v1410 = vmul.f32 0.5, %v1409
    %v1411 = vsub.f32 1.5, %v1410
    %v1412 = vmul.f32 %v1407, %v1411
    %vm1413 = vweird.f32 %v906
    %vm1414 = vweird.f32 %v1407
    %vm1415 = vmor %vm1413, %vm1414
    %v1416 = vsel %vm1415, %v1407, %v1412
    %v1417 = vrsqrt.pop %v907
    %v1418 = vmul.f32 %v1417, %v907
    %v1419 = vmul.f32 %v1418, %v1417
    %v1420 = vmul.f32 0.5, %v1419
    %v1421 = vsub.f32 1.5, %v1420
    %v1422 = vmul.f32 %v1417, %v1421
    %vm1423 = vweird.f32 %v907
    %vm1424 = vweird.f32 %v1417
    %vm1425 = vmor %vm1423, %vm1424
    %v1426 = vsel %vm1425, %v1417, %v1422
    %v1427 = vrsqrt.pop %v908
    %v1428 = vmul.f32 %v1427, %v908
    %v1429 = vmul.f32 %v1428, %v1427
    %v1430 = vmul.f32 0.5, %v1429
    %v1431 = vsub.f32 1.5, %v1430
    %v1432 = vmul.f32 %v1427, %v1431
    %vm1433 = vweird.f32 %v908
    %vm1434 = vweird.f32 %v1427
    %vm1435 = vmor %vm1433, %vm1434
    %v1436 = vsel %vm1435, %v1427, %v1432
    %v1437 = vrsqrt.pop %v909
    %v1438 = vmul.f32 %v1437, %v909
    %v1439 = vmul.f32 %v1438, %v1437
    %v1440 = vmul.f32 0.5, %v1439
    %v1441 = vsub.f32 1.5, %v1440
    %v1442 = vmul.f32 %v1437, %v1441
    %vm1443 = vweird.f32 %v909
    %vm1444 = vweird.f32 %v1437
    %vm1445 = vmor %vm1443, %vm1444
    %v1446 = vsel %vm1445, %v1437, %v1442
    %v1447 = vrsqrt.pop %v910
    %v1448 = vmul.f32 %v1447, %v910
    %v1449 = vmul.f32 %v1448, %v1447
    %v1450 = vmul.f32 0.5, %v1449
    %v1451 = vsub.f32 1.5, %v1450
    %v1452 = vmul.f32 %v1447, %v1451
    %vm1453 = vweird.f32 %v910
    %vm1454 = vweird.f32 %v1447
    %vm1455 = vmor %vm1453, %vm1454
    %v1456 = vsel %vm1455, %v1447, %v1452
    %v1457 = vrsqrt.pop %v911
    %v1458 = vmul.f32 %v1457, %v911
    %v1459 = vmul.f32 %v1458, %v1457
    %v1460 = vmul.f32 0.5, %v1459
    %v1461 = vsub.f32 1.5, %v1460
    %v1462 = vmul.f32 %v1457, %v1461
    %vm1463 = vweird.f32 %v911
    %vm1464 = vweird.f32 %v1457
    %vm1465 = vmor %vm1463, %vm1464
    %v1466 = vsel %vm1465, %v1457, %v1462
    %v1467 = vrsqrt.pop %v912
    %v1468 = vmul.f32 %v1467, %v912
    %v1469 = vmul.f32 %v1468, %v1467
    %v1470 = vmul.f32 0.5, %v1469
    %v1471 = vsub.f32 1.5, %v1470
    %v1472 = vmul.f32 %v1467, %v1471
    %vm1473 = vweird.f32 %v912
    %vm1474 = vweird.f32 %v1467
    %vm1475 = vmor %vm1473, %vm1474
    %v1476 = vsel %vm1475, %v1467, %v1472
    %v1477 = vrsqrt.pop %v913
    %v1478 = vmul.f32 %v1477, %v913
    %v1479 = vmul.f32 %v1478, %v1477
    %v1480 = vmul.f32 0.5, %v1479
    %v1481 = vsub.f32 1.5, %v1480
    %v1482 = vmul.f32 %v1477, %v1481
    %vm1483 = vweird.f32 %v913
    %vm1484 = vweird.f32 %v1477
    %vm1485 = vmor %vm1483, %vm1484
    %v1486 = vsel %vm1485, %v1477, %v1482
    %v1487 = vrsqrt.pop %v914
    %v1488 = vmul.f32 %v1487, %v914
    %v1489 = vmul.f32 %v1488, %v1487
    %v1490 = vmul.f32 0.5, %v1489
    %v1491 = vsub.f32 1.5, %v1490
    %v1492 = vmul.f32 %v1487, %v1491
    %vm1493 = vweird.f32 %v914
    %vm1494 = vweird.f32 %v1487
    %vm1495 = vmor %vm1493, %vm1494
    %v1496 = vsel %vm1495, %v1487, %v1492
    %v1497 = vrsqrt.pop %v915
    %v1498 = vmul.f32 %v1497, %v915
    %v1499 = vmul.f32 %v1498, %v1497
    %v1500 = vmul.f32 0.5, %v1499
    %v1501 = vsub.f32 1.5, %v1500
    %v1502 = vmul.f32 %v1497, %v1501
    %vm1503 = vweird.f32 %v915
    %vm1504 = vweird.f32 %v1497
    %vm1505 = vmor %vm1503, %vm1504
    %v1506 = vsel %vm1505, %v1497, %v1502
    %v1507 = vrsqrt.pop %v916
    %v1508 = vmul.f32 %v1507, %v916
    %v1509 = vmul.f32 %v1508, %v1507
    %v1510 = vmul.f32 0.5, %v1509
    %v1511 = vsub.f32 1.5, %v1510
    %v1512 = vmul.f32 %v1507, %v1511
    %vm1513 = vweird.f32 %v916
    %vm1514 = vweird.f32 %v1507
    %vm1515 = vmor %vm1513, %vm1514
    %v1516 = vsel %vm1515, %v1507, %v1512
    %v1517 = vmul.f32 %v978, %v1276
    %v1518 = vmul.f32 %v990, %v1286
    %v1519 = vmul.f32 %v1002, %v1296
    %v1520 = vmul.f32 %v1014, %v1306
    %v1521 = vmul.f32 %v1026, %v1316
    %v1522 = vmul.f32 %v1038, %v1326
    %v1523 = vmul.f32 %v1050, %v1336
    %v1524 = vmul.f32 %v1062, %v1346
    %v1525 = vmul.f32 %v1074, %v1356
    %v1526 = vmul.f32 %v1086, %v1366
    %v1527 = vmul.f32 %v1098, %v1376
    %v1528 = vmul.f32 %v1110, %v1386
    %v1529 = vmul.f32 %v1122, %v1396
    %v1530 = vmul.f32 %v1134, %v1406
    %v1531 = vmul.f32 %v1146, %v1416
    %v1532 = vmul.f32 %v1158, %v1426
    %v1533 = vmul.f32 %v1170, %v1436
    %v1534 = vmul.f32 %v1182, %v1446
    %v1535 = vmul.f32 %v1194, %v1456
    %v1536 = vmul.f32 %v1206, %v1466
    %v1537 = vmul.f32 %v1218, %v1476
    %v1538 = vmul.f32 %v1230, %v1486
    %v1539 = vmul.f32 %v1242, %v1496
    %v1540 = vmul.f32 %v1254, %v1506
    %v1541 = vmul.f32 %v1266, %v1516
    %v1542 = vlaneseq
    %v1543 = vand.u32 %v1542, 127
    %vm1544 = vcmp.eq.s32.totalorder %v1543, 0
    %v1545 = vmul.f32 %v742, -1.0
    %v1546 = vmul.f32 %v743, -1.0
    %v1547 = vmul.f32 %v744, -1.0
    %v1548 = vmul.f32 %v745, -1.0
    %v1549 = vmul.f32 %v746, -1.0
    %v1550 = vmul.f32 %v747, -1.0
    %v1551 = vmul.f32 %v748, -1.0
    %v1552 = vmul.f32 %v749, -1.0
    %v1553 = vmul.f32 %v750, -1.0
    %v1554 = vmul.f32 %v751, -1.0
    %v1555 = vmul.f32 %v752, -1.0
    %v1556 = vmul.f32 %v753, -1.0
    %v1557 = vmul.f32 %v754, -1.0
    %v1558 = vmul.f32 %v755, -1.0
    %v1559 = vmul.f32 %v756, -1.0
    %v1560 = vmul.f32 %v757, -1.0
    %v1561 = vmul.f32 %v758, -1.0
    %v1562 = vmul.f32 %v759, -1.0
    %v1563 = vmul.f32 %v760, -1.0
    %v1564 = vmul.f32 %v761, -1.0
    %v1565 = vmul.f32 %v762, -1.0
    %v1566 = vmul.f32 %v763, -1.0
    %v1567 = vmul.f32 %v764, -1.0
    %v1568 = vmul.f32 %v765, -1.0
    %v1569 = vmul.f32 %v766, -1.0
    %1571 = vset.pattern.permute.xlu0 0
    %1572 = vperm.xlu0 %1571, %v1517
    %v1573 = vpop.permute.xlu0 %1572
    %1576 = vset.pattern.permute.xlu0 0
    %1577 = vperm.xlu0 %1576, %v1518
    %v1578 = vpop.permute.xlu0 %1577
    %1581 = vset.pattern.permute.xlu0 0
    %1582 = vperm.xlu0 %1581, %v1519
    %v1583 = vpop.permute.xlu0 %1582
    %1586 = vset.pattern.permute.xlu0 0
    %1587 = vperm.xlu0 %1586, %v1520
    %v1588 = vpop.permute.xlu0 %1587
    %1591 = vset.pattern.permute.xlu0 0
    %1592 = vperm.xlu0 %1591, %v1521
    %v1593 = vpop.permute.xlu0 %1592
    %1596 = vset.pattern.permute.xlu0 0
    %1597 = vperm.xlu0 %1596, %v1522
    %v1598 = vpop.permute.xlu0 %1597
    %1601 = vset.pattern.permute.xlu0 0
    %1602 = vperm.xlu0 %1601, %v1523
    %v1603 = vpop.permute.xlu0 %1602
    %1606 = vset.pattern.permute.xlu0 0
    %1607 = vperm.xlu0 %1606, %v1524
    %v1608 = vpop.permute.xlu0 %1607
    %1611 = vset.pattern.permute.xlu0 0
    %1612 = vperm.xlu0 %1611, %v1525
    %v1613 = vpop.permute.xlu0 %1612
    %1616 = vset.pattern.permute.xlu0 0
    %1617 = vperm.xlu0 %1616, %v1526
    %v1618 = vpop.permute.xlu0 %1617
    %1621 = vset.pattern.permute.xlu0 0
    %1622 = vperm.xlu0 %1621, %v1527
    %v1623 = vpop.permute.xlu0 %1622
    %1626 = vset.pattern.permute.xlu0 0
    %1627 = vperm.xlu0 %1626, %v1528
    %v1628 = vpop.permute.xlu0 %1627
    %1631 = vset.pattern.permute.xlu0 0
    %1632 = vperm.xlu0 %1631, %v1529
    %v1633 = vpop.permute.xlu0 %1632
    %1636 = vset.pattern.permute.xlu0 0
    %1637 = vperm.xlu0 %1636, %v1530
    %v1638 = vpop.permute.xlu0 %1637
    %1641 = vset.pattern.permute.xlu0 0
    %1642 = vperm.xlu0 %1641, %v1531
    %v1643 = vpop.permute.xlu0 %1642
    %1646 = vset.pattern.permute.xlu0 0
    %1647 = vperm.xlu0 %1646, %v1532
    %v1648 = vpop.permute.xlu0 %1647
    %1651 = vset.pattern.permute.xlu0 0
    %1652 = vperm.xlu0 %1651, %v1533
    %v1653 = vpop.permute.xlu0 %1652
    %1656 = vset.pattern.permute.xlu0 0
    %1657 = vperm.xlu0 %1656, %v1534
    %v1658 = vpop.permute.xlu0 %1657
    %1661 = vset.pattern.permute.xlu0 0
    %1662 = vperm.xlu0 %1661, %v1535
    %v1663 = vpop.permute.xlu0 %1662
    %1666 = vset.pattern.permute.xlu0 0
    %1667 = vperm.xlu0 %1666, %v1536
    %v1668 = vpop.permute.xlu0 %1667
    %1671 = vset.pattern.permute.xlu0 0
    %1672 = vperm.xlu0 %1671, %v1537
    %v1673 = vpop.permute.xlu0 %1672
    %1676 = vset.pattern.permute.xlu0 0
    %1677 = vperm.xlu0 %1676, %v1538
    %v1678 = vpop.permute.xlu0 %1677
    %1681 = vset.pattern.permute.xlu0 0
    %1682 = vperm.xlu0 %1681, %v1539
    %v1683 = vpop.permute.xlu0 %1682
    %1686 = vset.pattern.permute.xlu0 0
    %1687 = vperm.xlu0 %1686, %v1540
    %v1688 = vpop.permute.xlu0 %1687
    %1691 = vset.pattern.permute.xlu0 0
    %1692 = vperm.xlu0 %1691, %v1541
    %v1693 = vpop.permute.xlu0 %1692
    %v1695 = vmul.f32 %v166, %v1573
    %v1696 = vmul.f32 %v169, %v1578
    %v1697 = vmul.f32 %v172, %v1583
    %v1698 = vmul.f32 %v175, %v1588
    %v1699 = vmul.f32 %v178, %v1593
    %v1700 = vmul.f32 %v181, %v1598
    %v1701 = vmul.f32 %v184, %v1603
    %v1702 = vmul.f32 %v187, %v1608
    %v1703 = vmul.f32 %v190, %v1613
    %v1704 = vmul.f32 %v193, %v1618
    %v1705 = vmul.f32 %v196, %v1623
    %v1706 = vmul.f32 %v199, %v1628
    %v1707 = vmul.f32 %v202, %v1633
    %v1708 = vmul.f32 %v205, %v1638
    %v1709 = vmul.f32 %v208, %v1643
    %v1710 = vmul.f32 %v211, %v1648
    %v1711 = vmul.f32 %v214, %v1653
    %v1712 = vmul.f32 %v217, %v1658
    %v1713 = vmul.f32 %v220, %v1663
    %v1714 = vmul.f32 %v223, %v1668
    %v1715 = vmul.f32 %v226, %v1673
    %v1716 = vmul.f32 %v229, %v1678
    %v1717 = vmul.f32 %v232, %v1683
    %v1718 = vmul.f32 %v235, %v1688
    %v1719 = vmul.f32 %v238, %v1693
    %1721 = vset.pattern.permute.xlu0 0
    %1722 = vperm.xlu0 %1721, %v1545
    %v1723 = vpop.permute.xlu0 %1722
    %1726 = vset.pattern.permute.xlu0 0
    %1727 = vperm.xlu0 %1726, %v1546
    %v1728 = vpop.permute.xlu0 %1727
    %1731 = vset.pattern.permute.xlu0 0
    %1732 = vperm.xlu0 %1731, %v1547
    %v1733 = vpop.permute.xlu0 %1732
    %1736 = vset.pattern.permute.xlu0 0
    %1737 = vperm.xlu0 %1736, %v1548
    %v1738 = vpop.permute.xlu0 %1737
    %1741 = vset.pattern.permute.xlu0 0
    %1742 = vperm.xlu0 %1741, %v1549
    %v1743 = vpop.permute.xlu0 %1742
    %1746 = vset.pattern.permute.xlu0 0
    %1747 = vperm.xlu0 %1746, %v1550
    %v1748 = vpop.permute.xlu0 %1747
    %1751 = vset.pattern.permute.xlu0 0
    %1752 = vperm.xlu0 %1751, %v1551
    %v1753 = vpop.permute.xlu0 %1752
    %1756 = vset.pattern.permute.xlu0 0
    %1757 = vperm.xlu0 %1756, %v1552
    %v1758 = vpop.permute.xlu0 %1757
    %1761 = vset.pattern.permute.xlu0 0
    %1762 = vperm.xlu0 %1761, %v1553
    %v1763 = vpop.permute.xlu0 %1762
    %1766 = vset.pattern.permute.xlu0 0
    %1767 = vperm.xlu0 %1766, %v1554
    %v1768 = vpop.permute.xlu0 %1767
    %1771 = vset.pattern.permute.xlu0 0
    %1772 = vperm.xlu0 %1771, %v1555
    %v1773 = vpop.permute.xlu0 %1772
    %1776 = vset.pattern.permute.xlu0 0
    %1777 = vperm.xlu0 %1776, %v1556
    %v1778 = vpop.permute.xlu0 %1777
    %1781 = vset.pattern.permute.xlu0 0
    %1782 = vperm.xlu0 %1781, %v1557
    %v1783 = vpop.permute.xlu0 %1782
    %1786 = vset.pattern.permute.xlu0 0
    %1787 = vperm.xlu0 %1786, %v1558
    %v1788 = vpop.permute.xlu0 %1787
    %1791 = vset.pattern.permute.xlu0 0
    %1792 = vperm.xlu0 %1791, %v1559
    %v1793 = vpop.permute.xlu0 %1792
    %1796 = vset.pattern.permute.xlu0 0
    %1797 = vperm.xlu0 %1796, %v1560
    %v1798 = vpop.permute.xlu0 %1797
    %1801 = vset.pattern.permute.xlu0 0
    %1802 = vperm.xlu0 %1801, %v1561
    %v1803 = vpop.permute.xlu0 %1802
    %1806 = vset.pattern.permute.xlu0 0
    %1807 = vperm.xlu0 %1806, %v1562
    %v1808 = vpop.permute.xlu0 %1807
    %1811 = vset.pattern.permute.xlu0 0
    %1812 = vperm.xlu0 %1811, %v1563
    %v1813 = vpop.permute.xlu0 %1812
    %1816 = vset.pattern.permute.xlu0 0
    %1817 = vperm.xlu0 %1816, %v1564
    %v1818 = vpop.permute.xlu0 %1817
    %1821 = vset.pattern.permute.xlu0 0
    %1822 = vperm.xlu0 %1821, %v1565
    %v1823 = vpop.permute.xlu0 %1822
    %1826 = vset.pattern.permute.xlu0 0
    %1827 = vperm.xlu0 %1826, %v1566
    %v1828 = vpop.permute.xlu0 %1827
    %1831 = vset.pattern.permute.xlu0 0
    %1832 = vperm.xlu0 %1831, %v1567
    %v1833 = vpop.permute.xlu0 %1832
    %1836 = vset.pattern.permute.xlu0 0
    %1837 = vperm.xlu0 %1836, %v1568
    %v1838 = vpop.permute.xlu0 %1837
    %1841 = vset.pattern.permute.xlu0 0
    %1842 = vperm.xlu0 %1841, %v1569
    %v1843 = vpop.permute.xlu0 %1842
    %v1845 = vsel %vm1544, %v1723, %v1695
    %v1846 = vsel %vm1544, %v1728, %v1696
    %v1847 = vsel %vm1544, %v1733, %v1697
    %v1848 = vsel %vm1544, %v1738, %v1698
    %v1849 = vsel %vm1544, %v1743, %v1699
    %v1850 = vsel %vm1544, %v1748, %v1700
    %v1851 = vsel %vm1544, %v1753, %v1701
    %v1852 = vsel %vm1544, %v1758, %v1702
    %v1853 = vsel %vm1544, %v1763, %v1703
    %v1854 = vsel %vm1544, %v1768, %v1704
    %v1855 = vsel %vm1544, %v1773, %v1705
    %v1856 = vsel %vm1544, %v1778, %v1706
    %v1857 = vsel %vm1544, %v1783, %v1707
    %v1858 = vsel %vm1544, %v1788, %v1708
    %v1859 = vsel %vm1544, %v1793, %v1709
    %v1860 = vsel %vm1544, %v1798, %v1710
    %v1861 = vsel %vm1544, %v1803, %v1711
    %v1862 = vsel %vm1544, %v1808, %v1712
    %v1863 = vsel %vm1544, %v1813, %v1713
    %v1864 = vsel %vm1544, %v1818, %v1714
    %v1865 = vsel %vm1544, %v1823, %v1715
    %v1866 = vsel %vm1544, %v1828, %v1716
    %v1867 = vsel %vm1544, %v1833, %v1717
    %v1868 = vsel %vm1544, %v1838, %v1718
    %v1869 = vsel %vm1544, %v1843, %v1719
    %v1870 = vld [vmem:[%s4] sm:$0xff]
    %v1871 = vld [vmem:[%s4 + $0x8] sm:$0xff]
    %v1872 = vld [vmem:[%s4 + $0x10] sm:$0xff]
    %v1873 = vld [vmem:[%s4 + $0x18] sm:$0xff]
    %v1874 = vld [vmem:[%s4 + $0x20] sm:$0xff]
    %v1875 = vld [vmem:[%s4 + $0x28] sm:$0xff]
    %v1876 = vld [vmem:[%s4 + $0x30] sm:$0xff]
    %v1877 = vld [vmem:[%s4 + $0x38] sm:$0xff]
    %v1879 = vsel %vm72, %v1845, 0
    %v1882 = vsel %vm72, %v1846, 0
    %v1885 = vsel %vm72, %v1847, 0
    %v1888 = vsel %vm72, %v1848, 0
    %v1891 = vsel %vm72, %v1849, 0
    %v1894 = vsel %vm72, %v1850, 0
    %v1897 = vsel %vm72, %v1851, 0
    %v1900 = vsel %vm72, %v1852, 0
    %v1903 = vsel %vm72, %v1853, 0
    %v1906 = vsel %vm72, %v1854, 0
    %v1909 = vsel %vm72, %v1855, 0
    %v1912 = vsel %vm72, %v1856, 0
    %v1915 = vsel %vm72, %v1857, 0
    %v1918 = vsel %vm72, %v1858, 0
    %v1921 = vsel %vm72, %v1859, 0
    %v1924 = vsel %vm72, %v1860, 0
    %v1927 = vsel %vm72, %v1861, 0
    %v1930 = vsel %vm72, %v1862, 0
    %v1933 = vsel %vm72, %v1863, 0
    %v1936 = vsel %vm72, %v1864, 0
    %v1939 = vsel %vm72, %v1865, 0
    %v1942 = vsel %vm72, %v1866, 0
    %v1945 = vsel %vm72, %v1867, 0
    %v1948 = vsel %vm72, %v1868, 0
    %v1951 = vsel %vm72, %v1869, 0
    %1953 = vmatpush.msra.mxu0 0.0
    %1954 = vmatpush.msra.mxu0 0.0
    %1955 = vmatpush.msra.mxu0 0.0
    %1956 = vmatpush.msra.mxu0 0.0
    %1957 = vmatpush.msra.mxu0 0.0
    %1958 = vmatpush.msra.mxu0 0.0
    %1959 = vmatpush.msra.mxu0 0.0
    %1960 = vmatpush.msra.mxu0 0.0
    %1961 = vmatpush.msra.mxu0 0.0
    %1962 = vmatpush.msra.mxu0 0.0
    %1963 = vmatpush.msra.mxu0 0.0
    %1964 = vmatpush.msra.mxu0 0.0
    %1965 = vmatpush.msra.mxu0 %v1876
    %1966 = vmatpush.msra.mxu0 %v1874
    %1967 = vmatpush.msra.mxu0 %v1872
    %1968 = vmatpush.msra.mxu0 %v1870
    %1969 = vmatmul.f32.gmra.mxu0 %v1879
    %v1970 = vpop.f32.mrf.mxu0
    %v1971 = vadd.f32 0.0, %v1970
    %1972 = vmatmul.f32.gmra.mxu0 %v1882
    %v1973 = vpop.f32.mrf.mxu0
    %v1974 = vadd.f32 0.0, %v1973
    %1975 = vmatmul.f32.gmra.mxu0 %v1885
    %v1976 = vpop.f32.mrf.mxu0
    %v1977 = vadd.f32 0.0, %v1976
    %1978 = vmatmul.f32.gmra.mxu0 %v1888
    %v1979 = vpop.f32.mrf.mxu0
    %v1980 = vadd.f32 0.0, %v1979
    %1981 = vmatmul.f32.gmra.mxu0 %v1891
    %v1982 = vpop.f32.mrf.mxu0
    %v1983 = vadd.f32 0.0, %v1982
    %1984 = vmatmul.f32.gmra.mxu0 %v1894
    %v1985 = vpop.f32.mrf.mxu0
    %v1986 = vadd.f32 0.0, %v1985
    %1987 = vmatmul.f32.gmra.mxu0 %v1897
    %v1988 = vpop.f32.mrf.mxu0
    %v1989 = vadd.f32 0.0, %v1988
    %1990 = vmatmul.f32.gmra.mxu0 %v1900
    %v1991 = vpop.f32.mrf.mxu0
    %v1992 = vadd.f32 0.0, %v1991
    %1993 = vmatmul.f32.gmra.mxu0 %v1903
    %v1994 = vpop.f32.mrf.mxu0
    %v1995 = vadd.f32 0.0, %v1994
    %1996 = vmatmul.f32.gmra.mxu0 %v1906
    %v1997 = vpop.f32.mrf.mxu0
    %v1998 = vadd.f32 0.0, %v1997
    %1999 = vmatmul.f32.gmra.mxu0 %v1909
    %v2000 = vpop.f32.mrf.mxu0
    %v2001 = vadd.f32 0.0, %v2000
    %2002 = vmatmul.f32.gmra.mxu0 %v1912
    %v2003 = vpop.f32.mrf.mxu0
    %v2004 = vadd.f32 0.0, %v2003
    %2005 = vmatmul.f32.gmra.mxu0 %v1915
    %v2006 = vpop.f32.mrf.mxu0
    %v2007 = vadd.f32 0.0, %v2006
    %2008 = vmatmul.f32.gmra.mxu0 %v1918
    %v2009 = vpop.f32.mrf.mxu0
    %v2010 = vadd.f32 0.0, %v2009
    %2011 = vmatmul.f32.gmra.mxu0 %v1921
    %v2012 = vpop.f32.mrf.mxu0
    %v2013 = vadd.f32 0.0, %v2012
    %2014 = vmatmul.f32.gmra.mxu0 %v1924
    %v2015 = vpop.f32.mrf.mxu0
    %v2016 = vadd.f32 0.0, %v2015
    %2017 = vmatmul.f32.gmra.mxu0 %v1927
    %v2018 = vpop.f32.mrf.mxu0
    %v2019 = vadd.f32 0.0, %v2018
    %2020 = vmatmul.f32.gmra.mxu0 %v1930
    %v2021 = vpop.f32.mrf.mxu0
    %v2022 = vadd.f32 0.0, %v2021
    %2023 = vmatmul.f32.gmra.mxu0 %v1933
    %v2024 = vpop.f32.mrf.mxu0
    %v2025 = vadd.f32 0.0, %v2024
    %2026 = vmatmul.f32.gmra.mxu0 %v1936
    %v2027 = vpop.f32.mrf.mxu0
    %v2028 = vadd.f32 0.0, %v2027
    %2029 = vmatmul.f32.gmra.mxu0 %v1939
    %v2030 = vpop.f32.mrf.mxu0
    %v2031 = vadd.f32 0.0, %v2030
    %2032 = vmatmul.f32.gmra.mxu0 %v1942
    %v2033 = vpop.f32.mrf.mxu0
    %v2034 = vadd.f32 0.0, %v2033
    %2035 = vmatmul.f32.gmra.mxu0 %v1945
    %v2036 = vpop.f32.mrf.mxu0
    %v2037 = vadd.f32 0.0, %v2036
    %2038 = vmatmul.f32.gmra.mxu0 %v1948
    %v2039 = vpop.f32.mrf.mxu0
    %v2040 = vadd.f32 0.0, %v2039
    %2041 = vmatmul.f32.gmra.mxu0 %v1951
    %v2042 = vpop.f32.mrf.mxu0
    %v2043 = vadd.f32 0.0, %v2042
    %2044 = vdwg.mxu0
    %2045 = vmatpush.msra.mxu0 0.0
    %2046 = vmatpush.msra.mxu0 0.0
    %2047 = vmatpush.msra.mxu0 0.0
    %2048 = vmatpush.msra.mxu0 0.0
    %2049 = vmatpush.msra.mxu0 0.0
    %2050 = vmatpush.msra.mxu0 0.0
    %2051 = vmatpush.msra.mxu0 0.0
    %2052 = vmatpush.msra.mxu0 0.0
    %2053 = vmatpush.msra.mxu0 0.0
    %2054 = vmatpush.msra.mxu0 0.0
    %2055 = vmatpush.msra.mxu0 0.0
    %2056 = vmatpush.msra.mxu0 0.0
    %2057 = vmatpush.msra.mxu0 %v1877
    %2058 = vmatpush.msra.mxu0 %v1875
    %2059 = vmatpush.msra.mxu0 %v1873
    %2060 = vmatpush.msra.mxu0 %v1871
    %2061 = vmatmul.f32.gmra.mxu0 %v1879
    %v2062 = vpop.f32.mrf.mxu0
    %v2063 = vadd.f32 0.0, %v2062
    %2064 = vmatmul.f32.gmra.mxu0 %v1882
    %v2065 = vpop.f32.mrf.mxu0
    %v2066 = vadd.f32 0.0, %v2065
    %2067 = vmatmul.f32.gmra.mxu0 %v1885
    %v2068 = vpop.f32.mrf.mxu0
    %v2069 = vadd.f32 0.0, %v2068
    %2070 = vmatmul.f32.gmra.mxu0 %v1888
    %v2071 = vpop.f32.mrf.mxu0
    %v2072 = vadd.f32 0.0, %v2071
    %2073 = vmatmul.f32.gmra.mxu0 %v1891
    %v2074 = vpop.f32.mrf.mxu0
    %v2075 = vadd.f32 0.0, %v2074
    %2076 = vmatmul.f32.gmra.mxu0 %v1894
    %v2077 = vpop.f32.mrf.mxu0
    %v2078 = vadd.f32 0.0, %v2077
    %2079 = vmatmul.f32.gmra.mxu0 %v1897
    %v2080 = vpop.f32.mrf.mxu0
    %v2081 = vadd.f32 0.0, %v2080
    %2082 = vmatmul.f32.gmra.mxu0 %v1900
    %v2083 = vpop.f32.mrf.mxu0
    %v2084 = vadd.f32 0.0, %v2083
    %2085 = vmatmul.f32.gmra.mxu0 %v1903
    %v2086 = vpop.f32.mrf.mxu0
    %v2087 = vadd.f32 0.0, %v2086
    %2088 = vmatmul.f32.gmra.mxu0 %v1906
    %v2089 = vpop.f32.mrf.mxu0
    %v2090 = vadd.f32 0.0, %v2089
    %2091 = vmatmul.f32.gmra.mxu0 %v1909
    %v2092 = vpop.f32.mrf.mxu0
    %v2093 = vadd.f32 0.0, %v2092
    %2094 = vmatmul.f32.gmra.mxu0 %v1912
    %v2095 = vpop.f32.mrf.mxu0
    %v2096 = vadd.f32 0.0, %v2095
    %2097 = vmatmul.f32.gmra.mxu0 %v1915
    %v2098 = vpop.f32.mrf.mxu0
    %v2099 = vadd.f32 0.0, %v2098
    %2100 = vmatmul.f32.gmra.mxu0 %v1918
    %v2101 = vpop.f32.mrf.mxu0
    %v2102 = vadd.f32 0.0, %v2101
    %2103 = vmatmul.f32.gmra.mxu0 %v1921
    %v2104 = vpop.f32.mrf.mxu0
    %v2105 = vadd.f32 0.0, %v2104
    %2106 = vmatmul.f32.gmra.mxu0 %v1924
    %v2107 = vpop.f32.mrf.mxu0
    %v2108 = vadd.f32 0.0, %v2107
    %2109 = vmatmul.f32.gmra.mxu0 %v1927
    %v2110 = vpop.f32.mrf.mxu0
    %v2111 = vadd.f32 0.0, %v2110
    %2112 = vmatmul.f32.gmra.mxu0 %v1930
    %v2113 = vpop.f32.mrf.mxu0
    %v2114 = vadd.f32 0.0, %v2113
    %2115 = vmatmul.f32.gmra.mxu0 %v1933
    %v2116 = vpop.f32.mrf.mxu0
    %v2117 = vadd.f32 0.0, %v2116
    %2118 = vmatmul.f32.gmra.mxu0 %v1936
    %v2119 = vpop.f32.mrf.mxu0
    %v2120 = vadd.f32 0.0, %v2119
    %2121 = vmatmul.f32.gmra.mxu0 %v1939
    %v2122 = vpop.f32.mrf.mxu0
    %v2123 = vadd.f32 0.0, %v2122
    %2124 = vmatmul.f32.gmra.mxu0 %v1942
    %v2125 = vpop.f32.mrf.mxu0
    %v2126 = vadd.f32 0.0, %v2125
    %2127 = vmatmul.f32.gmra.mxu0 %v1945
    %v2128 = vpop.f32.mrf.mxu0
    %v2129 = vadd.f32 0.0, %v2128
    %2130 = vmatmul.f32.gmra.mxu0 %v1948
    %v2131 = vpop.f32.mrf.mxu0
    %v2132 = vadd.f32 0.0, %v2131
    %2133 = vmatmul.f32.gmra.mxu0 %v1951
    %v2134 = vpop.f32.mrf.mxu0
    %v2135 = vadd.f32 0.0, %v2134
    %2136 = vdwg.mxu0
    %s2137 = sld [smem:[#allocation2 + $0x1]]
    %v2138 = vstv %s2137
    %v2139 = vmul.f32 %v2138, %v1971
    %v2140 = vmul.f32 %v2138, %v2063
    %v2141 = vmul.f32 %v2138, %v1974
    %v2142 = vmul.f32 %v2138, %v2066
    %v2143 = vmul.f32 %v2138, %v1977
    %v2144 = vmul.f32 %v2138, %v2069
    %v2145 = vmul.f32 %v2138, %v1980
    %v2146 = vmul.f32 %v2138, %v2072
    %v2147 = vmul.f32 %v2138, %v1983
    %v2148 = vmul.f32 %v2138, %v2075
    %v2149 = vmul.f32 %v2138, %v1986
    %v2150 = vmul.f32 %v2138, %v2078
    %v2151 = vmul.f32 %v2138, %v1989
    %v2152 = vmul.f32 %v2138, %v2081
    %v2153 = vmul.f32 %v2138, %v1992
    %v2154 = vmul.f32 %v2138, %v2084
    %v2155 = vmul.f32 %v2138, %v1995
    %v2156 = vmul.f32 %v2138, %v2087
    %v2157 = vmul.f32 %v2138, %v1998
    %v2158 = vmul.f32 %v2138, %v2090
    %v2159 = vmul.f32 %v2138, %v2001
    %v2160 = vmul.f32 %v2138, %v2093
    %v2161 = vmul.f32 %v2138, %v2004
    %v2162 = vmul.f32 %v2138, %v2096
    %v2163 = vmul.f32 %v2138, %v2007
    %v2164 = vmul.f32 %v2138, %v2099
    %v2165 = vmul.f32 %v2138, %v2010
    %v2166 = vmul.f32 %v2138, %v2102
    %v2167 = vmul.f32 %v2138, %v2013
    %v2168 = vmul.f32 %v2138, %v2105
    %v2169 = vmul.f32 %v2138, %v2016
    %v2170 = vmul.f32 %v2138, %v2108
    %v2171 = vmul.f32 %v2138, %v2019
    %v2172 = vmul.f32 %v2138, %v2111
    %v2173 = vmul.f32 %v2138, %v2022
    %v2174 = vmul.f32 %v2138, %v2114
    %v2175 = vmul.f32 %v2138, %v2025
    %v2176 = vmul.f32 %v2138, %v2117
    %v2177 = vmul.f32 %v2138, %v2028
    %v2178 = vmul.f32 %v2138, %v2120
    %v2179 = vmul.f32 %v2138, %v2031
    %v2180 = vmul.f32 %v2138, %v2123
    %v2181 = vmul.f32 %v2138, %v2034
    %v2182 = vmul.f32 %v2138, %v2126
    %v2183 = vmul.f32 %v2138, %v2037
    %v2184 = vmul.f32 %v2138, %v2129
    %v2185 = vmul.f32 %v2138, %v2040
    %v2186 = vmul.f32 %v2138, %v2132
    %v2187 = vmul.f32 %v2138, %v2043
    %v2188 = vmul.f32 %v2138, %v2135
    %s2189 = sld [smem:[#allocation2 + $0x2]]
    %v2190 = vstv %s2189
    %v2191 = vadd.f32 %v2139, %v2190
    %v2192 = vadd.f32 %v2140, %v2190
    %v2193 = vadd.f32 %v2141, %v2190
    %v2194 = vadd.f32 %v2142, %v2190
    %v2195 = vadd.f32 %v2143, %v2190
    %v2196 = vadd.f32 %v2144, %v2190
    %v2197 = vadd.f32 %v2145, %v2190
    %v2198 = vadd.f32 %v2146, %v2190
    %v2199 = vadd.f32 %v2147, %v2190
    %v2200 = vadd.f32 %v2148, %v2190
    %v2201 = vadd.f32 %v2149, %v2190
    %v2202 = vadd.f32 %v2150, %v2190
    %v2203 = vadd.f32 %v2151, %v2190
    %v2204 = vadd.f32 %v2152, %v2190
    %v2205 = vadd.f32 %v2153, %v2190
    %v2206 = vadd.f32 %v2154, %v2190
    %v2207 = vadd.f32 %v2155, %v2190
    %v2208 = vadd.f32 %v2156, %v2190
    %v2209 = vadd.f32 %v2157, %v2190
    %v2210 = vadd.f32 %v2158, %v2190
    %v2211 = vadd.f32 %v2159, %v2190
    %v2212 = vadd.f32 %v2160, %v2190
    %v2213 = vadd.f32 %v2161, %v2190
    %v2214 = vadd.f32 %v2162, %v2190
    %v2215 = vadd.f32 %v2163, %v2190
    %v2216 = vadd.f32 %v2164, %v2190
    %v2217 = vadd.f32 %v2165, %v2190
    %v2218 = vadd.f32 %v2166, %v2190
    %v2219 = vadd.f32 %v2167, %v2190
    %v2220 = vadd.f32 %v2168, %v2190
    %v2221 = vadd.f32 %v2169, %v2190
    %v2222 = vadd.f32 %v2170, %v2190
    %v2223 = vadd.f32 %v2171, %v2190
    %v2224 = vadd.f32 %v2172, %v2190
    %v2225 = vadd.f32 %v2173, %v2190
    %v2226 = vadd.f32 %v2174, %v2190
    %v2227 = vadd.f32 %v2175, %v2190
    %v2228 = vadd.f32 %v2176, %v2190
    %v2229 = vadd.f32 %v2177, %v2190
    %v2230 = vadd.f32 %v2178, %v2190
    %v2231 = vadd.f32 %v2179, %v2190
    %v2232 = vadd.f32 %v2180, %v2190
    %v2233 = vadd.f32 %v2181, %v2190
    %v2234 = vadd.f32 %v2182, %v2190
    %v2235 = vadd.f32 %v2183, %v2190
    %v2236 = vadd.f32 %v2184, %v2190
    %v2237 = vadd.f32 %v2185, %v2190
    %v2238 = vadd.f32 %v2186, %v2190
    %v2239 = vadd.f32 %v2187, %v2190
    %v2240 = vadd.f32 %v2188, %v2190
    %v2241 = vxor.u32 %v2191, 2147483648
    %v2242 = vxor.u32 %v2192, 2147483648
    %v2243 = vxor.u32 %v2193, 2147483648
    %v2244 = vxor.u32 %v2194, 2147483648
    %v2245 = vxor.u32 %v2195, 2147483648
    %v2246 = vxor.u32 %v2196, 2147483648
    %v2247 = vxor.u32 %v2197, 2147483648
    %v2248 = vxor.u32 %v2198, 2147483648
    %v2249 = vxor.u32 %v2199, 2147483648
    %v2250 = vxor.u32 %v2200, 2147483648
    %v2251 = vxor.u32 %v2201, 2147483648
    %v2252 = vxor.u32 %v2202, 2147483648
    %v2253 = vxor.u32 %v2203, 2147483648
    %v2254 = vxor.u32 %v2204, 2147483648
    %v2255 = vxor.u32 %v2205, 2147483648
    %v2256 = vxor.u32 %v2206, 2147483648
    %v2257 = vxor.u32 %v2207, 2147483648
    %v2258 = vxor.u32 %v2208, 2147483648
    %v2259 = vxor.u32 %v2209, 2147483648
    %v2260 = vxor.u32 %v2210, 2147483648
    %v2261 = vxor.u32 %v2211, 2147483648
    %v2262 = vxor.u32 %v2212, 2147483648
    %v2263 = vxor.u32 %v2213, 2147483648
    %v2264 = vxor.u32 %v2214, 2147483648
    %v2265 = vxor.u32 %v2215, 2147483648
    %v2266 = vxor.u32 %v2216, 2147483648
    %v2267 = vxor.u32 %v2217, 2147483648
    %v2268 = vxor.u32 %v2218, 2147483648
    %v2269 = vxor.u32 %v2219, 2147483648
    %v2270 = vxor.u32 %v2220, 2147483648
    %v2271 = vxor.u32 %v2221, 2147483648
    %v2272 = vxor.u32 %v2222, 2147483648
    %v2273 = vxor.u32 %v2223, 2147483648
    %v2274 = vxor.u32 %v2224, 2147483648
    %v2275 = vxor.u32 %v2225, 2147483648
    %v2276 = vxor.u32 %v2226, 2147483648
    %v2277 = vxor.u32 %v2227, 2147483648
    %v2278 = vxor.u32 %v2228, 2147483648
    %v2279 = vxor.u32 %v2229, 2147483648
    %v2280 = vxor.u32 %v2230, 2147483648
    %v2281 = vxor.u32 %v2231, 2147483648
    %v2282 = vxor.u32 %v2232, 2147483648
    %v2283 = vxor.u32 %v2233, 2147483648
    %v2284 = vxor.u32 %v2234, 2147483648
    %v2285 = vxor.u32 %v2235, 2147483648
    %v2286 = vxor.u32 %v2236, 2147483648
    %v2287 = vxor.u32 %v2237, 2147483648
    %v2288 = vxor.u32 %v2238, 2147483648
    %v2289 = vxor.u32 %v2239, 2147483648
    %v2290 = vxor.u32 %v2240, 2147483648
    %v2291 = vmul.f32 %v2241, 1.442695
    %v2292 = vpow.pop %v2291
    %v2293 = vmul.f32 %v2242, 1.442695
    %v2294 = vpow.pop %v2293
    %v2295 = vmul.f32 %v2243, 1.442695
    %v2296 = vpow.pop %v2295
    %v2297 = vmul.f32 %v2244, 1.442695
    %v2298 = vpow.pop %v2297
    %v2299 = vmul.f32 %v2245, 1.442695
    %v2300 = vpow.pop %v2299
    %v2301 = vmul.f32 %v2246, 1.442695
    %v2302 = vpow.pop %v2301
    %v2303 = vmul.f32 %v2247, 1.442695
    %v2304 = vpow.pop %v2303
    %v2305 = vmul.f32 %v2248, 1.442695
    %v2306 = vpow.pop %v2305
    %v2307 = vmul.f32 %v2249, 1.442695
    %v2308 = vpow.pop %v2307
    %v2309 = vmul.f32 %v2250, 1.442695
    %v2310 = vpow.pop %v2309
    %v2311 = vmul.f32 %v2251, 1.442695
    %v2312 = vpow.pop %v2311
    %v2313 = vmul.f32 %v2252, 1.442695
    %v2314 = vpow.pop %v2313
    %v2315 = vmul.f32 %v2253, 1.442695
    %v2316 = vpow.pop %v2315
    %v2317 = vmul.f32 %v2254, 1.442695
    %v2318 = vpow.pop %v2317
    %v2319 = vmul.f32 %v2255, 1.442695
    %v2320 = vpow.pop %v2319
    %v2321 = vmul.f32 %v2256, 1.442695
    %v2322 = vpow.pop %v2321
    %v2323 = vmul.f32 %v2257, 1.442695
    %v2324 = vpow.pop %v2323
    %v2325 = vmul.f32 %v2258, 1.442695
    %v2326 = vpow.pop %v2325
    %v2327 = vmul.f32 %v2259, 1.442695
    %v2328 = vpow.pop %v2327
    %v2329 = vmul.f32 %v2260, 1.442695
    %v2330 = vpow.pop %v2329
    %v2331 = vmul.f32 %v2261, 1.442695
    %v2332 = vpow.pop %v2331
    %v2333 = vmul.f32 %v2262, 1.442695
    %v2334 = vpow.pop %v2333
    %v2335 = vmul.f32 %v2263, 1.442695
    %v2336 = vpow.pop %v2335
    %v2337 = vmul.f32 %v2264, 1.442695
    %v2338 = vpow.pop %v2337
    %v2339 = vmul.f32 %v2265, 1.442695
    %v2340 = vpow.pop %v2339
    %v2341 = vmul.f32 %v2266, 1.442695
    %v2342 = vpow.pop %v2341
    %v2343 = vmul.f32 %v2267, 1.442695
    %v2344 = vpow.pop %v2343
    %v2345 = vmul.f32 %v2268, 1.442695
    %v2346 = vpow.pop %v2345
    %v2347 = vmul.f32 %v2269, 1.442695
    %v2348 = vpow.pop %v2347
    %v2349 = vmul.f32 %v2270, 1.442695
    %v2350 = vpow.pop %v2349
    %v2351 = vmul.f32 %v2271, 1.442695
    %v2352 = vpow.pop %v2351
    %v2353 = vmul.f32 %v2272, 1.442695
    %v2354 = vpow.pop %v2353
    %v2355 = vmul.f32 %v2273, 1.442695
    %v2356 = vpow.pop %v2355
    %v2357 = vmul.f32 %v2274, 1.442695
    %v2358 = vpow.pop %v2357
    %v2359 = vmul.f32 %v2275, 1.442695
    %v2360 = vpow.pop %v2359
    %v2361 = vmul.f32 %v2276, 1.442695
    %v2362 = vpow.pop %v2361
    %v2363 = vmul.f32 %v2277, 1.442695
    %v2364 = vpow.pop %v2363
    %v2365 = vmul.f32 %v2278, 1.442695
    %v2366 = vpow.pop %v2365
    %v2367 = vmul.f32 %v2279, 1.442695
    %v2368 = vpow.pop %v2367
    %v2369 = vmul.f32 %v2280, 1.442695
    %v2370 = vpow.pop %v2369
    %v2371 = vmul.f32 %v2281, 1.442695
    %v2372 = vpow.pop %v2371
    %v2373 = vmul.f32 %v2282, 1.442695
    %v2374 = vpow.pop %v2373
    %v2375 = vmul.f32 %v2283, 1.442695
    %v2376 = vpow.pop %v2375
    %v2377 = vmul.f32 %v2284, 1.442695
    %v2378 = vpow.pop %v2377
    %v2379 = vmul.f32 %v2285, 1.442695
    %v2380 = vpow.pop %v2379
    %v2381 = vmul.f32 %v2286, 1.442695
    %v2382 = vpow.pop %v2381
    %v2383 = vmul.f32 %v2287, 1.442695
    %v2384 = vpow.pop %v2383
    %v2385 = vmul.f32 %v2288, 1.442695
    %v2386 = vpow.pop %v2385
    %v2387 = vmul.f32 %v2289, 1.442695
    %v2388 = vpow.pop %v2387
    %v2389 = vmul.f32 %v2290, 1.442695
    %v2390 = vpow.pop %v2389
    %v2391 = vadd.f32 %v2292, 1.0
    %v2392 = vadd.f32 %v2294, 1.0
    %v2393 = vadd.f32 %v2296, 1.0
    %v2394 = vadd.f32 %v2298, 1.0
    %v2395 = vadd.f32 %v2300, 1.0
    %v2396 = vadd.f32 %v2302, 1.0
    %v2397 = vadd.f32 %v2304, 1.0
    %v2398 = vadd.f32 %v2306, 1.0
    %v2399 = vadd.f32 %v2308, 1.0
    %v2400 = vadd.f32 %v2310, 1.0
    %v2401 = vadd.f32 %v2312, 1.0
    %v2402 = vadd.f32 %v2314, 1.0
    %v2403 = vadd.f32 %v2316, 1.0
    %v2404 = vadd.f32 %v2318, 1.0
    %v2405 = vadd.f32 %v2320, 1.0
    %v2406 = vadd.f32 %v2322, 1.0
    %v2407 = vadd.f32 %v2324, 1.0
    %v2408 = vadd.f32 %v2326, 1.0
    %v2409 = vadd.f32 %v2328, 1.0
    %v2410 = vadd.f32 %v2330, 1.0
    %v2411 = vadd.f32 %v2332, 1.0
    %v2412 = vadd.f32 %v2334, 1.0
    %v2413 = vadd.f32 %v2336, 1.0
    %v2414 = vadd.f32 %v2338, 1.0
    %v2415 = vadd.f32 %v2340, 1.0
    %v2416 = vadd.f32 %v2342, 1.0
    %v2417 = vadd.f32 %v2344, 1.0
    %v2418 = vadd.f32 %v2346, 1.0
    %v2419 = vadd.f32 %v2348, 1.0
    %v2420 = vadd.f32 %v2350, 1.0
    %v2421 = vadd.f32 %v2352, 1.0
    %v2422 = vadd.f32 %v2354, 1.0
    %v2423 = vadd.f32 %v2356, 1.0
    %v2424 = vadd.f32 %v2358, 1.0
    %v2425 = vadd.f32 %v2360, 1.0
    %v2426 = vadd.f32 %v2362, 1.0
    %v2427 = vadd.f32 %v2364, 1.0
    %v2428 = vadd.f32 %v2366, 1.0
    %v2429 = vadd.f32 %v2368, 1.0
    %v2430 = vadd.f32 %v2370, 1.0
    %v2431 = vadd.f32 %v2372, 1.0
    %v2432 = vadd.f32 %v2374, 1.0
    %v2433 = vadd.f32 %v2376, 1.0
    %v2434 = vadd.f32 %v2378, 1.0
    %v2435 = vadd.f32 %v2380, 1.0
    %v2436 = vadd.f32 %v2382, 1.0
    %v2437 = vadd.f32 %v2384, 1.0
    %v2438 = vadd.f32 %v2386, 1.0
    %v2439 = vadd.f32 %v2388, 1.0
    %v2440 = vadd.f32 %v2390, 1.0
    %v2441 = vrcp.pop %v2391
    %v2442 = vmul.f32 %v2391, %v2441
    %v2443 = vsub.f32 1.0, %v2442
    %v2444 = vmul.f32 %v2441, %v2443
    %v2445 = vadd.f32 %v2441, %v2444
    %vm2446 = vweird.f32 %v2391
    %vm2447 = vweird.f32 %v2441
    %vm2448 = vmor %vm2446, %vm2447
    %v2449 = vsel %vm2448, %v2441, %v2445
    %v2450 = vand.u32 2147483647, %v2391
    %vm2451 = vcmp.eq.f32.partialorder %v2450, 8.507059e+37
    %v2452 = vand.u32 %v2391, 2147483648
    %v2453 = vor.u32 1.1754944e-38, %v2452
    %v2454 = vsel %vm2451, %v2453, %v2449
    %v2455 = vmul.f32 1.0, %v2454
    %v2456 = vrcp.pop %v2392
    %v2457 = vmul.f32 %v2392, %v2456
    %v2458 = vsub.f32 1.0, %v2457
    %v2459 = vmul.f32 %v2456, %v2458
    %v2460 = vadd.f32 %v2456, %v2459
    %vm2461 = vweird.f32 %v2392
    %vm2462 = vweird.f32 %v2456
    %vm2463 = vmor %vm2461, %vm2462
    %v2464 = vsel %vm2463, %v2456, %v2460
    %v2465 = vand.u32 2147483647, %v2392
    %vm2466 = vcmp.eq.f32.partialorder %v2465, 8.507059e+37
    %v2467 = vand.u32 %v2392, 2147483648
    %v2468 = vor.u32 1.1754944e-38, %v2467
    %v2469 = vsel %vm2466, %v2468, %v2464
    %v2470 = vmul.f32 1.0, %v2469
    %v2471 = vrcp.pop %v2393
    %v2472 = vmul.f32 %v2393, %v2471
    %v2473 = vsub.f32 1.0, %v2472
    %v2474 = vmul.f32 %v2471, %v2473
    %v2475 = vadd.f32 %v2471, %v2474
    %vm2476 = vweird.f32 %v2393
    %vm2477 = vweird.f32 %v2471
    %vm2478 = vmor %vm2476, %vm2477
    %v2479 = vsel %vm2478, %v2471, %v2475
    %v2480 = vand.u32 2147483647, %v2393
    %vm2481 = vcmp.eq.f32.partialorder %v2480, 8.507059e+37
    %v2482 = vand.u32 %v2393, 2147483648
    %v2483 = vor.u32 1.1754944e-38, %v2482
    %v2484 = vsel %vm2481, %v2483, %v2479
    %v2485 = vmul.f32 1.0, %v2484
    %v2486 = vrcp.pop %v2394
    %v2487 = vmul.f32 %v2394, %v2486
    %v2488 = vsub.f32 1.0, %v2487
    %v2489 = vmul.f32 %v2486, %v2488
    %v2490 = vadd.f32 %v2486, %v2489
    %vm2491 = vweird.f32 %v2394
    %vm2492 = vweird.f32 %v2486
    %vm2493 = vmor %vm2491, %vm2492
    %v2494 = vsel %vm2493, %v2486, %v2490
    %v2495 = vand.u32 2147483647, %v2394
    %vm2496 = vcmp.eq.f32.partialorder %v2495, 8.507059e+37
    %v2497 = vand.u32 %v2394, 2147483648
    %v2498 = vor.u32 1.1754944e-38, %v2497
    %v2499 = vsel %vm2496, %v2498, %v2494
    %v2500 = vmul.f32 1.0, %v2499
    %v2501 = vrcp.pop %v2395
    %v2502 = vmul.f32 %v2395, %v2501
    %v2503 = vsub.f32 1.0, %v2502
    %v2504 = vmul.f32 %v2501, %v2503
    %v2505 = vadd.f32 %v2501, %v2504
    %vm2506 = vweird.f32 %v2395
    %vm2507 = vweird.f32 %v2501
    %vm2508 = vmor %vm2506, %vm2507
    %v2509 = vsel %vm2508, %v2501, %v2505
    %v2510 = vand.u32 2147483647, %v2395
    %vm2511 = vcmp.eq.f32.partialorder %v2510, 8.507059e+37
    %v2512 = vand.u32 %v2395, 2147483648
    %v2513 = vor.u32 1.1754944e-38, %v2512
    %v2514 = vsel %vm2511, %v2513, %v2509
    %v2515 = vmul.f32 1.0, %v2514
    %v2516 = vrcp.pop %v2396
    %v2517 = vmul.f32 %v2396, %v2516
    %v2518 = vsub.f32 1.0, %v2517
    %v2519 = vmul.f32 %v2516, %v2518
    %v2520 = vadd.f32 %v2516, %v2519
    %vm2521 = vweird.f32 %v2396
    %vm2522 = vweird.f32 %v2516
    %vm2523 = vmor %vm2521, %vm2522
    %v2524 = vsel %vm2523, %v2516, %v2520
    %v2525 = vand.u32 2147483647, %v2396
    %vm2526 = vcmp.eq.f32.partialorder %v2525, 8.507059e+37
    %v2527 = vand.u32 %v2396, 2147483648
    %v2528 = vor.u32 1.1754944e-38, %v2527
    %v2529 = vsel %vm2526, %v2528, %v2524
    %v2530 = vmul.f32 1.0, %v2529
    %v2531 = vrcp.pop %v2397
    %v2532 = vmul.f32 %v2397, %v2531
    %v2533 = vsub.f32 1.0, %v2532
    %v2534 = vmul.f32 %v2531, %v2533
    %v2535 = vadd.f32 %v2531, %v2534
    %vm2536 = vweird.f32 %v2397
    %vm2537 = vweird.f32 %v2531
    %vm2538 = vmor %vm2536, %vm2537
    %v2539 = vsel %vm2538, %v2531, %v2535
    %v2540 = vand.u32 2147483647, %v2397
    %vm2541 = vcmp.eq.f32.partialorder %v2540, 8.507059e+37
    %v2542 = vand.u32 %v2397, 2147483648
    %v2543 = vor.u32 1.1754944e-38, %v2542
    %v2544 = vsel %vm2541, %v2543, %v2539
    %v2545 = vmul.f32 1.0, %v2544
    %v2546 = vrcp.pop %v2398
    %v2547 = vmul.f32 %v2398, %v2546
    %v2548 = vsub.f32 1.0, %v2547
    %v2549 = vmul.f32 %v2546, %v2548
    %v2550 = vadd.f32 %v2546, %v2549
    %vm2551 = vweird.f32 %v2398
    %vm2552 = vweird.f32 %v2546
    %vm2553 = vmor %vm2551, %vm2552
    %v2554 = vsel %vm2553, %v2546, %v2550
    %v2555 = vand.u32 2147483647, %v2398
    %vm2556 = vcmp.eq.f32.partialorder %v2555, 8.507059e+37
    %v2557 = vand.u32 %v2398, 2147483648
    %v2558 = vor.u32 1.1754944e-38, %v2557
    %v2559 = vsel %vm2556, %v2558, %v2554
    %v2560 = vmul.f32 1.0, %v2559
    %v2561 = vrcp.pop %v2399
    %v2562 = vmul.f32 %v2399, %v2561
    %v2563 = vsub.f32 1.0, %v2562
    %v2564 = vmul.f32 %v2561, %v2563
    %v2565 = vadd.f32 %v2561, %v2564
    %vm2566 = vweird.f32 %v2399
    %vm2567 = vweird.f32 %v2561
    %vm2568 = vmor %vm2566, %vm2567
    %v2569 = vsel %vm2568, %v2561, %v2565
    %v2570 = vand.u32 2147483647, %v2399
    %vm2571 = vcmp.eq.f32.partialorder %v2570, 8.507059e+37
    %v2572 = vand.u32 %v2399, 2147483648
    %v2573 = vor.u32 1.1754944e-38, %v2572
    %v2574 = vsel %vm2571, %v2573, %v2569
    %v2575 = vmul.f32 1.0, %v2574
    %v2576 = vrcp.pop %v2400
    %v2577 = vmul.f32 %v2400, %v2576
    %v2578 = vsub.f32 1.0, %v2577
    %v2579 = vmul.f32 %v2576, %v2578
    %v2580 = vadd.f32 %v2576, %v2579
    %vm2581 = vweird.f32 %v2400
    %vm2582 = vweird.f32 %v2576
    %vm2583 = vmor %vm2581, %vm2582
    %v2584 = vsel %vm2583, %v2576, %v2580
    %v2585 = vand.u32 2147483647, %v2400
    %vm2586 = vcmp.eq.f32.partialorder %v2585, 8.507059e+37
    %v2587 = vand.u32 %v2400, 2147483648
    %v2588 = vor.u32 1.1754944e-38, %v2587
    %v2589 = vsel %vm2586, %v2588, %v2584
    %v2590 = vmul.f32 1.0, %v2589
    %v2591 = vrcp.pop %v2401
    %v2592 = vmul.f32 %v2401, %v2591
    %v2593 = vsub.f32 1.0, %v2592
    %v2594 = vmul.f32 %v2591, %v2593
    %v2595 = vadd.f32 %v2591, %v2594
    %vm2596 = vweird.f32 %v2401
    %vm2597 = vweird.f32 %v2591
    %vm2598 = vmor %vm2596, %vm2597
    %v2599 = vsel %vm2598, %v2591, %v2595
    %v2600 = vand.u32 2147483647, %v2401
    %vm2601 = vcmp.eq.f32.partialorder %v2600, 8.507059e+37
    %v2602 = vand.u32 %v2401, 2147483648
    %v2603 = vor.u32 1.1754944e-38, %v2602
    %v2604 = vsel %vm2601, %v2603, %v2599
    %v2605 = vmul.f32 1.0, %v2604
    %v2606 = vrcp.pop %v2402
    %v2607 = vmul.f32 %v2402, %v2606
    %v2608 = vsub.f32 1.0, %v2607
    %v2609 = vmul.f32 %v2606, %v2608
    %v2610 = vadd.f32 %v2606, %v2609
    %vm2611 = vweird.f32 %v2402
    %vm2612 = vweird.f32 %v2606
    %vm2613 = vmor %vm2611, %vm2612
    %v2614 = vsel %vm2613, %v2606, %v2610
    %v2615 = vand.u32 2147483647, %v2402
    %vm2616 = vcmp.eq.f32.partialorder %v2615, 8.507059e+37
    %v2617 = vand.u32 %v2402, 2147483648
    %v2618 = vor.u32 1.1754944e-38, %v2617
    %v2619 = vsel %vm2616, %v2618, %v2614
    %v2620 = vmul.f32 1.0, %v2619
    %v2621 = vrcp.pop %v2403
    %v2622 = vmul.f32 %v2403, %v2621
    %v2623 = vsub.f32 1.0, %v2622
    %v2624 = vmul.f32 %v2621, %v2623
    %v2625 = vadd.f32 %v2621, %v2624
    %vm2626 = vweird.f32 %v2403
    %vm2627 = vweird.f32 %v2621
    %vm2628 = vmor %vm2626, %vm2627
    %v2629 = vsel %vm2628, %v2621, %v2625
    %v2630 = vand.u32 2147483647, %v2403
    %vm2631 = vcmp.eq.f32.partialorder %v2630, 8.507059e+37
    %v2632 = vand.u32 %v2403, 2147483648
    %v2633 = vor.u32 1.1754944e-38, %v2632
    %v2634 = vsel %vm2631, %v2633, %v2629
    %v2635 = vmul.f32 1.0, %v2634
    %v2636 = vrcp.pop %v2404
    %v2637 = vmul.f32 %v2404, %v2636
    %v2638 = vsub.f32 1.0, %v2637
    %v2639 = vmul.f32 %v2636, %v2638
    %v2640 = vadd.f32 %v2636, %v2639
    %vm2641 = vweird.f32 %v2404
    %vm2642 = vweird.f32 %v2636
    %vm2643 = vmor %vm2641, %vm2642
    %v2644 = vsel %vm2643, %v2636, %v2640
    %v2645 = vand.u32 2147483647, %v2404
    %vm2646 = vcmp.eq.f32.partialorder %v2645, 8.507059e+37
    %v2647 = vand.u32 %v2404, 2147483648
    %v2648 = vor.u32 1.1754944e-38, %v2647
    %v2649 = vsel %vm2646, %v2648, %v2644
    %v2650 = vmul.f32 1.0, %v2649
    %v2651 = vrcp.pop %v2405
    %v2652 = vmul.f32 %v2405, %v2651
    %v2653 = vsub.f32 1.0, %v2652
    %v2654 = vmul.f32 %v2651, %v2653
    %v2655 = vadd.f32 %v2651, %v2654
    %vm2656 = vweird.f32 %v2405
    %vm2657 = vweird.f32 %v2651
    %vm2658 = vmor %vm2656, %vm2657
    %v2659 = vsel %vm2658, %v2651, %v2655
    %v2660 = vand.u32 2147483647, %v2405
    %vm2661 = vcmp.eq.f32.partialorder %v2660, 8.507059e+37
    %v2662 = vand.u32 %v2405, 2147483648
    %v2663 = vor.u32 1.1754944e-38, %v2662
    %v2664 = vsel %vm2661, %v2663, %v2659
    %v2665 = vmul.f32 1.0, %v2664
    %v2666 = vrcp.pop %v2406
    %v2667 = vmul.f32 %v2406, %v2666
    %v2668 = vsub.f32 1.0, %v2667
    %v2669 = vmul.f32 %v2666, %v2668
    %v2670 = vadd.f32 %v2666, %v2669
    %vm2671 = vweird.f32 %v2406
    %vm2672 = vweird.f32 %v2666
    %vm2673 = vmor %vm2671, %vm2672
    %v2674 = vsel %vm2673, %v2666, %v2670
    %v2675 = vand.u32 2147483647, %v2406
    %vm2676 = vcmp.eq.f32.partialorder %v2675, 8.507059e+37
    %v2677 = vand.u32 %v2406, 2147483648
    %v2678 = vor.u32 1.1754944e-38, %v2677
    %v2679 = vsel %vm2676, %v2678, %v2674
    %v2680 = vmul.f32 1.0, %v2679
    %v2681 = vrcp.pop %v2407
    %v2682 = vmul.f32 %v2407, %v2681
    %v2683 = vsub.f32 1.0, %v2682
    %v2684 = vmul.f32 %v2681, %v2683
    %v2685 = vadd.f32 %v2681, %v2684
    %vm2686 = vweird.f32 %v2407
    %vm2687 = vweird.f32 %v2681
    %vm2688 = vmor %vm2686, %vm2687
    %v2689 = vsel %vm2688, %v2681, %v2685
    %v2690 = vand.u32 2147483647, %v2407
    %vm2691 = vcmp.eq.f32.partialorder %v2690, 8.507059e+37
    %v2692 = vand.u32 %v2407, 2147483648
    %v2693 = vor.u32 1.1754944e-38, %v2692
    %v2694 = vsel %vm2691, %v2693, %v2689
    %v2695 = vmul.f32 1.0, %v2694
    %v2696 = vrcp.pop %v2408
    %v2697 = vmul.f32 %v2408, %v2696
    %v2698 = vsub.f32 1.0, %v2697
    %v2699 = vmul.f32 %v2696, %v2698
    %v2700 = vadd.f32 %v2696, %v2699
    %vm2701 = vweird.f32 %v2408
    %vm2702 = vweird.f32 %v2696
    %vm2703 = vmor %vm2701, %vm2702
    %v2704 = vsel %vm2703, %v2696, %v2700
    %v2705 = vand.u32 2147483647, %v2408
    %vm2706 = vcmp.eq.f32.partialorder %v2705, 8.507059e+37
    %v2707 = vand.u32 %v2408, 2147483648
    %v2708 = vor.u32 1.1754944e-38, %v2707
    %v2709 = vsel %vm2706, %v2708, %v2704
    %v2710 = vmul.f32 1.0, %v2709
    %v2711 = vrcp.pop %v2409
    %v2712 = vmul.f32 %v2409, %v2711
    %v2713 = vsub.f32 1.0, %v2712
    %v2714 = vmul.f32 %v2711, %v2713
    %v2715 = vadd.f32 %v2711, %v2714
    %vm2716 = vweird.f32 %v2409
    %vm2717 = vweird.f32 %v2711
    %vm2718 = vmor %vm2716, %vm2717
    %v2719 = vsel %vm2718, %v2711, %v2715
    %v2720 = vand.u32 2147483647, %v2409
    %vm2721 = vcmp.eq.f32.partialorder %v2720, 8.507059e+37
    %v2722 = vand.u32 %v2409, 2147483648
    %v2723 = vor.u32 1.1754944e-38, %v2722
    %v2724 = vsel %vm2721, %v2723, %v2719
    %v2725 = vmul.f32 1.0, %v2724
    %v2726 = vrcp.pop %v2410
    %v2727 = vmul.f32 %v2410, %v2726
    %v2728 = vsub.f32 1.0, %v2727
    %v2729 = vmul.f32 %v2726, %v2728
    %v2730 = vadd.f32 %v2726, %v2729
    %vm2731 = vweird.f32 %v2410
    %vm2732 = vweird.f32 %v2726
    %vm2733 = vmor %vm2731, %vm2732
    %v2734 = vsel %vm2733, %v2726, %v2730
    %v2735 = vand.u32 2147483647, %v2410
    %vm2736 = vcmp.eq.f32.partialorder %v2735, 8.507059e+37
    %v2737 = vand.u32 %v2410, 2147483648
    %v2738 = vor.u32 1.1754944e-38, %v2737
    %v2739 = vsel %vm2736, %v2738, %v2734
    %v2740 = vmul.f32 1.0, %v2739
    %v2741 = vrcp.pop %v2411
    %v2742 = vmul.f32 %v2411, %v2741
    %v2743 = vsub.f32 1.0, %v2742
    %v2744 = vmul.f32 %v2741, %v2743
    %v2745 = vadd.f32 %v2741, %v2744
    %vm2746 = vweird.f32 %v2411
    %vm2747 = vweird.f32 %v2741
    %vm2748 = vmor %vm2746, %vm2747
    %v2749 = vsel %vm2748, %v2741, %v2745
    %v2750 = vand.u32 2147483647, %v2411
    %vm2751 = vcmp.eq.f32.partialorder %v2750, 8.507059e+37
    %v2752 = vand.u32 %v2411, 2147483648
    %v2753 = vor.u32 1.1754944e-38, %v2752
    %v2754 = vsel %vm2751, %v2753, %v2749
    %v2755 = vmul.f32 1.0, %v2754
    %v2756 = vrcp.pop %v2412
    %v2757 = vmul.f32 %v2412, %v2756
    %v2758 = vsub.f32 1.0, %v2757
    %v2759 = vmul.f32 %v2756, %v2758
    %v2760 = vadd.f32 %v2756, %v2759
    %vm2761 = vweird.f32 %v2412
    %vm2762 = vweird.f32 %v2756
    %vm2763 = vmor %vm2761, %vm2762
    %v2764 = vsel %vm2763, %v2756, %v2760
    %v2765 = vand.u32 2147483647, %v2412
    %vm2766 = vcmp.eq.f32.partialorder %v2765, 8.507059e+37
    %v2767 = vand.u32 %v2412, 2147483648
    %v2768 = vor.u32 1.1754944e-38, %v2767
    %v2769 = vsel %vm2766, %v2768, %v2764
    %v2770 = vmul.f32 1.0, %v2769
    %v2771 = vrcp.pop %v2413
    %v2772 = vmul.f32 %v2413, %v2771
    %v2773 = vsub.f32 1.0, %v2772
    %v2774 = vmul.f32 %v2771, %v2773
    %v2775 = vadd.f32 %v2771, %v2774
    %vm2776 = vweird.f32 %v2413
    %vm2777 = vweird.f32 %v2771
    %vm2778 = vmor %vm2776, %vm2777
    %v2779 = vsel %vm2778, %v2771, %v2775
    %v2780 = vand.u32 2147483647, %v2413
    %vm2781 = vcmp.eq.f32.partialorder %v2780, 8.507059e+37
    %v2782 = vand.u32 %v2413, 2147483648
    %v2783 = vor.u32 1.1754944e-38, %v2782
    %v2784 = vsel %vm2781, %v2783, %v2779
    %v2785 = vmul.f32 1.0, %v2784
    %v2786 = vrcp.pop %v2414
    %v2787 = vmul.f32 %v2414, %v2786
    %v2788 = vsub.f32 1.0, %v2787
    %v2789 = vmul.f32 %v2786, %v2788
    %v2790 = vadd.f32 %v2786, %v2789
    %vm2791 = vweird.f32 %v2414
    %vm2792 = vweird.f32 %v2786
    %vm2793 = vmor %vm2791, %vm2792
    %v2794 = vsel %vm2793, %v2786, %v2790
    %v2795 = vand.u32 2147483647, %v2414
    %vm2796 = vcmp.eq.f32.partialorder %v2795, 8.507059e+37
    %v2797 = vand.u32 %v2414, 2147483648
    %v2798 = vor.u32 1.1754944e-38, %v2797
    %v2799 = vsel %vm2796, %v2798, %v2794
    %v2800 = vmul.f32 1.0, %v2799
    %v2801 = vrcp.pop %v2415
    %v2802 = vmul.f32 %v2415, %v2801
    %v2803 = vsub.f32 1.0, %v2802
    %v2804 = vmul.f32 %v2801, %v2803
    %v2805 = vadd.f32 %v2801, %v2804
    %vm2806 = vweird.f32 %v2415
    %vm2807 = vweird.f32 %v2801
    %vm2808 = vmor %vm2806, %vm2807
    %v2809 = vsel %vm2808, %v2801, %v2805
    %v2810 = vand.u32 2147483647, %v2415
    %vm2811 = vcmp.eq.f32.partialorder %v2810, 8.507059e+37
    %v2812 = vand.u32 %v2415, 2147483648
    %v2813 = vor.u32 1.1754944e-38, %v2812
    %v2814 = vsel %vm2811, %v2813, %v2809
    %v2815 = vmul.f32 1.0, %v2814
    %v2816 = vrcp.pop %v2416
    %v2817 = vmul.f32 %v2416, %v2816
    %v2818 = vsub.f32 1.0, %v2817
    %v2819 = vmul.f32 %v2816, %v2818
    %v2820 = vadd.f32 %v2816, %v2819
    %vm2821 = vweird.f32 %v2416
    %vm2822 = vweird.f32 %v2816
    %vm2823 = vmor %vm2821, %vm2822
    %v2824 = vsel %vm2823, %v2816, %v2820
    %v2825 = vand.u32 2147483647, %v2416
    %vm2826 = vcmp.eq.f32.partialorder %v2825, 8.507059e+37
    %v2827 = vand.u32 %v2416, 2147483648
    %v2828 = vor.u32 1.1754944e-38, %v2827
    %v2829 = vsel %vm2826, %v2828, %v2824
    %v2830 = vmul.f32 1.0, %v2829
    %v2831 = vrcp.pop %v2417
    %v2832 = vmul.f32 %v2417, %v2831
    %v2833 = vsub.f32 1.0, %v2832
    %v2834 = vmul.f32 %v2831, %v2833
    %v2835 = vadd.f32 %v2831, %v2834
    %vm2836 = vweird.f32 %v2417
    %vm2837 = vweird.f32 %v2831
    %vm2838 = vmor %vm2836, %vm2837
    %v2839 = vsel %vm2838, %v2831, %v2835
    %v2840 = vand.u32 2147483647, %v2417
    %vm2841 = vcmp.eq.f32.partialorder %v2840, 8.507059e+37
    %v2842 = vand.u32 %v2417, 2147483648
    %v2843 = vor.u32 1.1754944e-38, %v2842
    %v2844 = vsel %vm2841, %v2843, %v2839
    %v2845 = vmul.f32 1.0, %v2844
    %v2846 = vrcp.pop %v2418
    %v2847 = vmul.f32 %v2418, %v2846
    %v2848 = vsub.f32 1.0, %v2847
    %v2849 = vmul.f32 %v2846, %v2848
    %v2850 = vadd.f32 %v2846, %v2849
    %vm2851 = vweird.f32 %v2418
    %vm2852 = vweird.f32 %v2846
    %vm2853 = vmor %vm2851, %vm2852
    %v2854 = vsel %vm2853, %v2846, %v2850
    %v2855 = vand.u32 2147483647, %v2418
    %vm2856 = vcmp.eq.f32.partialorder %v2855, 8.507059e+37
    %v2857 = vand.u32 %v2418, 2147483648
    %v2858 = vor.u32 1.1754944e-38, %v2857
    %v2859 = vsel %vm2856, %v2858, %v2854
    %v2860 = vmul.f32 1.0, %v2859
    %v2861 = vrcp.pop %v2419
    %v2862 = vmul.f32 %v2419, %v2861
    %v2863 = vsub.f32 1.0, %v2862
    %v2864 = vmul.f32 %v2861, %v2863
    %v2865 = vadd.f32 %v2861, %v2864
    %vm2866 = vweird.f32 %v2419
    %vm2867 = vweird.f32 %v2861
    %vm2868 = vmor %vm2866, %vm2867
    %v2869 = vsel %vm2868, %v2861, %v2865
    %v2870 = vand.u32 2147483647, %v2419
    %vm2871 = vcmp.eq.f32.partialorder %v2870, 8.507059e+37
    %v2872 = vand.u32 %v2419, 2147483648
    %v2873 = vor.u32 1.1754944e-38, %v2872
    %v2874 = vsel %vm2871, %v2873, %v2869
    %v2875 = vmul.f32 1.0, %v2874
    %v2876 = vrcp.pop %v2420
    %v2877 = vmul.f32 %v2420, %v2876
    %v2878 = vsub.f32 1.0, %v2877
    %v2879 = vmul.f32 %v2876, %v2878
    %v2880 = vadd.f32 %v2876, %v2879
    %vm2881 = vweird.f32 %v2420
    %vm2882 = vweird.f32 %v2876
    %vm2883 = vmor %vm2881, %vm2882
    %v2884 = vsel %vm2883, %v2876, %v2880
    %v2885 = vand.u32 2147483647, %v2420
    %vm2886 = vcmp.eq.f32.partialorder %v2885, 8.507059e+37
    %v2887 = vand.u32 %v2420, 2147483648
    %v2888 = vor.u32 1.1754944e-38, %v2887
    %v2889 = vsel %vm2886, %v2888, %v2884
    %v2890 = vmul.f32 1.0, %v2889
    %v2891 = vrcp.pop %v2421
    %v2892 = vmul.f32 %v2421, %v2891
    %v2893 = vsub.f32 1.0, %v2892
    %v2894 = vmul.f32 %v2891, %v2893
    %v2895 = vadd.f32 %v2891, %v2894
    %vm2896 = vweird.f32 %v2421
    %vm2897 = vweird.f32 %v2891
    %vm2898 = vmor %vm2896, %vm2897
    %v2899 = vsel %vm2898, %v2891, %v2895
    %v2900 = vand.u32 2147483647, %v2421
    %vm2901 = vcmp.eq.f32.partialorder %v2900, 8.507059e+37
    %v2902 = vand.u32 %v2421, 2147483648
    %v2903 = vor.u32 1.1754944e-38, %v2902
    %v2904 = vsel %vm2901, %v2903, %v2899
    %v2905 = vmul.f32 1.0, %v2904
    %v2906 = vrcp.pop %v2422
    %v2907 = vmul.f32 %v2422, %v2906
    %v2908 = vsub.f32 1.0, %v2907
    %v2909 = vmul.f32 %v2906, %v2908
    %v2910 = vadd.f32 %v2906, %v2909
    %vm2911 = vweird.f32 %v2422
    %vm2912 = vweird.f32 %v2906
    %vm2913 = vmor %vm2911, %vm2912
    %v2914 = vsel %vm2913, %v2906, %v2910
    %v2915 = vand.u32 2147483647, %v2422
    %vm2916 = vcmp.eq.f32.partialorder %v2915, 8.507059e+37
    %v2917 = vand.u32 %v2422, 2147483648
    %v2918 = vor.u32 1.1754944e-38, %v2917
    %v2919 = vsel %vm2916, %v2918, %v2914
    %v2920 = vmul.f32 1.0, %v2919
    %v2921 = vrcp.pop %v2423
    %v2922 = vmul.f32 %v2423, %v2921
    %v2923 = vsub.f32 1.0, %v2922
    %v2924 = vmul.f32 %v2921, %v2923
    %v2925 = vadd.f32 %v2921, %v2924
    %vm2926 = vweird.f32 %v2423
    %vm2927 = vweird.f32 %v2921
    %vm2928 = vmor %vm2926, %vm2927
    %v2929 = vsel %vm2928, %v2921, %v2925
    %v2930 = vand.u32 2147483647, %v2423
    %vm2931 = vcmp.eq.f32.partialorder %v2930, 8.507059e+37
    %v2932 = vand.u32 %v2423, 2147483648
    %v2933 = vor.u32 1.1754944e-38, %v2932
    %v2934 = vsel %vm2931, %v2933, %v2929
    %v2935 = vmul.f32 1.0, %v2934
    %v2936 = vrcp.pop %v2424
    %v2937 = vmul.f32 %v2424, %v2936
    %v2938 = vsub.f32 1.0, %v2937
    %v2939 = vmul.f32 %v2936, %v2938
    %v2940 = vadd.f32 %v2936, %v2939
    %vm2941 = vweird.f32 %v2424
    %vm2942 = vweird.f32 %v2936
    %vm2943 = vmor %vm2941, %vm2942
    %v2944 = vsel %vm2943, %v2936, %v2940
    %v2945 = vand.u32 2147483647, %v2424
    %vm2946 = vcmp.eq.f32.partialorder %v2945, 8.507059e+37
    %v2947 = vand.u32 %v2424, 2147483648
    %v2948 = vor.u32 1.1754944e-38, %v2947
    %v2949 = vsel %vm2946, %v2948, %v2944
    %v2950 = vmul.f32 1.0, %v2949
    %v2951 = vrcp.pop %v2425
    %v2952 = vmul.f32 %v2425, %v2951
    %v2953 = vsub.f32 1.0, %v2952
    %v2954 = vmul.f32 %v2951, %v2953
    %v2955 = vadd.f32 %v2951, %v2954
    %vm2956 = vweird.f32 %v2425
    %vm2957 = vweird.f32 %v2951
    %vm2958 = vmor %vm2956, %vm2957
    %v2959 = vsel %vm2958, %v2951, %v2955
    %v2960 = vand.u32 2147483647, %v2425
    %vm2961 = vcmp.eq.f32.partialorder %v2960, 8.507059e+37
    %v2962 = vand.u32 %v2425, 2147483648
    %v2963 = vor.u32 1.1754944e-38, %v2962
    %v2964 = vsel %vm2961, %v2963, %v2959
    %v2965 = vmul.f32 1.0, %v2964
    %v2966 = vrcp.pop %v2426
    %v2967 = vmul.f32 %v2426, %v2966
    %v2968 = vsub.f32 1.0, %v2967
    %v2969 = vmul.f32 %v2966, %v2968
    %v2970 = vadd.f32 %v2966, %v2969
    %vm2971 = vweird.f32 %v2426
    %vm2972 = vweird.f32 %v2966
    %vm2973 = vmor %vm2971, %vm2972
    %v2974 = vsel %vm2973, %v2966, %v2970
    %v2975 = vand.u32 2147483647, %v2426
    %vm2976 = vcmp.eq.f32.partialorder %v2975, 8.507059e+37
    %v2977 = vand.u32 %v2426, 2147483648
    %v2978 = vor.u32 1.1754944e-38, %v2977
    %v2979 = vsel %vm2976, %v2978, %v2974
    %v2980 = vmul.f32 1.0, %v2979
    %v2981 = vrcp.pop %v2427
    %v2982 = vmul.f32 %v2427, %v2981
    %v2983 = vsub.f32 1.0, %v2982
    %v2984 = vmul.f32 %v2981, %v2983
    %v2985 = vadd.f32 %v2981, %v2984
    %vm2986 = vweird.f32 %v2427
    %vm2987 = vweird.f32 %v2981
    %vm2988 = vmor %vm2986, %vm2987
    %v2989 = vsel %vm2988, %v2981, %v2985
    %v2990 = vand.u32 2147483647, %v2427
    %vm2991 = vcmp.eq.f32.partialorder %v2990, 8.507059e+37
    %v2992 = vand.u32 %v2427, 2147483648
    %v2993 = vor.u32 1.1754944e-38, %v2992
    %v2994 = vsel %vm2991, %v2993, %v2989
    %v2995 = vmul.f32 1.0, %v2994
    %v2996 = vrcp.pop %v2428
    %v2997 = vmul.f32 %v2428, %v2996
    %v2998 = vsub.f32 1.0, %v2997
    %v2999 = vmul.f32 %v2996, %v2998
    %v3000 = vadd.f32 %v2996, %v2999
    %vm3001 = vweird.f32 %v2428
    %vm3002 = vweird.f32 %v2996
    %vm3003 = vmor %vm3001, %vm3002
    %v3004 = vsel %vm3003, %v2996, %v3000
    %v3005 = vand.u32 2147483647, %v2428
    %vm3006 = vcmp.eq.f32.partialorder %v3005, 8.507059e+37
    %v3007 = vand.u32 %v2428, 2147483648
    %v3008 = vor.u32 1.1754944e-38, %v3007
    %v3009 = vsel %vm3006, %v3008, %v3004
    %v3010 = vmul.f32 1.0, %v3009
    %v3011 = vrcp.pop %v2429
    %v3012 = vmul.f32 %v2429, %v3011
    %v3013 = vsub.f32 1.0, %v3012
    %v3014 = vmul.f32 %v3011, %v3013
    %v3015 = vadd.f32 %v3011, %v3014
    %vm3016 = vweird.f32 %v2429
    %vm3017 = vweird.f32 %v3011
    %vm3018 = vmor %vm3016, %vm3017
    %v3019 = vsel %vm3018, %v3011, %v3015
    %v3020 = vand.u32 2147483647, %v2429
    %vm3021 = vcmp.eq.f32.partialorder %v3020, 8.507059e+37
    %v3022 = vand.u32 %v2429, 2147483648
    %v3023 = vor.u32 1.1754944e-38, %v3022
    %v3024 = vsel %vm3021, %v3023, %v3019
    %v3025 = vmul.f32 1.0, %v3024
    %v3026 = vrcp.pop %v2430
    %v3027 = vmul.f32 %v2430, %v3026
    %v3028 = vsub.f32 1.0, %v3027
    %v3029 = vmul.f32 %v3026, %v3028
    %v3030 = vadd.f32 %v3026, %v3029
    %vm3031 = vweird.f32 %v2430
    %vm3032 = vweird.f32 %v3026
    %vm3033 = vmor %vm3031, %vm3032
    %v3034 = vsel %vm3033, %v3026, %v3030
    %v3035 = vand.u32 2147483647, %v2430
    %vm3036 = vcmp.eq.f32.partialorder %v3035, 8.507059e+37
    %v3037 = vand.u32 %v2430, 2147483648
    %v3038 = vor.u32 1.1754944e-38, %v3037
    %v3039 = vsel %vm3036, %v3038, %v3034
    %v3040 = vmul.f32 1.0, %v3039
    %v3041 = vrcp.pop %v2431
    %v3042 = vmul.f32 %v2431, %v3041
    %v3043 = vsub.f32 1.0, %v3042
    %v3044 = vmul.f32 %v3041, %v3043
    %v3045 = vadd.f32 %v3041, %v3044
    %vm3046 = vweird.f32 %v2431
    %vm3047 = vweird.f32 %v3041
    %vm3048 = vmor %vm3046, %vm3047
    %v3049 = vsel %vm3048, %v3041, %v3045
    %v3050 = vand.u32 2147483647, %v2431
    %vm3051 = vcmp.eq.f32.partialorder %v3050, 8.507059e+37
    %v3052 = vand.u32 %v2431, 2147483648
    %v3053 = vor.u32 1.1754944e-38, %v3052
    %v3054 = vsel %vm3051, %v3053, %v3049
    %v3055 = vmul.f32 1.0, %v3054
    %v3056 = vrcp.pop %v2432
    %v3057 = vmul.f32 %v2432, %v3056
    %v3058 = vsub.f32 1.0, %v3057
    %v3059 = vmul.f32 %v3056, %v3058
    %v3060 = vadd.f32 %v3056, %v3059
    %vm3061 = vweird.f32 %v2432
    %vm3062 = vweird.f32 %v3056
    %vm3063 = vmor %vm3061, %vm3062
    %v3064 = vsel %vm3063, %v3056, %v3060
    %v3065 = vand.u32 2147483647, %v2432
    %vm3066 = vcmp.eq.f32.partialorder %v3065, 8.507059e+37
    %v3067 = vand.u32 %v2432, 2147483648
    %v3068 = vor.u32 1.1754944e-38, %v3067
    %v3069 = vsel %vm3066, %v3068, %v3064
    %v3070 = vmul.f32 1.0, %v3069
    %v3071 = vrcp.pop %v2433
    %v3072 = vmul.f32 %v2433, %v3071
    %v3073 = vsub.f32 1.0, %v3072
    %v3074 = vmul.f32 %v3071, %v3073
    %v3075 = vadd.f32 %v3071, %v3074
    %vm3076 = vweird.f32 %v2433
    %vm3077 = vweird.f32 %v3071
    %vm3078 = vmor %vm3076, %vm3077
    %v3079 = vsel %vm3078, %v3071, %v3075
    %v3080 = vand.u32 2147483647, %v2433
    %vm3081 = vcmp.eq.f32.partialorder %v3080, 8.507059e+37
    %v3082 = vand.u32 %v2433, 2147483648
    %v3083 = vor.u32 1.1754944e-38, %v3082
    %v3084 = vsel %vm3081, %v3083, %v3079
    %v3085 = vmul.f32 1.0, %v3084
    %v3086 = vrcp.pop %v2434
    %v3087 = vmul.f32 %v2434, %v3086
    %v3088 = vsub.f32 1.0, %v3087
    %v3089 = vmul.f32 %v3086, %v3088
    %v3090 = vadd.f32 %v3086, %v3089
    %vm3091 = vweird.f32 %v2434
    %vm3092 = vweird.f32 %v3086
    %vm3093 = vmor %vm3091, %vm3092
    %v3094 = vsel %vm3093, %v3086, %v3090
    %v3095 = vand.u32 2147483647, %v2434
    %vm3096 = vcmp.eq.f32.partialorder %v3095, 8.507059e+37
    %v3097 = vand.u32 %v2434, 2147483648
    %v3098 = vor.u32 1.1754944e-38, %v3097
    %v3099 = vsel %vm3096, %v3098, %v3094
    %v3100 = vmul.f32 1.0, %v3099
    %v3101 = vrcp.pop %v2435
    %v3102 = vmul.f32 %v2435, %v3101
    %v3103 = vsub.f32 1.0, %v3102
    %v3104 = vmul.f32 %v3101, %v3103
    %v3105 = vadd.f32 %v3101, %v3104
    %vm3106 = vweird.f32 %v2435
    %vm3107 = vweird.f32 %v3101
    %vm3108 = vmor %vm3106, %vm3107
    %v3109 = vsel %vm3108, %v3101, %v3105
    %v3110 = vand.u32 2147483647, %v2435
    %vm3111 = vcmp.eq.f32.partialorder %v3110, 8.507059e+37
    %v3112 = vand.u32 %v2435, 2147483648
    %v3113 = vor.u32 1.1754944e-38, %v3112
    %v3114 = vsel %vm3111, %v3113, %v3109
    %v3115 = vmul.f32 1.0, %v3114
    %v3116 = vrcp.pop %v2436
    %v3117 = vmul.f32 %v2436, %v3116
    %v3118 = vsub.f32 1.0, %v3117
    %v3119 = vmul.f32 %v3116, %v3118
    %v3120 = vadd.f32 %v3116, %v3119
    %vm3121 = vweird.f32 %v2436
    %vm3122 = vweird.f32 %v3116
    %vm3123 = vmor %vm3121, %vm3122
    %v3124 = vsel %vm3123, %v3116, %v3120
    %v3125 = vand.u32 2147483647, %v2436
    %vm3126 = vcmp.eq.f32.partialorder %v3125, 8.507059e+37
    %v3127 = vand.u32 %v2436, 2147483648
    %v3128 = vor.u32 1.1754944e-38, %v3127
    %v3129 = vsel %vm3126, %v3128, %v3124
    %v3130 = vmul.f32 1.0, %v3129
    %v3131 = vrcp.pop %v2437
    %v3132 = vmul.f32 %v2437, %v3131
    %v3133 = vsub.f32 1.0, %v3132
    %v3134 = vmul.f32 %v3131, %v3133
    %v3135 = vadd.f32 %v3131, %v3134
    %vm3136 = vweird.f32 %v2437
    %vm3137 = vweird.f32 %v3131
    %vm3138 = vmor %vm3136, %vm3137
    %v3139 = vsel %vm3138, %v3131, %v3135
    %v3140 = vand.u32 2147483647, %v2437
    %vm3141 = vcmp.eq.f32.partialorder %v3140, 8.507059e+37
    %v3142 = vand.u32 %v2437, 2147483648
    %v3143 = vor.u32 1.1754944e-38, %v3142
    %v3144 = vsel %vm3141, %v3143, %v3139
    %v3145 = vmul.f32 1.0, %v3144
    %v3146 = vrcp.pop %v2438
    %v3147 = vmul.f32 %v2438, %v3146
    %v3148 = vsub.f32 1.0, %v3147
    %v3149 = vmul.f32 %v3146, %v3148
    %v3150 = vadd.f32 %v3146, %v3149
    %vm3151 = vweird.f32 %v2438
    %vm3152 = vweird.f32 %v3146
    %vm3153 = vmor %vm3151, %vm3152
    %v3154 = vsel %vm3153, %v3146, %v3150
    %v3155 = vand.u32 2147483647, %v2438
    %vm3156 = vcmp.eq.f32.partialorder %v3155, 8.507059e+37
    %v3157 = vand.u32 %v2438, 2147483648
    %v3158 = vor.u32 1.1754944e-38, %v3157
    %v3159 = vsel %vm3156, %v3158, %v3154
    %v3160 = vmul.f32 1.0, %v3159
    %v3161 = vrcp.pop %v2439
    %v3162 = vmul.f32 %v2439, %v3161
    %v3163 = vsub.f32 1.0, %v3162
    %v3164 = vmul.f32 %v3161, %v3163
    %v3165 = vadd.f32 %v3161, %v3164
    %vm3166 = vweird.f32 %v2439
    %vm3167 = vweird.f32 %v3161
    %vm3168 = vmor %vm3166, %vm3167
    %v3169 = vsel %vm3168, %v3161, %v3165
    %v3170 = vand.u32 2147483647, %v2439
    %vm3171 = vcmp.eq.f32.partialorder %v3170, 8.507059e+37
    %v3172 = vand.u32 %v2439, 2147483648
    %v3173 = vor.u32 1.1754944e-38, %v3172
    %v3174 = vsel %vm3171, %v3173, %v3169
    %v3175 = vmul.f32 1.0, %v3174
    %v3176 = vrcp.pop %v2440
    %v3177 = vmul.f32 %v2440, %v3176
    %v3178 = vsub.f32 1.0, %v3177
    %v3179 = vmul.f32 %v3176, %v3178
    %v3180 = vadd.f32 %v3176, %v3179
    %vm3181 = vweird.f32 %v2440
    %vm3182 = vweird.f32 %v3176
    %vm3183 = vmor %vm3181, %vm3182
    %v3184 = vsel %vm3183, %v3176, %v3180
    %v3185 = vand.u32 2147483647, %v2440
    %vm3186 = vcmp.eq.f32.partialorder %v3185, 8.507059e+37
    %v3187 = vand.u32 %v2440, 2147483648
    %v3188 = vor.u32 1.1754944e-38, %v3187
    %v3189 = vsel %vm3186, %v3188, %v3184
    %v3190 = vmul.f32 1.0, %v3189
    %v3191 = vld [vmem:[%s5] sm:$0xff]
    %v3192 = vld [vmem:[%s5 + $0x8] sm:$0xff]
    %v3193 = vld [vmem:[%s5 + $0x10] sm:$0xff]
    %v3194 = vld [vmem:[%s5 + $0x18] sm:$0xff]
    %v3195 = vld [vmem:[%s5 + $0x20] sm:$0xff]
    %v3196 = vld [vmem:[%s5 + $0x28] sm:$0xff]
    %v3197 = vld [vmem:[%s5 + $0x30] sm:$0xff]
    %v3198 = vld [vmem:[%s5 + $0x38] sm:$0xff]
    %v3199 = vld [vmem:[%s5 + $0x40] sm:$0xff]
    %v3200 = vld [vmem:[%s5 + $0x48] sm:$0xff]
    %v3201 = vld [vmem:[%s5 + $0x50] sm:$0xff]
    %v3202 = vld [vmem:[%s5 + $0x58] sm:$0xff]
    %v3203 = vld [vmem:[%s5 + $0x60] sm:$0xff]
    %v3204 = vld [vmem:[%s5 + $0x68] sm:$0xff]
    %v3205 = vld [vmem:[%s5 + $0x70] sm:$0xff]
    %v3206 = vld [vmem:[%s5 + $0x78] sm:$0xff]
    %v3207 = vld [vmem:[%s5 + $0x80] sm:$0xff]
    %v3208 = vld [vmem:[%s5 + $0x88] sm:$0xff]
    %v3209 = vld [vmem:[%s5 + $0x90] sm:$0xff]
    %v3210 = vld [vmem:[%s5 + $0x98] sm:$0xff]
    %v3211 = vld [vmem:[%s5 + $0xa0] sm:$0xff]
    %v3212 = vld [vmem:[%s5 + $0xa8] sm:$0xff]
    %v3213 = vld [vmem:[%s5 + $0xb0] sm:$0xff]
    %v3214 = vld [vmem:[%s5 + $0xb8] sm:$0xff]
    %v3215 = vld [vmem:[%s5 + $0xc0] sm:$0xff]
    %v3216 = vld [vmem:[%s5 + $0xc8] sm:$0xff]
    %v3217 = vld [vmem:[%s5 + $0xd0] sm:$0xff]
    %v3218 = vld [vmem:[%s5 + $0xd8] sm:$0xff]
    %v3219 = vld [vmem:[%s5 + $0xe0] sm:$0xff]
    %v3220 = vld [vmem:[%s5 + $0xe8] sm:$0xff]
    %v3221 = vld [vmem:[%s5 + $0xf0] sm:$0xff]
    %v3222 = vld [vmem:[%s5 + $0xf8] sm:$0xff]
    %v3223 = vld [vmem:[%s5 + $0x100] sm:$0xff]
    %v3224 = vld [vmem:[%s5 + $0x108] sm:$0xff]
    %v3225 = vld [vmem:[%s5 + $0x110] sm:$0xff]
    %v3226 = vld [vmem:[%s5 + $0x118] sm:$0xff]
    %v3227 = vld [vmem:[%s5 + $0x120] sm:$0xff]
    %v3228 = vld [vmem:[%s5 + $0x128] sm:$0xff]
    %v3229 = vld [vmem:[%s5 + $0x130] sm:$0xff]
    %v3230 = vld [vmem:[%s5 + $0x138] sm:$0xff]
    %v3231 = vld [vmem:[%s5 + $0x140] sm:$0xff]
    %v3232 = vld [vmem:[%s5 + $0x148] sm:$0xff]
    %v3233 = vld [vmem:[%s5 + $0x150] sm:$0xff]
    %v3234 = vld [vmem:[%s5 + $0x158] sm:$0xff]
    %v3235 = vld [vmem:[%s5 + $0x160] sm:$0xff]
    %v3236 = vld [vmem:[%s5 + $0x168] sm:$0xff]
    %v3237 = vld [vmem:[%s5 + $0x170] sm:$0xff]
    %v3238 = vld [vmem:[%s5 + $0x178] sm:$0xff]
    %v3239 = vld [vmem:[%s5 + $0x180] sm:$0xff]
    %v3240 = vld [vmem:[%s5 + $0x188] sm:$0xff]
    %v3241 = vmul.f32 %v2455, %v3191
    %v3242 = vmul.f32 %v2470, %v3192
    %v3243 = vmul.f32 %v2485, %v3193
    %v3244 = vmul.f32 %v2500, %v3194
    %v3245 = vmul.f32 %v2515, %v3195
    %v3246 = vmul.f32 %v2530, %v3196
    %v3247 = vmul.f32 %v2545, %v3197
    %v3248 = vmul.f32 %v2560, %v3198
    %v3249 = vmul.f32 %v2575, %v3199
    %v3250 = vmul.f32 %v2590, %v3200
    %v3251 = vmul.f32 %v2605, %v3201
    %v3252 = vmul.f32 %v2620, %v3202
    %v3253 = vmul.f32 %v2635, %v3203
    %v3254 = vmul.f32 %v2650, %v3204
    %v3255 = vmul.f32 %v2665, %v3205
    %v3256 = vmul.f32 %v2680, %v3206
    %v3257 = vmul.f32 %v2695, %v3207
    %v3258 = vmul.f32 %v2710, %v3208
    %v3259 = vmul.f32 %v2725, %v3209
    %v3260 = vmul.f32 %v2740, %v3210
    %v3261 = vmul.f32 %v2755, %v3211
    %v3262 = vmul.f32 %v2770, %v3212
    %v3263 = vmul.f32 %v2785, %v3213
    %v3264 = vmul.f32 %v2800, %v3214
    %v3265 = vmul.f32 %v2815, %v3215
    %v3266 = vmul.f32 %v2830, %v3216
    %v3267 = vmul.f32 %v2845, %v3217
    %v3268 = vmul.f32 %v2860, %v3218
    %v3269 = vmul.f32 %v2875, %v3219
    %v3270 = vmul.f32 %v2890, %v3220
    %v3271 = vmul.f32 %v2905, %v3221
    %v3272 = vmul.f32 %v2920, %v3222
    %v3273 = vmul.f32 %v2935, %v3223
    %v3274 = vmul.f32 %v2950, %v3224
    %v3275 = vmul.f32 %v2965, %v3225
    %v3276 = vmul.f32 %v2980, %v3226
    %v3277 = vmul.f32 %v2995, %v3227
    %v3278 = vmul.f32 %v3010, %v3228
    %v3279 = vmul.f32 %v3025, %v3229
    %v3280 = vmul.f32 %v3040, %v3230
    %v3281 = vmul.f32 %v3055, %v3231
    %v3282 = vmul.f32 %v3070, %v3232
    %v3283 = vmul.f32 %v3085, %v3233
    %v3284 = vmul.f32 %v3100, %v3234
    %v3285 = vmul.f32 %v3115, %v3235
    %v3286 = vmul.f32 %v3130, %v3236
    %v3287 = vmul.f32 %v3145, %v3237
    %v3288 = vmul.f32 %v3160, %v3238
    %v3289 = vmul.f32 %v3175, %v3239
    %v3290 = vmul.f32 %v3190, %v3240
    %v3291 = vld [vmem:[%s6] sm:$0xff]
    %v3292 = vld [vmem:[%s6 + $0x8] sm:$0xff]
    %v3293 = vld [vmem:[%s6 + $0x10] sm:$0xff]
    %v3294 = vld [vmem:[%s6 + $0x18] sm:$0xff]
    %v3295 = vld [vmem:[%s6 + $0x20] sm:$0xff]
    %v3296 = vld [vmem:[%s6 + $0x28] sm:$0xff]
    %v3297 = vld [vmem:[%s6 + $0x30] sm:$0xff]
    %v3298 = vld [vmem:[%s6 + $0x38] sm:$0xff]
    %v3299 = vld [vmem:[%s6 + $0x40] sm:$0xff]
    %v3300 = vld [vmem:[%s6 + $0x48] sm:$0xff]
    %v3301 = vld [vmem:[%s6 + $0x50] sm:$0xff]
    %v3302 = vld [vmem:[%s6 + $0x58] sm:$0xff]
    %v3303 = vld [vmem:[%s6 + $0x60] sm:$0xff]
    %v3304 = vld [vmem:[%s6 + $0x68] sm:$0xff]
    %v3305 = vld [vmem:[%s6 + $0x70] sm:$0xff]
    %v3306 = vld [vmem:[%s6 + $0x78] sm:$0xff]
    %v3307 = vld [vmem:[%s6 + $0x80] sm:$0xff]
    %v3308 = vld [vmem:[%s6 + $0x88] sm:$0xff]
    %v3309 = vld [vmem:[%s6 + $0x90] sm:$0xff]
    %v3310 = vld [vmem:[%s6 + $0x98] sm:$0xff]
    %v3311 = vld [vmem:[%s6 + $0xa0] sm:$0xff]
    %v3312 = vld [vmem:[%s6 + $0xa8] sm:$0xff]
    %v3313 = vld [vmem:[%s6 + $0xb0] sm:$0xff]
    %v3314 = vld [vmem:[%s6 + $0xb8] sm:$0xff]
    %v3315 = vld [vmem:[%s6 + $0xc0] sm:$0xff]
    %vm3316 = vcmask 588800
    %v3318 = vsel %vm3316, %v3242, 0
    %v3321 = vsel %vm3316, %v3244, 0
    %v3324 = vsel %vm3316, %v3246, 0
    %v3327 = vsel %vm3316, %v3248, 0
    %v3330 = vsel %vm3316, %v3250, 0
    %v3333 = vsel %vm3316, %v3252, 0
    %v3336 = vsel %vm3316, %v3254, 0
    %v3339 = vsel %vm3316, %v3256, 0
    %v3342 = vsel %vm3316, %v3258, 0
    %v3345 = vsel %vm3316, %v3260, 0
    %v3348 = vsel %vm3316, %v3262, 0
    %v3351 = vsel %vm3316, %v3264, 0
    %v3354 = vsel %vm3316, %v3266, 0
    %v3357 = vsel %vm3316, %v3268, 0
    %v3360 = vsel %vm3316, %v3270, 0
    %v3363 = vsel %vm3316, %v3272, 0
    %v3366 = vsel %vm3316, %v3274, 0
    %v3369 = vsel %vm3316, %v3276, 0
    %v3372 = vsel %vm3316, %v3278, 0
    %v3375 = vsel %vm3316, %v3280, 0
    %v3378 = vsel %vm3316, %v3282, 0
    %v3381 = vsel %vm3316, %v3284, 0
    %v3384 = vsel %vm3316, %v3286, 0
    %v3387 = vsel %vm3316, %v3288, 0
    %v3390 = vsel %vm3316, %v3290, 0
    %3392 = vmatpush.msra.mxu0 %v3306
    %3393 = vmatpush.msra.mxu0 %v3305
    %3394 = vmatpush.msra.mxu0 %v3304
    %3395 = vmatpush.msra.mxu0 %v3303
    %3396 = vmatpush.msra.mxu0 %v3302
    %3397 = vmatpush.msra.mxu0 %v3301
    %3398 = vmatpush.msra.mxu0 %v3300
    %3399 = vmatpush.msra.mxu0 %v3299
    %3400 = vmatpush.msra.mxu0 %v3298
    %3401 = vmatpush.msra.mxu0 %v3297
    %3402 = vmatpush.msra.mxu0 %v3296
    %3403 = vmatpush.msra.mxu0 %v3295
    %3404 = vmatpush.msra.mxu0 %v3294
    %3405 = vmatpush.msra.mxu0 %v3293
    %3406 = vmatpush.msra.mxu0 %v3292
    %3407 = vmatpush.msra.mxu0 %v3291
    %3408 = vmatmul.f32.gmra.mxu0 %v3241
    %v3409 = vpop.f32.mrf.mxu0
    %v3410 = vadd.f32 0.0, %v3409
    %3411 = vmatmul.f32.gmra.mxu0 %v3243
    %v3412 = vpop.f32.mrf.mxu0
    %v3413 = vadd.f32 0.0, %v3412
    %3414 = vmatmul.f32.gmra.mxu0 %v3245
    %v3415 = vpop.f32.mrf.mxu0
    %v3416 = vadd.f32 0.0, %v3415
    %3417 = vmatmul.f32.gmra.mxu0 %v3247
    %v3418 = vpop.f32.mrf.mxu0
    %v3419 = vadd.f32 0.0, %v3418
    %3420 = vmatmul.f32.gmra.mxu0 %v3249
    %v3421 = vpop.f32.mrf.mxu0
    %v3422 = vadd.f32 0.0, %v3421
    %3423 = vmatmul.f32.gmra.mxu0 %v3251
    %v3424 = vpop.f32.mrf.mxu0
    %v3425 = vadd.f32 0.0, %v3424
    %3426 = vmatmul.f32.gmra.mxu0 %v3253
    %v3427 = vpop.f32.mrf.mxu0
    %v3428 = vadd.f32 0.0, %v3427
    %3429 = vmatmul.f32.gmra.mxu0 %v3255
    %v3430 = vpop.f32.mrf.mxu0
    %v3431 = vadd.f32 0.0, %v3430
    %3432 = vmatmul.f32.gmra.mxu0 %v3257
    %v3433 = vpop.f32.mrf.mxu0
    %v3434 = vadd.f32 0.0, %v3433
    %3435 = vmatmul.f32.gmra.mxu0 %v3259
    %v3436 = vpop.f32.mrf.mxu0
    %v3437 = vadd.f32 0.0, %v3436
    %3438 = vmatmul.f32.gmra.mxu0 %v3261
    %v3439 = vpop.f32.mrf.mxu0
    %v3440 = vadd.f32 0.0, %v3439
    %3441 = vmatmul.f32.gmra.mxu0 %v3263
    %v3442 = vpop.f32.mrf.mxu0
    %v3443 = vadd.f32 0.0, %v3442
    %3444 = vmatmul.f32.gmra.mxu0 %v3265
    %v3445 = vpop.f32.mrf.mxu0
    %v3446 = vadd.f32 0.0, %v3445
    %3447 = vmatmul.f32.gmra.mxu0 %v3267
    %v3448 = vpop.f32.mrf.mxu0
    %v3449 = vadd.f32 0.0, %v3448
    %3450 = vmatmul.f32.gmra.mxu0 %v3269
    %v3451 = vpop.f32.mrf.mxu0
    %v3452 = vadd.f32 0.0, %v3451
    %3453 = vmatmul.f32.gmra.mxu0 %v3271
    %v3454 = vpop.f32.mrf.mxu0
    %v3455 = vadd.f32 0.0, %v3454
    %3456 = vmatmul.f32.gmra.mxu0 %v3273
    %v3457 = vpop.f32.mrf.mxu0
    %v3458 = vadd.f32 0.0, %v3457
    %3459 = vmatmul.f32.gmra.mxu0 %v3275
    %v3460 = vpop.f32.mrf.mxu0
    %v3461 = vadd.f32 0.0, %v3460
    %3462 = vmatmul.f32.gmra.mxu0 %v3277
    %v3463 = vpop.f32.mrf.mxu0
    %v3464 = vadd.f32 0.0, %v3463
    %3465 = vmatmul.f32.gmra.mxu0 %v3279
    %v3466 = vpop.f32.mrf.mxu0
    %v3467 = vadd.f32 0.0, %v3466
    %3468 = vmatmul.f32.gmra.mxu0 %v3281
    %v3469 = vpop.f32.mrf.mxu0
    %v3470 = vadd.f32 0.0, %v3469
    %3471 = vmatmul.f32.gmra.mxu0 %v3283
    %v3472 = vpop.f32.mrf.mxu0
    %v3473 = vadd.f32 0.0, %v3472
    %3474 = vmatmul.f32.gmra.mxu0 %v3285
    %v3475 = vpop.f32.mrf.mxu0
    %v3476 = vadd.f32 0.0, %v3475
    %3477 = vmatmul.f32.gmra.mxu0 %v3287
    %v3478 = vpop.f32.mrf.mxu0
    %v3479 = vadd.f32 0.0, %v3478
    %3480 = vmatmul.f32.gmra.mxu0 %v3289
    %v3481 = vpop.f32.mrf.mxu0
    %v3482 = vadd.f32 0.0, %v3481
    %3483 = vdwg.mxu0
    %3484 = vmatpush.msra.mxu0 0.0
    %3485 = vmatpush.msra.mxu0 0.0
    %3486 = vmatpush.msra.mxu0 0.0
    %3487 = vmatpush.msra.mxu0 0.0
    %3488 = vmatpush.msra.mxu0 0.0
    %3489 = vmatpush.msra.mxu0 0.0
    %3490 = vmatpush.msra.mxu0 0.0
    %3491 = vmatpush.msra.mxu0 %v3315
    %3492 = vmatpush.msra.mxu0 %v3314
    %3493 = vmatpush.msra.mxu0 %v3313
    %3494 = vmatpush.msra.mxu0 %v3312
    %3495 = vmatpush.msra.mxu0 %v3311
    %3496 = vmatpush.msra.mxu0 %v3310
    %3497 = vmatpush.msra.mxu0 %v3309
    %3498 = vmatpush.msra.mxu0 %v3308
    %3499 = vmatpush.msra.mxu0 %v3307
    %3500 = vmatmul.f32.gmra.mxu0 %v3318
    %v3501 = vpop.f32.mrf.mxu0
    %v3502 = vadd.f32 %v3410, %v3501
    %3503 = vmatmul.f32.gmra.mxu0 %v3321
    %v3504 = vpop.f32.mrf.mxu0
    %v3505 = vadd.f32 %v3413, %v3504
    %3506 = vmatmul.f32.gmra.mxu0 %v3324
    %v3507 = vpop.f32.mrf.mxu0
    %v3508 = vadd.f32 %v3416, %v3507
    %3509 = vmatmul.f32.gmra.mxu0 %v3327
    %v3510 = vpop.f32.mrf.mxu0
    %v3511 = vadd.f32 %v3419, %v3510
    %3512 = vmatmul.f32.gmra.mxu0 %v3330
    %v3513 = vpop.f32.mrf.mxu0
    %v3514 = vadd.f32 %v3422, %v3513
    %3515 = vmatmul.f32.gmra.mxu0 %v3333
    %v3516 = vpop.f32.mrf.mxu0
    %v3517 = vadd.f32 %v3425, %v3516
    %3518 = vmatmul.f32.gmra.mxu0 %v3336
    %v3519 = vpop.f32.mrf.mxu0
    %v3520 = vadd.f32 %v3428, %v3519
    %3521 = vmatmul.f32.gmra.mxu0 %v3339
    %v3522 = vpop.f32.mrf.mxu0
    %v3523 = vadd.f32 %v3431, %v3522
    %3524 = vmatmul.f32.gmra.mxu0 %v3342
    %v3525 = vpop.f32.mrf.mxu0
    %v3526 = vadd.f32 %v3434, %v3525
    %3527 = vmatmul.f32.gmra.mxu0 %v3345
    %v3528 = vpop.f32.mrf.mxu0
    %v3529 = vadd.f32 %v3437, %v3528
    %3530 = vmatmul.f32.gmra.mxu0 %v3348
    %v3531 = vpop.f32.mrf.mxu0
    %v3532 = vadd.f32 %v3440, %v3531
    %3533 = vmatmul.f32.gmra.mxu0 %v3351
    %v3534 = vpop.f32.mrf.mxu0
    %v3535 = vadd.f32 %v3443, %v3534
    %3536 = vmatmul.f32.gmra.mxu0 %v3354
    %v3537 = vpop.f32.mrf.mxu0
    %v3538 = vadd.f32 %v3446, %v3537
    %3539 = vmatmul.f32.gmra.mxu0 %v3357
    %v3540 = vpop.f32.mrf.mxu0
    %v3541 = vadd.f32 %v3449, %v3540
    %3542 = vmatmul.f32.gmra.mxu0 %v3360
    %v3543 = vpop.f32.mrf.mxu0
    %v3544 = vadd.f32 %v3452, %v3543
    %3545 = vmatmul.f32.gmra.mxu0 %v3363
    %v3546 = vpop.f32.mrf.mxu0
    %v3547 = vadd.f32 %v3455, %v3546
    %3548 = vmatmul.f32.gmra.mxu0 %v3366
    %v3549 = vpop.f32.mrf.mxu0
    %v3550 = vadd.f32 %v3458, %v3549
    %3551 = vmatmul.f32.gmra.mxu0 %v3369
    %v3552 = vpop.f32.mrf.mxu0
    %v3553 = vadd.f32 %v3461, %v3552
    %3554 = vmatmul.f32.gmra.mxu0 %v3372
    %v3555 = vpop.f32.mrf.mxu0
    %v3556 = vadd.f32 %v3464, %v3555
    %3557 = vmatmul.f32.gmra.mxu0 %v3375
    %v3558 = vpop.f32.mrf.mxu0
    %v3559 = vadd.f32 %v3467, %v3558
    %3560 = vmatmul.f32.gmra.mxu0 %v3378
    %v3561 = vpop.f32.mrf.mxu0
    %v3562 = vadd.f32 %v3470, %v3561
    %3563 = vmatmul.f32.gmra.mxu0 %v3381
    %v3564 = vpop.f32.mrf.mxu0
    %v3565 = vadd.f32 %v3473, %v3564
    %3566 = vmatmul.f32.gmra.mxu0 %v3384
    %v3567 = vpop.f32.mrf.mxu0
    %v3568 = vadd.f32 %v3476, %v3567
    %3569 = vmatmul.f32.gmra.mxu0 %v3387
    %v3570 = vpop.f32.mrf.mxu0
    %v3571 = vadd.f32 %v3479, %v3570
    %3572 = vmatmul.f32.gmra.mxu0 %v3390
    %v3573 = vpop.f32.mrf.mxu0
    %v3574 = vadd.f32 %v3482, %v3573
    %3575 = vdwg.mxu0
    %vm3576 = vcmask 64512
    %v3577 = vsel %vm3576, %v3502, -inf
    %3578 = vmax.xlane.f32.xlu0 %v3577
    %v3579 = vpop.xlane.xlu0 %3578
    %v3580 = vsel %vm3576, %v3505, -inf
    %3581 = vmax.xlane.f32.xlu0 %v3580
    %v3582 = vpop.xlane.xlu0 %3581
    %v3583 = vsel %vm3576, %v3508, -inf
    %3584 = vmax.xlane.f32.xlu0 %v3583
    %v3585 = vpop.xlane.xlu0 %3584
    %v3586 = vsel %vm3576, %v3511, -inf
    %3587 = vmax.xlane.f32.xlu0 %v3586
    %v3588 = vpop.xlane.xlu0 %3587
    %v3589 = vsel %vm3576, %v3514, -inf
    %3590 = vmax.xlane.f32.xlu0 %v3589
    %v3591 = vpop.xlane.xlu0 %3590
    %v3592 = vsel %vm3576, %v3517, -inf
    %3593 = vmax.xlane.f32.xlu0 %v3592
    %v3594 = vpop.xlane.xlu0 %3593
    %v3595 = vsel %vm3576, %v3520, -inf
    %3596 = vmax.xlane.f32.xlu0 %v3595
    %v3597 = vpop.xlane.xlu0 %3596
    %v3598 = vsel %vm3576, %v3523, -inf
    %3599 = vmax.xlane.f32.xlu0 %v3598
    %v3600 = vpop.xlane.xlu0 %3599
    %v3601 = vsel %vm3576, %v3526, -inf
    %3602 = vmax.xlane.f32.xlu0 %v3601
    %v3603 = vpop.xlane.xlu0 %3602
    %v3604 = vsel %vm3576, %v3529, -inf
    %3605 = vmax.xlane.f32.xlu0 %v3604
    %v3606 = vpop.xlane.xlu0 %3605
    %v3607 = vsel %vm3576, %v3532, -inf
    %3608 = vmax.xlane.f32.xlu0 %v3607
    %v3609 = vpop.xlane.xlu0 %3608
    %v3610 = vsel %vm3576, %v3535, -inf
    %3611 = vmax.xlane.f32.xlu0 %v3610
    %v3612 = vpop.xlane.xlu0 %3611
    %v3613 = vsel %vm3576, %v3538, -inf
    %3614 = vmax.xlane.f32.xlu0 %v3613
    %v3615 = vpop.xlane.xlu0 %3614
    %v3616 = vsel %vm3576, %v3541, -inf
    %3617 = vmax.xlane.f32.xlu0 %v3616
    %v3618 = vpop.xlane.xlu0 %3617
    %v3619 = vsel %vm3576, %v3544, -inf
    %3620 = vmax.xlane.f32.xlu0 %v3619
    %v3621 = vpop.xlane.xlu0 %3620
    %v3622 = vsel %vm3576, %v3547, -inf
    %3623 = vmax.xlane.f32.xlu0 %v3622
    %v3624 = vpop.xlane.xlu0 %3623
    %v3625 = vsel %vm3576, %v3550, -inf
    %3626 = vmax.xlane.f32.xlu0 %v3625
    %v3627 = vpop.xlane.xlu0 %3626
    %v3628 = vsel %vm3576, %v3553, -inf
    %3629 = vmax.xlane.f32.xlu0 %v3628
    %v3630 = vpop.xlane.xlu0 %3629
    %v3631 = vsel %vm3576, %v3556, -inf
    %3632 = vmax.xlane.f32.xlu0 %v3631
    %v3633 = vpop.xlane.xlu0 %3632
    %v3634 = vsel %vm3576, %v3559, -inf
    %3635 = vmax.xlane.f32.xlu0 %v3634
    %v3636 = vpop.xlane.xlu0 %3635
    %v3637 = vsel %vm3576, %v3562, -inf
    %3638 = vmax.xlane.f32.xlu0 %v3637
    %v3639 = vpop.xlane.xlu0 %3638
    %v3640 = vsel %vm3576, %v3565, -inf
    %3641 = vmax.xlane.f32.xlu0 %v3640
    %v3642 = vpop.xlane.xlu0 %3641
    %v3643 = vsel %vm3576, %v3568, -inf
    %3644 = vmax.xlane.f32.xlu0 %v3643
    %v3645 = vpop.xlane.xlu0 %3644
    %v3646 = vsel %vm3576, %v3571, -inf
    %3647 = vmax.xlane.f32.xlu0 %v3646
    %v3648 = vpop.xlane.xlu0 %3647
    %v3649 = vsel %vm3576, %v3574, -inf
    %3650 = vmax.xlane.f32.xlu0 %v3649
    %v3651 = vpop.xlane.xlu0 %3650
    %v3652 = vsub.f32 %v3502, %v3579
    %v3653 = vsub.f32 %v3505, %v3582
    %v3654 = vsub.f32 %v3508, %v3585
    %v3655 = vsub.f32 %v3511, %v3588
    %v3656 = vsub.f32 %v3514, %v3591
    %v3657 = vsub.f32 %v3517, %v3594
    %v3658 = vsub.f32 %v3520, %v3597
    %v3659 = vsub.f32 %v3523, %v3600
    %v3660 = vsub.f32 %v3526, %v3603
    %v3661 = vsub.f32 %v3529, %v3606
    %v3662 = vsub.f32 %v3532, %v3609
    %v3663 = vsub.f32 %v3535, %v3612
    %v3664 = vsub.f32 %v3538, %v3615
    %v3665 = vsub.f32 %v3541, %v3618
    %v3666 = vsub.f32 %v3544, %v3621
    %v3667 = vsub.f32 %v3547, %v3624
    %v3668 = vsub.f32 %v3550, %v3627
    %v3669 = vsub.f32 %v3553, %v3630
    %v3670 = vsub.f32 %v3556, %v3633
    %v3671 = vsub.f32 %v3559, %v3636
    %v3672 = vsub.f32 %v3562, %v3639
    %v3673 = vsub.f32 %v3565, %v3642
    %v3674 = vsub.f32 %v3568, %v3645
    %v3675 = vsub.f32 %v3571, %v3648
    %v3676 = vsub.f32 %v3574, %v3651
    %v3677 = vmul.f32 %v3652, 1.442695
    %v3678 = vpow.pop %v3677
    %v3679 = vmul.f32 %v3653, 1.442695
    %v3680 = vpow.pop %v3679
    %v3681 = vmul.f32 %v3654, 1.442695
    %v3682 = vpow.pop %v3681
    %v3683 = vmul.f32 %v3655, 1.442695
    %v3684 = vpow.pop %v3683
    %v3685 = vmul.f32 %v3656, 1.442695
    %v3686 = vpow.pop %v3685
    %v3687 = vmul.f32 %v3657, 1.442695
    %v3688 = vpow.pop %v3687
    %v3689 = vmul.f32 %v3658, 1.442695
    %v3690 = vpow.pop %v3689
    %v3691 = vmul.f32 %v3659, 1.442695
    %v3692 = vpow.pop %v3691
    %v3693 = vmul.f32 %v3660, 1.442695
    %v3694 = vpow.pop %v3693
    %v3695 = vmul.f32 %v3661, 1.442695
    %v3696 = vpow.pop %v3695
    %v3697 = vmul.f32 %v3662, 1.442695
    %v3698 = vpow.pop %v3697
    %v3699 = vmul.f32 %v3663, 1.442695
    %v3700 = vpow.pop %v3699
    %v3701 = vmul.f32 %v3664, 1.442695
    %v3702 = vpow.pop %v3701
    %v3703 = vmul.f32 %v3665, 1.442695
    %v3704 = vpow.pop %v3703
    %v3705 = vmul.f32 %v3666, 1.442695
    %v3706 = vpow.pop %v3705
    %v3707 = vmul.f32 %v3667, 1.442695
    %v3708 = vpow.pop %v3707
    %v3709 = vmul.f32 %v3668, 1.442695
    %v3710 = vpow.pop %v3709
    %v3711 = vmul.f32 %v3669, 1.442695
    %v3712 = vpow.pop %v3711
    %v3713 = vmul.f32 %v3670, 1.442695
    %v3714 = vpow.pop %v3713
    %v3715 = vmul.f32 %v3671, 1.442695
    %v3716 = vpow.pop %v3715
    %v3717 = vmul.f32 %v3672, 1.442695
    %v3718 = vpow.pop %v3717
    %v3719 = vmul.f32 %v3673, 1.442695
    %v3720 = vpow.pop %v3719
    %v3721 = vmul.f32 %v3674, 1.442695
    %v3722 = vpow.pop %v3721
    %v3723 = vmul.f32 %v3675, 1.442695
    %v3724 = vpow.pop %v3723
    %v3725 = vmul.f32 %v3676, 1.442695
    %v3726 = vpow.pop %v3725
    %v3727 = vsel %vm3576, %v3678, 0.0
    %3728 = vadd.xlane.f32.xlu0 %v3727
    %v3729 = vpop.xlane.xlu0 %3728
    %v3730 = vsel %vm3576, %v3680, 0.0
    %3731 = vadd.xlane.f32.xlu0 %v3730
    %v3732 = vpop.xlane.xlu0 %3731
    %v3733 = vsel %vm3576, %v3682, 0.0
    %3734 = vadd.xlane.f32.xlu0 %v3733
    %v3735 = vpop.xlane.xlu0 %3734
    %v3736 = vsel %vm3576, %v3684, 0.0
    %3737 = vadd.xlane.f32.xlu0 %v3736
    %v3738 = vpop.xlane.xlu0 %3737
    %v3739 = vsel %vm3576, %v3686, 0.0
    %3740 = vadd.xlane.f32.xlu0 %v3739
    %v3741 = vpop.xlane.xlu0 %3740
    %v3742 = vsel %vm3576, %v3688, 0.0
    %3743 = vadd.xlane.f32.xlu0 %v3742
    %v3744 = vpop.xlane.xlu0 %3743
    %v3745 = vsel %vm3576, %v3690, 0.0
    %3746 = vadd.xlane.f32.xlu0 %v3745
    %v3747 = vpop.xlane.xlu0 %3746
    %v3748 = vsel %vm3576, %v3692, 0.0
    %3749 = vadd.xlane.f32.xlu0 %v3748
    %v3750 = vpop.xlane.xlu0 %3749
    %v3751 = vsel %vm3576, %v3694, 0.0
    %3752 = vadd.xlane.f32.xlu0 %v3751
    %v3753 = vpop.xlane.xlu0 %3752
    %v3754 = vsel %vm3576, %v3696, 0.0
    %3755 = vadd.xlane.f32.xlu0 %v3754
    %v3756 = vpop.xlane.xlu0 %3755
    %v3757 = vsel %vm3576, %v3698, 0.0
    %3758 = vadd.xlane.f32.xlu0 %v3757
    %v3759 = vpop.xlane.xlu0 %3758
    %v3760 = vsel %vm3576, %v3700, 0.0
    %3761 = vadd.xlane.f32.xlu0 %v3760
    %v3762 = vpop.xlane.xlu0 %3761
    %v3763 = vsel %vm3576, %v3702, 0.0
    %3764 = vadd.xlane.f32.xlu0 %v3763
    %v3765 = vpop.xlane.xlu0 %3764
    %v3766 = vsel %vm3576, %v3704, 0.0
    %3767 = vadd.xlane.f32.xlu0 %v3766
    %v3768 = vpop.xlane.xlu0 %3767
    %v3769 = vsel %vm3576, %v3706, 0.0
    %3770 = vadd.xlane.f32.xlu0 %v3769
    %v3771 = vpop.xlane.xlu0 %3770
    %v3772 = vsel %vm3576, %v3708, 0.0
    %3773 = vadd.xlane.f32.xlu0 %v3772
    %v3774 = vpop.xlane.xlu0 %3773
    %v3775 = vsel %vm3576, %v3710, 0.0
    %3776 = vadd.xlane.f32.xlu0 %v3775
    %v3777 = vpop.xlane.xlu0 %3776
    %v3778 = vsel %vm3576, %v3712, 0.0
    %3779 = vadd.xlane.f32.xlu0 %v3778
    %v3780 = vpop.xlane.xlu0 %3779
    %v3781 = vsel %vm3576, %v3714, 0.0
    %3782 = vadd.xlane.f32.xlu0 %v3781
    %v3783 = vpop.xlane.xlu0 %3782
    %v3784 = vsel %vm3576, %v3716, 0.0
    %3785 = vadd.xlane.f32.xlu0 %v3784
    %v3786 = vpop.xlane.xlu0 %3785
    %v3787 = vsel %vm3576, %v3718, 0.0
    %3788 = vadd.xlane.f32.xlu0 %v3787
    %v3789 = vpop.xlane.xlu0 %3788
    %v3790 = vsel %vm3576, %v3720, 0.0
    %3791 = vadd.xlane.f32.xlu0 %v3790
    %v3792 = vpop.xlane.xlu0 %3791
    %v3793 = vsel %vm3576, %v3722, 0.0
    %3794 = vadd.xlane.f32.xlu0 %v3793
    %v3795 = vpop.xlane.xlu0 %3794
    %v3796 = vsel %vm3576, %v3724, 0.0
    %3797 = vadd.xlane.f32.xlu0 %v3796
    %v3798 = vpop.xlane.xlu0 %3797
    %v3799 = vsel %vm3576, %v3726, 0.0
    %3800 = vadd.xlane.f32.xlu0 %v3799
    %v3801 = vpop.xlane.xlu0 %3800
    %v3802 = vlog2.pop %v3729
    %v3803 = vmul.f32 %v3802, 0.6931472
    %v3804 = vlog2.pop %v3732
    %v3805 = vmul.f32 %v3804, 0.6931472
    %v3806 = vlog2.pop %v3735
    %v3807 = vmul.f32 %v3806, 0.6931472
    %v3808 = vlog2.pop %v3738
    %v3809 = vmul.f32 %v3808, 0.6931472
    %v3810 = vlog2.pop %v3741
    %v3811 = vmul.f32 %v3810, 0.6931472
    %v3812 = vlog2.pop %v3744
    %v3813 = vmul.f32 %v3812, 0.6931472
    %v3814 = vlog2.pop %v3747
    %v3815 = vmul.f32 %v3814, 0.6931472
    %v3816 = vlog2.pop %v3750
    %v3817 = vmul.f32 %v3816, 0.6931472
    %v3818 = vlog2.pop %v3753
    %v3819 = vmul.f32 %v3818, 0.6931472
    %v3820 = vlog2.pop %v3756
    %v3821 = vmul.f32 %v3820, 0.6931472
    %v3822 = vlog2.pop %v3759
    %v3823 = vmul.f32 %v3822, 0.6931472
    %v3824 = vlog2.pop %v3762
    %v3825 = vmul.f32 %v3824, 0.6931472
    %v3826 = vlog2.pop %v3765
    %v3827 = vmul.f32 %v3826, 0.6931472
    %v3828 = vlog2.pop %v3768
    %v3829 = vmul.f32 %v3828, 0.6931472
    %v3830 = vlog2.pop %v3771
    %v3831 = vmul.f32 %v3830, 0.6931472
    %v3832 = vlog2.pop %v3774
    %v3833 = vmul.f32 %v3832, 0.6931472
    %v3834 = vlog2.pop %v3777
    %v3835 = vmul.f32 %v3834, 0.6931472
    %v3836 = vlog2.pop %v3780
    %v3837 = vmul.f32 %v3836, 0.6931472
    %v3838 = vlog2.pop %v3783
    %v3839 = vmul.f32 %v3838, 0.6931472
    %v3840 = vlog2.pop %v3786
    %v3841 = vmul.f32 %v3840, 0.6931472
    %v3842 = vlog2.pop %v3789
    %v3843 = vmul.f32 %v3842, 0.6931472
    %v3844 = vlog2.pop %v3792
    %v3845 = vmul.f32 %v3844, 0.6931472
    %v3846 = vlog2.pop %v3795
    %v3847 = vmul.f32 %v3846, 0.6931472
    %v3848 = vlog2.pop %v3798
    %v3849 = vmul.f32 %v3848, 0.6931472
    %v3850 = vlog2.pop %v3801
    %v3851 = vmul.f32 %v3850, 0.6931472
    %v3852 = vsub.f32 %v3652, %v3803
    %v3853 = vsub.f32 %v3653, %v3805
    %v3854 = vsub.f32 %v3654, %v3807
    %v3855 = vsub.f32 %v3655, %v3809
    %v3856 = vsub.f32 %v3656, %v3811
    %v3857 = vsub.f32 %v3657, %v3813
    %v3858 = vsub.f32 %v3658, %v3815
    %v3859 = vsub.f32 %v3659, %v3817
    %v3860 = vsub.f32 %v3660, %v3819
    %v3861 = vsub.f32 %v3661, %v3821
    %v3862 = vsub.f32 %v3662, %v3823
    %v3863 = vsub.f32 %v3663, %v3825
    %v3864 = vsub.f32 %v3664, %v3827
    %v3865 = vsub.f32 %v3665, %v3829
    %v3866 = vsub.f32 %v3666, %v3831
    %v3867 = vsub.f32 %v3667, %v3833
    %v3868 = vsub.f32 %v3668, %v3835
    %v3869 = vsub.f32 %v3669, %v3837
    %v3870 = vsub.f32 %v3670, %v3839
    %v3871 = vsub.f32 %v3671, %v3841
    %v3872 = vsub.f32 %v3672, %v3843
    %v3873 = vsub.f32 %v3673, %v3845
    %v3874 = vsub.f32 %v3674, %v3847
    %v3875 = vsub.f32 %v3675, %v3849
    %v3876 = vsub.f32 %v3676, %v3851
    %3877 = vst.msk [vmem:[%s7] sm:$0xff] %vm3576, %v3852
    %3878 = vst.msk [vmem:[%s7 + $0x8] sm:$0xff] %vm3576, %v3853
    %3879 = vst.msk [vmem:[%s7 + $0x10] sm:$0xff] %vm3576, %v3854
    %3880 = vst.msk [vmem:[%s7 + $0x18] sm:$0xff] %vm3576, %v3855
    %3881 = vst.msk [vmem:[%s7 + $0x20] sm:$0xff] %vm3576, %v3856
    %3882 = vst.msk [vmem:[%s7 + $0x28] sm:$0xff] %vm3576, %v3857
    %3883 = vst.msk [vmem:[%s7 + $0x30] sm:$0xff] %vm3576, %v3858
    %3884 = vst.msk [vmem:[%s7 + $0x38] sm:$0xff] %vm3576, %v3859
    %3885 = vst.msk [vmem:[%s7 + $0x40] sm:$0xff] %vm3576, %v3860
    %3886 = vst.msk [vmem:[%s7 + $0x48] sm:$0xff] %vm3576, %v3861
    %3887 = vst.msk [vmem:[%s7 + $0x50] sm:$0xff] %vm3576, %v3862
    %3888 = vst.msk [vmem:[%s7 + $0x58] sm:$0xff] %vm3576, %v3863
    %3889 = vst.msk [vmem:[%s7 + $0x60] sm:$0xff] %vm3576, %v3864
    %3890 = vst.msk [vmem:[%s7 + $0x68] sm:$0xff] %vm3576, %v3865
    %3891 = vst.msk [vmem:[%s7 + $0x70] sm:$0xff] %vm3576, %v3866
    %3892 = vst.msk [vmem:[%s7 + $0x78] sm:$0xff] %vm3576, %v3867
    %3893 = vst.msk [vmem:[%s7 + $0x80] sm:$0xff] %vm3576, %v3868
    %3894 = vst.msk [vmem:[%s7 + $0x88] sm:$0xff] %vm3576, %v3869
    %3895 = vst.msk [vmem:[%s7 + $0x90] sm:$0xff] %vm3576, %v3870
    %3896 = vst.msk [vmem:[%s7 + $0x98] sm:$0xff] %vm3576, %v3871
    %3897 = vst.msk [vmem:[%s7 + $0xa0] sm:$0xff] %vm3576, %v3872
    %3898 = vst.msk [vmem:[%s7 + $0xa8] sm:$0xff] %vm3576, %v3873
    %3899 = vst.msk [vmem:[%s7 + $0xb0] sm:$0xff] %vm3576, %v3874
    %3900 = vst.msk [vmem:[%s7 + $0xb8] sm:$0xff] %vm3576, %v3875
    %3901 = vst.msk [vmem:[%s7 + $0xc0] sm:$0xff] %vm3576, %v3876
    // Predicated region
    $region34: #{_lambda_.5} parent=1 // pred_check
      _
    $region35: #{_lambda_.5} parent=1 // pred_check_branch
      %3903 = sbr.rel (0) target = $region37
    $region36: #{_lambda_.5} parent=1 // pred_region
      _
    $region37: #{_lambda_.5} parent=1 // pred_fallthru
      _
    // Predicated region
    $region38: #{_lambda_.5} parent=1 // pred_check
      _
    $region39: #{_lambda_.5} parent=1 // pred_check_branch
      %3905 = sbr.rel (0) target = $region41
    $region40: #{_lambda_.5} parent=1 // pred_region
      _
    $region41: #{_lambda_.5} parent=1 // pred_fallthru
      _
    %3906 = vsyncpa [#allocation3], 1

// kernel: _lambda_.3
$region0: #{_lambda_.3}
  #allocation0 [shape = 'u32[]', space=smem, size = 0x4, offset = 0x4, fixed_abs, tag = 'smem constant byte address 0x4 - core index']
  #allocation1 [shape = 'u32[72,128]{1,0:T(1,128)}', space=vmem, size = 0x9000, scoped, tag = 'internal scratch']
  %s0 = inlined_call_operand.vmem [shape: f32[3], index: 0, kind: input, shape index: {}]
  %s1 = inlined_call_operand.vmem [shape: f32[200,32], index: 1, kind: input, shape index: {}]
  %s2 = inlined_call_operand.vmem [shape: f32[32,32], index: 2, kind: input, shape index: {}]
  %s3 = inlined_call_operand.vmem [shape: f32[32,9], index: 3, kind: input, shape index: {}]
  %s4 = inlined_call_operand.vmem [shape: f32[32,32], index: 4, kind: input, shape index: {}]
  %s5 = inlined_call_operand.vmem [shape: f32[1,32], index: 5, kind: input, shape index: {}]
  %s6 = inlined_call_operand.vmem [shape: f32[200,9], index: 6, kind: output, shape index: {0}]
  %s7 = inlined_call_operand.vmem [shape: f32[200,32], index: 7, kind: output, shape index: {1}]
  %8 = xla_tuple %s6, %s7
  %s9 = sld [smem:[#allocation0]]
  $region46: #{_lambda_.3} parent=0
    _
  %s11 = ssub.s32 1, %s9
  %s12 = scalar_select 0, %s11, %s9
  $region1: #{_lambda_.3} parent=0
    #allocation2 [shape = 'u8[512]{0}', space=smem, size = 0x200, scoped, tag = 'input window, operand 0, single buffered']
    #allocation3 [shape = 's32[1]{0}', space=sflag, size = 0x4, scoped, tag = 'scoped memory for _lambda_.3']
    %13 = vsyncpa [#allocation3], 0
    // Predicated region
    $region2: #{_lambda_.3} parent=1 // pred_check
      _
    $region3: #{_lambda_.3} parent=1 // pred_check_branch
      %15 = sbr.rel (0) target = $region5
    $region4: #{_lambda_.3} parent=1 // pred_region
      %17 = vsyncadd [#allocation3], 0
      %s19 = sshll.u32 %s0, 4
      %s20 = int_to_ptr.vmem [resolvable:$true] %s19
      %22 = dma.vmem_to_smem %s20, 16, [#allocation2], [#allocation3]
    $region5: #{_lambda_.3} parent=1 // pred_fallthru
      _
    // Predicated region
    $region6: #{_lambda_.3} parent=1 // pred_check
      _
    $region7: #{_lambda_.3} parent=1 // pred_check_branch
      %24 = sbr.rel (0) target = $region9
    $region8: #{_lambda_.3} parent=1 // pred_region
      _
    $region9: #{_lambda_.3} parent=1 // pred_fallthru
      _
    // Predicated region
    $region10: #{_lambda_.3} parent=1 // pred_check
      _
    $region11: #{_lambda_.3} parent=1 // pred_check_branch
      %26 = sbr.rel (0) target = $region13
    $region12: #{_lambda_.3} parent=1 // pred_region
      _
    $region13: #{_lambda_.3} parent=1 // pred_fallthru
      _
    // Predicated region
    $region14: #{_lambda_.3} parent=1 // pred_check
      _
    $region15: #{_lambda_.3} parent=1 // pred_check_branch
      %28 = sbr.rel (0) target = $region17
    $region16: #{_lambda_.3} parent=1 // pred_region
      _
    $region17: #{_lambda_.3} parent=1 // pred_fallthru
      _
    // Predicated region
    $region18: #{_lambda_.3} parent=1 // pred_check
      _
    $region19: #{_lambda_.3} parent=1 // pred_check_branch
      %30 = sbr.rel (0) target = $region21
    $region20: #{_lambda_.3} parent=1 // pred_region
      _
    $region21: #{_lambda_.3} parent=1 // pred_fallthru
      _
    // Predicated region
    $region22: #{_lambda_.3} parent=1 // pred_check
      _
    $region23: #{_lambda_.3} parent=1 // pred_check_branch
      %32 = sbr.rel (0) target = $region25
    $region24: #{_lambda_.3} parent=1 // pred_region
      _
    $region25: #{_lambda_.3} parent=1 // pred_fallthru
      _
    // Predicated region
    $region26: #{_lambda_.3} parent=1 // pred_check
      _
    $region27: #{_lambda_.3} parent=1 // pred_check_branch
      %34 = sbr.rel (0) target = $region29
    $region28: #{_lambda_.3} parent=1 // pred_region
      %36 = dma.done [#allocation3], 16
    $region29: #{_lambda_.3} parent=1 // pred_fallthru
      _
    %37 = sfence
    %v38 = vld [vmem:[%s1] sm:$0xff]
    %v39 = vld [vmem:[%s1 + $0x8] sm:$0xff]
    %v40 = vld [vmem:[%s1 + $0x10] sm:$0xff]
    %v41 = vld [vmem:[%s1 + $0x18] sm:$0xff]
    %v42 = vld [vmem:[%s1 + $0x20] sm:$0xff]
    %v43 = vld [vmem:[%s1 + $0x28] sm:$0xff]
    %v44 = vld [vmem:[%s1 + $0x30] sm:$0xff]
    %v45 = vld [vmem:[%s1 + $0x38] sm:$0xff]
    %v46 = vld [vmem:[%s1 + $0x40] sm:$0xff]
    %v47 = vld [vmem:[%s1 + $0x48] sm:$0xff]
    %v48 = vld [vmem:[%s1 + $0x50] sm:$0xff]
    %v49 = vld [vmem:[%s1 + $0x58] sm:$0xff]
    %v50 = vld [vmem:[%s1 + $0x60] sm:$0xff]
    %v51 = vld [vmem:[%s1 + $0x68] sm:$0xff]
    %v52 = vld [vmem:[%s1 + $0x70] sm:$0xff]
    %v53 = vld [vmem:[%s1 + $0x78] sm:$0xff]
    %v54 = vld [vmem:[%s1 + $0x80] sm:$0xff]
    %v55 = vld [vmem:[%s1 + $0x88] sm:$0xff]
    %v56 = vld [vmem:[%s1 + $0x90] sm:$0xff]
    %v57 = vld [vmem:[%s1 + $0x98] sm:$0xff]
    %v58 = vld [vmem:[%s1 + $0xa0] sm:$0xff]
    %v59 = vld [vmem:[%s1 + $0xa8] sm:$0xff]
    %v60 = vld [vmem:[%s1 + $0xb0] sm:$0xff]
    %v61 = vld [vmem:[%s1 + $0xb8] sm:$0xff]
    %v62 = vld [vmem:[%s1 + $0xc0] sm:$0xff]
    %v63 = vld [vmem:[%s2] sm:$0xff]
    %v64 = vld [vmem:[%s2 + $0x8] sm:$0xff]
    %v65 = vld [vmem:[%s2 + $0x10] sm:$0xff]
    %v66 = vld [vmem:[%s2 + $0x18] sm:$0xff]
    %vm67 = vcmask 261120
    %v69 = vsel %vm67, %v38, 0
    %v72 = vsel %vm67, %v39, 0
    %v75 = vsel %vm67, %v40, 0
    %v78 = vsel %vm67, %v41, 0
    %v81 = vsel %vm67, %v42, 0
    %v84 = vsel %vm67, %v43, 0
    %v87 = vsel %vm67, %v44, 0
    %v90 = vsel %vm67, %v45, 0
    %v93 = vsel %vm67, %v46, 0
    %v96 = vsel %vm67, %v47, 0
    %v99 = vsel %vm67, %v48, 0
    %v102 = vsel %vm67, %v49, 0
    %v105 = vsel %vm67, %v50, 0
    %v108 = vsel %vm67, %v51, 0
    %v111 = vsel %vm67, %v52, 0
    %v114 = vsel %vm67, %v53, 0
    %v117 = vsel %vm67, %v54, 0
    %v120 = vsel %vm67, %v55, 0
    %v123 = vsel %vm67, %v56, 0
    %v126 = vsel %vm67, %v57, 0
    %v129 = vsel %vm67, %v58, 0
    %v132 = vsel %vm67, %v59, 0
    %v135 = vsel %vm67, %v60, 0
    %v138 = vsel %vm67, %v61, 0
    %v141 = vsel %vm67, %v62, 0
    %143 = vmatpush.msra.mxu0 0.0
    %144 = vmatpush.msra.mxu0 0.0
    %145 = vmatpush.msra.mxu0 0.0
    %146 = vmatpush.msra.mxu0 0.0
    %147 = vmatpush.msra.mxu0 0.0
    %148 = vmatpush.msra.mxu0 0.0
    %149 = vmatpush.msra.mxu0 0.0
    %150 = vmatpush.msra.mxu0 0.0
    %151 = vmatpush.msra.mxu0 0.0
    %152 = vmatpush.msra.mxu0 0.0
    %153 = vmatpush.msra.mxu0 0.0
    %154 = vmatpush.msra.mxu0 0.0
    %155 = vmatpush.msra.mxu0 %v66
    %156 = vmatpush.msra.mxu0 %v65
    %157 = vmatpush.msra.mxu0 %v64
    %158 = vmatpush.msra.mxu0 %v63
    %159 = vmatmul.f32.gmra.mxu0 %v69
    %v160 = vpop.f32.mrf.mxu0
    %v161 = vadd.f32 0.0, %v160
    %162 = vmatmul.f32.gmra.mxu0 %v72
    %v163 = vpop.f32.mrf.mxu0
    %v164 = vadd.f32 0.0, %v163
    %165 = vmatmul.f32.gmra.mxu0 %v75
    %v166 = vpop.f32.mrf.mxu0
    %v167 = vadd.f32 0.0, %v166
    %168 = vmatmul.f32.gmra.mxu0 %v78
    %v169 = vpop.f32.mrf.mxu0
    %v170 = vadd.f32 0.0, %v169
    %171 = vmatmul.f32.gmra.mxu0 %v81
    %v172 = vpop.f32.mrf.mxu0
    %v173 = vadd.f32 0.0, %v172
    %174 = vmatmul.f32.gmra.mxu0 %v84
    %v175 = vpop.f32.mrf.mxu0
    %v176 = vadd.f32 0.0, %v175
    %177 = vmatmul.f32.gmra.mxu0 %v87
    %v178 = vpop.f32.mrf.mxu0
    %v179 = vadd.f32 0.0, %v178
    %180 = vmatmul.f32.gmra.mxu0 %v90
    %v181 = vpop.f32.mrf.mxu0
    %v182 = vadd.f32 0.0, %v181
    %183 = vmatmul.f32.gmra.mxu0 %v93
    %v184 = vpop.f32.mrf.mxu0
    %v185 = vadd.f32 0.0, %v184
    %186 = vmatmul.f32.gmra.mxu0 %v96
    %v187 = vpop.f32.mrf.mxu0
    %v188 = vadd.f32 0.0, %v187
    %189 = vmatmul.f32.gmra.mxu0 %v99
    %v190 = vpop.f32.mrf.mxu0
    %v191 = vadd.f32 0.0, %v190
    %192 = vmatmul.f32.gmra.mxu0 %v102
    %v193 = vpop.f32.mrf.mxu0
    %v194 = vadd.f32 0.0, %v193
    %195 = vmatmul.f32.gmra.mxu0 %v105
    %v196 = vpop.f32.mrf.mxu0
    %v197 = vadd.f32 0.0, %v196
    %198 = vmatmul.f32.gmra.mxu0 %v108
    %v199 = vpop.f32.mrf.mxu0
    %v200 = vadd.f32 0.0, %v199
    %201 = vmatmul.f32.gmra.mxu0 %v111
    %v202 = vpop.f32.mrf.mxu0
    %v203 = vadd.f32 0.0, %v202
    %204 = vmatmul.f32.gmra.mxu0 %v114
    %v205 = vpop.f32.mrf.mxu0
    %v206 = vadd.f32 0.0, %v205
    %207 = vmatmul.f32.gmra.mxu0 %v117
    %v208 = vpop.f32.mrf.mxu0
    %v209 = vadd.f32 0.0, %v208
    %210 = vmatmul.f32.gmra.mxu0 %v120
    %v211 = vpop.f32.mrf.mxu0
    %v212 = vadd.f32 0.0, %v211
    %213 = vmatmul.f32.gmra.mxu0 %v123
    %v214 = vpop.f32.mrf.mxu0
    %v215 = vadd.f32 0.0, %v214
    %216 = vmatmul.f32.gmra.mxu0 %v126
    %v217 = vpop.f32.mrf.mxu0
    %v218 = vadd.f32 0.0, %v217
    %219 = vmatmul.f32.gmra.mxu0 %v129
    %v220 = vpop.f32.mrf.mxu0
    %v221 = vadd.f32 0.0, %v220
    %222 = vmatmul.f32.gmra.mxu0 %v132
    %v223 = vpop.f32.mrf.mxu0
    %v224 = vadd.f32 0.0, %v223
    %225 = vmatmul.f32.gmra.mxu0 %v135
    %v226 = vpop.f32.mrf.mxu0
    %v227 = vadd.f32 0.0, %v226
    %228 = vmatmul.f32.gmra.mxu0 %v138
    %v229 = vpop.f32.mrf.mxu0
    %v230 = vadd.f32 0.0, %v229
    %231 = vmatmul.f32.gmra.mxu0 %v141
    %v232 = vpop.f32.mrf.mxu0
    %v233 = vadd.f32 0.0, %v232
    %234 = vdwg.mxu0
    %s235 = sld [smem:[#allocation2]]
    %v236 = vxor.u32 %v161, 2147483648
    %v237 = vxor.u32 %v164, 2147483648
    %v238 = vxor.u32 %v167, 2147483648
    %v239 = vxor.u32 %v170, 2147483648
    %v240 = vxor.u32 %v173, 2147483648
    %v241 = vxor.u32 %v176, 2147483648
    %v242 = vxor.u32 %v179, 2147483648
    %v243 = vxor.u32 %v182, 2147483648
    %v244 = vxor.u32 %v185, 2147483648
    %v245 = vxor.u32 %v188, 2147483648
    %v246 = vxor.u32 %v191, 2147483648
    %v247 = vxor.u32 %v194, 2147483648
    %v248 = vxor.u32 %v197, 2147483648
    %v249 = vxor.u32 %v200, 2147483648
    %v250 = vxor.u32 %v203, 2147483648
    %v251 = vxor.u32 %v206, 2147483648
    %v252 = vxor.u32 %v209, 2147483648
    %v253 = vxor.u32 %v212, 2147483648
    %v254 = vxor.u32 %v215, 2147483648
    %v255 = vxor.u32 %v218, 2147483648
    %v256 = vxor.u32 %v221, 2147483648
    %v257 = vxor.u32 %v224, 2147483648
    %v258 = vxor.u32 %v227, 2147483648
    %v259 = vxor.u32 %v230, 2147483648
    %v260 = vxor.u32 %v233, 2147483648
    %v261 = vmul.f32 %v236, 1.442695
    %v262 = vpow.pop %v261
    %v263 = vmul.f32 %v237, 1.442695
    %v264 = vpow.pop %v263
    %v265 = vmul.f32 %v238, 1.442695
    %v266 = vpow.pop %v265
    %v267 = vmul.f32 %v239, 1.442695
    %v268 = vpow.pop %v267
    %v269 = vmul.f32 %v240, 1.442695
    %v270 = vpow.pop %v269
    %v271 = vmul.f32 %v241, 1.442695
    %v272 = vpow.pop %v271
    %v273 = vmul.f32 %v242, 1.442695
    %v274 = vpow.pop %v273
    %v275 = vmul.f32 %v243, 1.442695
    %v276 = vpow.pop %v275
    %v277 = vmul.f32 %v244, 1.442695
    %v278 = vpow.pop %v277
    %v279 = vmul.f32 %v245, 1.442695
    %v280 = vpow.pop %v279
    %v281 = vmul.f32 %v246, 1.442695
    %v282 = vpow.pop %v281
    %v283 = vmul.f32 %v247, 1.442695
    %v284 = vpow.pop %v283
    %v285 = vmul.f32 %v248, 1.442695
    %v286 = vpow.pop %v285
    %v287 = vmul.f32 %v249, 1.442695
    %v288 = vpow.pop %v287
    %v289 = vmul.f32 %v250, 1.442695
    %v290 = vpow.pop %v289
    %v291 = vmul.f32 %v251, 1.442695
    %v292 = vpow.pop %v291
    %v293 = vmul.f32 %v252, 1.442695
    %v294 = vpow.pop %v293
    %v295 = vmul.f32 %v253, 1.442695
    %v296 = vpow.pop %v295
    %v297 = vmul.f32 %v254, 1.442695
    %v298 = vpow.pop %v297
    %v299 = vmul.f32 %v255, 1.442695
    %v300 = vpow.pop %v299
    %v301 = vmul.f32 %v256, 1.442695
    %v302 = vpow.pop %v301
    %v303 = vmul.f32 %v257, 1.442695
    %v304 = vpow.pop %v303
    %v305 = vmul.f32 %v258, 1.442695
    %v306 = vpow.pop %v305
    %v307 = vmul.f32 %v259, 1.442695
    %v308 = vpow.pop %v307
    %v309 = vmul.f32 %v260, 1.442695
    %v310 = vpow.pop %v309
    %v311 = vadd.f32 %v262, 1.0
    %v312 = vadd.f32 %v264, 1.0
    %v313 = vadd.f32 %v266, 1.0
    %v314 = vadd.f32 %v268, 1.0
    %v315 = vadd.f32 %v270, 1.0
    %v316 = vadd.f32 %v272, 1.0
    %v317 = vadd.f32 %v274, 1.0
    %v318 = vadd.f32 %v276, 1.0
    %v319 = vadd.f32 %v278, 1.0
    %v320 = vadd.f32 %v280, 1.0
    %v321 = vadd.f32 %v282, 1.0
    %v322 = vadd.f32 %v284, 1.0
    %v323 = vadd.f32 %v286, 1.0
    %v324 = vadd.f32 %v288, 1.0
    %v325 = vadd.f32 %v290, 1.0
    %v326 = vadd.f32 %v292, 1.0
    %v327 = vadd.f32 %v294, 1.0
    %v328 = vadd.f32 %v296, 1.0
    %v329 = vadd.f32 %v298, 1.0
    %v330 = vadd.f32 %v300, 1.0
    %v331 = vadd.f32 %v302, 1.0
    %v332 = vadd.f32 %v304, 1.0
    %v333 = vadd.f32 %v306, 1.0
    %v334 = vadd.f32 %v308, 1.0
    %v335 = vadd.f32 %v310, 1.0
    %v336 = vrcp.pop %v311
    %v337 = vmul.f32 %v311, %v336
    %v338 = vsub.f32 1.0, %v337
    %v339 = vmul.f32 %v336, %v338
    %v340 = vadd.f32 %v336, %v339
    %vm341 = vweird.f32 %v311
    %vm342 = vweird.f32 %v336
    %vm343 = vmor %vm341, %vm342
    %v344 = vsel %vm343, %v336, %v340
    %v345 = vand.u32 2147483647, %v311
    %vm346 = vcmp.eq.f32.partialorder %v345, 8.507059e+37
    %v347 = vand.u32 %v311, 2147483648
    %v348 = vor.u32 1.1754944e-38, %v347
    %v349 = vsel %vm346, %v348, %v344
    %v350 = vmul.f32 1.0, %v349
    %v351 = vrcp.pop %v312
    %v352 = vmul.f32 %v312, %v351
    %v353 = vsub.f32 1.0, %v352
    %v354 = vmul.f32 %v351, %v353
    %v355 = vadd.f32 %v351, %v354
    %vm356 = vweird.f32 %v312
    %vm357 = vweird.f32 %v351
    %vm358 = vmor %vm356, %vm357
    %v359 = vsel %vm358, %v351, %v355
    %v360 = vand.u32 2147483647, %v312
    %vm361 = vcmp.eq.f32.partialorder %v360, 8.507059e+37
    %v362 = vand.u32 %v312, 2147483648
    %v363 = vor.u32 1.1754944e-38, %v362
    %v364 = vsel %vm361, %v363, %v359
    %v365 = vmul.f32 1.0, %v364
    %v366 = vrcp.pop %v313
    %v367 = vmul.f32 %v313, %v366
    %v368 = vsub.f32 1.0, %v367
    %v369 = vmul.f32 %v366, %v368
    %v370 = vadd.f32 %v366, %v369
    %vm371 = vweird.f32 %v313
    %vm372 = vweird.f32 %v366
    %vm373 = vmor %vm371, %vm372
    %v374 = vsel %vm373, %v366, %v370
    %v375 = vand.u32 2147483647, %v313
    %vm376 = vcmp.eq.f32.partialorder %v375, 8.507059e+37
    %v377 = vand.u32 %v313, 2147483648
    %v378 = vor.u32 1.1754944e-38, %v377
    %v379 = vsel %vm376, %v378, %v374
    %v380 = vmul.f32 1.0, %v379
    %v381 = vrcp.pop %v314
    %v382 = vmul.f32 %v314, %v381
    %v383 = vsub.f32 1.0, %v382
    %v384 = vmul.f32 %v381, %v383
    %v385 = vadd.f32 %v381, %v384
    %vm386 = vweird.f32 %v314
    %vm387 = vweird.f32 %v381
    %vm388 = vmor %vm386, %vm387
    %v389 = vsel %vm388, %v381, %v385
    %v390 = vand.u32 2147483647, %v314
    %vm391 = vcmp.eq.f32.partialorder %v390, 8.507059e+37
    %v392 = vand.u32 %v314, 2147483648
    %v393 = vor.u32 1.1754944e-38, %v392
    %v394 = vsel %vm391, %v393, %v389
    %v395 = vmul.f32 1.0, %v394
    %v396 = vrcp.pop %v315
    %v397 = vmul.f32 %v315, %v396
    %v398 = vsub.f32 1.0, %v397
    %v399 = vmul.f32 %v396, %v398
    %v400 = vadd.f32 %v396, %v399
    %vm401 = vweird.f32 %v315
    %vm402 = vweird.f32 %v396
    %vm403 = vmor %vm401, %vm402
    %v404 = vsel %vm403, %v396, %v400
    %v405 = vand.u32 2147483647, %v315
    %vm406 = vcmp.eq.f32.partialorder %v405, 8.507059e+37
    %v407 = vand.u32 %v315, 2147483648
    %v408 = vor.u32 1.1754944e-38, %v407
    %v409 = vsel %vm406, %v408, %v404
    %v410 = vmul.f32 1.0, %v409
    %v411 = vrcp.pop %v316
    %v412 = vmul.f32 %v316, %v411
    %v413 = vsub.f32 1.0, %v412
    %v414 = vmul.f32 %v411, %v413
    %v415 = vadd.f32 %v411, %v414
    %vm416 = vweird.f32 %v316
    %vm417 = vweird.f32 %v411
    %vm418 = vmor %vm416, %vm417
    %v419 = vsel %vm418, %v411, %v415
    %v420 = vand.u32 2147483647, %v316
    %vm421 = vcmp.eq.f32.partialorder %v420, 8.507059e+37
    %v422 = vand.u32 %v316, 2147483648
    %v423 = vor.u32 1.1754944e-38, %v422
    %v424 = vsel %vm421, %v423, %v419
    %v425 = vmul.f32 1.0, %v424
    %v426 = vrcp.pop %v317
    %v427 = vmul.f32 %v317, %v426
    %v428 = vsub.f32 1.0, %v427
    %v429 = vmul.f32 %v426, %v428
    %v430 = vadd.f32 %v426, %v429
    %vm431 = vweird.f32 %v317
    %vm432 = vweird.f32 %v426
    %vm433 = vmor %vm431, %vm432
    %v434 = vsel %vm433, %v426, %v430
    %v435 = vand.u32 2147483647, %v317
    %vm436 = vcmp.eq.f32.partialorder %v435, 8.507059e+37
    %v437 = vand.u32 %v317, 2147483648
    %v438 = vor.u32 1.1754944e-38, %v437
    %v439 = vsel %vm436, %v438, %v434
    %v440 = vmul.f32 1.0, %v439
    %v441 = vrcp.pop %v318
    %v442 = vmul.f32 %v318, %v441
    %v443 = vsub.f32 1.0, %v442
    %v444 = vmul.f32 %v441, %v443
    %v445 = vadd.f32 %v441, %v444
    %vm446 = vweird.f32 %v318
    %vm447 = vweird.f32 %v441
    %vm448 = vmor %vm446, %vm447
    %v449 = vsel %vm448, %v441, %v445
    %v450 = vand.u32 2147483647, %v318
    %vm451 = vcmp.eq.f32.partialorder %v450, 8.507059e+37
    %v452 = vand.u32 %v318, 2147483648
    %v453 = vor.u32 1.1754944e-38, %v452
    %v454 = vsel %vm451, %v453, %v449
    %v455 = vmul.f32 1.0, %v454
    %v456 = vrcp.pop %v319
    %v457 = vmul.f32 %v319, %v456
    %v458 = vsub.f32 1.0, %v457
    %v459 = vmul.f32 %v456, %v458
    %v460 = vadd.f32 %v456, %v459
    %vm461 = vweird.f32 %v319
    %vm462 = vweird.f32 %v456
    %vm463 = vmor %vm461, %vm462
    %v464 = vsel %vm463, %v456, %v460
    %v465 = vand.u32 2147483647, %v319
    %vm466 = vcmp.eq.f32.partialorder %v465, 8.507059e+37
    %v467 = vand.u32 %v319, 2147483648
    %v468 = vor.u32 1.1754944e-38, %v467
    %v469 = vsel %vm466, %v468, %v464
    %v470 = vmul.f32 1.0, %v469
    %v471 = vrcp.pop %v320
    %v472 = vmul.f32 %v320, %v471
    %v473 = vsub.f32 1.0, %v472
    %v474 = vmul.f32 %v471, %v473
    %v475 = vadd.f32 %v471, %v474
    %vm476 = vweird.f32 %v320
    %vm477 = vweird.f32 %v471
    %vm478 = vmor %vm476, %vm477
    %v479 = vsel %vm478, %v471, %v475
    %v480 = vand.u32 2147483647, %v320
    %vm481 = vcmp.eq.f32.partialorder %v480, 8.507059e+37
    %v482 = vand.u32 %v320, 2147483648
    %v483 = vor.u32 1.1754944e-38, %v482
    %v484 = vsel %vm481, %v483, %v479
    %v485 = vmul.f32 1.0, %v484
    %v486 = vrcp.pop %v321
    %v487 = vmul.f32 %v321, %v486
    %v488 = vsub.f32 1.0, %v487
    %v489 = vmul.f32 %v486, %v488
    %v490 = vadd.f32 %v486, %v489
    %vm491 = vweird.f32 %v321
    %vm492 = vweird.f32 %v486
    %vm493 = vmor %vm491, %vm492
    %v494 = vsel %vm493, %v486, %v490
    %v495 = vand.u32 2147483647, %v321
    %vm496 = vcmp.eq.f32.partialorder %v495, 8.507059e+37
    %v497 = vand.u32 %v321, 2147483648
    %v498 = vor.u32 1.1754944e-38, %v497
    %v499 = vsel %vm496, %v498, %v494
    %v500 = vmul.f32 1.0, %v499
    %v501 = vrcp.pop %v322
    %v502 = vmul.f32 %v322, %v501
    %v503 = vsub.f32 1.0, %v502
    %v504 = vmul.f32 %v501, %v503
    %v505 = vadd.f32 %v501, %v504
    %vm506 = vweird.f32 %v322
    %vm507 = vweird.f32 %v501
    %vm508 = vmor %vm506, %vm507
    %v509 = vsel %vm508, %v501, %v505
    %v510 = vand.u32 2147483647, %v322
    %vm511 = vcmp.eq.f32.partialorder %v510, 8.507059e+37
    %v512 = vand.u32 %v322, 2147483648
    %v513 = vor.u32 1.1754944e-38, %v512
    %v514 = vsel %vm511, %v513, %v509
    %v515 = vmul.f32 1.0, %v514
    %v516 = vrcp.pop %v323
    %v517 = vmul.f32 %v323, %v516
    %v518 = vsub.f32 1.0, %v517
    %v519 = vmul.f32 %v516, %v518
    %v520 = vadd.f32 %v516, %v519
    %vm521 = vweird.f32 %v323
    %vm522 = vweird.f32 %v516
    %vm523 = vmor %vm521, %vm522
    %v524 = vsel %vm523, %v516, %v520
    %v525 = vand.u32 2147483647, %v323
    %vm526 = vcmp.eq.f32.partialorder %v525, 8.507059e+37
    %v527 = vand.u32 %v323, 2147483648
    %v528 = vor.u32 1.1754944e-38, %v527
    %v529 = vsel %vm526, %v528, %v524
    %v530 = vmul.f32 1.0, %v529
    %v531 = vrcp.pop %v324
    %v532 = vmul.f32 %v324, %v531
    %v533 = vsub.f32 1.0, %v532
    %v534 = vmul.f32 %v531, %v533
    %v535 = vadd.f32 %v531, %v534
    %vm536 = vweird.f32 %v324
    %vm537 = vweird.f32 %v531
    %vm538 = vmor %vm536, %vm537
    %v539 = vsel %vm538, %v531, %v535
    %v540 = vand.u32 2147483647, %v324
    %vm541 = vcmp.eq.f32.partialorder %v540, 8.507059e+37
    %v542 = vand.u32 %v324, 2147483648
    %v543 = vor.u32 1.1754944e-38, %v542
    %v544 = vsel %vm541, %v543, %v539
    %v545 = vmul.f32 1.0, %v544
    %v546 = vrcp.pop %v325
    %v547 = vmul.f32 %v325, %v546
    %v548 = vsub.f32 1.0, %v547
    %v549 = vmul.f32 %v546, %v548
    %v550 = vadd.f32 %v546, %v549
    %vm551 = vweird.f32 %v325
    %vm552 = vweird.f32 %v546
    %vm553 = vmor %vm551, %vm552
    %v554 = vsel %vm553, %v546, %v550
    %v555 = vand.u32 2147483647, %v325
    %vm556 = vcmp.eq.f32.partialorder %v555, 8.507059e+37
    %v557 = vand.u32 %v325, 2147483648
    %v558 = vor.u32 1.1754944e-38, %v557
    %v559 = vsel %vm556, %v558, %v554
    %v560 = vmul.f32 1.0, %v559
    %v561 = vrcp.pop %v326
    %v562 = vmul.f32 %v326, %v561
    %v563 = vsub.f32 1.0, %v562
    %v564 = vmul.f32 %v561, %v563
    %v565 = vadd.f32 %v561, %v564
    %vm566 = vweird.f32 %v326
    %vm567 = vweird.f32 %v561
    %vm568 = vmor %vm566, %vm567
    %v569 = vsel %vm568, %v561, %v565
    %v570 = vand.u32 2147483647, %v326
    %vm571 = vcmp.eq.f32.partialorder %v570, 8.507059e+37
    %v572 = vand.u32 %v326, 2147483648
    %v573 = vor.u32 1.1754944e-38, %v572
    %v574 = vsel %vm571, %v573, %v569
    %v575 = vmul.f32 1.0, %v574
    %v576 = vrcp.pop %v327
    %v577 = vmul.f32 %v327, %v576
    %v578 = vsub.f32 1.0, %v577
    %v579 = vmul.f32 %v576, %v578
    %v580 = vadd.f32 %v576, %v579
    %vm581 = vweird.f32 %v327
    %vm582 = vweird.f32 %v576
    %vm583 = vmor %vm581, %vm582
    %v584 = vsel %vm583, %v576, %v580
    %v585 = vand.u32 2147483647, %v327
    %vm586 = vcmp.eq.f32.partialorder %v585, 8.507059e+37
    %v587 = vand.u32 %v327, 2147483648
    %v588 = vor.u32 1.1754944e-38, %v587
    %v589 = vsel %vm586, %v588, %v584
    %v590 = vmul.f32 1.0, %v589
    %v591 = vrcp.pop %v328
    %v592 = vmul.f32 %v328, %v591
    %v593 = vsub.f32 1.0, %v592
    %v594 = vmul.f32 %v591, %v593
    %v595 = vadd.f32 %v591, %v594
    %vm596 = vweird.f32 %v328
    %vm597 = vweird.f32 %v591
    %vm598 = vmor %vm596, %vm597
    %v599 = vsel %vm598, %v591, %v595
    %v600 = vand.u32 2147483647, %v328
    %vm601 = vcmp.eq.f32.partialorder %v600, 8.507059e+37
    %v602 = vand.u32 %v328, 2147483648
    %v603 = vor.u32 1.1754944e-38, %v602
    %v604 = vsel %vm601, %v603, %v599
    %v605 = vmul.f32 1.0, %v604
    %v606 = vrcp.pop %v329
    %v607 = vmul.f32 %v329, %v606
    %v608 = vsub.f32 1.0, %v607
    %v609 = vmul.f32 %v606, %v608
    %v610 = vadd.f32 %v606, %v609
    %vm611 = vweird.f32 %v329
    %vm612 = vweird.f32 %v606
    %vm613 = vmor %vm611, %vm612
    %v614 = vsel %vm613, %v606, %v610
    %v615 = vand.u32 2147483647, %v329
    %vm616 = vcmp.eq.f32.partialorder %v615, 8.507059e+37
    %v617 = vand.u32 %v329, 2147483648
    %v618 = vor.u32 1.1754944e-38, %v617
    %v619 = vsel %vm616, %v618, %v614
    %v620 = vmul.f32 1.0, %v619
    %v621 = vrcp.pop %v330
    %v622 = vmul.f32 %v330, %v621
    %v623 = vsub.f32 1.0, %v622
    %v624 = vmul.f32 %v621, %v623
    %v625 = vadd.f32 %v621, %v624
    %vm626 = vweird.f32 %v330
    %vm627 = vweird.f32 %v621
    %vm628 = vmor %vm626, %vm627
    %v629 = vsel %vm628, %v621, %v625
    %v630 = vand.u32 2147483647, %v330
    %vm631 = vcmp.eq.f32.partialorder %v630, 8.507059e+37
    %v632 = vand.u32 %v330, 2147483648
    %v633 = vor.u32 1.1754944e-38, %v632
    %v634 = vsel %vm631, %v633, %v629
    %v635 = vmul.f32 1.0, %v634
    %v636 = vrcp.pop %v331
    %v637 = vmul.f32 %v331, %v636
    %v638 = vsub.f32 1.0, %v637
    %v639 = vmul.f32 %v636, %v638
    %v640 = vadd.f32 %v636, %v639
    %vm641 = vweird.f32 %v331
    %vm642 = vweird.f32 %v636
    %vm643 = vmor %vm641, %vm642
    %v644 = vsel %vm643, %v636, %v640
    %v645 = vand.u32 2147483647, %v331
    %vm646 = vcmp.eq.f32.partialorder %v645, 8.507059e+37
    %v647 = vand.u32 %v331, 2147483648
    %v648 = vor.u32 1.1754944e-38, %v647
    %v649 = vsel %vm646, %v648, %v644
    %v650 = vmul.f32 1.0, %v649
    %v651 = vrcp.pop %v332
    %v652 = vmul.f32 %v332, %v651
    %v653 = vsub.f32 1.0, %v652
    %v654 = vmul.f32 %v651, %v653
    %v655 = vadd.f32 %v651, %v654
    %vm656 = vweird.f32 %v332
    %vm657 = vweird.f32 %v651
    %vm658 = vmor %vm656, %vm657
    %v659 = vsel %vm658, %v651, %v655
    %v660 = vand.u32 2147483647, %v332
    %vm661 = vcmp.eq.f32.partialorder %v660, 8.507059e+37
    %v662 = vand.u32 %v332, 2147483648
    %v663 = vor.u32 1.1754944e-38, %v662
    %v664 = vsel %vm661, %v663, %v659
    %v665 = vmul.f32 1.0, %v664
    %v666 = vrcp.pop %v333
    %v667 = vmul.f32 %v333, %v666
    %v668 = vsub.f32 1.0, %v667
    %v669 = vmul.f32 %v666, %v668
    %v670 = vadd.f32 %v666, %v669
    %vm671 = vweird.f32 %v333
    %vm672 = vweird.f32 %v666
    %vm673 = vmor %vm671, %vm672
    %v674 = vsel %vm673, %v666, %v670
    %v675 = vand.u32 2147483647, %v333
    %vm676 = vcmp.eq.f32.partialorder %v675, 8.507059e+37
    %v677 = vand.u32 %v333, 2147483648
    %v678 = vor.u32 1.1754944e-38, %v677
    %v679 = vsel %vm676, %v678, %v674
    %v680 = vmul.f32 1.0, %v679
    %v681 = vrcp.pop %v334
    %v682 = vmul.f32 %v334, %v681
    %v683 = vsub.f32 1.0, %v682
    %v684 = vmul.f32 %v681, %v683
    %v685 = vadd.f32 %v681, %v684
    %vm686 = vweird.f32 %v334
    %vm687 = vweird.f32 %v681
    %vm688 = vmor %vm686, %vm687
    %v689 = vsel %vm688, %v681, %v685
    %v690 = vand.u32 2147483647, %v334
    %vm691 = vcmp.eq.f32.partialorder %v690, 8.507059e+37
    %v692 = vand.u32 %v334, 2147483648
    %v693 = vor.u32 1.1754944e-38, %v692
    %v694 = vsel %vm691, %v693, %v689
    %v695 = vmul.f32 1.0, %v694
    %v696 = vrcp.pop %v335
    %v697 = vmul.f32 %v335, %v696
    %v698 = vsub.f32 1.0, %v697
    %v699 = vmul.f32 %v696, %v698
    %v700 = vadd.f32 %v696, %v699
    %vm701 = vweird.f32 %v335
    %vm702 = vweird.f32 %v696
    %vm703 = vmor %vm701, %vm702
    %v704 = vsel %vm703, %v696, %v700
    %v705 = vand.u32 2147483647, %v335
    %vm706 = vcmp.eq.f32.partialorder %v705, 8.507059e+37
    %v707 = vand.u32 %v335, 2147483648
    %v708 = vor.u32 1.1754944e-38, %v707
    %v709 = vsel %vm706, %v708, %v704
    %v710 = vmul.f32 1.0, %v709
    %v711 = vstv %s235
    %v712 = vmul.f32 %v350, %v711
    %v713 = vmul.f32 %v365, %v711
    %v714 = vmul.f32 %v380, %v711
    %v715 = vmul.f32 %v395, %v711
    %v716 = vmul.f32 %v410, %v711
    %v717 = vmul.f32 %v425, %v711
    %v718 = vmul.f32 %v440, %v711
    %v719 = vmul.f32 %v455, %v711
    %v720 = vmul.f32 %v470, %v711
    %v721 = vmul.f32 %v485, %v711
    %v722 = vmul.f32 %v500, %v711
    %v723 = vmul.f32 %v515, %v711
    %v724 = vmul.f32 %v530, %v711
    %v725 = vmul.f32 %v545, %v711
    %v726 = vmul.f32 %v560, %v711
    %v727 = vmul.f32 %v575, %v711
    %v728 = vmul.f32 %v590, %v711
    %v729 = vmul.f32 %v605, %v711
    %v730 = vmul.f32 %v620, %v711
    %v731 = vmul.f32 %v635, %v711
    %v732 = vmul.f32 %v650, %v711
    %v733 = vmul.f32 %v665, %v711
    %v734 = vmul.f32 %v680, %v711
    %v735 = vmul.f32 %v695, %v711
    %v736 = vmul.f32 %v710, %v711
    %v737 = vadd.f32 %v712, 1.1
    %v738 = vadd.f32 %v713, 1.1
    %v739 = vadd.f32 %v714, 1.1
    %v740 = vadd.f32 %v715, 1.1
    %v741 = vadd.f32 %v716, 1.1
    %v742 = vadd.f32 %v717, 1.1
    %v743 = vadd.f32 %v718, 1.1
    %v744 = vadd.f32 %v719, 1.1
    %v745 = vadd.f32 %v720, 1.1
    %v746 = vadd.f32 %v721, 1.1
    %v747 = vadd.f32 %v722, 1.1
    %v748 = vadd.f32 %v723, 1.1
    %v749 = vadd.f32 %v724, 1.1
    %v750 = vadd.f32 %v725, 1.1
    %v751 = vadd.f32 %v726, 1.1
    %v752 = vadd.f32 %v727, 1.1
    %v753 = vadd.f32 %v728, 1.1
    %v754 = vadd.f32 %v729, 1.1
    %v755 = vadd.f32 %v730, 1.1
    %v756 = vadd.f32 %v731, 1.1
    %v757 = vadd.f32 %v732, 1.1
    %v758 = vadd.f32 %v733, 1.1
    %v759 = vadd.f32 %v734, 1.1
    %v760 = vadd.f32 %v735, 1.1
    %v761 = vadd.f32 %v736, 1.1
    %v762 = vmul.f32 %v161, %v161
    %v763 = vmul.f32 %v164, %v164
    %v764 = vmul.f32 %v167, %v167
    %v765 = vmul.f32 %v170, %v170
    %v766 = vmul.f32 %v173, %v173
    %v767 = vmul.f32 %v176, %v176
    %v768 = vmul.f32 %v179, %v179
    %v769 = vmul.f32 %v182, %v182
    %v770 = vmul.f32 %v185, %v185
    %v771 = vmul.f32 %v188, %v188
    %v772 = vmul.f32 %v191, %v191
    %v773 = vmul.f32 %v194, %v194
    %v774 = vmul.f32 %v197, %v197
    %v775 = vmul.f32 %v200, %v200
    %v776 = vmul.f32 %v203, %v203
    %v777 = vmul.f32 %v206, %v206
    %v778 = vmul.f32 %v209, %v209
    %v779 = vmul.f32 %v212, %v212
    %v780 = vmul.f32 %v215, %v215
    %v781 = vmul.f32 %v218, %v218
    %v782 = vmul.f32 %v221, %v221
    %v783 = vmul.f32 %v224, %v224
    %v784 = vmul.f32 %v227, %v227
    %v785 = vmul.f32 %v230, %v230
    %v786 = vmul.f32 %v233, %v233
    %v787 = vsel %vm67, %v762, 0.0
    %788 = vadd.xlane.f32.xlu0 %v787
    %v789 = vpop.xlane.xlu0 %788
    %v790 = vsel %vm67, %v763, 0.0
    %791 = vadd.xlane.f32.xlu0 %v790
    %v792 = vpop.xlane.xlu0 %791
    %v793 = vsel %vm67, %v764, 0.0
    %794 = vadd.xlane.f32.xlu0 %v793
    %v795 = vpop.xlane.xlu0 %794
    %v796 = vsel %vm67, %v765, 0.0
    %797 = vadd.xlane.f32.xlu0 %v796
    %v798 = vpop.xlane.xlu0 %797
    %v799 = vsel %vm67, %v766, 0.0
    %800 = vadd.xlane.f32.xlu0 %v799
    %v801 = vpop.xlane.xlu0 %800
    %v802 = vsel %vm67, %v767, 0.0
    %803 = vadd.xlane.f32.xlu0 %v802
    %v804 = vpop.xlane.xlu0 %803
    %v805 = vsel %vm67, %v768, 0.0
    %806 = vadd.xlane.f32.xlu0 %v805
    %v807 = vpop.xlane.xlu0 %806
    %v808 = vsel %vm67, %v769, 0.0
    %809 = vadd.xlane.f32.xlu0 %v808
    %v810 = vpop.xlane.xlu0 %809
    %v811 = vsel %vm67, %v770, 0.0
    %812 = vadd.xlane.f32.xlu0 %v811
    %v813 = vpop.xlane.xlu0 %812
    %v814 = vsel %vm67, %v771, 0.0
    %815 = vadd.xlane.f32.xlu0 %v814
    %v816 = vpop.xlane.xlu0 %815
    %v817 = vsel %vm67, %v772, 0.0
    %818 = vadd.xlane.f32.xlu0 %v817
    %v819 = vpop.xlane.xlu0 %818
    %v820 = vsel %vm67, %v773, 0.0
    %821 = vadd.xlane.f32.xlu0 %v820
    %v822 = vpop.xlane.xlu0 %821
    %v823 = vsel %vm67, %v774, 0.0
    %824 = vadd.xlane.f32.xlu0 %v823
    %v825 = vpop.xlane.xlu0 %824
    %v826 = vsel %vm67, %v775, 0.0
    %827 = vadd.xlane.f32.xlu0 %v826
    %v828 = vpop.xlane.xlu0 %827
    %v829 = vsel %vm67, %v776, 0.0
    %830 = vadd.xlane.f32.xlu0 %v829
    %v831 = vpop.xlane.xlu0 %830
    %v832 = vsel %vm67, %v777, 0.0
    %833 = vadd.xlane.f32.xlu0 %v832
    %v834 = vpop.xlane.xlu0 %833
    %v835 = vsel %vm67, %v778, 0.0
    %836 = vadd.xlane.f32.xlu0 %v835
    %v837 = vpop.xlane.xlu0 %836
    %v838 = vsel %vm67, %v779, 0.0
    %839 = vadd.xlane.f32.xlu0 %v838
    %v840 = vpop.xlane.xlu0 %839
    %v841 = vsel %vm67, %v780, 0.0
    %842 = vadd.xlane.f32.xlu0 %v841
    %v843 = vpop.xlane.xlu0 %842
    %v844 = vsel %vm67, %v781, 0.0
    %845 = vadd.xlane.f32.xlu0 %v844
    %v846 = vpop.xlane.xlu0 %845
    %v847 = vsel %vm67, %v782, 0.0
    %848 = vadd.xlane.f32.xlu0 %v847
    %v849 = vpop.xlane.xlu0 %848
    %v850 = vsel %vm67, %v783, 0.0
    %851 = vadd.xlane.f32.xlu0 %v850
    %v852 = vpop.xlane.xlu0 %851
    %v853 = vsel %vm67, %v784, 0.0
    %854 = vadd.xlane.f32.xlu0 %v853
    %v855 = vpop.xlane.xlu0 %854
    %v856 = vsel %vm67, %v785, 0.0
    %857 = vadd.xlane.f32.xlu0 %v856
    %v858 = vpop.xlane.xlu0 %857
    %v859 = vsel %vm67, %v786, 0.0
    %860 = vadd.xlane.f32.xlu0 %v859
    %v861 = vpop.xlane.xlu0 %860
    %v862 = vsub.f32 %v789, %v762
    %v863 = vsub.f32 %v792, %v763
    %v864 = vsub.f32 %v795, %v764
    %v865 = vsub.f32 %v798, %v765
    %v866 = vsub.f32 %v801, %v766
    %v867 = vsub.f32 %v804, %v767
    %v868 = vsub.f32 %v807, %v768
    %v869 = vsub.f32 %v810, %v769
    %v870 = vsub.f32 %v813, %v770
    %v871 = vsub.f32 %v816, %v771
    %v872 = vsub.f32 %v819, %v772
    %v873 = vsub.f32 %v822, %v773
    %v874 = vsub.f32 %v825, %v774
    %v875 = vsub.f32 %v828, %v775
    %v876 = vsub.f32 %v831, %v776
    %v877 = vsub.f32 %v834, %v777
    %v878 = vsub.f32 %v837, %v778
    %v879 = vsub.f32 %v840, %v779
    %v880 = vsub.f32 %v843, %v780
    %v881 = vsub.f32 %v846, %v781
    %v882 = vsub.f32 %v849, %v782
    %v883 = vsub.f32 %v852, %v783
    %v884 = vsub.f32 %v855, %v784
    %v885 = vsub.f32 %v858, %v785
    %v886 = vsub.f32 %v861, %v786
    %v887 = vmax.f32 %v862, 1e-08
    %v888 = vmax.f32 %v863, 1e-08
    %v889 = vmax.f32 %v864, 1e-08
    %v890 = vmax.f32 %v865, 1e-08
    %v891 = vmax.f32 %v866, 1e-08
    %v892 = vmax.f32 %v867, 1e-08
    %v893 = vmax.f32 %v868, 1e-08
    %v894 = vmax.f32 %v869, 1e-08
    %v895 = vmax.f32 %v870, 1e-08
    %v896 = vmax.f32 %v871, 1e-08
    %v897 = vmax.f32 %v872, 1e-08
    %v898 = vmax.f32 %v873, 1e-08
    %v899 = vmax.f32 %v874, 1e-08
    %v900 = vmax.f32 %v875, 1e-08
    %v901 = vmax.f32 %v876, 1e-08
    %v902 = vmax.f32 %v877, 1e-08
    %v903 = vmax.f32 %v878, 1e-08
    %v904 = vmax.f32 %v879, 1e-08
    %v905 = vmax.f32 %v880, 1e-08
    %v906 = vmax.f32 %v881, 1e-08
    %v907 = vmax.f32 %v882, 1e-08
    %v908 = vmax.f32 %v883, 1e-08
    %v909 = vmax.f32 %v884, 1e-08
    %v910 = vmax.f32 %v885, 1e-08
    %v911 = vmax.f32 %v886, 1e-08
    %v912 = vmul.f32 %v737, %v737
    %v913 = vmul.f32 %v738, %v738
    %v914 = vmul.f32 %v739, %v739
    %v915 = vmul.f32 %v740, %v740
    %v916 = vmul.f32 %v741, %v741
    %v917 = vmul.f32 %v742, %v742
    %v918 = vmul.f32 %v743, %v743
    %v919 = vmul.f32 %v744, %v744
    %v920 = vmul.f32 %v745, %v745
    %v921 = vmul.f32 %v746, %v746
    %v922 = vmul.f32 %v747, %v747
    %v923 = vmul.f32 %v748, %v748
    %v924 = vmul.f32 %v749, %v749
    %v925 = vmul.f32 %v750, %v750
    %v926 = vmul.f32 %v751, %v751
    %v927 = vmul.f32 %v752, %v752
    %v928 = vmul.f32 %v753, %v753
    %v929 = vmul.f32 %v754, %v754
    %v930 = vmul.f32 %v755, %v755
    %v931 = vmul.f32 %v756, %v756
    %v932 = vmul.f32 %v757, %v757
    %v933 = vmul.f32 %v758, %v758
    %v934 = vmul.f32 %v759, %v759
    %v935 = vmul.f32 %v760, %v760
    %v936 = vmul.f32 %v761, %v761
    %v937 = vsub.f32 %v912, 1.0
    %v938 = vsub.f32 %v913, 1.0
    %v939 = vsub.f32 %v914, 1.0
    %v940 = vsub.f32 %v915, 1.0
    %v941 = vsub.f32 %v916, 1.0
    %v942 = vsub.f32 %v917, 1.0
    %v943 = vsub.f32 %v918, 1.0
    %v944 = vsub.f32 %v919, 1.0
    %v945 = vsub.f32 %v920, 1.0
    %v946 = vsub.f32 %v921, 1.0
    %v947 = vsub.f32 %v922, 1.0
    %v948 = vsub.f32 %v923, 1.0
    %v949 = vsub.f32 %v924, 1.0
    %v950 = vsub.f32 %v925, 1.0
    %v951 = vsub.f32 %v926, 1.0
    %v952 = vsub.f32 %v927, 1.0
    %v953 = vsub.f32 %v928, 1.0
    %v954 = vsub.f32 %v929, 1.0
    %v955 = vsub.f32 %v930, 1.0
    %v956 = vsub.f32 %v931, 1.0
    %v957 = vsub.f32 %v932, 1.0
    %v958 = vsub.f32 %v933, 1.0
    %v959 = vsub.f32 %v934, 1.0
    %v960 = vsub.f32 %v935, 1.0
    %v961 = vsub.f32 %v936, 1.0
    %v962 = vrsqrt.pop %v937
    %v963 = vmul.f32 %v962, %v937
    %v964 = vmul.f32 %v963, %v962
    %v965 = vmul.f32 0.5, %v964
    %v966 = vsub.f32 1.5, %v965
    %v967 = vmul.f32 %v962, %v966
    %v968 = vmul.f32 %v937, %v967
    %vm969 = vcmp.eq.f32.partialorder %v937, inf
    %v970 = vsel %vm969, %v937, %v968
    %vm971 = vcmp.eq.f32.partialorder %v937, 0.0
    %v972 = vand.u32 %v937, 2147483648
    %v973 = vsel %vm971, %v972, %v970
    %v974 = vrsqrt.pop %v938
    %v975 = vmul.f32 %v974, %v938
    %v976 = vmul.f32 %v975, %v974
    %v977 = vmul.f32 0.5, %v976
    %v978 = vsub.f32 1.5, %v977
    %v979 = vmul.f32 %v974, %v978
    %v980 = vmul.f32 %v938, %v979
    %vm981 = vcmp.eq.f32.partialorder %v938, inf
    %v982 = vsel %vm981, %v938, %v980
    %vm983 = vcmp.eq.f32.partialorder %v938, 0.0
    %v984 = vand.u32 %v938, 2147483648
    %v985 = vsel %vm983, %v984, %v982
    %v986 = vrsqrt.pop %v939
    %v987 = vmul.f32 %v986, %v939
    %v988 = vmul.f32 %v987, %v986
    %v989 = vmul.f32 0.5, %v988
    %v990 = vsub.f32 1.5, %v989
    %v991 = vmul.f32 %v986, %v990
    %v992 = vmul.f32 %v939, %v991
    %vm993 = vcmp.eq.f32.partialorder %v939, inf
    %v994 = vsel %vm993, %v939, %v992
    %vm995 = vcmp.eq.f32.partialorder %v939, 0.0
    %v996 = vand.u32 %v939, 2147483648
    %v997 = vsel %vm995, %v996, %v994
    %v998 = vrsqrt.pop %v940
    %v999 = vmul.f32 %v998, %v940
    %v1000 = vmul.f32 %v999, %v998
    %v1001 = vmul.f32 0.5, %v1000
    %v1002 = vsub.f32 1.5, %v1001
    %v1003 = vmul.f32 %v998, %v1002
    %v1004 = vmul.f32 %v940, %v1003
    %vm1005 = vcmp.eq.f32.partialorder %v940, inf
    %v1006 = vsel %vm1005, %v940, %v1004
    %vm1007 = vcmp.eq.f32.partialorder %v940, 0.0
    %v1008 = vand.u32 %v940, 2147483648
    %v1009 = vsel %vm1007, %v1008, %v1006
    %v1010 = vrsqrt.pop %v941
    %v1011 = vmul.f32 %v1010, %v941
    %v1012 = vmul.f32 %v1011, %v1010
    %v1013 = vmul.f32 0.5, %v1012
    %v1014 = vsub.f32 1.5, %v1013
    %v1015 = vmul.f32 %v1010, %v1014
    %v1016 = vmul.f32 %v941, %v1015
    %vm1017 = vcmp.eq.f32.partialorder %v941, inf
    %v1018 = vsel %vm1017, %v941, %v1016
    %vm1019 = vcmp.eq.f32.partialorder %v941, 0.0
    %v1020 = vand.u32 %v941, 2147483648
    %v1021 = vsel %vm1019, %v1020, %v1018
    %v1022 = vrsqrt.pop %v942
    %v1023 = vmul.f32 %v1022, %v942
    %v1024 = vmul.f32 %v1023, %v1022
    %v1025 = vmul.f32 0.5, %v1024
    %v1026 = vsub.f32 1.5, %v1025
    %v1027 = vmul.f32 %v1022, %v1026
    %v1028 = vmul.f32 %v942, %v1027
    %vm1029 = vcmp.eq.f32.partialorder %v942, inf
    %v1030 = vsel %vm1029, %v942, %v1028
    %vm1031 = vcmp.eq.f32.partialorder %v942, 0.0
    %v1032 = vand.u32 %v942, 2147483648
    %v1033 = vsel %vm1031, %v1032, %v1030
    %v1034 = vrsqrt.pop %v943
    %v1035 = vmul.f32 %v1034, %v943
    %v1036 = vmul.f32 %v1035, %v1034
    %v1037 = vmul.f32 0.5, %v1036
    %v1038 = vsub.f32 1.5, %v1037
    %v1039 = vmul.f32 %v1034, %v1038
    %v1040 = vmul.f32 %v943, %v1039
    %vm1041 = vcmp.eq.f32.partialorder %v943, inf
    %v1042 = vsel %vm1041, %v943, %v1040
    %vm1043 = vcmp.eq.f32.partialorder %v943, 0.0
    %v1044 = vand.u32 %v943, 2147483648
    %v1045 = vsel %vm1043, %v1044, %v1042
    %v1046 = vrsqrt.pop %v944
    %v1047 = vmul.f32 %v1046, %v944
    %v1048 = vmul.f32 %v1047, %v1046
    %v1049 = vmul.f32 0.5, %v1048
    %v1050 = vsub.f32 1.5, %v1049
    %v1051 = vmul.f32 %v1046, %v1050
    %v1052 = vmul.f32 %v944, %v1051
    %vm1053 = vcmp.eq.f32.partialorder %v944, inf
    %v1054 = vsel %vm1053, %v944, %v1052
    %vm1055 = vcmp.eq.f32.partialorder %v944, 0.0
    %v1056 = vand.u32 %v944, 2147483648
    %v1057 = vsel %vm1055, %v1056, %v1054
    %v1058 = vrsqrt.pop %v945
    %v1059 = vmul.f32 %v1058, %v945
    %v1060 = vmul.f32 %v1059, %v1058
    %v1061 = vmul.f32 0.5, %v1060
    %v1062 = vsub.f32 1.5, %v1061
    %v1063 = vmul.f32 %v1058, %v1062
    %v1064 = vmul.f32 %v945, %v1063
    %vm1065 = vcmp.eq.f32.partialorder %v945, inf
    %v1066 = vsel %vm1065, %v945, %v1064
    %vm1067 = vcmp.eq.f32.partialorder %v945, 0.0
    %v1068 = vand.u32 %v945, 2147483648
    %v1069 = vsel %vm1067, %v1068, %v1066
    %v1070 = vrsqrt.pop %v946
    %v1071 = vmul.f32 %v1070, %v946
    %v1072 = vmul.f32 %v1071, %v1070
    %v1073 = vmul.f32 0.5, %v1072
    %v1074 = vsub.f32 1.5, %v1073
    %v1075 = vmul.f32 %v1070, %v1074
    %v1076 = vmul.f32 %v946, %v1075
    %vm1077 = vcmp.eq.f32.partialorder %v946, inf
    %v1078 = vsel %vm1077, %v946, %v1076
    %vm1079 = vcmp.eq.f32.partialorder %v946, 0.0
    %v1080 = vand.u32 %v946, 2147483648
    %v1081 = vsel %vm1079, %v1080, %v1078
    %v1082 = vrsqrt.pop %v947
    %v1083 = vmul.f32 %v1082, %v947
    %v1084 = vmul.f32 %v1083, %v1082
    %v1085 = vmul.f32 0.5, %v1084
    %v1086 = vsub.f32 1.5, %v1085
    %v1087 = vmul.f32 %v1082, %v1086
    %v1088 = vmul.f32 %v947, %v1087
    %vm1089 = vcmp.eq.f32.partialorder %v947, inf
    %v1090 = vsel %vm1089, %v947, %v1088
    %vm1091 = vcmp.eq.f32.partialorder %v947, 0.0
    %v1092 = vand.u32 %v947, 2147483648
    %v1093 = vsel %vm1091, %v1092, %v1090
    %v1094 = vrsqrt.pop %v948
    %v1095 = vmul.f32 %v1094, %v948
    %v1096 = vmul.f32 %v1095, %v1094
    %v1097 = vmul.f32 0.5, %v1096
    %v1098 = vsub.f32 1.5, %v1097
    %v1099 = vmul.f32 %v1094, %v1098
    %v1100 = vmul.f32 %v948, %v1099
    %vm1101 = vcmp.eq.f32.partialorder %v948, inf
    %v1102 = vsel %vm1101, %v948, %v1100
    %vm1103 = vcmp.eq.f32.partialorder %v948, 0.0
    %v1104 = vand.u32 %v948, 2147483648
    %v1105 = vsel %vm1103, %v1104, %v1102
    %v1106 = vrsqrt.pop %v949
    %v1107 = vmul.f32 %v1106, %v949
    %v1108 = vmul.f32 %v1107, %v1106
    %v1109 = vmul.f32 0.5, %v1108
    %v1110 = vsub.f32 1.5, %v1109
    %v1111 = vmul.f32 %v1106, %v1110
    %v1112 = vmul.f32 %v949, %v1111
    %vm1113 = vcmp.eq.f32.partialorder %v949, inf
    %v1114 = vsel %vm1113, %v949, %v1112
    %vm1115 = vcmp.eq.f32.partialorder %v949, 0.0
    %v1116 = vand.u32 %v949, 2147483648
    %v1117 = vsel %vm1115, %v1116, %v1114
    %v1118 = vrsqrt.pop %v950
    %v1119 = vmul.f32 %v1118, %v950
    %v1120 = vmul.f32 %v1119, %v1118
    %v1121 = vmul.f32 0.5, %v1120
    %v1122 = vsub.f32 1.5, %v1121
    %v1123 = vmul.f32 %v1118, %v1122
    %v1124 = vmul.f32 %v950, %v1123
    %vm1125 = vcmp.eq.f32.partialorder %v950, inf
    %v1126 = vsel %vm1125, %v950, %v1124
    %vm1127 = vcmp.eq.f32.partialorder %v950, 0.0
    %v1128 = vand.u32 %v950, 2147483648
    %v1129 = vsel %vm1127, %v1128, %v1126
    %v1130 = vrsqrt.pop %v951
    %v1131 = vmul.f32 %v1130, %v951
    %v1132 = vmul.f32 %v1131, %v1130
    %v1133 = vmul.f32 0.5, %v1132
    %v1134 = vsub.f32 1.5, %v1133
    %v1135 = vmul.f32 %v1130, %v1134
    %v1136 = vmul.f32 %v951, %v1135
    %vm1137 = vcmp.eq.f32.partialorder %v951, inf
    %v1138 = vsel %vm1137, %v951, %v1136
    %vm1139 = vcmp.eq.f32.partialorder %v951, 0.0
    %v1140 = vand.u32 %v951, 2147483648
    %v1141 = vsel %vm1139, %v1140, %v1138
    %v1142 = vrsqrt.pop %v952
    %v1143 = vmul.f32 %v1142, %v952
    %v1144 = vmul.f32 %v1143, %v1142
    %v1145 = vmul.f32 0.5, %v1144
    %v1146 = vsub.f32 1.5, %v1145
    %v1147 = vmul.f32 %v1142, %v1146
    %v1148 = vmul.f32 %v952, %v1147
    %vm1149 = vcmp.eq.f32.partialorder %v952, inf
    %v1150 = vsel %vm1149, %v952, %v1148
    %vm1151 = vcmp.eq.f32.partialorder %v952, 0.0
    %v1152 = vand.u32 %v952, 2147483648
    %v1153 = vsel %vm1151, %v1152, %v1150
    %v1154 = vrsqrt.pop %v953
    %v1155 = vmul.f32 %v1154, %v953
    %v1156 = vmul.f32 %v1155, %v1154
    %v1157 = vmul.f32 0.5, %v1156
    %v1158 = vsub.f32 1.5, %v1157
    %v1159 = vmul.f32 %v1154, %v1158
    %v1160 = vmul.f32 %v953, %v1159
    %vm1161 = vcmp.eq.f32.partialorder %v953, inf
    %v1162 = vsel %vm1161, %v953, %v1160
    %vm1163 = vcmp.eq.f32.partialorder %v953, 0.0
    %v1164 = vand.u32 %v953, 2147483648
    %v1165 = vsel %vm1163, %v1164, %v1162
    %v1166 = vrsqrt.pop %v954
    %v1167 = vmul.f32 %v1166, %v954
    %v1168 = vmul.f32 %v1167, %v1166
    %v1169 = vmul.f32 0.5, %v1168
    %v1170 = vsub.f32 1.5, %v1169
    %v1171 = vmul.f32 %v1166, %v1170
    %v1172 = vmul.f32 %v954, %v1171
    %vm1173 = vcmp.eq.f32.partialorder %v954, inf
    %v1174 = vsel %vm1173, %v954, %v1172
    %vm1175 = vcmp.eq.f32.partialorder %v954, 0.0
    %v1176 = vand.u32 %v954, 2147483648
    %v1177 = vsel %vm1175, %v1176, %v1174
    %v1178 = vrsqrt.pop %v955
    %v1179 = vmul.f32 %v1178, %v955
    %v1180 = vmul.f32 %v1179, %v1178
    %v1181 = vmul.f32 0.5, %v1180
    %v1182 = vsub.f32 1.5, %v1181
    %v1183 = vmul.f32 %v1178, %v1182
    %v1184 = vmul.f32 %v955, %v1183
    %vm1185 = vcmp.eq.f32.partialorder %v955, inf
    %v1186 = vsel %vm1185, %v955, %v1184
    %vm1187 = vcmp.eq.f32.partialorder %v955, 0.0
    %v1188 = vand.u32 %v955, 2147483648
    %v1189 = vsel %vm1187, %v1188, %v1186
    %v1190 = vrsqrt.pop %v956
    %v1191 = vmul.f32 %v1190, %v956
    %v1192 = vmul.f32 %v1191, %v1190
    %v1193 = vmul.f32 0.5, %v1192
    %v1194 = vsub.f32 1.5, %v1193
    %v1195 = vmul.f32 %v1190, %v1194
    %v1196 = vmul.f32 %v956, %v1195
    %vm1197 = vcmp.eq.f32.partialorder %v956, inf
    %v1198 = vsel %vm1197, %v956, %v1196
    %vm1199 = vcmp.eq.f32.partialorder %v956, 0.0
    %v1200 = vand.u32 %v956, 2147483648
    %v1201 = vsel %vm1199, %v1200, %v1198
    %v1202 = vrsqrt.pop %v957
    %v1203 = vmul.f32 %v1202, %v957
    %v1204 = vmul.f32 %v1203, %v1202
    %v1205 = vmul.f32 0.5, %v1204
    %v1206 = vsub.f32 1.5, %v1205
    %v1207 = vmul.f32 %v1202, %v1206
    %v1208 = vmul.f32 %v957, %v1207
    %vm1209 = vcmp.eq.f32.partialorder %v957, inf
    %v1210 = vsel %vm1209, %v957, %v1208
    %vm1211 = vcmp.eq.f32.partialorder %v957, 0.0
    %v1212 = vand.u32 %v957, 2147483648
    %v1213 = vsel %vm1211, %v1212, %v1210
    %v1214 = vrsqrt.pop %v958
    %v1215 = vmul.f32 %v1214, %v958
    %v1216 = vmul.f32 %v1215, %v1214
    %v1217 = vmul.f32 0.5, %v1216
    %v1218 = vsub.f32 1.5, %v1217
    %v1219 = vmul.f32 %v1214, %v1218
    %v1220 = vmul.f32 %v958, %v1219
    %vm1221 = vcmp.eq.f32.partialorder %v958, inf
    %v1222 = vsel %vm1221, %v958, %v1220
    %vm1223 = vcmp.eq.f32.partialorder %v958, 0.0
    %v1224 = vand.u32 %v958, 2147483648
    %v1225 = vsel %vm1223, %v1224, %v1222
    %v1226 = vrsqrt.pop %v959
    %v1227 = vmul.f32 %v1226, %v959
    %v1228 = vmul.f32 %v1227, %v1226
    %v1229 = vmul.f32 0.5, %v1228
    %v1230 = vsub.f32 1.5, %v1229
    %v1231 = vmul.f32 %v1226, %v1230
    %v1232 = vmul.f32 %v959, %v1231
    %vm1233 = vcmp.eq.f32.partialorder %v959, inf
    %v1234 = vsel %vm1233, %v959, %v1232
    %vm1235 = vcmp.eq.f32.partialorder %v959, 0.0
    %v1236 = vand.u32 %v959, 2147483648
    %v1237 = vsel %vm1235, %v1236, %v1234
    %v1238 = vrsqrt.pop %v960
    %v1239 = vmul.f32 %v1238, %v960
    %v1240 = vmul.f32 %v1239, %v1238
    %v1241 = vmul.f32 0.5, %v1240
    %v1242 = vsub.f32 1.5, %v1241
    %v1243 = vmul.f32 %v1238, %v1242
    %v1244 = vmul.f32 %v960, %v1243
    %vm1245 = vcmp.eq.f32.partialorder %v960, inf
    %v1246 = vsel %vm1245, %v960, %v1244
    %vm1247 = vcmp.eq.f32.partialorder %v960, 0.0
    %v1248 = vand.u32 %v960, 2147483648
    %v1249 = vsel %vm1247, %v1248, %v1246
    %v1250 = vrsqrt.pop %v961
    %v1251 = vmul.f32 %v1250, %v961
    %v1252 = vmul.f32 %v1251, %v1250
    %v1253 = vmul.f32 0.5, %v1252
    %v1254 = vsub.f32 1.5, %v1253
    %v1255 = vmul.f32 %v1250, %v1254
    %v1256 = vmul.f32 %v961, %v1255
    %vm1257 = vcmp.eq.f32.partialorder %v961, inf
    %v1258 = vsel %vm1257, %v961, %v1256
    %vm1259 = vcmp.eq.f32.partialorder %v961, 0.0
    %v1260 = vand.u32 %v961, 2147483648
    %v1261 = vsel %vm1259, %v1260, %v1258
    %v1262 = vrsqrt.pop %v887
    %v1263 = vmul.f32 %v1262, %v887
    %v1264 = vmul.f32 %v1263, %v1262
    %v1265 = vmul.f32 0.5, %v1264
    %v1266 = vsub.f32 1.5, %v1265
    %v1267 = vmul.f32 %v1262, %v1266
    %vm1268 = vweird.f32 %v887
    %vm1269 = vweird.f32 %v1262
    %vm1270 = vmor %vm1268, %vm1269
    %v1271 = vsel %vm1270, %v1262, %v1267
    %v1272 = vrsqrt.pop %v888
    %v1273 = vmul.f32 %v1272, %v888
    %v1274 = vmul.f32 %v1273, %v1272
    %v1275 = vmul.f32 0.5, %v1274
    %v1276 = vsub.f32 1.5, %v1275
    %v1277 = vmul.f32 %v1272, %v1276
    %vm1278 = vweird.f32 %v888
    %vm1279 = vweird.f32 %v1272
    %vm1280 = vmor %vm1278, %vm1279
    %v1281 = vsel %vm1280, %v1272, %v1277
    %v1282 = vrsqrt.pop %v889
    %v1283 = vmul.f32 %v1282, %v889
    %v1284 = vmul.f32 %v1283, %v1282
    %v1285 = vmul.f32 0.5, %v1284
    %v1286 = vsub.f32 1.5, %v1285
    %v1287 = vmul.f32 %v1282, %v1286
    %vm1288 = vweird.f32 %v889
    %vm1289 = vweird.f32 %v1282
    %vm1290 = vmor %vm1288, %vm1289
    %v1291 = vsel %vm1290, %v1282, %v1287
    %v1292 = vrsqrt.pop %v890
    %v1293 = vmul.f32 %v1292, %v890
    %v1294 = vmul.f32 %v1293, %v1292
    %v1295 = vmul.f32 0.5, %v1294
    %v1296 = vsub.f32 1.5, %v1295
    %v1297 = vmul.f32 %v1292, %v1296
    %vm1298 = vweird.f32 %v890
    %vm1299 = vweird.f32 %v1292
    %vm1300 = vmor %vm1298, %vm1299
    %v1301 = vsel %vm1300, %v1292, %v1297
    %v1302 = vrsqrt.pop %v891
    %v1303 = vmul.f32 %v1302, %v891
    %v1304 = vmul.f32 %v1303, %v1302
    %v1305 = vmul.f32 0.5, %v1304
    %v1306 = vsub.f32 1.5, %v1305
    %v1307 = vmul.f32 %v1302, %v1306
    %vm1308 = vweird.f32 %v891
    %vm1309 = vweird.f32 %v1302
    %vm1310 = vmor %vm1308, %vm1309
    %v1311 = vsel %vm1310, %v1302, %v1307
    %v1312 = vrsqrt.pop %v892
    %v1313 = vmul.f32 %v1312, %v892
    %v1314 = vmul.f32 %v1313, %v1312
    %v1315 = vmul.f32 0.5, %v1314
    %v1316 = vsub.f32 1.5, %v1315
    %v1317 = vmul.f32 %v1312, %v1316
    %vm1318 = vweird.f32 %v892
    %vm1319 = vweird.f32 %v1312
    %vm1320 = vmor %vm1318, %vm1319
    %v1321 = vsel %vm1320, %v1312, %v1317
    %v1322 = vrsqrt.pop %v893
    %v1323 = vmul.f32 %v1322, %v893
    %v1324 = vmul.f32 %v1323, %v1322
    %v1325 = vmul.f32 0.5, %v1324
    %v1326 = vsub.f32 1.5, %v1325
    %v1327 = vmul.f32 %v1322, %v1326
    %vm1328 = vweird.f32 %v893
    %vm1329 = vweird.f32 %v1322
    %vm1330 = vmor %vm1328, %vm1329
    %v1331 = vsel %vm1330, %v1322, %v1327
    %v1332 = vrsqrt.pop %v894
    %v1333 = vmul.f32 %v1332, %v894
    %v1334 = vmul.f32 %v1333, %v1332
    %v1335 = vmul.f32 0.5, %v1334
    %v1336 = vsub.f32 1.5, %v1335
    %v1337 = vmul.f32 %v1332, %v1336
    %vm1338 = vweird.f32 %v894
    %vm1339 = vweird.f32 %v1332
    %vm1340 = vmor %vm1338, %vm1339
    %v1341 = vsel %vm1340, %v1332, %v1337
    %v1342 = vrsqrt.pop %v895
    %v1343 = vmul.f32 %v1342, %v895
    %v1344 = vmul.f32 %v1343, %v1342
    %v1345 = vmul.f32 0.5, %v1344
    %v1346 = vsub.f32 1.5, %v1345
    %v1347 = vmul.f32 %v1342, %v1346
    %vm1348 = vweird.f32 %v895
    %vm1349 = vweird.f32 %v1342
    %vm1350 = vmor %vm1348, %vm1349
    %v1351 = vsel %vm1350, %v1342, %v1347
    %v1352 = vrsqrt.pop %v896
    %v1353 = vmul.f32 %v1352, %v896
    %v1354 = vmul.f32 %v1353, %v1352
    %v1355 = vmul.f32 0.5, %v1354
    %v1356 = vsub.f32 1.5, %v1355
    %v1357 = vmul.f32 %v1352, %v1356
    %vm1358 = vweird.f32 %v896
    %vm1359 = vweird.f32 %v1352
    %vm1360 = vmor %vm1358, %vm1359
    %v1361 = vsel %vm1360, %v1352, %v1357
    %v1362 = vrsqrt.pop %v897
    %v1363 = vmul.f32 %v1362, %v897
    %v1364 = vmul.f32 %v1363, %v1362
    %v1365 = vmul.f32 0.5, %v1364
    %v1366 = vsub.f32 1.5, %v1365
    %v1367 = vmul.f32 %v1362, %v1366
    %vm1368 = vweird.f32 %v897
    %vm1369 = vweird.f32 %v1362
    %vm1370 = vmor %vm1368, %vm1369
    %v1371 = vsel %vm1370, %v1362, %v1367
    %v1372 = vrsqrt.pop %v898
    %v1373 = vmul.f32 %v1372, %v898
    %v1374 = vmul.f32 %v1373, %v1372
    %v1375 = vmul.f32 0.5, %v1374
    %v1376 = vsub.f32 1.5, %v1375
    %v1377 = vmul.f32 %v1372, %v1376
    %vm1378 = vweird.f32 %v898
    %vm1379 = vweird.f32 %v1372
    %vm1380 = vmor %vm1378, %vm1379
    %v1381 = vsel %vm1380, %v1372, %v1377
    %v1382 = vrsqrt.pop %v899
    %v1383 = vmul.f32 %v1382, %v899
    %v1384 = vmul.f32 %v1383, %v1382
    %v1385 = vmul.f32 0.5, %v1384
    %v1386 = vsub.f32 1.5, %v1385
    %v1387 = vmul.f32 %v1382, %v1386
    %vm1388 = vweird.f32 %v899
    %vm1389 = vweird.f32 %v1382
    %vm1390 = vmor %vm1388, %vm1389
    %v1391 = vsel %vm1390, %v1382, %v1387
    %v1392 = vrsqrt.pop %v900
    %v1393 = vmul.f32 %v1392, %v900
    %v1394 = vmul.f32 %v1393, %v1392
    %v1395 = vmul.f32 0.5, %v1394
    %v1396 = vsub.f32 1.5, %v1395
    %v1397 = vmul.f32 %v1392, %v1396
    %vm1398 = vweird.f32 %v900
    %vm1399 = vweird.f32 %v1392
    %vm1400 = vmor %vm1398, %vm1399
    %v1401 = vsel %vm1400, %v1392, %v1397
    %v1402 = vrsqrt.pop %v901
    %v1403 = vmul.f32 %v1402, %v901
    %v1404 = vmul.f32 %v1403, %v1402
    %v1405 = vmul.f32 0.5, %v1404
    %v1406 = vsub.f32 1.5, %v1405
    %v1407 = vmul.f32 %v1402, %v1406
    %vm1408 = vweird.f32 %v901
    %vm1409 = vweird.f32 %v1402
    %vm1410 = vmor %vm1408, %vm1409
    %v1411 = vsel %vm1410, %v1402, %v1407
    %v1412 = vrsqrt.pop %v902
    %v1413 = vmul.f32 %v1412, %v902
    %v1414 = vmul.f32 %v1413, %v1412
    %v1415 = vmul.f32 0.5, %v1414
    %v1416 = vsub.f32 1.5, %v1415
    %v1417 = vmul.f32 %v1412, %v1416
    %vm1418 = vweird.f32 %v902
    %vm1419 = vweird.f32 %v1412
    %vm1420 = vmor %vm1418, %vm1419
    %v1421 = vsel %vm1420, %v1412, %v1417
    %v1422 = vrsqrt.pop %v903
    %v1423 = vmul.f32 %v1422, %v903
    %v1424 = vmul.f32 %v1423, %v1422
    %v1425 = vmul.f32 0.5, %v1424
    %v1426 = vsub.f32 1.5, %v1425
    %v1427 = vmul.f32 %v1422, %v1426
    %vm1428 = vweird.f32 %v903
    %vm1429 = vweird.f32 %v1422
    %vm1430 = vmor %vm1428, %vm1429
    %v1431 = vsel %vm1430, %v1422, %v1427
    %v1432 = vrsqrt.pop %v904
    %v1433 = vmul.f32 %v1432, %v904
    %v1434 = vmul.f32 %v1433, %v1432
    %v1435 = vmul.f32 0.5, %v1434
    %v1436 = vsub.f32 1.5, %v1435
    %v1437 = vmul.f32 %v1432, %v1436
    %vm1438 = vweird.f32 %v904
    %vm1439 = vweird.f32 %v1432
    %vm1440 = vmor %vm1438, %vm1439
    %v1441 = vsel %vm1440, %v1432, %v1437
    %v1442 = vrsqrt.pop %v905
    %v1443 = vmul.f32 %v1442, %v905
    %v1444 = vmul.f32 %v1443, %v1442
    %v1445 = vmul.f32 0.5, %v1444
    %v1446 = vsub.f32 1.5, %v1445
    %v1447 = vmul.f32 %v1442, %v1446
    %vm1448 = vweird.f32 %v905
    %vm1449 = vweird.f32 %v1442
    %vm1450 = vmor %vm1448, %vm1449
    %v1451 = vsel %vm1450, %v1442, %v1447
    %v1452 = vrsqrt.pop %v906
    %v1453 = vmul.f32 %v1452, %v906
    %v1454 = vmul.f32 %v1453, %v1452
    %v1455 = vmul.f32 0.5, %v1454
    %v1456 = vsub.f32 1.5, %v1455
    %v1457 = vmul.f32 %v1452, %v1456
    %vm1458 = vweird.f32 %v906
    %vm1459 = vweird.f32 %v1452
    %vm1460 = vmor %vm1458, %vm1459
    %v1461 = vsel %vm1460, %v1452, %v1457
    %v1462 = vrsqrt.pop %v907
    %v1463 = vmul.f32 %v1462, %v907
    %v1464 = vmul.f32 %v1463, %v1462
    %v1465 = vmul.f32 0.5, %v1464
    %v1466 = vsub.f32 1.5, %v1465
    %v1467 = vmul.f32 %v1462, %v1466
    %vm1468 = vweird.f32 %v907
    %vm1469 = vweird.f32 %v1462
    %vm1470 = vmor %vm1468, %vm1469
    %v1471 = vsel %vm1470, %v1462, %v1467
    %v1472 = vrsqrt.pop %v908
    %v1473 = vmul.f32 %v1472, %v908
    %v1474 = vmul.f32 %v1473, %v1472
    %v1475 = vmul.f32 0.5, %v1474
    %v1476 = vsub.f32 1.5, %v1475
    %v1477 = vmul.f32 %v1472, %v1476
    %vm1478 = vweird.f32 %v908
    %vm1479 = vweird.f32 %v1472
    %vm1480 = vmor %vm1478, %vm1479
    %v1481 = vsel %vm1480, %v1472, %v1477
    %v1482 = vrsqrt.pop %v909
    %v1483 = vmul.f32 %v1482, %v909
    %v1484 = vmul.f32 %v1483, %v1482
    %v1485 = vmul.f32 0.5, %v1484
    %v1486 = vsub.f32 1.5, %v1485
    %v1487 = vmul.f32 %v1482, %v1486
    %vm1488 = vweird.f32 %v909
    %vm1489 = vweird.f32 %v1482
    %vm1490 = vmor %vm1488, %vm1489
    %v1491 = vsel %vm1490, %v1482, %v1487
    %v1492 = vrsqrt.pop %v910
    %v1493 = vmul.f32 %v1492, %v910
    %v1494 = vmul.f32 %v1493, %v1492
    %v1495 = vmul.f32 0.5, %v1494
    %v1496 = vsub.f32 1.5, %v1495
    %v1497 = vmul.f32 %v1492, %v1496
    %vm1498 = vweird.f32 %v910
    %vm1499 = vweird.f32 %v1492
    %vm1500 = vmor %vm1498, %vm1499
    %v1501 = vsel %vm1500, %v1492, %v1497
    %v1502 = vrsqrt.pop %v911
    %v1503 = vmul.f32 %v1502, %v911
    %v1504 = vmul.f32 %v1503, %v1502
    %v1505 = vmul.f32 0.5, %v1504
    %v1506 = vsub.f32 1.5, %v1505
    %v1507 = vmul.f32 %v1502, %v1506
    %vm1508 = vweird.f32 %v911
    %vm1509 = vweird.f32 %v1502
    %vm1510 = vmor %vm1508, %vm1509
    %v1511 = vsel %vm1510, %v1502, %v1507
    %v1512 = vmul.f32 %v973, %v1271
    %v1513 = vmul.f32 %v985, %v1281
    %v1514 = vmul.f32 %v997, %v1291
    %v1515 = vmul.f32 %v1009, %v1301
    %v1516 = vmul.f32 %v1021, %v1311
    %v1517 = vmul.f32 %v1033, %v1321
    %v1518 = vmul.f32 %v1045, %v1331
    %v1519 = vmul.f32 %v1057, %v1341
    %v1520 = vmul.f32 %v1069, %v1351
    %v1521 = vmul.f32 %v1081, %v1361
    %v1522 = vmul.f32 %v1093, %v1371
    %v1523 = vmul.f32 %v1105, %v1381
    %v1524 = vmul.f32 %v1117, %v1391
    %v1525 = vmul.f32 %v1129, %v1401
    %v1526 = vmul.f32 %v1141, %v1411
    %v1527 = vmul.f32 %v1153, %v1421
    %v1528 = vmul.f32 %v1165, %v1431
    %v1529 = vmul.f32 %v1177, %v1441
    %v1530 = vmul.f32 %v1189, %v1451
    %v1531 = vmul.f32 %v1201, %v1461
    %v1532 = vmul.f32 %v1213, %v1471
    %v1533 = vmul.f32 %v1225, %v1481
    %v1534 = vmul.f32 %v1237, %v1491
    %v1535 = vmul.f32 %v1249, %v1501
    %v1536 = vmul.f32 %v1261, %v1511
    %v1537 = vlaneseq
    %v1538 = vand.u32 %v1537, 127
    %vm1539 = vcmp.eq.s32.totalorder %v1538, 0
    %1541 = vset.pattern.permute.xlu0 0
    %1542 = vperm.xlu0 %1541, %v1512
    %v1543 = vpop.permute.xlu0 %1542
    %1546 = vset.pattern.permute.xlu0 0
    %1547 = vperm.xlu0 %1546, %v1513
    %v1548 = vpop.permute.xlu0 %1547
    %1551 = vset.pattern.permute.xlu0 0
    %1552 = vperm.xlu0 %1551, %v1514
    %v1553 = vpop.permute.xlu0 %1552
    %1556 = vset.pattern.permute.xlu0 0
    %1557 = vperm.xlu0 %1556, %v1515
    %v1558 = vpop.permute.xlu0 %1557
    %1561 = vset.pattern.permute.xlu0 0
    %1562 = vperm.xlu0 %1561, %v1516
    %v1563 = vpop.permute.xlu0 %1562
    %1566 = vset.pattern.permute.xlu0 0
    %1567 = vperm.xlu0 %1566, %v1517
    %v1568 = vpop.permute.xlu0 %1567
    %1571 = vset.pattern.permute.xlu0 0
    %1572 = vperm.xlu0 %1571, %v1518
    %v1573 = vpop.permute.xlu0 %1572
    %1576 = vset.pattern.permute.xlu0 0
    %1577 = vperm.xlu0 %1576, %v1519
    %v1578 = vpop.permute.xlu0 %1577
    %1581 = vset.pattern.permute.xlu0 0
    %1582 = vperm.xlu0 %1581, %v1520
    %v1583 = vpop.permute.xlu0 %1582
    %1586 = vset.pattern.permute.xlu0 0
    %1587 = vperm.xlu0 %1586, %v1521
    %v1588 = vpop.permute.xlu0 %1587
    %1591 = vset.pattern.permute.xlu0 0
    %1592 = vperm.xlu0 %1591, %v1522
    %v1593 = vpop.permute.xlu0 %1592
    %1596 = vset.pattern.permute.xlu0 0
    %1597 = vperm.xlu0 %1596, %v1523
    %v1598 = vpop.permute.xlu0 %1597
    %1601 = vset.pattern.permute.xlu0 0
    %1602 = vperm.xlu0 %1601, %v1524
    %v1603 = vpop.permute.xlu0 %1602
    %1606 = vset.pattern.permute.xlu0 0
    %1607 = vperm.xlu0 %1606, %v1525
    %v1608 = vpop.permute.xlu0 %1607
    %1611 = vset.pattern.permute.xlu0 0
    %1612 = vperm.xlu0 %1611, %v1526
    %v1613 = vpop.permute.xlu0 %1612
    %1616 = vset.pattern.permute.xlu0 0
    %1617 = vperm.xlu0 %1616, %v1527
    %v1618 = vpop.permute.xlu0 %1617
    %1621 = vset.pattern.permute.xlu0 0
    %1622 = vperm.xlu0 %1621, %v1528
    %v1623 = vpop.permute.xlu0 %1622
    %1626 = vset.pattern.permute.xlu0 0
    %1627 = vperm.xlu0 %1626, %v1529
    %v1628 = vpop.permute.xlu0 %1627
    %1631 = vset.pattern.permute.xlu0 0
    %1632 = vperm.xlu0 %1631, %v1530
    %v1633 = vpop.permute.xlu0 %1632
    %1636 = vset.pattern.permute.xlu0 0
    %1637 = vperm.xlu0 %1636, %v1531
    %v1638 = vpop.permute.xlu0 %1637
    %1641 = vset.pattern.permute.xlu0 0
    %1642 = vperm.xlu0 %1641, %v1532
    %v1643 = vpop.permute.xlu0 %1642
    %1646 = vset.pattern.permute.xlu0 0
    %1647 = vperm.xlu0 %1646, %v1533
    %v1648 = vpop.permute.xlu0 %1647
    %1651 = vset.pattern.permute.xlu0 0
    %1652 = vperm.xlu0 %1651, %v1534
    %v1653 = vpop.permute.xlu0 %1652
    %1656 = vset.pattern.permute.xlu0 0
    %1657 = vperm.xlu0 %1656, %v1535
    %v1658 = vpop.permute.xlu0 %1657
    %1661 = vset.pattern.permute.xlu0 0
    %1662 = vperm.xlu0 %1661, %v1536
    %v1663 = vpop.permute.xlu0 %1662
    %v1665 = vmul.f32 %v161, %v1543
    %v1666 = vmul.f32 %v164, %v1548
    %v1667 = vmul.f32 %v167, %v1553
    %v1668 = vmul.f32 %v170, %v1558
    %v1669 = vmul.f32 %v173, %v1563
    %v1670 = vmul.f32 %v176, %v1568
    %v1671 = vmul.f32 %v179, %v1573
    %v1672 = vmul.f32 %v182, %v1578
    %v1673 = vmul.f32 %v185, %v1583
    %v1674 = vmul.f32 %v188, %v1588
    %v1675 = vmul.f32 %v191, %v1593
    %v1676 = vmul.f32 %v194, %v1598
    %v1677 = vmul.f32 %v197, %v1603
    %v1678 = vmul.f32 %v200, %v1608
    %v1679 = vmul.f32 %v203, %v1613
    %v1680 = vmul.f32 %v206, %v1618
    %v1681 = vmul.f32 %v209, %v1623
    %v1682 = vmul.f32 %v212, %v1628
    %v1683 = vmul.f32 %v215, %v1633
    %v1684 = vmul.f32 %v218, %v1638
    %v1685 = vmul.f32 %v221, %v1643
    %v1686 = vmul.f32 %v224, %v1648
    %v1687 = vmul.f32 %v227, %v1653
    %v1688 = vmul.f32 %v230, %v1658
    %v1689 = vmul.f32 %v233, %v1663
    %1691 = vset.pattern.permute.xlu0 0
    %1692 = vperm.xlu0 %1691, %v737
    %v1693 = vpop.permute.xlu0 %1692
    %1696 = vset.pattern.permute.xlu0 0
    %1697 = vperm.xlu0 %1696, %v738
    %v1698 = vpop.permute.xlu0 %1697
    %1701 = vset.pattern.permute.xlu0 0
    %1702 = vperm.xlu0 %1701, %v739
    %v1703 = vpop.permute.xlu0 %1702
    %1706 = vset.pattern.permute.xlu0 0
    %1707 = vperm.xlu0 %1706, %v740
    %v1708 = vpop.permute.xlu0 %1707
    %1711 = vset.pattern.permute.xlu0 0
    %1712 = vperm.xlu0 %1711, %v741
    %v1713 = vpop.permute.xlu0 %1712
    %1716 = vset.pattern.permute.xlu0 0
    %1717 = vperm.xlu0 %1716, %v742
    %v1718 = vpop.permute.xlu0 %1717
    %1721 = vset.pattern.permute.xlu0 0
    %1722 = vperm.xlu0 %1721, %v743
    %v1723 = vpop.permute.xlu0 %1722
    %1726 = vset.pattern.permute.xlu0 0
    %1727 = vperm.xlu0 %1726, %v744
    %v1728 = vpop.permute.xlu0 %1727
    %1731 = vset.pattern.permute.xlu0 0
    %1732 = vperm.xlu0 %1731, %v745
    %v1733 = vpop.permute.xlu0 %1732
    %1736 = vset.pattern.permute.xlu0 0
    %1737 = vperm.xlu0 %1736, %v746
    %v1738 = vpop.permute.xlu0 %1737
    %1741 = vset.pattern.permute.xlu0 0
    %1742 = vperm.xlu0 %1741, %v747
    %v1743 = vpop.permute.xlu0 %1742
    %1746 = vset.pattern.permute.xlu0 0
    %1747 = vperm.xlu0 %1746, %v748
    %v1748 = vpop.permute.xlu0 %1747
    %1751 = vset.pattern.permute.xlu0 0
    %1752 = vperm.xlu0 %1751, %v749
    %v1753 = vpop.permute.xlu0 %1752
    %1756 = vset.pattern.permute.xlu0 0
    %1757 = vperm.xlu0 %1756, %v750
    %v1758 = vpop.permute.xlu0 %1757
    %1761 = vset.pattern.permute.xlu0 0
    %1762 = vperm.xlu0 %1761, %v751
    %v1763 = vpop.permute.xlu0 %1762
    %1766 = vset.pattern.permute.xlu0 0
    %1767 = vperm.xlu0 %1766, %v752
    %v1768 = vpop.permute.xlu0 %1767
    %1771 = vset.pattern.permute.xlu0 0
    %1772 = vperm.xlu0 %1771, %v753
    %v1773 = vpop.permute.xlu0 %1772
    %1776 = vset.pattern.permute.xlu0 0
    %1777 = vperm.xlu0 %1776, %v754
    %v1778 = vpop.permute.xlu0 %1777
    %1781 = vset.pattern.permute.xlu0 0
    %1782 = vperm.xlu0 %1781, %v755
    %v1783 = vpop.permute.xlu0 %1782
    %1786 = vset.pattern.permute.xlu0 0
    %1787 = vperm.xlu0 %1786, %v756
    %v1788 = vpop.permute.xlu0 %1787
    %1791 = vset.pattern.permute.xlu0 0
    %1792 = vperm.xlu0 %1791, %v757
    %v1793 = vpop.permute.xlu0 %1792
    %1796 = vset.pattern.permute.xlu0 0
    %1797 = vperm.xlu0 %1796, %v758
    %v1798 = vpop.permute.xlu0 %1797
    %1801 = vset.pattern.permute.xlu0 0
    %1802 = vperm.xlu0 %1801, %v759
    %v1803 = vpop.permute.xlu0 %1802
    %1806 = vset.pattern.permute.xlu0 0
    %1807 = vperm.xlu0 %1806, %v760
    %v1808 = vpop.permute.xlu0 %1807
    %1811 = vset.pattern.permute.xlu0 0
    %1812 = vperm.xlu0 %1811, %v761
    %v1813 = vpop.permute.xlu0 %1812
    %v1815 = vsel %vm1539, %v1693, %v1665
    %v1816 = vsel %vm1539, %v1698, %v1666
    %v1817 = vsel %vm1539, %v1703, %v1667
    %v1818 = vsel %vm1539, %v1708, %v1668
    %v1819 = vsel %vm1539, %v1713, %v1669
    %v1820 = vsel %vm1539, %v1718, %v1670
    %v1821 = vsel %vm1539, %v1723, %v1671
    %v1822 = vsel %vm1539, %v1728, %v1672
    %v1823 = vsel %vm1539, %v1733, %v1673
    %v1824 = vsel %vm1539, %v1738, %v1674
    %v1825 = vsel %vm1539, %v1743, %v1675
    %v1826 = vsel %vm1539, %v1748, %v1676
    %v1827 = vsel %vm1539, %v1753, %v1677
    %v1828 = vsel %vm1539, %v1758, %v1678
    %v1829 = vsel %vm1539, %v1763, %v1679
    %v1830 = vsel %vm1539, %v1768, %v1680
    %v1831 = vsel %vm1539, %v1773, %v1681
    %v1832 = vsel %vm1539, %v1778, %v1682
    %v1833 = vsel %vm1539, %v1783, %v1683
    %v1834 = vsel %vm1539, %v1788, %v1684
    %v1835 = vsel %vm1539, %v1793, %v1685
    %v1836 = vsel %vm1539, %v1798, %v1686
    %v1837 = vsel %vm1539, %v1803, %v1687
    %v1838 = vsel %vm1539, %v1808, %v1688
    %v1839 = vsel %vm1539, %v1813, %v1689
    %v1840 = vld [vmem:[%s3] sm:$0xff]
    %v1841 = vld [vmem:[%s3 + $0x8] sm:$0xff]
    %v1842 = vld [vmem:[%s3 + $0x10] sm:$0xff]
    %v1843 = vld [vmem:[%s3 + $0x18] sm:$0xff]
    %v1845 = vsel %vm67, %v1815, 0
    %v1848 = vsel %vm67, %v1816, 0
    %v1851 = vsel %vm67, %v1817, 0
    %v1854 = vsel %vm67, %v1818, 0
    %v1857 = vsel %vm67, %v1819, 0
    %v1860 = vsel %vm67, %v1820, 0
    %v1863 = vsel %vm67, %v1821, 0
    %v1866 = vsel %vm67, %v1822, 0
    %v1869 = vsel %vm67, %v1823, 0
    %v1872 = vsel %vm67, %v1824, 0
    %v1875 = vsel %vm67, %v1825, 0
    %v1878 = vsel %vm67, %v1826, 0
    %v1881 = vsel %vm67, %v1827, 0
    %v1884 = vsel %vm67, %v1828, 0
    %v1887 = vsel %vm67, %v1829, 0
    %v1890 = vsel %vm67, %v1830, 0
    %v1893 = vsel %vm67, %v1831, 0
    %v1896 = vsel %vm67, %v1832, 0
    %v1899 = vsel %vm67, %v1833, 0
    %v1902 = vsel %vm67, %v1834, 0
    %v1905 = vsel %vm67, %v1835, 0
    %v1908 = vsel %vm67, %v1836, 0
    %v1911 = vsel %vm67, %v1837, 0
    %v1914 = vsel %vm67, %v1838, 0
    %v1917 = vsel %vm67, %v1839, 0
    %1919 = vmatpush.msra.mxu0 0.0
    %1920 = vmatpush.msra.mxu0 0.0
    %1921 = vmatpush.msra.mxu0 0.0
    %1922 = vmatpush.msra.mxu0 0.0
    %1923 = vmatpush.msra.mxu0 0.0
    %1924 = vmatpush.msra.mxu0 0.0
    %1925 = vmatpush.msra.mxu0 0.0
    %1926 = vmatpush.msra.mxu0 0.0
    %1927 = vmatpush.msra.mxu0 0.0
    %1928 = vmatpush.msra.mxu0 0.0
    %1929 = vmatpush.msra.mxu0 0.0
    %1930 = vmatpush.msra.mxu0 0.0
    %1931 = vmatpush.msra.mxu0 %v1843
    %1932 = vmatpush.msra.mxu0 %v1842
    %1933 = vmatpush.msra.mxu0 %v1841
    %1934 = vmatpush.msra.mxu0 %v1840
    %1935 = vmatmul.f32.gmra.mxu0 %v1845
    %v1936 = vpop.f32.mrf.mxu0
    %v1937 = vadd.f32 0.0, %v1936
    %1938 = vmatmul.f32.gmra.mxu0 %v1848
    %v1939 = vpop.f32.mrf.mxu0
    %v1940 = vadd.f32 0.0, %v1939
    %1941 = vmatmul.f32.gmra.mxu0 %v1851
    %v1942 = vpop.f32.mrf.mxu0
    %v1943 = vadd.f32 0.0, %v1942
    %1944 = vmatmul.f32.gmra.mxu0 %v1854
    %v1945 = vpop.f32.mrf.mxu0
    %v1946 = vadd.f32 0.0, %v1945
    %1947 = vmatmul.f32.gmra.mxu0 %v1857
    %v1948 = vpop.f32.mrf.mxu0
    %v1949 = vadd.f32 0.0, %v1948
    %1950 = vmatmul.f32.gmra.mxu0 %v1860
    %v1951 = vpop.f32.mrf.mxu0
    %v1952 = vadd.f32 0.0, %v1951
    %1953 = vmatmul.f32.gmra.mxu0 %v1863
    %v1954 = vpop.f32.mrf.mxu0
    %v1955 = vadd.f32 0.0, %v1954
    %1956 = vmatmul.f32.gmra.mxu0 %v1866
    %v1957 = vpop.f32.mrf.mxu0
    %v1958 = vadd.f32 0.0, %v1957
    %1959 = vmatmul.f32.gmra.mxu0 %v1869
    %v1960 = vpop.f32.mrf.mxu0
    %v1961 = vadd.f32 0.0, %v1960
    %1962 = vmatmul.f32.gmra.mxu0 %v1872
    %v1963 = vpop.f32.mrf.mxu0
    %v1964 = vadd.f32 0.0, %v1963
    %1965 = vmatmul.f32.gmra.mxu0 %v1875
    %v1966 = vpop.f32.mrf.mxu0
    %v1967 = vadd.f32 0.0, %v1966
    %1968 = vmatmul.f32.gmra.mxu0 %v1878
    %v1969 = vpop.f32.mrf.mxu0
    %v1970 = vadd.f32 0.0, %v1969
    %1971 = vmatmul.f32.gmra.mxu0 %v1881
    %v1972 = vpop.f32.mrf.mxu0
    %v1973 = vadd.f32 0.0, %v1972
    %1974 = vmatmul.f32.gmra.mxu0 %v1884
    %v1975 = vpop.f32.mrf.mxu0
    %v1976 = vadd.f32 0.0, %v1975
    %1977 = vmatmul.f32.gmra.mxu0 %v1887
    %v1978 = vpop.f32.mrf.mxu0
    %v1979 = vadd.f32 0.0, %v1978
    %1980 = vmatmul.f32.gmra.mxu0 %v1890
    %v1981 = vpop.f32.mrf.mxu0
    %v1982 = vadd.f32 0.0, %v1981
    %1983 = vmatmul.f32.gmra.mxu0 %v1893
    %v1984 = vpop.f32.mrf.mxu0
    %v1985 = vadd.f32 0.0, %v1984
    %1986 = vmatmul.f32.gmra.mxu0 %v1896
    %v1987 = vpop.f32.mrf.mxu0
    %v1988 = vadd.f32 0.0, %v1987
    %1989 = vmatmul.f32.gmra.mxu0 %v1899
    %v1990 = vpop.f32.mrf.mxu0
    %v1991 = vadd.f32 0.0, %v1990
    %1992 = vmatmul.f32.gmra.mxu0 %v1902
    %v1993 = vpop.f32.mrf.mxu0
    %v1994 = vadd.f32 0.0, %v1993
    %1995 = vmatmul.f32.gmra.mxu0 %v1905
    %v1996 = vpop.f32.mrf.mxu0
    %v1997 = vadd.f32 0.0, %v1996
    %1998 = vmatmul.f32.gmra.mxu0 %v1908
    %v1999 = vpop.f32.mrf.mxu0
    %v2000 = vadd.f32 0.0, %v1999
    %2001 = vmatmul.f32.gmra.mxu0 %v1911
    %v2002 = vpop.f32.mrf.mxu0
    %v2003 = vadd.f32 0.0, %v2002
    %2004 = vmatmul.f32.gmra.mxu0 %v1914
    %v2005 = vpop.f32.mrf.mxu0
    %v2006 = vadd.f32 0.0, %v2005
    %2007 = vmatmul.f32.gmra.mxu0 %v1917
    %v2008 = vpop.f32.mrf.mxu0
    %v2009 = vadd.f32 0.0, %v2008
    %2010 = vdwg.mxu0
    %s2011 = sld [smem:[#allocation2 + $0x1]]
    %v2012 = vxor.u32 %v1937, 2147483648
    %v2013 = vxor.u32 %v1940, 2147483648
    %v2014 = vxor.u32 %v1943, 2147483648
    %v2015 = vxor.u32 %v1946, 2147483648
    %v2016 = vxor.u32 %v1949, 2147483648
    %v2017 = vxor.u32 %v1952, 2147483648
    %v2018 = vxor.u32 %v1955, 2147483648
    %v2019 = vxor.u32 %v1958, 2147483648
    %v2020 = vxor.u32 %v1961, 2147483648
    %v2021 = vxor.u32 %v1964, 2147483648
    %v2022 = vxor.u32 %v1967, 2147483648
    %v2023 = vxor.u32 %v1970, 2147483648
    %v2024 = vxor.u32 %v1973, 2147483648
    %v2025 = vxor.u32 %v1976, 2147483648
    %v2026 = vxor.u32 %v1979, 2147483648
    %v2027 = vxor.u32 %v1982, 2147483648
    %v2028 = vxor.u32 %v1985, 2147483648
    %v2029 = vxor.u32 %v1988, 2147483648
    %v2030 = vxor.u32 %v1991, 2147483648
    %v2031 = vxor.u32 %v1994, 2147483648
    %v2032 = vxor.u32 %v1997, 2147483648
    %v2033 = vxor.u32 %v2000, 2147483648
    %v2034 = vxor.u32 %v2003, 2147483648
    %v2035 = vxor.u32 %v2006, 2147483648
    %v2036 = vxor.u32 %v2009, 2147483648
    %v2037 = vmul.f32 %v2012, 1.442695
    %v2038 = vpow.pop %v2037
    %v2039 = vmul.f32 %v2013, 1.442695
    %v2040 = vpow.pop %v2039
    %v2041 = vmul.f32 %v2014, 1.442695
    %v2042 = vpow.pop %v2041
    %v2043 = vmul.f32 %v2015, 1.442695
    %v2044 = vpow.pop %v2043
    %v2045 = vmul.f32 %v2016, 1.442695
    %v2046 = vpow.pop %v2045
    %v2047 = vmul.f32 %v2017, 1.442695
    %v2048 = vpow.pop %v2047
    %v2049 = vmul.f32 %v2018, 1.442695
    %v2050 = vpow.pop %v2049
    %v2051 = vmul.f32 %v2019, 1.442695
    %v2052 = vpow.pop %v2051
    %v2053 = vmul.f32 %v2020, 1.442695
    %v2054 = vpow.pop %v2053
    %v2055 = vmul.f32 %v2021, 1.442695
    %v2056 = vpow.pop %v2055
    %v2057 = vmul.f32 %v2022, 1.442695
    %v2058 = vpow.pop %v2057
    %v2059 = vmul.f32 %v2023, 1.442695
    %v2060 = vpow.pop %v2059
    %v2061 = vmul.f32 %v2024, 1.442695
    %v2062 = vpow.pop %v2061
    %v2063 = vmul.f32 %v2025, 1.442695
    %v2064 = vpow.pop %v2063
    %v2065 = vmul.f32 %v2026, 1.442695
    %v2066 = vpow.pop %v2065
    %v2067 = vmul.f32 %v2027, 1.442695
    %v2068 = vpow.pop %v2067
    %v2069 = vmul.f32 %v2028, 1.442695
    %v2070 = vpow.pop %v2069
    %v2071 = vmul.f32 %v2029, 1.442695
    %v2072 = vpow.pop %v2071
    %v2073 = vmul.f32 %v2030, 1.442695
    %v2074 = vpow.pop %v2073
    %v2075 = vmul.f32 %v2031, 1.442695
    %v2076 = vpow.pop %v2075
    %v2077 = vmul.f32 %v2032, 1.442695
    %v2078 = vpow.pop %v2077
    %v2079 = vmul.f32 %v2033, 1.442695
    %v2080 = vpow.pop %v2079
    %v2081 = vmul.f32 %v2034, 1.442695
    %v2082 = vpow.pop %v2081
    %v2083 = vmul.f32 %v2035, 1.442695
    %v2084 = vpow.pop %v2083
    %v2085 = vmul.f32 %v2036, 1.442695
    %v2086 = vpow.pop %v2085
    %v2087 = vadd.f32 %v2038, 1.0
    %v2088 = vadd.f32 %v2040, 1.0
    %v2089 = vadd.f32 %v2042, 1.0
    %v2090 = vadd.f32 %v2044, 1.0
    %v2091 = vadd.f32 %v2046, 1.0
    %v2092 = vadd.f32 %v2048, 1.0
    %v2093 = vadd.f32 %v2050, 1.0
    %v2094 = vadd.f32 %v2052, 1.0
    %v2095 = vadd.f32 %v2054, 1.0
    %v2096 = vadd.f32 %v2056, 1.0
    %v2097 = vadd.f32 %v2058, 1.0
    %v2098 = vadd.f32 %v2060, 1.0
    %v2099 = vadd.f32 %v2062, 1.0
    %v2100 = vadd.f32 %v2064, 1.0
    %v2101 = vadd.f32 %v2066, 1.0
    %v2102 = vadd.f32 %v2068, 1.0
    %v2103 = vadd.f32 %v2070, 1.0
    %v2104 = vadd.f32 %v2072, 1.0
    %v2105 = vadd.f32 %v2074, 1.0
    %v2106 = vadd.f32 %v2076, 1.0
    %v2107 = vadd.f32 %v2078, 1.0
    %v2108 = vadd.f32 %v2080, 1.0
    %v2109 = vadd.f32 %v2082, 1.0
    %v2110 = vadd.f32 %v2084, 1.0
    %v2111 = vadd.f32 %v2086, 1.0
    %v2112 = vrcp.pop %v2087
    %v2113 = vmul.f32 %v2087, %v2112
    %v2114 = vsub.f32 1.0, %v2113
    %v2115 = vmul.f32 %v2112, %v2114
    %v2116 = vadd.f32 %v2112, %v2115
    %vm2117 = vweird.f32 %v2087
    %vm2118 = vweird.f32 %v2112
    %vm2119 = vmor %vm2117, %vm2118
    %v2120 = vsel %vm2119, %v2112, %v2116
    %v2121 = vand.u32 2147483647, %v2087
    %vm2122 = vcmp.eq.f32.partialorder %v2121, 8.507059e+37
    %v2123 = vand.u32 %v2087, 2147483648
    %v2124 = vor.u32 1.1754944e-38, %v2123
    %v2125 = vsel %vm2122, %v2124, %v2120
    %v2126 = vmul.f32 1.0, %v2125
    %v2127 = vrcp.pop %v2088
    %v2128 = vmul.f32 %v2088, %v2127
    %v2129 = vsub.f32 1.0, %v2128
    %v2130 = vmul.f32 %v2127, %v2129
    %v2131 = vadd.f32 %v2127, %v2130
    %vm2132 = vweird.f32 %v2088
    %vm2133 = vweird.f32 %v2127
    %vm2134 = vmor %vm2132, %vm2133
    %v2135 = vsel %vm2134, %v2127, %v2131
    %v2136 = vand.u32 2147483647, %v2088
    %vm2137 = vcmp.eq.f32.partialorder %v2136, 8.507059e+37
    %v2138 = vand.u32 %v2088, 2147483648
    %v2139 = vor.u32 1.1754944e-38, %v2138
    %v2140 = vsel %vm2137, %v2139, %v2135
    %v2141 = vmul.f32 1.0, %v2140
    %v2142 = vrcp.pop %v2089
    %v2143 = vmul.f32 %v2089, %v2142
    %v2144 = vsub.f32 1.0, %v2143
    %v2145 = vmul.f32 %v2142, %v2144
    %v2146 = vadd.f32 %v2142, %v2145
    %vm2147 = vweird.f32 %v2089
    %vm2148 = vweird.f32 %v2142
    %vm2149 = vmor %vm2147, %vm2148
    %v2150 = vsel %vm2149, %v2142, %v2146
    %v2151 = vand.u32 2147483647, %v2089
    %vm2152 = vcmp.eq.f32.partialorder %v2151, 8.507059e+37
    %v2153 = vand.u32 %v2089, 2147483648
    %v2154 = vor.u32 1.1754944e-38, %v2153
    %v2155 = vsel %vm2152, %v2154, %v2150
    %v2156 = vmul.f32 1.0, %v2155
    %v2157 = vrcp.pop %v2090
    %v2158 = vmul.f32 %v2090, %v2157
    %v2159 = vsub.f32 1.0, %v2158
    %v2160 = vmul.f32 %v2157, %v2159
    %v2161 = vadd.f32 %v2157, %v2160
    %vm2162 = vweird.f32 %v2090
    %vm2163 = vweird.f32 %v2157
    %vm2164 = vmor %vm2162, %vm2163
    %v2165 = vsel %vm2164, %v2157, %v2161
    %v2166 = vand.u32 2147483647, %v2090
    %vm2167 = vcmp.eq.f32.partialorder %v2166, 8.507059e+37
    %v2168 = vand.u32 %v2090, 2147483648
    %v2169 = vor.u32 1.1754944e-38, %v2168
    %v2170 = vsel %vm2167, %v2169, %v2165
    %v2171 = vmul.f32 1.0, %v2170
    %v2172 = vrcp.pop %v2091
    %v2173 = vmul.f32 %v2091, %v2172
    %v2174 = vsub.f32 1.0, %v2173
    %v2175 = vmul.f32 %v2172, %v2174
    %v2176 = vadd.f32 %v2172, %v2175
    %vm2177 = vweird.f32 %v2091
    %vm2178 = vweird.f32 %v2172
    %vm2179 = vmor %vm2177, %vm2178
    %v2180 = vsel %vm2179, %v2172, %v2176
    %v2181 = vand.u32 2147483647, %v2091
    %vm2182 = vcmp.eq.f32.partialorder %v2181, 8.507059e+37
    %v2183 = vand.u32 %v2091, 2147483648
    %v2184 = vor.u32 1.1754944e-38, %v2183
    %v2185 = vsel %vm2182, %v2184, %v2180
    %v2186 = vmul.f32 1.0, %v2185
    %v2187 = vrcp.pop %v2092
    %v2188 = vmul.f32 %v2092, %v2187
    %v2189 = vsub.f32 1.0, %v2188
    %v2190 = vmul.f32 %v2187, %v2189
    %v2191 = vadd.f32 %v2187, %v2190
    %vm2192 = vweird.f32 %v2092
    %vm2193 = vweird.f32 %v2187
    %vm2194 = vmor %vm2192, %vm2193
    %v2195 = vsel %vm2194, %v2187, %v2191
    %v2196 = vand.u32 2147483647, %v2092
    %vm2197 = vcmp.eq.f32.partialorder %v2196, 8.507059e+37
    %v2198 = vand.u32 %v2092, 2147483648
    %v2199 = vor.u32 1.1754944e-38, %v2198
    %v2200 = vsel %vm2197, %v2199, %v2195
    %v2201 = vmul.f32 1.0, %v2200
    %v2202 = vrcp.pop %v2093
    %v2203 = vmul.f32 %v2093, %v2202
    %v2204 = vsub.f32 1.0, %v2203
    %v2205 = vmul.f32 %v2202, %v2204
    %v2206 = vadd.f32 %v2202, %v2205
    %vm2207 = vweird.f32 %v2093
    %vm2208 = vweird.f32 %v2202
    %vm2209 = vmor %vm2207, %vm2208
    %v2210 = vsel %vm2209, %v2202, %v2206
    %v2211 = vand.u32 2147483647, %v2093
    %vm2212 = vcmp.eq.f32.partialorder %v2211, 8.507059e+37
    %v2213 = vand.u32 %v2093, 2147483648
    %v2214 = vor.u32 1.1754944e-38, %v2213
    %v2215 = vsel %vm2212, %v2214, %v2210
    %v2216 = vmul.f32 1.0, %v2215
    %v2217 = vrcp.pop %v2094
    %v2218 = vmul.f32 %v2094, %v2217
    %v2219 = vsub.f32 1.0, %v2218
    %v2220 = vmul.f32 %v2217, %v2219
    %v2221 = vadd.f32 %v2217, %v2220
    %vm2222 = vweird.f32 %v2094
    %vm2223 = vweird.f32 %v2217
    %vm2224 = vmor %vm2222, %vm2223
    %v2225 = vsel %vm2224, %v2217, %v2221
    %v2226 = vand.u32 2147483647, %v2094
    %vm2227 = vcmp.eq.f32.partialorder %v2226, 8.507059e+37
    %v2228 = vand.u32 %v2094, 2147483648
    %v2229 = vor.u32 1.1754944e-38, %v2228
    %v2230 = vsel %vm2227, %v2229, %v2225
    %v2231 = vmul.f32 1.0, %v2230
    %v2232 = vrcp.pop %v2095
    %v2233 = vmul.f32 %v2095, %v2232
    %v2234 = vsub.f32 1.0, %v2233
    %v2235 = vmul.f32 %v2232, %v2234
    %v2236 = vadd.f32 %v2232, %v2235
    %vm2237 = vweird.f32 %v2095
    %vm2238 = vweird.f32 %v2232
    %vm2239 = vmor %vm2237, %vm2238
    %v2240 = vsel %vm2239, %v2232, %v2236
    %v2241 = vand.u32 2147483647, %v2095
    %vm2242 = vcmp.eq.f32.partialorder %v2241, 8.507059e+37
    %v2243 = vand.u32 %v2095, 2147483648
    %v2244 = vor.u32 1.1754944e-38, %v2243
    %v2245 = vsel %vm2242, %v2244, %v2240
    %v2246 = vmul.f32 1.0, %v2245
    %v2247 = vrcp.pop %v2096
    %v2248 = vmul.f32 %v2096, %v2247
    %v2249 = vsub.f32 1.0, %v2248
    %v2250 = vmul.f32 %v2247, %v2249
    %v2251 = vadd.f32 %v2247, %v2250
    %vm2252 = vweird.f32 %v2096
    %vm2253 = vweird.f32 %v2247
    %vm2254 = vmor %vm2252, %vm2253
    %v2255 = vsel %vm2254, %v2247, %v2251
    %v2256 = vand.u32 2147483647, %v2096
    %vm2257 = vcmp.eq.f32.partialorder %v2256, 8.507059e+37
    %v2258 = vand.u32 %v2096, 2147483648
    %v2259 = vor.u32 1.1754944e-38, %v2258
    %v2260 = vsel %vm2257, %v2259, %v2255
    %v2261 = vmul.f32 1.0, %v2260
    %v2262 = vrcp.pop %v2097
    %v2263 = vmul.f32 %v2097, %v2262
    %v2264 = vsub.f32 1.0, %v2263
    %v2265 = vmul.f32 %v2262, %v2264
    %v2266 = vadd.f32 %v2262, %v2265
    %vm2267 = vweird.f32 %v2097
    %vm2268 = vweird.f32 %v2262
    %vm2269 = vmor %vm2267, %vm2268
    %v2270 = vsel %vm2269, %v2262, %v2266
    %v2271 = vand.u32 2147483647, %v2097
    %vm2272 = vcmp.eq.f32.partialorder %v2271, 8.507059e+37
    %v2273 = vand.u32 %v2097, 2147483648
    %v2274 = vor.u32 1.1754944e-38, %v2273
    %v2275 = vsel %vm2272, %v2274, %v2270
    %v2276 = vmul.f32 1.0, %v2275
    %v2277 = vrcp.pop %v2098
    %v2278 = vmul.f32 %v2098, %v2277
    %v2279 = vsub.f32 1.0, %v2278
    %v2280 = vmul.f32 %v2277, %v2279
    %v2281 = vadd.f32 %v2277, %v2280
    %vm2282 = vweird.f32 %v2098
    %vm2283 = vweird.f32 %v2277
    %vm2284 = vmor %vm2282, %vm2283
    %v2285 = vsel %vm2284, %v2277, %v2281
    %v2286 = vand.u32 2147483647, %v2098
    %vm2287 = vcmp.eq.f32.partialorder %v2286, 8.507059e+37
    %v2288 = vand.u32 %v2098, 2147483648
    %v2289 = vor.u32 1.1754944e-38, %v2288
    %v2290 = vsel %vm2287, %v2289, %v2285
    %v2291 = vmul.f32 1.0, %v2290
    %v2292 = vrcp.pop %v2099
    %v2293 = vmul.f32 %v2099, %v2292
    %v2294 = vsub.f32 1.0, %v2293
    %v2295 = vmul.f32 %v2292, %v2294
    %v2296 = vadd.f32 %v2292, %v2295
    %vm2297 = vweird.f32 %v2099
    %vm2298 = vweird.f32 %v2292
    %vm2299 = vmor %vm2297, %vm2298
    %v2300 = vsel %vm2299, %v2292, %v2296
    %v2301 = vand.u32 2147483647, %v2099
    %vm2302 = vcmp.eq.f32.partialorder %v2301, 8.507059e+37
    %v2303 = vand.u32 %v2099, 2147483648
    %v2304 = vor.u32 1.1754944e-38, %v2303
    %v2305 = vsel %vm2302, %v2304, %v2300
    %v2306 = vmul.f32 1.0, %v2305
    %v2307 = vrcp.pop %v2100
    %v2308 = vmul.f32 %v2100, %v2307
    %v2309 = vsub.f32 1.0, %v2308
    %v2310 = vmul.f32 %v2307, %v2309
    %v2311 = vadd.f32 %v2307, %v2310
    %vm2312 = vweird.f32 %v2100
    %vm2313 = vweird.f32 %v2307
    %vm2314 = vmor %vm2312, %vm2313
    %v2315 = vsel %vm2314, %v2307, %v2311
    %v2316 = vand.u32 2147483647, %v2100
    %vm2317 = vcmp.eq.f32.partialorder %v2316, 8.507059e+37
    %v2318 = vand.u32 %v2100, 2147483648
    %v2319 = vor.u32 1.1754944e-38, %v2318
    %v2320 = vsel %vm2317, %v2319, %v2315
    %v2321 = vmul.f32 1.0, %v2320
    %v2322 = vrcp.pop %v2101
    %v2323 = vmul.f32 %v2101, %v2322
    %v2324 = vsub.f32 1.0, %v2323
    %v2325 = vmul.f32 %v2322, %v2324
    %v2326 = vadd.f32 %v2322, %v2325
    %vm2327 = vweird.f32 %v2101
    %vm2328 = vweird.f32 %v2322
    %vm2329 = vmor %vm2327, %vm2328
    %v2330 = vsel %vm2329, %v2322, %v2326
    %v2331 = vand.u32 2147483647, %v2101
    %vm2332 = vcmp.eq.f32.partialorder %v2331, 8.507059e+37
    %v2333 = vand.u32 %v2101, 2147483648
    %v2334 = vor.u32 1.1754944e-38, %v2333
    %v2335 = vsel %vm2332, %v2334, %v2330
    %v2336 = vmul.f32 1.0, %v2335
    %v2337 = vrcp.pop %v2102
    %v2338 = vmul.f32 %v2102, %v2337
    %v2339 = vsub.f32 1.0, %v2338
    %v2340 = vmul.f32 %v2337, %v2339
    %v2341 = vadd.f32 %v2337, %v2340
    %vm2342 = vweird.f32 %v2102
    %vm2343 = vweird.f32 %v2337
    %vm2344 = vmor %vm2342, %vm2343
    %v2345 = vsel %vm2344, %v2337, %v2341
    %v2346 = vand.u32 2147483647, %v2102
    %vm2347 = vcmp.eq.f32.partialorder %v2346, 8.507059e+37
    %v2348 = vand.u32 %v2102, 2147483648
    %v2349 = vor.u32 1.1754944e-38, %v2348
    %v2350 = vsel %vm2347, %v2349, %v2345
    %v2351 = vmul.f32 1.0, %v2350
    %v2352 = vrcp.pop %v2103
    %v2353 = vmul.f32 %v2103, %v2352
    %v2354 = vsub.f32 1.0, %v2353
    %v2355 = vmul.f32 %v2352, %v2354
    %v2356 = vadd.f32 %v2352, %v2355
    %vm2357 = vweird.f32 %v2103
    %vm2358 = vweird.f32 %v2352
    %vm2359 = vmor %vm2357, %vm2358
    %v2360 = vsel %vm2359, %v2352, %v2356
    %v2361 = vand.u32 2147483647, %v2103
    %vm2362 = vcmp.eq.f32.partialorder %v2361, 8.507059e+37
    %v2363 = vand.u32 %v2103, 2147483648
    %v2364 = vor.u32 1.1754944e-38, %v2363
    %v2365 = vsel %vm2362, %v2364, %v2360
    %v2366 = vmul.f32 1.0, %v2365
    %v2367 = vrcp.pop %v2104
    %v2368 = vmul.f32 %v2104, %v2367
    %v2369 = vsub.f32 1.0, %v2368
    %v2370 = vmul.f32 %v2367, %v2369
    %v2371 = vadd.f32 %v2367, %v2370
    %vm2372 = vweird.f32 %v2104
    %vm2373 = vweird.f32 %v2367
    %vm2374 = vmor %vm2372, %vm2373
    %v2375 = vsel %vm2374, %v2367, %v2371
    %v2376 = vand.u32 2147483647, %v2104
    %vm2377 = vcmp.eq.f32.partialorder %v2376, 8.507059e+37
    %v2378 = vand.u32 %v2104, 2147483648
    %v2379 = vor.u32 1.1754944e-38, %v2378
    %v2380 = vsel %vm2377, %v2379, %v2375
    %v2381 = vmul.f32 1.0, %v2380
    %v2382 = vrcp.pop %v2105
    %v2383 = vmul.f32 %v2105, %v2382
    %v2384 = vsub.f32 1.0, %v2383
    %v2385 = vmul.f32 %v2382, %v2384
    %v2386 = vadd.f32 %v2382, %v2385
    %vm2387 = vweird.f32 %v2105
    %vm2388 = vweird.f32 %v2382
    %vm2389 = vmor %vm2387, %vm2388
    %v2390 = vsel %vm2389, %v2382, %v2386
    %v2391 = vand.u32 2147483647, %v2105
    %vm2392 = vcmp.eq.f32.partialorder %v2391, 8.507059e+37
    %v2393 = vand.u32 %v2105, 2147483648
    %v2394 = vor.u32 1.1754944e-38, %v2393
    %v2395 = vsel %vm2392, %v2394, %v2390
    %v2396 = vmul.f32 1.0, %v2395
    %v2397 = vrcp.pop %v2106
    %v2398 = vmul.f32 %v2106, %v2397
    %v2399 = vsub.f32 1.0, %v2398
    %v2400 = vmul.f32 %v2397, %v2399
    %v2401 = vadd.f32 %v2397, %v2400
    %vm2402 = vweird.f32 %v2106
    %vm2403 = vweird.f32 %v2397
    %vm2404 = vmor %vm2402, %vm2403
    %v2405 = vsel %vm2404, %v2397, %v2401
    %v2406 = vand.u32 2147483647, %v2106
    %vm2407 = vcmp.eq.f32.partialorder %v2406, 8.507059e+37
    %v2408 = vand.u32 %v2106, 2147483648
    %v2409 = vor.u32 1.1754944e-38, %v2408
    %v2410 = vsel %vm2407, %v2409, %v2405
    %v2411 = vmul.f32 1.0, %v2410
    %v2412 = vrcp.pop %v2107
    %v2413 = vmul.f32 %v2107, %v2412
    %v2414 = vsub.f32 1.0, %v2413
    %v2415 = vmul.f32 %v2412, %v2414
    %v2416 = vadd.f32 %v2412, %v2415
    %vm2417 = vweird.f32 %v2107
    %vm2418 = vweird.f32 %v2412
    %vm2419 = vmor %vm2417, %vm2418
    %v2420 = vsel %vm2419, %v2412, %v2416
    %v2421 = vand.u32 2147483647, %v2107
    %vm2422 = vcmp.eq.f32.partialorder %v2421, 8.507059e+37
    %v2423 = vand.u32 %v2107, 2147483648
    %v2424 = vor.u32 1.1754944e-38, %v2423
    %v2425 = vsel %vm2422, %v2424, %v2420
    %v2426 = vmul.f32 1.0, %v2425
    %v2427 = vrcp.pop %v2108
    %v2428 = vmul.f32 %v2108, %v2427
    %v2429 = vsub.f32 1.0, %v2428
    %v2430 = vmul.f32 %v2427, %v2429
    %v2431 = vadd.f32 %v2427, %v2430
    %vm2432 = vweird.f32 %v2108
    %vm2433 = vweird.f32 %v2427
    %vm2434 = vmor %vm2432, %vm2433
    %v2435 = vsel %vm2434, %v2427, %v2431
    %v2436 = vand.u32 2147483647, %v2108
    %vm2437 = vcmp.eq.f32.partialorder %v2436, 8.507059e+37
    %v2438 = vand.u32 %v2108, 2147483648
    %v2439 = vor.u32 1.1754944e-38, %v2438
    %v2440 = vsel %vm2437, %v2439, %v2435
    %v2441 = vmul.f32 1.0, %v2440
    %v2442 = vrcp.pop %v2109
    %v2443 = vmul.f32 %v2109, %v2442
    %v2444 = vsub.f32 1.0, %v2443
    %v2445 = vmul.f32 %v2442, %v2444
    %v2446 = vadd.f32 %v2442, %v2445
    %vm2447 = vweird.f32 %v2109
    %vm2448 = vweird.f32 %v2442
    %vm2449 = vmor %vm2447, %vm2448
    %v2450 = vsel %vm2449, %v2442, %v2446
    %v2451 = vand.u32 2147483647, %v2109
    %vm2452 = vcmp.eq.f32.partialorder %v2451, 8.507059e+37
    %v2453 = vand.u32 %v2109, 2147483648
    %v2454 = vor.u32 1.1754944e-38, %v2453
    %v2455 = vsel %vm2452, %v2454, %v2450
    %v2456 = vmul.f32 1.0, %v2455
    %v2457 = vrcp.pop %v2110
    %v2458 = vmul.f32 %v2110, %v2457
    %v2459 = vsub.f32 1.0, %v2458
    %v2460 = vmul.f32 %v2457, %v2459
    %v2461 = vadd.f32 %v2457, %v2460
    %vm2462 = vweird.f32 %v2110
    %vm2463 = vweird.f32 %v2457
    %vm2464 = vmor %vm2462, %vm2463
    %v2465 = vsel %vm2464, %v2457, %v2461
    %v2466 = vand.u32 2147483647, %v2110
    %vm2467 = vcmp.eq.f32.partialorder %v2466, 8.507059e+37
    %v2468 = vand.u32 %v2110, 2147483648
    %v2469 = vor.u32 1.1754944e-38, %v2468
    %v2470 = vsel %vm2467, %v2469, %v2465
    %v2471 = vmul.f32 1.0, %v2470
    %v2472 = vrcp.pop %v2111
    %v2473 = vmul.f32 %v2111, %v2472
    %v2474 = vsub.f32 1.0, %v2473
    %v2475 = vmul.f32 %v2472, %v2474
    %v2476 = vadd.f32 %v2472, %v2475
    %vm2477 = vweird.f32 %v2111
    %vm2478 = vweird.f32 %v2472
    %vm2479 = vmor %vm2477, %vm2478
    %v2480 = vsel %vm2479, %v2472, %v2476
    %v2481 = vand.u32 2147483647, %v2111
    %vm2482 = vcmp.eq.f32.partialorder %v2481, 8.507059e+37
    %v2483 = vand.u32 %v2111, 2147483648
    %v2484 = vor.u32 1.1754944e-38, %v2483
    %v2485 = vsel %vm2482, %v2484, %v2480
    %v2486 = vmul.f32 1.0, %v2485
    %v2487 = vstv %s2011
    %v2488 = vmul.f32 %v2126, %v2487
    %v2489 = vmul.f32 %v2141, %v2487
    %v2490 = vmul.f32 %v2156, %v2487
    %v2491 = vmul.f32 %v2171, %v2487
    %v2492 = vmul.f32 %v2186, %v2487
    %v2493 = vmul.f32 %v2201, %v2487
    %v2494 = vmul.f32 %v2216, %v2487
    %v2495 = vmul.f32 %v2231, %v2487
    %v2496 = vmul.f32 %v2246, %v2487
    %v2497 = vmul.f32 %v2261, %v2487
    %v2498 = vmul.f32 %v2276, %v2487
    %v2499 = vmul.f32 %v2291, %v2487
    %v2500 = vmul.f32 %v2306, %v2487
    %v2501 = vmul.f32 %v2321, %v2487
    %v2502 = vmul.f32 %v2336, %v2487
    %v2503 = vmul.f32 %v2351, %v2487
    %v2504 = vmul.f32 %v2366, %v2487
    %v2505 = vmul.f32 %v2381, %v2487
    %v2506 = vmul.f32 %v2396, %v2487
    %v2507 = vmul.f32 %v2411, %v2487
    %v2508 = vmul.f32 %v2426, %v2487
    %v2509 = vmul.f32 %v2441, %v2487
    %v2510 = vmul.f32 %v2456, %v2487
    %v2511 = vmul.f32 %v2471, %v2487
    %v2512 = vmul.f32 %v2486, %v2487
    %v2513 = vadd.f32 %v2488, 1.1
    %v2514 = vadd.f32 %v2489, 1.1
    %v2515 = vadd.f32 %v2490, 1.1
    %v2516 = vadd.f32 %v2491, 1.1
    %v2517 = vadd.f32 %v2492, 1.1
    %v2518 = vadd.f32 %v2493, 1.1
    %v2519 = vadd.f32 %v2494, 1.1
    %v2520 = vadd.f32 %v2495, 1.1
    %v2521 = vadd.f32 %v2496, 1.1
    %v2522 = vadd.f32 %v2497, 1.1
    %v2523 = vadd.f32 %v2498, 1.1
    %v2524 = vadd.f32 %v2499, 1.1
    %v2525 = vadd.f32 %v2500, 1.1
    %v2526 = vadd.f32 %v2501, 1.1
    %v2527 = vadd.f32 %v2502, 1.1
    %v2528 = vadd.f32 %v2503, 1.1
    %v2529 = vadd.f32 %v2504, 1.1
    %v2530 = vadd.f32 %v2505, 1.1
    %v2531 = vadd.f32 %v2506, 1.1
    %v2532 = vadd.f32 %v2507, 1.1
    %v2533 = vadd.f32 %v2508, 1.1
    %v2534 = vadd.f32 %v2509, 1.1
    %v2535 = vadd.f32 %v2510, 1.1
    %v2536 = vadd.f32 %v2511, 1.1
    %v2537 = vadd.f32 %v2512, 1.1
    %v2538 = vmul.f32 %v1937, %v1937
    %v2539 = vmul.f32 %v1940, %v1940
    %v2540 = vmul.f32 %v1943, %v1943
    %v2541 = vmul.f32 %v1946, %v1946
    %v2542 = vmul.f32 %v1949, %v1949
    %v2543 = vmul.f32 %v1952, %v1952
    %v2544 = vmul.f32 %v1955, %v1955
    %v2545 = vmul.f32 %v1958, %v1958
    %v2546 = vmul.f32 %v1961, %v1961
    %v2547 = vmul.f32 %v1964, %v1964
    %v2548 = vmul.f32 %v1967, %v1967
    %v2549 = vmul.f32 %v1970, %v1970
    %v2550 = vmul.f32 %v1973, %v1973
    %v2551 = vmul.f32 %v1976, %v1976
    %v2552 = vmul.f32 %v1979, %v1979
    %v2553 = vmul.f32 %v1982, %v1982
    %v2554 = vmul.f32 %v1985, %v1985
    %v2555 = vmul.f32 %v1988, %v1988
    %v2556 = vmul.f32 %v1991, %v1991
    %v2557 = vmul.f32 %v1994, %v1994
    %v2558 = vmul.f32 %v1997, %v1997
    %v2559 = vmul.f32 %v2000, %v2000
    %v2560 = vmul.f32 %v2003, %v2003
    %v2561 = vmul.f32 %v2006, %v2006
    %v2562 = vmul.f32 %v2009, %v2009
    %vm2563 = vcmask 72704
    %v2564 = vsel %vm2563, %v2538, 0.0
    %2565 = vadd.xlane.f32.xlu0 %v2564
    %v2566 = vpop.xlane.xlu0 %2565
    %v2567 = vsel %vm2563, %v2539, 0.0
    %2568 = vadd.xlane.f32.xlu0 %v2567
    %v2569 = vpop.xlane.xlu0 %2568
    %v2570 = vsel %vm2563, %v2540, 0.0
    %2571 = vadd.xlane.f32.xlu0 %v2570
    %v2572 = vpop.xlane.xlu0 %2571
    %v2573 = vsel %vm2563, %v2541, 0.0
    %2574 = vadd.xlane.f32.xlu0 %v2573
    %v2575 = vpop.xlane.xlu0 %2574
    %v2576 = vsel %vm2563, %v2542, 0.0
    %2577 = vadd.xlane.f32.xlu0 %v2576
    %v2578 = vpop.xlane.xlu0 %2577
    %v2579 = vsel %vm2563, %v2543, 0.0
    %2580 = vadd.xlane.f32.xlu0 %v2579
    %v2581 = vpop.xlane.xlu0 %2580
    %v2582 = vsel %vm2563, %v2544, 0.0
    %2583 = vadd.xlane.f32.xlu0 %v2582
    %v2584 = vpop.xlane.xlu0 %2583
    %v2585 = vsel %vm2563, %v2545, 0.0
    %2586 = vadd.xlane.f32.xlu0 %v2585
    %v2587 = vpop.xlane.xlu0 %2586
    %v2588 = vsel %vm2563, %v2546, 0.0
    %2589 = vadd.xlane.f32.xlu0 %v2588
    %v2590 = vpop.xlane.xlu0 %2589
    %v2591 = vsel %vm2563, %v2547, 0.0
    %2592 = vadd.xlane.f32.xlu0 %v2591
    %v2593 = vpop.xlane.xlu0 %2592
    %v2594 = vsel %vm2563, %v2548, 0.0
    %2595 = vadd.xlane.f32.xlu0 %v2594
    %v2596 = vpop.xlane.xlu0 %2595
    %v2597 = vsel %vm2563, %v2549, 0.0
    %2598 = vadd.xlane.f32.xlu0 %v2597
    %v2599 = vpop.xlane.xlu0 %2598
    %v2600 = vsel %vm2563, %v2550, 0.0
    %2601 = vadd.xlane.f32.xlu0 %v2600
    %v2602 = vpop.xlane.xlu0 %2601
    %v2603 = vsel %vm2563, %v2551, 0.0
    %2604 = vadd.xlane.f32.xlu0 %v2603
    %v2605 = vpop.xlane.xlu0 %2604
    %v2606 = vsel %vm2563, %v2552, 0.0
    %2607 = vadd.xlane.f32.xlu0 %v2606
    %v2608 = vpop.xlane.xlu0 %2607
    %v2609 = vsel %vm2563, %v2553, 0.0
    %2610 = vadd.xlane.f32.xlu0 %v2609
    %v2611 = vpop.xlane.xlu0 %2610
    %v2612 = vsel %vm2563, %v2554, 0.0
    %2613 = vadd.xlane.f32.xlu0 %v2612
    %v2614 = vpop.xlane.xlu0 %2613
    %v2615 = vsel %vm2563, %v2555, 0.0
    %2616 = vadd.xlane.f32.xlu0 %v2615
    %v2617 = vpop.xlane.xlu0 %2616
    %v2618 = vsel %vm2563, %v2556, 0.0
    %2619 = vadd.xlane.f32.xlu0 %v2618
    %v2620 = vpop.xlane.xlu0 %2619
    %v2621 = vsel %vm2563, %v2557, 0.0
    %2622 = vadd.xlane.f32.xlu0 %v2621
    %v2623 = vpop.xlane.xlu0 %2622
    %v2624 = vsel %vm2563, %v2558, 0.0
    %2625 = vadd.xlane.f32.xlu0 %v2624
    %v2626 = vpop.xlane.xlu0 %2625
    %v2627 = vsel %vm2563, %v2559, 0.0
    %2628 = vadd.xlane.f32.xlu0 %v2627
    %v2629 = vpop.xlane.xlu0 %2628
    %v2630 = vsel %vm2563, %v2560, 0.0
    %2631 = vadd.xlane.f32.xlu0 %v2630
    %v2632 = vpop.xlane.xlu0 %2631
    %v2633 = vsel %vm2563, %v2561, 0.0
    %2634 = vadd.xlane.f32.xlu0 %v2633
    %v2635 = vpop.xlane.xlu0 %2634
    %v2636 = vsel %vm2563, %v2562, 0.0
    %2637 = vadd.xlane.f32.xlu0 %v2636
    %v2638 = vpop.xlane.xlu0 %2637
    %v2639 = vsub.f32 %v2566, %v2538
    %v2640 = vsub.f32 %v2569, %v2539
    %v2641 = vsub.f32 %v2572, %v2540
    %v2642 = vsub.f32 %v2575, %v2541
    %v2643 = vsub.f32 %v2578, %v2542
    %v2644 = vsub.f32 %v2581, %v2543
    %v2645 = vsub.f32 %v2584, %v2544
    %v2646 = vsub.f32 %v2587, %v2545
    %v2647 = vsub.f32 %v2590, %v2546
    %v2648 = vsub.f32 %v2593, %v2547
    %v2649 = vsub.f32 %v2596, %v2548
    %v2650 = vsub.f32 %v2599, %v2549
    %v2651 = vsub.f32 %v2602, %v2550
    %v2652 = vsub.f32 %v2605, %v2551
    %v2653 = vsub.f32 %v2608, %v2552
    %v2654 = vsub.f32 %v2611, %v2553
    %v2655 = vsub.f32 %v2614, %v2554
    %v2656 = vsub.f32 %v2617, %v2555
    %v2657 = vsub.f32 %v2620, %v2556
    %v2658 = vsub.f32 %v2623, %v2557
    %v2659 = vsub.f32 %v2626, %v2558
    %v2660 = vsub.f32 %v2629, %v2559
    %v2661 = vsub.f32 %v2632, %v2560
    %v2662 = vsub.f32 %v2635, %v2561
    %v2663 = vsub.f32 %v2638, %v2562
    %v2664 = vmax.f32 %v2639, 1e-08
    %v2665 = vmax.f32 %v2640, 1e-08
    %v2666 = vmax.f32 %v2641, 1e-08
    %v2667 = vmax.f32 %v2642, 1e-08
    %v2668 = vmax.f32 %v2643, 1e-08
    %v2669 = vmax.f32 %v2644, 1e-08
    %v2670 = vmax.f32 %v2645, 1e-08
    %v2671 = vmax.f32 %v2646, 1e-08
    %v2672 = vmax.f32 %v2647, 1e-08
    %v2673 = vmax.f32 %v2648, 1e-08
    %v2674 = vmax.f32 %v2649, 1e-08
    %v2675 = vmax.f32 %v2650, 1e-08
    %v2676 = vmax.f32 %v2651, 1e-08
    %v2677 = vmax.f32 %v2652, 1e-08
    %v2678 = vmax.f32 %v2653, 1e-08
    %v2679 = vmax.f32 %v2654, 1e-08
    %v2680 = vmax.f32 %v2655, 1e-08
    %v2681 = vmax.f32 %v2656, 1e-08
    %v2682 = vmax.f32 %v2657, 1e-08
    %v2683 = vmax.f32 %v2658, 1e-08
    %v2684 = vmax.f32 %v2659, 1e-08
    %v2685 = vmax.f32 %v2660, 1e-08
    %v2686 = vmax.f32 %v2661, 1e-08
    %v2687 = vmax.f32 %v2662, 1e-08
    %v2688 = vmax.f32 %v2663, 1e-08
    %v2689 = vmul.f32 %v2513, %v2513
    %v2690 = vmul.f32 %v2514, %v2514
    %v2691 = vmul.f32 %v2515, %v2515
    %v2692 = vmul.f32 %v2516, %v2516
    %v2693 = vmul.f32 %v2517, %v2517
    %v2694 = vmul.f32 %v2518, %v2518
    %v2695 = vmul.f32 %v2519, %v2519
    %v2696 = vmul.f32 %v2520, %v2520
    %v2697 = vmul.f32 %v2521, %v2521
    %v2698 = vmul.f32 %v2522, %v2522
    %v2699 = vmul.f32 %v2523, %v2523
    %v2700 = vmul.f32 %v2524, %v2524
    %v2701 = vmul.f32 %v2525, %v2525
    %v2702 = vmul.f32 %v2526, %v2526
    %v2703 = vmul.f32 %v2527, %v2527
    %v2704 = vmul.f32 %v2528, %v2528
    %v2705 = vmul.f32 %v2529, %v2529
    %v2706 = vmul.f32 %v2530, %v2530
    %v2707 = vmul.f32 %v2531, %v2531
    %v2708 = vmul.f32 %v2532, %v2532
    %v2709 = vmul.f32 %v2533, %v2533
    %v2710 = vmul.f32 %v2534, %v2534
    %v2711 = vmul.f32 %v2535, %v2535
    %v2712 = vmul.f32 %v2536, %v2536
    %v2713 = vmul.f32 %v2537, %v2537
    %v2714 = vsub.f32 %v2689, 1.0
    %v2715 = vsub.f32 %v2690, 1.0
    %v2716 = vsub.f32 %v2691, 1.0
    %v2717 = vsub.f32 %v2692, 1.0
    %v2718 = vsub.f32 %v2693, 1.0
    %v2719 = vsub.f32 %v2694, 1.0
    %v2720 = vsub.f32 %v2695, 1.0
    %v2721 = vsub.f32 %v2696, 1.0
    %v2722 = vsub.f32 %v2697, 1.0
    %v2723 = vsub.f32 %v2698, 1.0
    %v2724 = vsub.f32 %v2699, 1.0
    %v2725 = vsub.f32 %v2700, 1.0
    %v2726 = vsub.f32 %v2701, 1.0
    %v2727 = vsub.f32 %v2702, 1.0
    %v2728 = vsub.f32 %v2703, 1.0
    %v2729 = vsub.f32 %v2704, 1.0
    %v2730 = vsub.f32 %v2705, 1.0
    %v2731 = vsub.f32 %v2706, 1.0
    %v2732 = vsub.f32 %v2707, 1.0
    %v2733 = vsub.f32 %v2708, 1.0
    %v2734 = vsub.f32 %v2709, 1.0
    %v2735 = vsub.f32 %v2710, 1.0
    %v2736 = vsub.f32 %v2711, 1.0
    %v2737 = vsub.f32 %v2712, 1.0
    %v2738 = vsub.f32 %v2713, 1.0
    %v2739 = vrsqrt.pop %v2714
    %v2740 = vmul.f32 %v2739, %v2714
    %v2741 = vmul.f32 %v2740, %v2739
    %v2742 = vmul.f32 0.5, %v2741
    %v2743 = vsub.f32 1.5, %v2742
    %v2744 = vmul.f32 %v2739, %v2743
    %v2745 = vmul.f32 %v2714, %v2744
    %vm2746 = vcmp.eq.f32.partialorder %v2714, inf
    %v2747 = vsel %vm2746, %v2714, %v2745
    %vm2748 = vcmp.eq.f32.partialorder %v2714, 0.0
    %v2749 = vand.u32 %v2714, 2147483648
    %v2750 = vsel %vm2748, %v2749, %v2747
    %v2751 = vrsqrt.pop %v2715
    %v2752 = vmul.f32 %v2751, %v2715
    %v2753 = vmul.f32 %v2752, %v2751
    %v2754 = vmul.f32 0.5, %v2753
    %v2755 = vsub.f32 1.5, %v2754
    %v2756 = vmul.f32 %v2751, %v2755
    %v2757 = vmul.f32 %v2715, %v2756
    %vm2758 = vcmp.eq.f32.partialorder %v2715, inf
    %v2759 = vsel %vm2758, %v2715, %v2757
    %vm2760 = vcmp.eq.f32.partialorder %v2715, 0.0
    %v2761 = vand.u32 %v2715, 2147483648
    %v2762 = vsel %vm2760, %v2761, %v2759
    %v2763 = vrsqrt.pop %v2716
    %v2764 = vmul.f32 %v2763, %v2716
    %v2765 = vmul.f32 %v2764, %v2763
    %v2766 = vmul.f32 0.5, %v2765
    %v2767 = vsub.f32 1.5, %v2766
    %v2768 = vmul.f32 %v2763, %v2767
    %v2769 = vmul.f32 %v2716, %v2768
    %vm2770 = vcmp.eq.f32.partialorder %v2716, inf
    %v2771 = vsel %vm2770, %v2716, %v2769
    %vm2772 = vcmp.eq.f32.partialorder %v2716, 0.0
    %v2773 = vand.u32 %v2716, 2147483648
    %v2774 = vsel %vm2772, %v2773, %v2771
    %v2775 = vrsqrt.pop %v2717
    %v2776 = vmul.f32 %v2775, %v2717
    %v2777 = vmul.f32 %v2776, %v2775
    %v2778 = vmul.f32 0.5, %v2777
    %v2779 = vsub.f32 1.5, %v2778
    %v2780 = vmul.f32 %v2775, %v2779
    %v2781 = vmul.f32 %v2717, %v2780
    %vm2782 = vcmp.eq.f32.partialorder %v2717, inf
    %v2783 = vsel %vm2782, %v2717, %v2781
    %vm2784 = vcmp.eq.f32.partialorder %v2717, 0.0
    %v2785 = vand.u32 %v2717, 2147483648
    %v2786 = vsel %vm2784, %v2785, %v2783
    %v2787 = vrsqrt.pop %v2718
    %v2788 = vmul.f32 %v2787, %v2718
    %v2789 = vmul.f32 %v2788, %v2787
    %v2790 = vmul.f32 0.5, %v2789
    %v2791 = vsub.f32 1.5, %v2790
    %v2792 = vmul.f32 %v2787, %v2791
    %v2793 = vmul.f32 %v2718, %v2792
    %vm2794 = vcmp.eq.f32.partialorder %v2718, inf
    %v2795 = vsel %vm2794, %v2718, %v2793
    %vm2796 = vcmp.eq.f32.partialorder %v2718, 0.0
    %v2797 = vand.u32 %v2718, 2147483648
    %v2798 = vsel %vm2796, %v2797, %v2795
    %v2799 = vrsqrt.pop %v2719
    %v2800 = vmul.f32 %v2799, %v2719
    %v2801 = vmul.f32 %v2800, %v2799
    %v2802 = vmul.f32 0.5, %v2801
    %v2803 = vsub.f32 1.5, %v2802
    %v2804 = vmul.f32 %v2799, %v2803
    %v2805 = vmul.f32 %v2719, %v2804
    %vm2806 = vcmp.eq.f32.partialorder %v2719, inf
    %v2807 = vsel %vm2806, %v2719, %v2805
    %vm2808 = vcmp.eq.f32.partialorder %v2719, 0.0
    %v2809 = vand.u32 %v2719, 2147483648
    %v2810 = vsel %vm2808, %v2809, %v2807
    %v2811 = vrsqrt.pop %v2720
    %v2812 = vmul.f32 %v2811, %v2720
    %v2813 = vmul.f32 %v2812, %v2811
    %v2814 = vmul.f32 0.5, %v2813
    %v2815 = vsub.f32 1.5, %v2814
    %v2816 = vmul.f32 %v2811, %v2815
    %v2817 = vmul.f32 %v2720, %v2816
    %vm2818 = vcmp.eq.f32.partialorder %v2720, inf
    %v2819 = vsel %vm2818, %v2720, %v2817
    %vm2820 = vcmp.eq.f32.partialorder %v2720, 0.0
    %v2821 = vand.u32 %v2720, 2147483648
    %v2822 = vsel %vm2820, %v2821, %v2819
    %v2823 = vrsqrt.pop %v2721
    %v2824 = vmul.f32 %v2823, %v2721
    %v2825 = vmul.f32 %v2824, %v2823
    %v2826 = vmul.f32 0.5, %v2825
    %v2827 = vsub.f32 1.5, %v2826
    %v2828 = vmul.f32 %v2823, %v2827
    %v2829 = vmul.f32 %v2721, %v2828
    %vm2830 = vcmp.eq.f32.partialorder %v2721, inf
    %v2831 = vsel %vm2830, %v2721, %v2829
    %vm2832 = vcmp.eq.f32.partialorder %v2721, 0.0
    %v2833 = vand.u32 %v2721, 2147483648
    %v2834 = vsel %vm2832, %v2833, %v2831
    %v2835 = vrsqrt.pop %v2722
    %v2836 = vmul.f32 %v2835, %v2722
    %v2837 = vmul.f32 %v2836, %v2835
    %v2838 = vmul.f32 0.5, %v2837
    %v2839 = vsub.f32 1.5, %v2838
    %v2840 = vmul.f32 %v2835, %v2839
    %v2841 = vmul.f32 %v2722, %v2840
    %vm2842 = vcmp.eq.f32.partialorder %v2722, inf
    %v2843 = vsel %vm2842, %v2722, %v2841
    %vm2844 = vcmp.eq.f32.partialorder %v2722, 0.0
    %v2845 = vand.u32 %v2722, 2147483648
    %v2846 = vsel %vm2844, %v2845, %v2843
    %v2847 = vrsqrt.pop %v2723
    %v2848 = vmul.f32 %v2847, %v2723
    %v2849 = vmul.f32 %v2848, %v2847
    %v2850 = vmul.f32 0.5, %v2849
    %v2851 = vsub.f32 1.5, %v2850
    %v2852 = vmul.f32 %v2847, %v2851
    %v2853 = vmul.f32 %v2723, %v2852
    %vm2854 = vcmp.eq.f32.partialorder %v2723, inf
    %v2855 = vsel %vm2854, %v2723, %v2853
    %vm2856 = vcmp.eq.f32.partialorder %v2723, 0.0
    %v2857 = vand.u32 %v2723, 2147483648
    %v2858 = vsel %vm2856, %v2857, %v2855
    %v2859 = vrsqrt.pop %v2724
    %v2860 = vmul.f32 %v2859, %v2724
    %v2861 = vmul.f32 %v2860, %v2859
    %v2862 = vmul.f32 0.5, %v2861
    %v2863 = vsub.f32 1.5, %v2862
    %v2864 = vmul.f32 %v2859, %v2863
    %v2865 = vmul.f32 %v2724, %v2864
    %vm2866 = vcmp.eq.f32.partialorder %v2724, inf
    %v2867 = vsel %vm2866, %v2724, %v2865
    %vm2868 = vcmp.eq.f32.partialorder %v2724, 0.0
    %v2869 = vand.u32 %v2724, 2147483648
    %v2870 = vsel %vm2868, %v2869, %v2867
    %v2871 = vrsqrt.pop %v2725
    %v2872 = vmul.f32 %v2871, %v2725
    %v2873 = vmul.f32 %v2872, %v2871
    %v2874 = vmul.f32 0.5, %v2873
    %v2875 = vsub.f32 1.5, %v2874
    %v2876 = vmul.f32 %v2871, %v2875
    %v2877 = vmul.f32 %v2725, %v2876
    %vm2878 = vcmp.eq.f32.partialorder %v2725, inf
    %v2879 = vsel %vm2878, %v2725, %v2877
    %vm2880 = vcmp.eq.f32.partialorder %v2725, 0.0
    %v2881 = vand.u32 %v2725, 2147483648
    %v2882 = vsel %vm2880, %v2881, %v2879
    %v2883 = vrsqrt.pop %v2726
    %v2884 = vmul.f32 %v2883, %v2726
    %v2885 = vmul.f32 %v2884, %v2883
    %v2886 = vmul.f32 0.5, %v2885
    %v2887 = vsub.f32 1.5, %v2886
    %v2888 = vmul.f32 %v2883, %v2887
    %v2889 = vmul.f32 %v2726, %v2888
    %vm2890 = vcmp.eq.f32.partialorder %v2726, inf
    %v2891 = vsel %vm2890, %v2726, %v2889
    %vm2892 = vcmp.eq.f32.partialorder %v2726, 0.0
    %v2893 = vand.u32 %v2726, 2147483648
    %v2894 = vsel %vm2892, %v2893, %v2891
    %v2895 = vrsqrt.pop %v2727
    %v2896 = vmul.f32 %v2895, %v2727
    %v2897 = vmul.f32 %v2896, %v2895
    %v2898 = vmul.f32 0.5, %v2897
    %v2899 = vsub.f32 1.5, %v2898
    %v2900 = vmul.f32 %v2895, %v2899
    %v2901 = vmul.f32 %v2727, %v2900
    %vm2902 = vcmp.eq.f32.partialorder %v2727, inf
    %v2903 = vsel %vm2902, %v2727, %v2901
    %vm2904 = vcmp.eq.f32.partialorder %v2727, 0.0
    %v2905 = vand.u32 %v2727, 2147483648
    %v2906 = vsel %vm2904, %v2905, %v2903
    %v2907 = vrsqrt.pop %v2728
    %v2908 = vmul.f32 %v2907, %v2728
    %v2909 = vmul.f32 %v2908, %v2907
    %v2910 = vmul.f32 0.5, %v2909
    %v2911 = vsub.f32 1.5, %v2910
    %v2912 = vmul.f32 %v2907, %v2911
    %v2913 = vmul.f32 %v2728, %v2912
    %vm2914 = vcmp.eq.f32.partialorder %v2728, inf
    %v2915 = vsel %vm2914, %v2728, %v2913
    %vm2916 = vcmp.eq.f32.partialorder %v2728, 0.0
    %v2917 = vand.u32 %v2728, 2147483648
    %v2918 = vsel %vm2916, %v2917, %v2915
    %v2919 = vrsqrt.pop %v2729
    %v2920 = vmul.f32 %v2919, %v2729
    %v2921 = vmul.f32 %v2920, %v2919
    %v2922 = vmul.f32 0.5, %v2921
    %v2923 = vsub.f32 1.5, %v2922
    %v2924 = vmul.f32 %v2919, %v2923
    %v2925 = vmul.f32 %v2729, %v2924
    %vm2926 = vcmp.eq.f32.partialorder %v2729, inf
    %v2927 = vsel %vm2926, %v2729, %v2925
    %vm2928 = vcmp.eq.f32.partialorder %v2729, 0.0
    %v2929 = vand.u32 %v2729, 2147483648
    %v2930 = vsel %vm2928, %v2929, %v2927
    %v2931 = vrsqrt.pop %v2730
    %v2932 = vmul.f32 %v2931, %v2730
    %v2933 = vmul.f32 %v2932, %v2931
    %v2934 = vmul.f32 0.5, %v2933
    %v2935 = vsub.f32 1.5, %v2934
    %v2936 = vmul.f32 %v2931, %v2935
    %v2937 = vmul.f32 %v2730, %v2936
    %vm2938 = vcmp.eq.f32.partialorder %v2730, inf
    %v2939 = vsel %vm2938, %v2730, %v2937
    %vm2940 = vcmp.eq.f32.partialorder %v2730, 0.0
    %v2941 = vand.u32 %v2730, 2147483648
    %v2942 = vsel %vm2940, %v2941, %v2939
    %v2943 = vrsqrt.pop %v2731
    %v2944 = vmul.f32 %v2943, %v2731
    %v2945 = vmul.f32 %v2944, %v2943
    %v2946 = vmul.f32 0.5, %v2945
    %v2947 = vsub.f32 1.5, %v2946
    %v2948 = vmul.f32 %v2943, %v2947
    %v2949 = vmul.f32 %v2731, %v2948
    %vm2950 = vcmp.eq.f32.partialorder %v2731, inf
    %v2951 = vsel %vm2950, %v2731, %v2949
    %vm2952 = vcmp.eq.f32.partialorder %v2731, 0.0
    %v2953 = vand.u32 %v2731, 2147483648
    %v2954 = vsel %vm2952, %v2953, %v2951
    %v2955 = vrsqrt.pop %v2732
    %v2956 = vmul.f32 %v2955, %v2732
    %v2957 = vmul.f32 %v2956, %v2955
    %v2958 = vmul.f32 0.5, %v2957
    %v2959 = vsub.f32 1.5, %v2958
    %v2960 = vmul.f32 %v2955, %v2959
    %v2961 = vmul.f32 %v2732, %v2960
    %vm2962 = vcmp.eq.f32.partialorder %v2732, inf
    %v2963 = vsel %vm2962, %v2732, %v2961
    %vm2964 = vcmp.eq.f32.partialorder %v2732, 0.0
    %v2965 = vand.u32 %v2732, 2147483648
    %v2966 = vsel %vm2964, %v2965, %v2963
    %v2967 = vrsqrt.pop %v2733
    %v2968 = vmul.f32 %v2967, %v2733
    %v2969 = vmul.f32 %v2968, %v2967
    %v2970 = vmul.f32 0.5, %v2969
    %v2971 = vsub.f32 1.5, %v2970
    %v2972 = vmul.f32 %v2967, %v2971
    %v2973 = vmul.f32 %v2733, %v2972
    %vm2974 = vcmp.eq.f32.partialorder %v2733, inf
    %v2975 = vsel %vm2974, %v2733, %v2973
    %vm2976 = vcmp.eq.f32.partialorder %v2733, 0.0
    %v2977 = vand.u32 %v2733, 2147483648
    %v2978 = vsel %vm2976, %v2977, %v2975
    %v2979 = vrsqrt.pop %v2734
    %v2980 = vmul.f32 %v2979, %v2734
    %v2981 = vmul.f32 %v2980, %v2979
    %v2982 = vmul.f32 0.5, %v2981
    %v2983 = vsub.f32 1.5, %v2982
    %v2984 = vmul.f32 %v2979, %v2983
    %v2985 = vmul.f32 %v2734, %v2984
    %vm2986 = vcmp.eq.f32.partialorder %v2734, inf
    %v2987 = vsel %vm2986, %v2734, %v2985
    %vm2988 = vcmp.eq.f32.partialorder %v2734, 0.0
    %v2989 = vand.u32 %v2734, 2147483648
    %v2990 = vsel %vm2988, %v2989, %v2987
    %v2991 = vrsqrt.pop %v2735
    %v2992 = vmul.f32 %v2991, %v2735
    %v2993 = vmul.f32 %v2992, %v2991
    %v2994 = vmul.f32 0.5, %v2993
    %v2995 = vsub.f32 1.5, %v2994
    %v2996 = vmul.f32 %v2991, %v2995
    %v2997 = vmul.f32 %v2735, %v2996
    %vm2998 = vcmp.eq.f32.partialorder %v2735, inf
    %v2999 = vsel %vm2998, %v2735, %v2997
    %vm3000 = vcmp.eq.f32.partialorder %v2735, 0.0
    %v3001 = vand.u32 %v2735, 2147483648
    %v3002 = vsel %vm3000, %v3001, %v2999
    %v3003 = vrsqrt.pop %v2736
    %v3004 = vmul.f32 %v3003, %v2736
    %v3005 = vmul.f32 %v3004, %v3003
    %v3006 = vmul.f32 0.5, %v3005
    %v3007 = vsub.f32 1.5, %v3006
    %v3008 = vmul.f32 %v3003, %v3007
    %v3009 = vmul.f32 %v2736, %v3008
    %vm3010 = vcmp.eq.f32.partialorder %v2736, inf
    %v3011 = vsel %vm3010, %v2736, %v3009
    %vm3012 = vcmp.eq.f32.partialorder %v2736, 0.0
    %v3013 = vand.u32 %v2736, 2147483648
    %v3014 = vsel %vm3012, %v3013, %v3011
    %v3015 = vrsqrt.pop %v2737
    %v3016 = vmul.f32 %v3015, %v2737
    %v3017 = vmul.f32 %v3016, %v3015
    %v3018 = vmul.f32 0.5, %v3017
    %v3019 = vsub.f32 1.5, %v3018
    %v3020 = vmul.f32 %v3015, %v3019
    %v3021 = vmul.f32 %v2737, %v3020
    %vm3022 = vcmp.eq.f32.partialorder %v2737, inf
    %v3023 = vsel %vm3022, %v2737, %v3021
    %vm3024 = vcmp.eq.f32.partialorder %v2737, 0.0
    %v3025 = vand.u32 %v2737, 2147483648
    %v3026 = vsel %vm3024, %v3025, %v3023
    %v3027 = vrsqrt.pop %v2738
    %v3028 = vmul.f32 %v3027, %v2738
    %v3029 = vmul.f32 %v3028, %v3027
    %v3030 = vmul.f32 0.5, %v3029
    %v3031 = vsub.f32 1.5, %v3030
    %v3032 = vmul.f32 %v3027, %v3031
    %v3033 = vmul.f32 %v2738, %v3032
    %vm3034 = vcmp.eq.f32.partialorder %v2738, inf
    %v3035 = vsel %vm3034, %v2738, %v3033
    %vm3036 = vcmp.eq.f32.partialorder %v2738, 0.0
    %v3037 = vand.u32 %v2738, 2147483648
    %v3038 = vsel %vm3036, %v3037, %v3035
    %v3039 = vrsqrt.pop %v2664
    %v3040 = vmul.f32 %v3039, %v2664
    %v3041 = vmul.f32 %v3040, %v3039
    %v3042 = vmul.f32 0.5, %v3041
    %v3043 = vsub.f32 1.5, %v3042
    %v3044 = vmul.f32 %v3039, %v3043
    %vm3045 = vweird.f32 %v2664
    %vm3046 = vweird.f32 %v3039
    %vm3047 = vmor %vm3045, %vm3046
    %v3048 = vsel %vm3047, %v3039, %v3044
    %v3049 = vrsqrt.pop %v2665
    %v3050 = vmul.f32 %v3049, %v2665
    %v3051 = vmul.f32 %v3050, %v3049
    %v3052 = vmul.f32 0.5, %v3051
    %v3053 = vsub.f32 1.5, %v3052
    %v3054 = vmul.f32 %v3049, %v3053
    %vm3055 = vweird.f32 %v2665
    %vm3056 = vweird.f32 %v3049
    %vm3057 = vmor %vm3055, %vm3056
    %v3058 = vsel %vm3057, %v3049, %v3054
    %v3059 = vrsqrt.pop %v2666
    %v3060 = vmul.f32 %v3059, %v2666
    %v3061 = vmul.f32 %v3060, %v3059
    %v3062 = vmul.f32 0.5, %v3061
    %v3063 = vsub.f32 1.5, %v3062
    %v3064 = vmul.f32 %v3059, %v3063
    %vm3065 = vweird.f32 %v2666
    %vm3066 = vweird.f32 %v3059
    %vm3067 = vmor %vm3065, %vm3066
    %v3068 = vsel %vm3067, %v3059, %v3064
    %v3069 = vrsqrt.pop %v2667
    %v3070 = vmul.f32 %v3069, %v2667
    %v3071 = vmul.f32 %v3070, %v3069
    %v3072 = vmul.f32 0.5, %v3071
    %v3073 = vsub.f32 1.5, %v3072
    %v3074 = vmul.f32 %v3069, %v3073
    %vm3075 = vweird.f32 %v2667
    %vm3076 = vweird.f32 %v3069
    %vm3077 = vmor %vm3075, %vm3076
    %v3078 = vsel %vm3077, %v3069, %v3074
    %v3079 = vrsqrt.pop %v2668
    %v3080 = vmul.f32 %v3079, %v2668
    %v3081 = vmul.f32 %v3080, %v3079
    %v3082 = vmul.f32 0.5, %v3081
    %v3083 = vsub.f32 1.5, %v3082
    %v3084 = vmul.f32 %v3079, %v3083
    %vm3085 = vweird.f32 %v2668
    %vm3086 = vweird.f32 %v3079
    %vm3087 = vmor %vm3085, %vm3086
    %v3088 = vsel %vm3087, %v3079, %v3084
    %v3089 = vrsqrt.pop %v2669
    %v3090 = vmul.f32 %v3089, %v2669
    %v3091 = vmul.f32 %v3090, %v3089
    %v3092 = vmul.f32 0.5, %v3091
    %v3093 = vsub.f32 1.5, %v3092
    %v3094 = vmul.f32 %v3089, %v3093
    %vm3095 = vweird.f32 %v2669
    %vm3096 = vweird.f32 %v3089
    %vm3097 = vmor %vm3095, %vm3096
    %v3098 = vsel %vm3097, %v3089, %v3094
    %v3099 = vrsqrt.pop %v2670
    %v3100 = vmul.f32 %v3099, %v2670
    %v3101 = vmul.f32 %v3100, %v3099
    %v3102 = vmul.f32 0.5, %v3101
    %v3103 = vsub.f32 1.5, %v3102
    %v3104 = vmul.f32 %v3099, %v3103
    %vm3105 = vweird.f32 %v2670
    %vm3106 = vweird.f32 %v3099
    %vm3107 = vmor %vm3105, %vm3106
    %v3108 = vsel %vm3107, %v3099, %v3104
    %v3109 = vrsqrt.pop %v2671
    %v3110 = vmul.f32 %v3109, %v2671
    %v3111 = vmul.f32 %v3110, %v3109
    %v3112 = vmul.f32 0.5, %v3111
    %v3113 = vsub.f32 1.5, %v3112
    %v3114 = vmul.f32 %v3109, %v3113
    %vm3115 = vweird.f32 %v2671
    %vm3116 = vweird.f32 %v3109
    %vm3117 = vmor %vm3115, %vm3116
    %v3118 = vsel %vm3117, %v3109, %v3114
    %v3119 = vrsqrt.pop %v2672
    %v3120 = vmul.f32 %v3119, %v2672
    %v3121 = vmul.f32 %v3120, %v3119
    %v3122 = vmul.f32 0.5, %v3121
    %v3123 = vsub.f32 1.5, %v3122
    %v3124 = vmul.f32 %v3119, %v3123
    %vm3125 = vweird.f32 %v2672
    %vm3126 = vweird.f32 %v3119
    %vm3127 = vmor %vm3125, %vm3126
    %v3128 = vsel %vm3127, %v3119, %v3124
    %v3129 = vrsqrt.pop %v2673
    %v3130 = vmul.f32 %v3129, %v2673
    %v3131 = vmul.f32 %v3130, %v3129
    %v3132 = vmul.f32 0.5, %v3131
    %v3133 = vsub.f32 1.5, %v3132
    %v3134 = vmul.f32 %v3129, %v3133
    %vm3135 = vweird.f32 %v2673
    %vm3136 = vweird.f32 %v3129
    %vm3137 = vmor %vm3135, %vm3136
    %v3138 = vsel %vm3137, %v3129, %v3134
    %v3139 = vrsqrt.pop %v2674
    %v3140 = vmul.f32 %v3139, %v2674
    %v3141 = vmul.f32 %v3140, %v3139
    %v3142 = vmul.f32 0.5, %v3141
    %v3143 = vsub.f32 1.5, %v3142
    %v3144 = vmul.f32 %v3139, %v3143
    %vm3145 = vweird.f32 %v2674
    %vm3146 = vweird.f32 %v3139
    %vm3147 = vmor %vm3145, %vm3146
    %v3148 = vsel %vm3147, %v3139, %v3144
    %v3149 = vrsqrt.pop %v2675
    %v3150 = vmul.f32 %v3149, %v2675
    %v3151 = vmul.f32 %v3150, %v3149
    %v3152 = vmul.f32 0.5, %v3151
    %v3153 = vsub.f32 1.5, %v3152
    %v3154 = vmul.f32 %v3149, %v3153
    %vm3155 = vweird.f32 %v2675
    %vm3156 = vweird.f32 %v3149
    %vm3157 = vmor %vm3155, %vm3156
    %v3158 = vsel %vm3157, %v3149, %v3154
    %v3159 = vrsqrt.pop %v2676
    %v3160 = vmul.f32 %v3159, %v2676
    %v3161 = vmul.f32 %v3160, %v3159
    %v3162 = vmul.f32 0.5, %v3161
    %v3163 = vsub.f32 1.5, %v3162
    %v3164 = vmul.f32 %v3159, %v3163
    %vm3165 = vweird.f32 %v2676
    %vm3166 = vweird.f32 %v3159
    %vm3167 = vmor %vm3165, %vm3166
    %v3168 = vsel %vm3167, %v3159, %v3164
    %v3169 = vrsqrt.pop %v2677
    %v3170 = vmul.f32 %v3169, %v2677
    %v3171 = vmul.f32 %v3170, %v3169
    %v3172 = vmul.f32 0.5, %v3171
    %v3173 = vsub.f32 1.5, %v3172
    %v3174 = vmul.f32 %v3169, %v3173
    %vm3175 = vweird.f32 %v2677
    %vm3176 = vweird.f32 %v3169
    %vm3177 = vmor %vm3175, %vm3176
    %v3178 = vsel %vm3177, %v3169, %v3174
    %v3179 = vrsqrt.pop %v2678
    %v3180 = vmul.f32 %v3179, %v2678
    %v3181 = vmul.f32 %v3180, %v3179
    %v3182 = vmul.f32 0.5, %v3181
    %v3183 = vsub.f32 1.5, %v3182
    %v3184 = vmul.f32 %v3179, %v3183
    %vm3185 = vweird.f32 %v2678
    %vm3186 = vweird.f32 %v3179
    %vm3187 = vmor %vm3185, %vm3186
    %v3188 = vsel %vm3187, %v3179, %v3184
    %v3189 = vrsqrt.pop %v2679
    %v3190 = vmul.f32 %v3189, %v2679
    %v3191 = vmul.f32 %v3190, %v3189
    %v3192 = vmul.f32 0.5, %v3191
    %v3193 = vsub.f32 1.5, %v3192
    %v3194 = vmul.f32 %v3189, %v3193
    %vm3195 = vweird.f32 %v2679
    %vm3196 = vweird.f32 %v3189
    %vm3197 = vmor %vm3195, %vm3196
    %v3198 = vsel %vm3197, %v3189, %v3194
    %v3199 = vrsqrt.pop %v2680
    %v3200 = vmul.f32 %v3199, %v2680
    %v3201 = vmul.f32 %v3200, %v3199
    %v3202 = vmul.f32 0.5, %v3201
    %v3203 = vsub.f32 1.5, %v3202
    %v3204 = vmul.f32 %v3199, %v3203
    %vm3205 = vweird.f32 %v2680
    %vm3206 = vweird.f32 %v3199
    %vm3207 = vmor %vm3205, %vm3206
    %v3208 = vsel %vm3207, %v3199, %v3204
    %v3209 = vrsqrt.pop %v2681
    %v3210 = vmul.f32 %v3209, %v2681
    %v3211 = vmul.f32 %v3210, %v3209
    %v3212 = vmul.f32 0.5, %v3211
    %v3213 = vsub.f32 1.5, %v3212
    %v3214 = vmul.f32 %v3209, %v3213
    %vm3215 = vweird.f32 %v2681
    %vm3216 = vweird.f32 %v3209
    %vm3217 = vmor %vm3215, %vm3216
    %v3218 = vsel %vm3217, %v3209, %v3214
    %v3219 = vrsqrt.pop %v2682
    %v3220 = vmul.f32 %v3219, %v2682
    %v3221 = vmul.f32 %v3220, %v3219
    %v3222 = vmul.f32 0.5, %v3221
    %v3223 = vsub.f32 1.5, %v3222
    %v3224 = vmul.f32 %v3219, %v3223
    %vm3225 = vweird.f32 %v2682
    %vm3226 = vweird.f32 %v3219
    %vm3227 = vmor %vm3225, %vm3226
    %v3228 = vsel %vm3227, %v3219, %v3224
    %v3229 = vrsqrt.pop %v2683
    %v3230 = vmul.f32 %v3229, %v2683
    %v3231 = vmul.f32 %v3230, %v3229
    %v3232 = vmul.f32 0.5, %v3231
    %v3233 = vsub.f32 1.5, %v3232
    %v3234 = vmul.f32 %v3229, %v3233
    %vm3235 = vweird.f32 %v2683
    %vm3236 = vweird.f32 %v3229
    %vm3237 = vmor %vm3235, %vm3236
    %v3238 = vsel %vm3237, %v3229, %v3234
    %v3239 = vrsqrt.pop %v2684
    %v3240 = vmul.f32 %v3239, %v2684
    %v3241 = vmul.f32 %v3240, %v3239
    %v3242 = vmul.f32 0.5, %v3241
    %v3243 = vsub.f32 1.5, %v3242
    %v3244 = vmul.f32 %v3239, %v3243
    %vm3245 = vweird.f32 %v2684
    %vm3246 = vweird.f32 %v3239
    %vm3247 = vmor %vm3245, %vm3246
    %v3248 = vsel %vm3247, %v3239, %v3244
    %v3249 = vrsqrt.pop %v2685
    %v3250 = vmul.f32 %v3249, %v2685
    %v3251 = vmul.f32 %v3250, %v3249
    %v3252 = vmul.f32 0.5, %v3251
    %v3253 = vsub.f32 1.5, %v3252
    %v3254 = vmul.f32 %v3249, %v3253
    %vm3255 = vweird.f32 %v2685
    %vm3256 = vweird.f32 %v3249
    %vm3257 = vmor %vm3255, %vm3256
    %v3258 = vsel %vm3257, %v3249, %v3254
    %v3259 = vrsqrt.pop %v2686
    %v3260 = vmul.f32 %v3259, %v2686
    %v3261 = vmul.f32 %v3260, %v3259
    %v3262 = vmul.f32 0.5, %v3261
    %v3263 = vsub.f32 1.5, %v3262
    %v3264 = vmul.f32 %v3259, %v3263
    %vm3265 = vweird.f32 %v2686
    %vm3266 = vweird.f32 %v3259
    %vm3267 = vmor %vm3265, %vm3266
    %v3268 = vsel %vm3267, %v3259, %v3264
    %v3269 = vrsqrt.pop %v2687
    %v3270 = vmul.f32 %v3269, %v2687
    %v3271 = vmul.f32 %v3270, %v3269
    %v3272 = vmul.f32 0.5, %v3271
    %v3273 = vsub.f32 1.5, %v3272
    %v3274 = vmul.f32 %v3269, %v3273
    %vm3275 = vweird.f32 %v2687
    %vm3276 = vweird.f32 %v3269
    %vm3277 = vmor %vm3275, %vm3276
    %v3278 = vsel %vm3277, %v3269, %v3274
    %v3279 = vrsqrt.pop %v2688
    %v3280 = vmul.f32 %v3279, %v2688
    %v3281 = vmul.f32 %v3280, %v3279
    %v3282 = vmul.f32 0.5, %v3281
    %v3283 = vsub.f32 1.5, %v3282
    %v3284 = vmul.f32 %v3279, %v3283
    %vm3285 = vweird.f32 %v2688
    %vm3286 = vweird.f32 %v3279
    %vm3287 = vmor %vm3285, %vm3286
    %v3288 = vsel %vm3287, %v3279, %v3284
    %v3289 = vmul.f32 %v2750, %v3048
    %v3290 = vmul.f32 %v2762, %v3058
    %v3291 = vmul.f32 %v2774, %v3068
    %v3292 = vmul.f32 %v2786, %v3078
    %v3293 = vmul.f32 %v2798, %v3088
    %v3294 = vmul.f32 %v2810, %v3098
    %v3295 = vmul.f32 %v2822, %v3108
    %v3296 = vmul.f32 %v2834, %v3118
    %v3297 = vmul.f32 %v2846, %v3128
    %v3298 = vmul.f32 %v2858, %v3138
    %v3299 = vmul.f32 %v2870, %v3148
    %v3300 = vmul.f32 %v2882, %v3158
    %v3301 = vmul.f32 %v2894, %v3168
    %v3302 = vmul.f32 %v2906, %v3178
    %v3303 = vmul.f32 %v2918, %v3188
    %v3304 = vmul.f32 %v2930, %v3198
    %v3305 = vmul.f32 %v2942, %v3208
    %v3306 = vmul.f32 %v2954, %v3218
    %v3307 = vmul.f32 %v2966, %v3228
    %v3308 = vmul.f32 %v2978, %v3238
    %v3309 = vmul.f32 %v2990, %v3248
    %v3310 = vmul.f32 %v3002, %v3258
    %v3311 = vmul.f32 %v3014, %v3268
    %v3312 = vmul.f32 %v3026, %v3278
    %v3313 = vmul.f32 %v3038, %v3288
    %3315 = vset.pattern.permute.xlu0 0
    %3316 = vperm.xlu0 %3315, %v3289
    %v3317 = vpop.permute.xlu0 %3316
    %3320 = vset.pattern.permute.xlu0 0
    %3321 = vperm.xlu0 %3320, %v3290
    %v3322 = vpop.permute.xlu0 %3321
    %3325 = vset.pattern.permute.xlu0 0
    %3326 = vperm.xlu0 %3325, %v3291
    %v3327 = vpop.permute.xlu0 %3326
    %3330 = vset.pattern.permute.xlu0 0
    %3331 = vperm.xlu0 %3330, %v3292
    %v3332 = vpop.permute.xlu0 %3331
    %3335 = vset.pattern.permute.xlu0 0
    %3336 = vperm.xlu0 %3335, %v3293
    %v3337 = vpop.permute.xlu0 %3336
    %3340 = vset.pattern.permute.xlu0 0
    %3341 = vperm.xlu0 %3340, %v3294
    %v3342 = vpop.permute.xlu0 %3341
    %3345 = vset.pattern.permute.xlu0 0
    %3346 = vperm.xlu0 %3345, %v3295
    %v3347 = vpop.permute.xlu0 %3346
    %3350 = vset.pattern.permute.xlu0 0
    %3351 = vperm.xlu0 %3350, %v3296
    %v3352 = vpop.permute.xlu0 %3351
    %3355 = vset.pattern.permute.xlu0 0
    %3356 = vperm.xlu0 %3355, %v3297
    %v3357 = vpop.permute.xlu0 %3356
    %3360 = vset.pattern.permute.xlu0 0
    %3361 = vperm.xlu0 %3360, %v3298
    %v3362 = vpop.permute.xlu0 %3361
    %3365 = vset.pattern.permute.xlu0 0
    %3366 = vperm.xlu0 %3365, %v3299
    %v3367 = vpop.permute.xlu0 %3366
    %3370 = vset.pattern.permute.xlu0 0
    %3371 = vperm.xlu0 %3370, %v3300
    %v3372 = vpop.permute.xlu0 %3371
    %3375 = vset.pattern.permute.xlu0 0
    %3376 = vperm.xlu0 %3375, %v3301
    %v3377 = vpop.permute.xlu0 %3376
    %3380 = vset.pattern.permute.xlu0 0
    %3381 = vperm.xlu0 %3380, %v3302
    %v3382 = vpop.permute.xlu0 %3381
    %3385 = vset.pattern.permute.xlu0 0
    %3386 = vperm.xlu0 %3385, %v3303
    %v3387 = vpop.permute.xlu0 %3386
    %3390 = vset.pattern.permute.xlu0 0
    %3391 = vperm.xlu0 %3390, %v3304
    %v3392 = vpop.permute.xlu0 %3391
    %3395 = vset.pattern.permute.xlu0 0
    %3396 = vperm.xlu0 %3395, %v3305
    %v3397 = vpop.permute.xlu0 %3396
    %3400 = vset.pattern.permute.xlu0 0
    %3401 = vperm.xlu0 %3400, %v3306
    %v3402 = vpop.permute.xlu0 %3401
    %3405 = vset.pattern.permute.xlu0 0
    %3406 = vperm.xlu0 %3405, %v3307
    %v3407 = vpop.permute.xlu0 %3406
    %3410 = vset.pattern.permute.xlu0 0
    %3411 = vperm.xlu0 %3410, %v3308
    %v3412 = vpop.permute.xlu0 %3411
    %3415 = vset.pattern.permute.xlu0 0
    %3416 = vperm.xlu0 %3415, %v3309
    %v3417 = vpop.permute.xlu0 %3416
    %3420 = vset.pattern.permute.xlu0 0
    %3421 = vperm.xlu0 %3420, %v3310
    %v3422 = vpop.permute.xlu0 %3421
    %3425 = vset.pattern.permute.xlu0 0
    %3426 = vperm.xlu0 %3425, %v3311
    %v3427 = vpop.permute.xlu0 %3426
    %3430 = vset.pattern.permute.xlu0 0
    %3431 = vperm.xlu0 %3430, %v3312
    %v3432 = vpop.permute.xlu0 %3431
    %3435 = vset.pattern.permute.xlu0 0
    %3436 = vperm.xlu0 %3435, %v3313
    %v3437 = vpop.permute.xlu0 %3436
    %v3439 = vmul.f32 %v1937, %v3317
    %v3440 = vmul.f32 %v1940, %v3322
    %v3441 = vmul.f32 %v1943, %v3327
    %v3442 = vmul.f32 %v1946, %v3332
    %v3443 = vmul.f32 %v1949, %v3337
    %v3444 = vmul.f32 %v1952, %v3342
    %v3445 = vmul.f32 %v1955, %v3347
    %v3446 = vmul.f32 %v1958, %v3352
    %v3447 = vmul.f32 %v1961, %v3357
    %v3448 = vmul.f32 %v1964, %v3362
    %v3449 = vmul.f32 %v1967, %v3367
    %v3450 = vmul.f32 %v1970, %v3372
    %v3451 = vmul.f32 %v1973, %v3377
    %v3452 = vmul.f32 %v1976, %v3382
    %v3453 = vmul.f32 %v1979, %v3387
    %v3454 = vmul.f32 %v1982, %v3392
    %v3455 = vmul.f32 %v1985, %v3397
    %v3456 = vmul.f32 %v1988, %v3402
    %v3457 = vmul.f32 %v1991, %v3407
    %v3458 = vmul.f32 %v1994, %v3412
    %v3459 = vmul.f32 %v1997, %v3417
    %v3460 = vmul.f32 %v2000, %v3422
    %v3461 = vmul.f32 %v2003, %v3427
    %v3462 = vmul.f32 %v2006, %v3432
    %v3463 = vmul.f32 %v2009, %v3437
    %3464 = vst.msk [vmem:[%s6] sm:$0xff] %vm2563, %v3439
    %3465 = vst.msk [vmem:[%s6 + $0x8] sm:$0xff] %vm2563, %v3440
    %3466 = vst.msk [vmem:[%s6 + $0x10] sm:$0xff] %vm2563, %v3441
    %3467 = vst.msk [vmem:[%s6 + $0x18] sm:$0xff] %vm2563, %v3442
    %3468 = vst.msk [vmem:[%s6 + $0x20] sm:$0xff] %vm2563, %v3443
    %3469 = vst.msk [vmem:[%s6 + $0x28] sm:$0xff] %vm2563, %v3444
    %3470 = vst.msk [vmem:[%s6 + $0x30] sm:$0xff] %vm2563, %v3445
    %3471 = vst.msk [vmem:[%s6 + $0x38] sm:$0xff] %vm2563, %v3446
    %3472 = vst.msk [vmem:[%s6 + $0x40] sm:$0xff] %vm2563, %v3447
    %3473 = vst.msk [vmem:[%s6 + $0x48] sm:$0xff] %vm2563, %v3448
    %3474 = vst.msk [vmem:[%s6 + $0x50] sm:$0xff] %vm2563, %v3449
    %3475 = vst.msk [vmem:[%s6 + $0x58] sm:$0xff] %vm2563, %v3450
    %3476 = vst.msk [vmem:[%s6 + $0x60] sm:$0xff] %vm2563, %v3451
    %3477 = vst.msk [vmem:[%s6 + $0x68] sm:$0xff] %vm2563, %v3452
    %3478 = vst.msk [vmem:[%s6 + $0x70] sm:$0xff] %vm2563, %v3453
    %3479 = vst.msk [vmem:[%s6 + $0x78] sm:$0xff] %vm2563, %v3454
    %3480 = vst.msk [vmem:[%s6 + $0x80] sm:$0xff] %vm2563, %v3455
    %3481 = vst.msk [vmem:[%s6 + $0x88] sm:$0xff] %vm2563, %v3456
    %3482 = vst.msk [vmem:[%s6 + $0x90] sm:$0xff] %vm2563, %v3457
    %3483 = vst.msk [vmem:[%s6 + $0x98] sm:$0xff] %vm2563, %v3458
    %3484 = vst.msk [vmem:[%s6 + $0xa0] sm:$0xff] %vm2563, %v3459
    %3485 = vst.msk [vmem:[%s6 + $0xa8] sm:$0xff] %vm2563, %v3460
    %3486 = vst.msk [vmem:[%s6 + $0xb0] sm:$0xff] %vm2563, %v3461
    %3487 = vst.msk [vmem:[%s6 + $0xb8] sm:$0xff] %vm2563, %v3462
    %3488 = vst.msk [vmem:[%s6 + $0xc0] sm:$0xff] %vm2563, %v3463
    %vm3489 = vcmask 7168
    %3490 = vst.msk [vmem:[%s6] sm:$0xff] %vm3489, %v2513
    %3491 = vst.msk [vmem:[%s6 + $0x8] sm:$0xff] %vm3489, %v2514
    %3492 = vst.msk [vmem:[%s6 + $0x10] sm:$0xff] %vm3489, %v2515
    %3493 = vst.msk [vmem:[%s6 + $0x18] sm:$0xff] %vm3489, %v2516
    %3494 = vst.msk [vmem:[%s6 + $0x20] sm:$0xff] %vm3489, %v2517
    %3495 = vst.msk [vmem:[%s6 + $0x28] sm:$0xff] %vm3489, %v2518
    %3496 = vst.msk [vmem:[%s6 + $0x30] sm:$0xff] %vm3489, %v2519
    %3497 = vst.msk [vmem:[%s6 + $0x38] sm:$0xff] %vm3489, %v2520
    %3498 = vst.msk [vmem:[%s6 + $0x40] sm:$0xff] %vm3489, %v2521
    %3499 = vst.msk [vmem:[%s6 + $0x48] sm:$0xff] %vm3489, %v2522
    %3500 = vst.msk [vmem:[%s6 + $0x50] sm:$0xff] %vm3489, %v2523
    %3501 = vst.msk [vmem:[%s6 + $0x58] sm:$0xff] %vm3489, %v2524
    %3502 = vst.msk [vmem:[%s6 + $0x60] sm:$0xff] %vm3489, %v2525
    %3503 = vst.msk [vmem:[%s6 + $0x68] sm:$0xff] %vm3489, %v2526
    %3504 = vst.msk [vmem:[%s6 + $0x70] sm:$0xff] %vm3489, %v2527
    %3505 = vst.msk [vmem:[%s6 + $0x78] sm:$0xff] %vm3489, %v2528
    %3506 = vst.msk [vmem:[%s6 + $0x80] sm:$0xff] %vm3489, %v2529
    %3507 = vst.msk [vmem:[%s6 + $0x88] sm:$0xff] %vm3489, %v2530
    %3508 = vst.msk [vmem:[%s6 + $0x90] sm:$0xff] %vm3489, %v2531
    %3509 = vst.msk [vmem:[%s6 + $0x98] sm:$0xff] %vm3489, %v2532
    %3510 = vst.msk [vmem:[%s6 + $0xa0] sm:$0xff] %vm3489, %v2533
    %3511 = vst.msk [vmem:[%s6 + $0xa8] sm:$0xff] %vm3489, %v2534
    %3512 = vst.msk [vmem:[%s6 + $0xb0] sm:$0xff] %vm3489, %v2535
    %3513 = vst.msk [vmem:[%s6 + $0xb8] sm:$0xff] %vm3489, %v2536
    %3514 = vst.msk [vmem:[%s6 + $0xc0] sm:$0xff] %vm3489, %v2537
    %v3515 = vld [vmem:[%s4] sm:$0xff]
    %v3516 = vld [vmem:[%s4 + $0x8] sm:$0xff]
    %v3517 = vld [vmem:[%s4 + $0x10] sm:$0xff]
    %v3518 = vld [vmem:[%s4 + $0x18] sm:$0xff]
    %v3519 = vld [vmem:[%s5] sm:$0x1]
    %v3521 = vperm.slane %v3519, 0
    %3523 = vmatpush.msra.mxu0 0.0
    %3524 = vmatpush.msra.mxu0 0.0
    %3525 = vmatpush.msra.mxu0 0.0
    %3526 = vmatpush.msra.mxu0 0.0
    %3527 = vmatpush.msra.mxu0 0.0
    %3528 = vmatpush.msra.mxu0 0.0
    %3529 = vmatpush.msra.mxu0 0.0
    %3530 = vmatpush.msra.mxu0 0.0
    %3531 = vmatpush.msra.mxu0 0.0
    %3532 = vmatpush.msra.mxu0 0.0
    %3533 = vmatpush.msra.mxu0 0.0
    %3534 = vmatpush.msra.mxu0 0.0
    %3535 = vmatpush.msra.mxu0 %v3518
    %3536 = vmatpush.msra.mxu0 %v3517
    %3537 = vmatpush.msra.mxu0 %v3516
    %3538 = vmatpush.msra.mxu0 %v3515
    %3539 = vmatmul.f32.gmra.mxu0 %v69
    %v3540 = vpop.f32.mrf.mxu0
    %v3541 = vadd.f32 %v3521, %v3540
    %3542 = vmatmul.f32.gmra.mxu0 %v72
    %v3543 = vpop.f32.mrf.mxu0
    %v3544 = vadd.f32 %v3521, %v3543
    %3545 = vmatmul.f32.gmra.mxu0 %v75
    %v3546 = vpop.f32.mrf.mxu0
    %v3547 = vadd.f32 %v3521, %v3546
    %3548 = vmatmul.f32.gmra.mxu0 %v78
    %v3549 = vpop.f32.mrf.mxu0
    %v3550 = vadd.f32 %v3521, %v3549
    %3551 = vmatmul.f32.gmra.mxu0 %v81
    %v3552 = vpop.f32.mrf.mxu0
    %v3553 = vadd.f32 %v3521, %v3552
    %3554 = vmatmul.f32.gmra.mxu0 %v84
    %v3555 = vpop.f32.mrf.mxu0
    %v3556 = vadd.f32 %v3521, %v3555
    %3557 = vmatmul.f32.gmra.mxu0 %v87
    %v3558 = vpop.f32.mrf.mxu0
    %v3559 = vadd.f32 %v3521, %v3558
    %3560 = vmatmul.f32.gmra.mxu0 %v90
    %v3561 = vpop.f32.mrf.mxu0
    %v3562 = vadd.f32 %v3521, %v3561
    %3563 = vmatmul.f32.gmra.mxu0 %v93
    %v3564 = vpop.f32.mrf.mxu0
    %v3565 = vadd.f32 %v3521, %v3564
    %3566 = vmatmul.f32.gmra.mxu0 %v96
    %v3567 = vpop.f32.mrf.mxu0
    %v3568 = vadd.f32 %v3521, %v3567
    %3569 = vmatmul.f32.gmra.mxu0 %v99
    %v3570 = vpop.f32.mrf.mxu0
    %v3571 = vadd.f32 %v3521, %v3570
    %3572 = vmatmul.f32.gmra.mxu0 %v102
    %v3573 = vpop.f32.mrf.mxu0
    %v3574 = vadd.f32 %v3521, %v3573
    %3575 = vmatmul.f32.gmra.mxu0 %v105
    %v3576 = vpop.f32.mrf.mxu0
    %v3577 = vadd.f32 %v3521, %v3576
    %3578 = vmatmul.f32.gmra.mxu0 %v108
    %v3579 = vpop.f32.mrf.mxu0
    %v3580 = vadd.f32 %v3521, %v3579
    %3581 = vmatmul.f32.gmra.mxu0 %v111
    %v3582 = vpop.f32.mrf.mxu0
    %v3583 = vadd.f32 %v3521, %v3582
    %3584 = vmatmul.f32.gmra.mxu0 %v114
    %v3585 = vpop.f32.mrf.mxu0
    %v3586 = vadd.f32 %v3521, %v3585
    %3587 = vmatmul.f32.gmra.mxu0 %v117
    %v3588 = vpop.f32.mrf.mxu0
    %v3589 = vadd.f32 %v3521, %v3588
    %3590 = vmatmul.f32.gmra.mxu0 %v120
    %v3591 = vpop.f32.mrf.mxu0
    %v3592 = vadd.f32 %v3521, %v3591
    %3593 = vmatmul.f32.gmra.mxu0 %v123
    %v3594 = vpop.f32.mrf.mxu0
    %v3595 = vadd.f32 %v3521, %v3594
    %3596 = vmatmul.f32.gmra.mxu0 %v126
    %v3597 = vpop.f32.mrf.mxu0
    %v3598 = vadd.f32 %v3521, %v3597
    %3599 = vmatmul.f32.gmra.mxu0 %v129
    %v3600 = vpop.f32.mrf.mxu0
    %v3601 = vadd.f32 %v3521, %v3600
    %3602 = vmatmul.f32.gmra.mxu0 %v132
    %v3603 = vpop.f32.mrf.mxu0
    %v3604 = vadd.f32 %v3521, %v3603
    %3605 = vmatmul.f32.gmra.mxu0 %v135
    %v3606 = vpop.f32.mrf.mxu0
    %v3607 = vadd.f32 %v3521, %v3606
    %3608 = vmatmul.f32.gmra.mxu0 %v138
    %v3609 = vpop.f32.mrf.mxu0
    %v3610 = vadd.f32 %v3521, %v3609
    %3611 = vmatmul.f32.gmra.mxu0 %v141
    %v3612 = vpop.f32.mrf.mxu0
    %v3613 = vadd.f32 %v3521, %v3612
    %3614 = vdwg.mxu0
    %s3615 = sld [smem:[#allocation2 + $0x2]]
    %v3616 = vxor.u32 %v3541, 2147483648
    %v3617 = vxor.u32 %v3544, 2147483648
    %v3618 = vxor.u32 %v3547, 2147483648
    %v3619 = vxor.u32 %v3550, 2147483648
    %v3620 = vxor.u32 %v3553, 2147483648
    %v3621 = vxor.u32 %v3556, 2147483648
    %v3622 = vxor.u32 %v3559, 2147483648
    %v3623 = vxor.u32 %v3562, 2147483648
    %v3624 = vxor.u32 %v3565, 2147483648
    %v3625 = vxor.u32 %v3568, 2147483648
    %v3626 = vxor.u32 %v3571, 2147483648
    %v3627 = vxor.u32 %v3574, 2147483648
    %v3628 = vxor.u32 %v3577, 2147483648
    %v3629 = vxor.u32 %v3580, 2147483648
    %v3630 = vxor.u32 %v3583, 2147483648
    %v3631 = vxor.u32 %v3586, 2147483648
    %v3632 = vxor.u32 %v3589, 2147483648
    %v3633 = vxor.u32 %v3592, 2147483648
    %v3634 = vxor.u32 %v3595, 2147483648
    %v3635 = vxor.u32 %v3598, 2147483648
    %v3636 = vxor.u32 %v3601, 2147483648
    %v3637 = vxor.u32 %v3604, 2147483648
    %v3638 = vxor.u32 %v3607, 2147483648
    %v3639 = vxor.u32 %v3610, 2147483648
    %v3640 = vxor.u32 %v3613, 2147483648
    %v3641 = vmul.f32 %v3616, 1.442695
    %v3642 = vpow.pop %v3641
    %v3643 = vmul.f32 %v3617, 1.442695
    %v3644 = vpow.pop %v3643
    %v3645 = vmul.f32 %v3618, 1.442695
    %v3646 = vpow.pop %v3645
    %v3647 = vmul.f32 %v3619, 1.442695
    %v3648 = vpow.pop %v3647
    %v3649 = vmul.f32 %v3620, 1.442695
    %v3650 = vpow.pop %v3649
    %v3651 = vmul.f32 %v3621, 1.442695
    %v3652 = vpow.pop %v3651
    %v3653 = vmul.f32 %v3622, 1.442695
    %v3654 = vpow.pop %v3653
    %v3655 = vmul.f32 %v3623, 1.442695
    %v3656 = vpow.pop %v3655
    %v3657 = vmul.f32 %v3624, 1.442695
    %v3658 = vpow.pop %v3657
    %v3659 = vmul.f32 %v3625, 1.442695
    %v3660 = vpow.pop %v3659
    %v3661 = vmul.f32 %v3626, 1.442695
    %v3662 = vpow.pop %v3661
    %v3663 = vmul.f32 %v3627, 1.442695
    %v3664 = vpow.pop %v3663
    %v3665 = vmul.f32 %v3628, 1.442695
    %v3666 = vpow.pop %v3665
    %v3667 = vmul.f32 %v3629, 1.442695
    %v3668 = vpow.pop %v3667
    %v3669 = vmul.f32 %v3630, 1.442695
    %v3670 = vpow.pop %v3669
    %v3671 = vmul.f32 %v3631, 1.442695
    %v3672 = vpow.pop %v3671
    %v3673 = vmul.f32 %v3632, 1.442695
    %v3674 = vpow.pop %v3673
    %v3675 = vmul.f32 %v3633, 1.442695
    %v3676 = vpow.pop %v3675
    %v3677 = vmul.f32 %v3634, 1.442695
    %v3678 = vpow.pop %v3677
    %v3679 = vmul.f32 %v3635, 1.442695
    %v3680 = vpow.pop %v3679
    %v3681 = vmul.f32 %v3636, 1.442695
    %v3682 = vpow.pop %v3681
    %v3683 = vmul.f32 %v3637, 1.442695
    %v3684 = vpow.pop %v3683
    %v3685 = vmul.f32 %v3638, 1.442695
    %v3686 = vpow.pop %v3685
    %v3687 = vmul.f32 %v3639, 1.442695
    %v3688 = vpow.pop %v3687
    %v3689 = vmul.f32 %v3640, 1.442695
    %v3690 = vpow.pop %v3689
    %v3691 = vadd.f32 %v3642, 1.0
    %v3692 = vadd.f32 %v3644, 1.0
    %v3693 = vadd.f32 %v3646, 1.0
    %v3694 = vadd.f32 %v3648, 1.0
    %v3695 = vadd.f32 %v3650, 1.0
    %v3696 = vadd.f32 %v3652, 1.0
    %v3697 = vadd.f32 %v3654, 1.0
    %v3698 = vadd.f32 %v3656, 1.0
    %v3699 = vadd.f32 %v3658, 1.0
    %v3700 = vadd.f32 %v3660, 1.0
    %v3701 = vadd.f32 %v3662, 1.0
    %v3702 = vadd.f32 %v3664, 1.0
    %v3703 = vadd.f32 %v3666, 1.0
    %v3704 = vadd.f32 %v3668, 1.0
    %v3705 = vadd.f32 %v3670, 1.0
    %v3706 = vadd.f32 %v3672, 1.0
    %v3707 = vadd.f32 %v3674, 1.0
    %v3708 = vadd.f32 %v3676, 1.0
    %v3709 = vadd.f32 %v3678, 1.0
    %v3710 = vadd.f32 %v3680, 1.0
    %v3711 = vadd.f32 %v3682, 1.0
    %v3712 = vadd.f32 %v3684, 1.0
    %v3713 = vadd.f32 %v3686, 1.0
    %v3714 = vadd.f32 %v3688, 1.0
    %v3715 = vadd.f32 %v3690, 1.0
    %v3716 = vrcp.pop %v3691
    %v3717 = vmul.f32 %v3691, %v3716
    %v3718 = vsub.f32 1.0, %v3717
    %v3719 = vmul.f32 %v3716, %v3718
    %v3720 = vadd.f32 %v3716, %v3719
    %vm3721 = vweird.f32 %v3691
    %vm3722 = vweird.f32 %v3716
    %vm3723 = vmor %vm3721, %vm3722
    %v3724 = vsel %vm3723, %v3716, %v3720
    %v3725 = vand.u32 2147483647, %v3691
    %vm3726 = vcmp.eq.f32.partialorder %v3725, 8.507059e+37
    %v3727 = vand.u32 %v3691, 2147483648
    %v3728 = vor.u32 1.1754944e-38, %v3727
    %v3729 = vsel %vm3726, %v3728, %v3724
    %v3730 = vmul.f32 1.0, %v3729
    %v3731 = vrcp.pop %v3692
    %v3732 = vmul.f32 %v3692, %v3731
    %v3733 = vsub.f32 1.0, %v3732
    %v3734 = vmul.f32 %v3731, %v3733
    %v3735 = vadd.f32 %v3731, %v3734
    %vm3736 = vweird.f32 %v3692
    %vm3737 = vweird.f32 %v3731
    %vm3738 = vmor %vm3736, %vm3737
    %v3739 = vsel %vm3738, %v3731, %v3735
    %v3740 = vand.u32 2147483647, %v3692
    %vm3741 = vcmp.eq.f32.partialorder %v3740, 8.507059e+37
    %v3742 = vand.u32 %v3692, 2147483648
    %v3743 = vor.u32 1.1754944e-38, %v3742
    %v3744 = vsel %vm3741, %v3743, %v3739
    %v3745 = vmul.f32 1.0, %v3744
    %v3746 = vrcp.pop %v3693
    %v3747 = vmul.f32 %v3693, %v3746
    %v3748 = vsub.f32 1.0, %v3747
    %v3749 = vmul.f32 %v3746, %v3748
    %v3750 = vadd.f32 %v3746, %v3749
    %vm3751 = vweird.f32 %v3693
    %vm3752 = vweird.f32 %v3746
    %vm3753 = vmor %vm3751, %vm3752
    %v3754 = vsel %vm3753, %v3746, %v3750
    %v3755 = vand.u32 2147483647, %v3693
    %vm3756 = vcmp.eq.f32.partialorder %v3755, 8.507059e+37
    %v3757 = vand.u32 %v3693, 2147483648
    %v3758 = vor.u32 1.1754944e-38, %v3757
    %v3759 = vsel %vm3756, %v3758, %v3754
    %v3760 = vmul.f32 1.0, %v3759
    %v3761 = vrcp.pop %v3694
    %v3762 = vmul.f32 %v3694, %v3761
    %v3763 = vsub.f32 1.0, %v3762
    %v3764 = vmul.f32 %v3761, %v3763
    %v3765 = vadd.f32 %v3761, %v3764
    %vm3766 = vweird.f32 %v3694
    %vm3767 = vweird.f32 %v3761
    %vm3768 = vmor %vm3766, %vm3767
    %v3769 = vsel %vm3768, %v3761, %v3765
    %v3770 = vand.u32 2147483647, %v3694
    %vm3771 = vcmp.eq.f32.partialorder %v3770, 8.507059e+37
    %v3772 = vand.u32 %v3694, 2147483648
    %v3773 = vor.u32 1.1754944e-38, %v3772
    %v3774 = vsel %vm3771, %v3773, %v3769
    %v3775 = vmul.f32 1.0, %v3774
    %v3776 = vrcp.pop %v3695
    %v3777 = vmul.f32 %v3695, %v3776
    %v3778 = vsub.f32 1.0, %v3777
    %v3779 = vmul.f32 %v3776, %v3778
    %v3780 = vadd.f32 %v3776, %v3779
    %vm3781 = vweird.f32 %v3695
    %vm3782 = vweird.f32 %v3776
    %vm3783 = vmor %vm3781, %vm3782
    %v3784 = vsel %vm3783, %v3776, %v3780
    %v3785 = vand.u32 2147483647, %v3695
    %vm3786 = vcmp.eq.f32.partialorder %v3785, 8.507059e+37
    %v3787 = vand.u32 %v3695, 2147483648
    %v3788 = vor.u32 1.1754944e-38, %v3787
    %v3789 = vsel %vm3786, %v3788, %v3784
    %v3790 = vmul.f32 1.0, %v3789
    %v3791 = vrcp.pop %v3696
    %v3792 = vmul.f32 %v3696, %v3791
    %v3793 = vsub.f32 1.0, %v3792
    %v3794 = vmul.f32 %v3791, %v3793
    %v3795 = vadd.f32 %v3791, %v3794
    %vm3796 = vweird.f32 %v3696
    %vm3797 = vweird.f32 %v3791
    %vm3798 = vmor %vm3796, %vm3797
    %v3799 = vsel %vm3798, %v3791, %v3795
    %v3800 = vand.u32 2147483647, %v3696
    %vm3801 = vcmp.eq.f32.partialorder %v3800, 8.507059e+37
    %v3802 = vand.u32 %v3696, 2147483648
    %v3803 = vor.u32 1.1754944e-38, %v3802
    %v3804 = vsel %vm3801, %v3803, %v3799
    %v3805 = vmul.f32 1.0, %v3804
    %v3806 = vrcp.pop %v3697
    %v3807 = vmul.f32 %v3697, %v3806
    %v3808 = vsub.f32 1.0, %v3807
    %v3809 = vmul.f32 %v3806, %v3808
    %v3810 = vadd.f32 %v3806, %v3809
    %vm3811 = vweird.f32 %v3697
    %vm3812 = vweird.f32 %v3806
    %vm3813 = vmor %vm3811, %vm3812
    %v3814 = vsel %vm3813, %v3806, %v3810
    %v3815 = vand.u32 2147483647, %v3697
    %vm3816 = vcmp.eq.f32.partialorder %v3815, 8.507059e+37
    %v3817 = vand.u32 %v3697, 2147483648
    %v3818 = vor.u32 1.1754944e-38, %v3817
    %v3819 = vsel %vm3816, %v3818, %v3814
    %v3820 = vmul.f32 1.0, %v3819
    %v3821 = vrcp.pop %v3698
    %v3822 = vmul.f32 %v3698, %v3821
    %v3823 = vsub.f32 1.0, %v3822
    %v3824 = vmul.f32 %v3821, %v3823
    %v3825 = vadd.f32 %v3821, %v3824
    %vm3826 = vweird.f32 %v3698
    %vm3827 = vweird.f32 %v3821
    %vm3828 = vmor %vm3826, %vm3827
    %v3829 = vsel %vm3828, %v3821, %v3825
    %v3830 = vand.u32 2147483647, %v3698
    %vm3831 = vcmp.eq.f32.partialorder %v3830, 8.507059e+37
    %v3832 = vand.u32 %v3698, 2147483648
    %v3833 = vor.u32 1.1754944e-38, %v3832
    %v3834 = vsel %vm3831, %v3833, %v3829
    %v3835 = vmul.f32 1.0, %v3834
    %v3836 = vrcp.pop %v3699
    %v3837 = vmul.f32 %v3699, %v3836
    %v3838 = vsub.f32 1.0, %v3837
    %v3839 = vmul.f32 %v3836, %v3838
    %v3840 = vadd.f32 %v3836, %v3839
    %vm3841 = vweird.f32 %v3699
    %vm3842 = vweird.f32 %v3836
    %vm3843 = vmor %vm3841, %vm3842
    %v3844 = vsel %vm3843, %v3836, %v3840
    %v3845 = vand.u32 2147483647, %v3699
    %vm3846 = vcmp.eq.f32.partialorder %v3845, 8.507059e+37
    %v3847 = vand.u32 %v3699, 2147483648
    %v3848 = vor.u32 1.1754944e-38, %v3847
    %v3849 = vsel %vm3846, %v3848, %v3844
    %v3850 = vmul.f32 1.0, %v3849
    %v3851 = vrcp.pop %v3700
    %v3852 = vmul.f32 %v3700, %v3851
    %v3853 = vsub.f32 1.0, %v3852
    %v3854 = vmul.f32 %v3851, %v3853
    %v3855 = vadd.f32 %v3851, %v3854
    %vm3856 = vweird.f32 %v3700
    %vm3857 = vweird.f32 %v3851
    %vm3858 = vmor %vm3856, %vm3857
    %v3859 = vsel %vm3858, %v3851, %v3855
    %v3860 = vand.u32 2147483647, %v3700
    %vm3861 = vcmp.eq.f32.partialorder %v3860, 8.507059e+37
    %v3862 = vand.u32 %v3700, 2147483648
    %v3863 = vor.u32 1.1754944e-38, %v3862
    %v3864 = vsel %vm3861, %v3863, %v3859
    %v3865 = vmul.f32 1.0, %v3864
    %v3866 = vrcp.pop %v3701
    %v3867 = vmul.f32 %v3701, %v3866
    %v3868 = vsub.f32 1.0, %v3867
    %v3869 = vmul.f32 %v3866, %v3868
    %v3870 = vadd.f32 %v3866, %v3869
    %vm3871 = vweird.f32 %v3701
    %vm3872 = vweird.f32 %v3866
    %vm3873 = vmor %vm3871, %vm3872
    %v3874 = vsel %vm3873, %v3866, %v3870
    %v3875 = vand.u32 2147483647, %v3701
    %vm3876 = vcmp.eq.f32.partialorder %v3875, 8.507059e+37
    %v3877 = vand.u32 %v3701, 2147483648
    %v3878 = vor.u32 1.1754944e-38, %v3877
    %v3879 = vsel %vm3876, %v3878, %v3874
    %v3880 = vmul.f32 1.0, %v3879
    %v3881 = vrcp.pop %v3702
    %v3882 = vmul.f32 %v3702, %v3881
    %v3883 = vsub.f32 1.0, %v3882
    %v3884 = vmul.f32 %v3881, %v3883
    %v3885 = vadd.f32 %v3881, %v3884
    %vm3886 = vweird.f32 %v3702
    %vm3887 = vweird.f32 %v3881
    %vm3888 = vmor %vm3886, %vm3887
    %v3889 = vsel %vm3888, %v3881, %v3885
    %v3890 = vand.u32 2147483647, %v3702
    %vm3891 = vcmp.eq.f32.partialorder %v3890, 8.507059e+37
    %v3892 = vand.u32 %v3702, 2147483648
    %v3893 = vor.u32 1.1754944e-38, %v3892
    %v3894 = vsel %vm3891, %v3893, %v3889
    %v3895 = vmul.f32 1.0, %v3894
    %v3896 = vrcp.pop %v3703
    %v3897 = vmul.f32 %v3703, %v3896
    %v3898 = vsub.f32 1.0, %v3897
    %v3899 = vmul.f32 %v3896, %v3898
    %v3900 = vadd.f32 %v3896, %v3899
    %vm3901 = vweird.f32 %v3703
    %vm3902 = vweird.f32 %v3896
    %vm3903 = vmor %vm3901, %vm3902
    %v3904 = vsel %vm3903, %v3896, %v3900
    %v3905 = vand.u32 2147483647, %v3703
    %vm3906 = vcmp.eq.f32.partialorder %v3905, 8.507059e+37
    %v3907 = vand.u32 %v3703, 2147483648
    %v3908 = vor.u32 1.1754944e-38, %v3907
    %v3909 = vsel %vm3906, %v3908, %v3904
    %v3910 = vmul.f32 1.0, %v3909
    %v3911 = vrcp.pop %v3704
    %v3912 = vmul.f32 %v3704, %v3911
    %v3913 = vsub.f32 1.0, %v3912
    %v3914 = vmul.f32 %v3911, %v3913
    %v3915 = vadd.f32 %v3911, %v3914
    %vm3916 = vweird.f32 %v3704
    %vm3917 = vweird.f32 %v3911
    %vm3918 = vmor %vm3916, %vm3917
    %v3919 = vsel %vm3918, %v3911, %v3915
    %v3920 = vand.u32 2147483647, %v3704
    %vm3921 = vcmp.eq.f32.partialorder %v3920, 8.507059e+37
    %v3922 = vand.u32 %v3704, 2147483648
    %v3923 = vor.u32 1.1754944e-38, %v3922
    %v3924 = vsel %vm3921, %v3923, %v3919
    %v3925 = vmul.f32 1.0, %v3924
    %v3926 = vrcp.pop %v3705
    %v3927 = vmul.f32 %v3705, %v3926
    %v3928 = vsub.f32 1.0, %v3927
    %v3929 = vmul.f32 %v3926, %v3928
    %v3930 = vadd.f32 %v3926, %v3929
    %vm3931 = vweird.f32 %v3705
    %vm3932 = vweird.f32 %v3926
    %vm3933 = vmor %vm3931, %vm3932
    %v3934 = vsel %vm3933, %v3926, %v3930
    %v3935 = vand.u32 2147483647, %v3705
    %vm3936 = vcmp.eq.f32.partialorder %v3935, 8.507059e+37
    %v3937 = vand.u32 %v3705, 2147483648
    %v3938 = vor.u32 1.1754944e-38, %v3937
    %v3939 = vsel %vm3936, %v3938, %v3934
    %v3940 = vmul.f32 1.0, %v3939
    %v3941 = vrcp.pop %v3706
    %v3942 = vmul.f32 %v3706, %v3941
    %v3943 = vsub.f32 1.0, %v3942
    %v3944 = vmul.f32 %v3941, %v3943
    %v3945 = vadd.f32 %v3941, %v3944
    %vm3946 = vweird.f32 %v3706
    %vm3947 = vweird.f32 %v3941
    %vm3948 = vmor %vm3946, %vm3947
    %v3949 = vsel %vm3948, %v3941, %v3945
    %v3950 = vand.u32 2147483647, %v3706
    %vm3951 = vcmp.eq.f32.partialorder %v3950, 8.507059e+37
    %v3952 = vand.u32 %v3706, 2147483648
    %v3953 = vor.u32 1.1754944e-38, %v3952
    %v3954 = vsel %vm3951, %v3953, %v3949
    %v3955 = vmul.f32 1.0, %v3954
    %v3956 = vrcp.pop %v3707
    %v3957 = vmul.f32 %v3707, %v3956
    %v3958 = vsub.f32 1.0, %v3957
    %v3959 = vmul.f32 %v3956, %v3958
    %v3960 = vadd.f32 %v3956, %v3959
    %vm3961 = vweird.f32 %v3707
    %vm3962 = vweird.f32 %v3956
    %vm3963 = vmor %vm3961, %vm3962
    %v3964 = vsel %vm3963, %v3956, %v3960
    %v3965 = vand.u32 2147483647, %v3707
    %vm3966 = vcmp.eq.f32.partialorder %v3965, 8.507059e+37
    %v3967 = vand.u32 %v3707, 2147483648
    %v3968 = vor.u32 1.1754944e-38, %v3967
    %v3969 = vsel %vm3966, %v3968, %v3964
    %v3970 = vmul.f32 1.0, %v3969
    %v3971 = vrcp.pop %v3708
    %v3972 = vmul.f32 %v3708, %v3971
    %v3973 = vsub.f32 1.0, %v3972
    %v3974 = vmul.f32 %v3971, %v3973
    %v3975 = vadd.f32 %v3971, %v3974
    %vm3976 = vweird.f32 %v3708
    %vm3977 = vweird.f32 %v3971
    %vm3978 = vmor %vm3976, %vm3977
    %v3979 = vsel %vm3978, %v3971, %v3975
    %v3980 = vand.u32 2147483647, %v3708
    %vm3981 = vcmp.eq.f32.partialorder %v3980, 8.507059e+37
    %v3982 = vand.u32 %v3708, 2147483648
    %v3983 = vor.u32 1.1754944e-38, %v3982
    %v3984 = vsel %vm3981, %v3983, %v3979
    %v3985 = vmul.f32 1.0, %v3984
    %v3986 = vrcp.pop %v3709
    %v3987 = vmul.f32 %v3709, %v3986
    %v3988 = vsub.f32 1.0, %v3987
    %v3989 = vmul.f32 %v3986, %v3988
    %v3990 = vadd.f32 %v3986, %v3989
    %vm3991 = vweird.f32 %v3709
    %vm3992 = vweird.f32 %v3986
    %vm3993 = vmor %vm3991, %vm3992
    %v3994 = vsel %vm3993, %v3986, %v3990
    %v3995 = vand.u32 2147483647, %v3709
    %vm3996 = vcmp.eq.f32.partialorder %v3995, 8.507059e+37
    %v3997 = vand.u32 %v3709, 2147483648
    %v3998 = vor.u32 1.1754944e-38, %v3997
    %v3999 = vsel %vm3996, %v3998, %v3994
    %v4000 = vmul.f32 1.0, %v3999
    %v4001 = vrcp.pop %v3710
    %v4002 = vmul.f32 %v3710, %v4001
    %v4003 = vsub.f32 1.0, %v4002
    %v4004 = vmul.f32 %v4001, %v4003
    %v4005 = vadd.f32 %v4001, %v4004
    %vm4006 = vweird.f32 %v3710
    %vm4007 = vweird.f32 %v4001
    %vm4008 = vmor %vm4006, %vm4007
    %v4009 = vsel %vm4008, %v4001, %v4005
    %v4010 = vand.u32 2147483647, %v3710
    %vm4011 = vcmp.eq.f32.partialorder %v4010, 8.507059e+37
    %v4012 = vand.u32 %v3710, 2147483648
    %v4013 = vor.u32 1.1754944e-38, %v4012
    %v4014 = vsel %vm4011, %v4013, %v4009
    %v4015 = vmul.f32 1.0, %v4014
    %v4016 = vrcp.pop %v3711
    %v4017 = vmul.f32 %v3711, %v4016
    %v4018 = vsub.f32 1.0, %v4017
    %v4019 = vmul.f32 %v4016, %v4018
    %v4020 = vadd.f32 %v4016, %v4019
    %vm4021 = vweird.f32 %v3711
    %vm4022 = vweird.f32 %v4016
    %vm4023 = vmor %vm4021, %vm4022
    %v4024 = vsel %vm4023, %v4016, %v4020
    %v4025 = vand.u32 2147483647, %v3711
    %vm4026 = vcmp.eq.f32.partialorder %v4025, 8.507059e+37
    %v4027 = vand.u32 %v3711, 2147483648
    %v4028 = vor.u32 1.1754944e-38, %v4027
    %v4029 = vsel %vm4026, %v4028, %v4024
    %v4030 = vmul.f32 1.0, %v4029
    %v4031 = vrcp.pop %v3712
    %v4032 = vmul.f32 %v3712, %v4031
    %v4033 = vsub.f32 1.0, %v4032
    %v4034 = vmul.f32 %v4031, %v4033
    %v4035 = vadd.f32 %v4031, %v4034
    %vm4036 = vweird.f32 %v3712
    %vm4037 = vweird.f32 %v4031
    %vm4038 = vmor %vm4036, %vm4037
    %v4039 = vsel %vm4038, %v4031, %v4035
    %v4040 = vand.u32 2147483647, %v3712
    %vm4041 = vcmp.eq.f32.partialorder %v4040, 8.507059e+37
    %v4042 = vand.u32 %v3712, 2147483648
    %v4043 = vor.u32 1.1754944e-38, %v4042
    %v4044 = vsel %vm4041, %v4043, %v4039
    %v4045 = vmul.f32 1.0, %v4044
    %v4046 = vrcp.pop %v3713
    %v4047 = vmul.f32 %v3713, %v4046
    %v4048 = vsub.f32 1.0, %v4047
    %v4049 = vmul.f32 %v4046, %v4048
    %v4050 = vadd.f32 %v4046, %v4049
    %vm4051 = vweird.f32 %v3713
    %vm4052 = vweird.f32 %v4046
    %vm4053 = vmor %vm4051, %vm4052
    %v4054 = vsel %vm4053, %v4046, %v4050
    %v4055 = vand.u32 2147483647, %v3713
    %vm4056 = vcmp.eq.f32.partialorder %v4055, 8.507059e+37
    %v4057 = vand.u32 %v3713, 2147483648
    %v4058 = vor.u32 1.1754944e-38, %v4057
    %v4059 = vsel %vm4056, %v4058, %v4054
    %v4060 = vmul.f32 1.0, %v4059
    %v4061 = vrcp.pop %v3714
    %v4062 = vmul.f32 %v3714, %v4061
    %v4063 = vsub.f32 1.0, %v4062
    %v4064 = vmul.f32 %v4061, %v4063
    %v4065 = vadd.f32 %v4061, %v4064
    %vm4066 = vweird.f32 %v3714
    %vm4067 = vweird.f32 %v4061
    %vm4068 = vmor %vm4066, %vm4067
    %v4069 = vsel %vm4068, %v4061, %v4065
    %v4070 = vand.u32 2147483647, %v3714
    %vm4071 = vcmp.eq.f32.partialorder %v4070, 8.507059e+37
    %v4072 = vand.u32 %v3714, 2147483648
    %v4073 = vor.u32 1.1754944e-38, %v4072
    %v4074 = vsel %vm4071, %v4073, %v4069
    %v4075 = vmul.f32 1.0, %v4074
    %v4076 = vrcp.pop %v3715
    %v4077 = vmul.f32 %v3715, %v4076
    %v4078 = vsub.f32 1.0, %v4077
    %v4079 = vmul.f32 %v4076, %v4078
    %v4080 = vadd.f32 %v4076, %v4079
    %vm4081 = vweird.f32 %v3715
    %vm4082 = vweird.f32 %v4076
    %vm4083 = vmor %vm4081, %vm4082
    %v4084 = vsel %vm4083, %v4076, %v4080
    %v4085 = vand.u32 2147483647, %v3715
    %vm4086 = vcmp.eq.f32.partialorder %v4085, 8.507059e+37
    %v4087 = vand.u32 %v3715, 2147483648
    %v4088 = vor.u32 1.1754944e-38, %v4087
    %v4089 = vsel %vm4086, %v4088, %v4084
    %v4090 = vmul.f32 1.0, %v4089
    %v4091 = vstv %s3615
    %v4092 = vmul.f32 %v3730, %v4091
    %v4093 = vmul.f32 %v3745, %v4091
    %v4094 = vmul.f32 %v3760, %v4091
    %v4095 = vmul.f32 %v3775, %v4091
    %v4096 = vmul.f32 %v3790, %v4091
    %v4097 = vmul.f32 %v3805, %v4091
    %v4098 = vmul.f32 %v3820, %v4091
    %v4099 = vmul.f32 %v3835, %v4091
    %v4100 = vmul.f32 %v3850, %v4091
    %v4101 = vmul.f32 %v3865, %v4091
    %v4102 = vmul.f32 %v3880, %v4091
    %v4103 = vmul.f32 %v3895, %v4091
    %v4104 = vmul.f32 %v3910, %v4091
    %v4105 = vmul.f32 %v3925, %v4091
    %v4106 = vmul.f32 %v3940, %v4091
    %v4107 = vmul.f32 %v3955, %v4091
    %v4108 = vmul.f32 %v3970, %v4091
    %v4109 = vmul.f32 %v3985, %v4091
    %v4110 = vmul.f32 %v4000, %v4091
    %v4111 = vmul.f32 %v4015, %v4091
    %v4112 = vmul.f32 %v4030, %v4091
    %v4113 = vmul.f32 %v4045, %v4091
    %v4114 = vmul.f32 %v4060, %v4091
    %v4115 = vmul.f32 %v4075, %v4091
    %v4116 = vmul.f32 %v4090, %v4091
    %v4117 = vadd.f32 %v4092, 1.1
    %v4118 = vadd.f32 %v4093, 1.1
    %v4119 = vadd.f32 %v4094, 1.1
    %v4120 = vadd.f32 %v4095, 1.1
    %v4121 = vadd.f32 %v4096, 1.1
    %v4122 = vadd.f32 %v4097, 1.1
    %v4123 = vadd.f32 %v4098, 1.1
    %v4124 = vadd.f32 %v4099, 1.1
    %v4125 = vadd.f32 %v4100, 1.1
    %v4126 = vadd.f32 %v4101, 1.1
    %v4127 = vadd.f32 %v4102, 1.1
    %v4128 = vadd.f32 %v4103, 1.1
    %v4129 = vadd.f32 %v4104, 1.1
    %v4130 = vadd.f32 %v4105, 1.1
    %v4131 = vadd.f32 %v4106, 1.1
    %v4132 = vadd.f32 %v4107, 1.1
    %v4133 = vadd.f32 %v4108, 1.1
    %v4134 = vadd.f32 %v4109, 1.1
    %v4135 = vadd.f32 %v4110, 1.1
    %v4136 = vadd.f32 %v4111, 1.1
    %v4137 = vadd.f32 %v4112, 1.1
    %v4138 = vadd.f32 %v4113, 1.1
    %v4139 = vadd.f32 %v4114, 1.1
    %v4140 = vadd.f32 %v4115, 1.1
    %v4141 = vadd.f32 %v4116, 1.1
    %v4142 = vmul.f32 %v3541, %v3541
    %v4143 = vmul.f32 %v3544, %v3544
    %v4144 = vmul.f32 %v3547, %v3547
    %v4145 = vmul.f32 %v3550, %v3550
    %v4146 = vmul.f32 %v3553, %v3553
    %v4147 = vmul.f32 %v3556, %v3556
    %v4148 = vmul.f32 %v3559, %v3559
    %v4149 = vmul.f32 %v3562, %v3562
    %v4150 = vmul.f32 %v3565, %v3565
    %v4151 = vmul.f32 %v3568, %v3568
    %v4152 = vmul.f32 %v3571, %v3571
    %v4153 = vmul.f32 %v3574, %v3574
    %v4154 = vmul.f32 %v3577, %v3577
    %v4155 = vmul.f32 %v3580, %v3580
    %v4156 = vmul.f32 %v3583, %v3583
    %v4157 = vmul.f32 %v3586, %v3586
    %v4158 = vmul.f32 %v3589, %v3589
    %v4159 = vmul.f32 %v3592, %v3592
    %v4160 = vmul.f32 %v3595, %v3595
    %v4161 = vmul.f32 %v3598, %v3598
    %v4162 = vmul.f32 %v3601, %v3601
    %v4163 = vmul.f32 %v3604, %v3604
    %v4164 = vmul.f32 %v3607, %v3607
    %v4165 = vmul.f32 %v3610, %v3610
    %v4166 = vmul.f32 %v3613, %v3613
    %v4167 = vsel %vm67, %v4142, 0.0
    %4168 = vadd.xlane.f32.xlu0 %v4167
    %v4169 = vpop.xlane.xlu0 %4168
    %v4170 = vsel %vm67, %v4143, 0.0
    %4171 = vadd.xlane.f32.xlu0 %v4170
    %v4172 = vpop.xlane.xlu0 %4171
    %v4173 = vsel %vm67, %v4144, 0.0
    %4174 = vadd.xlane.f32.xlu0 %v4173
    %v4175 = vpop.xlane.xlu0 %4174
    %v4176 = vsel %vm67, %v4145, 0.0
    %4177 = vadd.xlane.f32.xlu0 %v4176
    %v4178 = vpop.xlane.xlu0 %4177
    %v4179 = vsel %vm67, %v4146, 0.0
    %4180 = vadd.xlane.f32.xlu0 %v4179
    %v4181 = vpop.xlane.xlu0 %4180
    %v4182 = vsel %vm67, %v4147, 0.0
    %4183 = vadd.xlane.f32.xlu0 %v4182
    %v4184 = vpop.xlane.xlu0 %4183
    %v4185 = vsel %vm67, %v4148, 0.0
    %4186 = vadd.xlane.f32.xlu0 %v4185
    %v4187 = vpop.xlane.xlu0 %4186
    %v4188 = vsel %vm67, %v4149, 0.0
    %4189 = vadd.xlane.f32.xlu0 %v4188
    %v4190 = vpop.xlane.xlu0 %4189
    %v4191 = vsel %vm67, %v4150, 0.0
    %4192 = vadd.xlane.f32.xlu0 %v4191
    %v4193 = vpop.xlane.xlu0 %4192
    %v4194 = vsel %vm67, %v4151, 0.0
    %4195 = vadd.xlane.f32.xlu0 %v4194
    %v4196 = vpop.xlane.xlu0 %4195
    %v4197 = vsel %vm67, %v4152, 0.0
    %4198 = vadd.xlane.f32.xlu0 %v4197
    %v4199 = vpop.xlane.xlu0 %4198
    %v4200 = vsel %vm67, %v4153, 0.0
    %4201 = vadd.xlane.f32.xlu0 %v4200
    %v4202 = vpop.xlane.xlu0 %4201
    %v4203 = vsel %vm67, %v4154, 0.0
    %4204 = vadd.xlane.f32.xlu0 %v4203
    %v4205 = vpop.xlane.xlu0 %4204
    %v4206 = vsel %vm67, %v4155, 0.0
    %4207 = vadd.xlane.f32.xlu0 %v4206
    %v4208 = vpop.xlane.xlu0 %4207
    %v4209 = vsel %vm67, %v4156, 0.0
    %4210 = vadd.xlane.f32.xlu0 %v4209
    %v4211 = vpop.xlane.xlu0 %4210
    %v4212 = vsel %vm67, %v4157, 0.0
    %4213 = vadd.xlane.f32.xlu0 %v4212
    %v4214 = vpop.xlane.xlu0 %4213
    %v4215 = vsel %vm67, %v4158, 0.0
    %4216 = vadd.xlane.f32.xlu0 %v4215
    %v4217 = vpop.xlane.xlu0 %4216
    %v4218 = vsel %vm67, %v4159, 0.0
    %4219 = vadd.xlane.f32.xlu0 %v4218
    %v4220 = vpop.xlane.xlu0 %4219
    %v4221 = vsel %vm67, %v4160, 0.0
    %4222 = vadd.xlane.f32.xlu0 %v4221
    %v4223 = vpop.xlane.xlu0 %4222
    %v4224 = vsel %vm67, %v4161, 0.0
    %4225 = vadd.xlane.f32.xlu0 %v4224
    %v4226 = vpop.xlane.xlu0 %4225
    %v4227 = vsel %vm67, %v4162, 0.0
    %4228 = vadd.xlane.f32.xlu0 %v4227
    %v4229 = vpop.xlane.xlu0 %4228
    %v4230 = vsel %vm67, %v4163, 0.0
    %4231 = vadd.xlane.f32.xlu0 %v4230
    %v4232 = vpop.xlane.xlu0 %4231
    %v4233 = vsel %vm67, %v4164, 0.0
    %4234 = vadd.xlane.f32.xlu0 %v4233
    %v4235 = vpop.xlane.xlu0 %4234
    %v4236 = vsel %vm67, %v4165, 0.0
    %4237 = vadd.xlane.f32.xlu0 %v4236
    %v4238 = vpop.xlane.xlu0 %4237
    %v4239 = vsel %vm67, %v4166, 0.0
    %4240 = vadd.xlane.f32.xlu0 %v4239
    %v4241 = vpop.xlane.xlu0 %4240
    %v4242 = vsub.f32 %v4169, %v4142
    %v4243 = vsub.f32 %v4172, %v4143
    %v4244 = vsub.f32 %v4175, %v4144
    %v4245 = vsub.f32 %v4178, %v4145
    %v4246 = vsub.f32 %v4181, %v4146
    %v4247 = vsub.f32 %v4184, %v4147
    %v4248 = vsub.f32 %v4187, %v4148
    %v4249 = vsub.f32 %v4190, %v4149
    %v4250 = vsub.f32 %v4193, %v4150
    %v4251 = vsub.f32 %v4196, %v4151
    %v4252 = vsub.f32 %v4199, %v4152
    %v4253 = vsub.f32 %v4202, %v4153
    %v4254 = vsub.f32 %v4205, %v4154
    %v4255 = vsub.f32 %v4208, %v4155
    %v4256 = vsub.f32 %v4211, %v4156
    %v4257 = vsub.f32 %v4214, %v4157
    %v4258 = vsub.f32 %v4217, %v4158
    %v4259 = vsub.f32 %v4220, %v4159
    %v4260 = vsub.f32 %v4223, %v4160
    %v4261 = vsub.f32 %v4226, %v4161
    %v4262 = vsub.f32 %v4229, %v4162
    %v4263 = vsub.f32 %v4232, %v4163
    %v4264 = vsub.f32 %v4235, %v4164
    %v4265 = vsub.f32 %v4238, %v4165
    %v4266 = vsub.f32 %v4241, %v4166
    %v4267 = vmax.f32 %v4242, 1e-08
    %v4268 = vmax.f32 %v4243, 1e-08
    %v4269 = vmax.f32 %v4244, 1e-08
    %v4270 = vmax.f32 %v4245, 1e-08
    %v4271 = vmax.f32 %v4246, 1e-08
    %v4272 = vmax.f32 %v4247, 1e-08
    %v4273 = vmax.f32 %v4248, 1e-08
    %v4274 = vmax.f32 %v4249, 1e-08
    %v4275 = vmax.f32 %v4250, 1e-08
    %v4276 = vmax.f32 %v4251, 1e-08
    %v4277 = vmax.f32 %v4252, 1e-08
    %v4278 = vmax.f32 %v4253, 1e-08
    %v4279 = vmax.f32 %v4254, 1e-08
    %v4280 = vmax.f32 %v4255, 1e-08
    %v4281 = vmax.f32 %v4256, 1e-08
    %v4282 = vmax.f32 %v4257, 1e-08
    %v4283 = vmax.f32 %v4258, 1e-08
    %v4284 = vmax.f32 %v4259, 1e-08
    %v4285 = vmax.f32 %v4260, 1e-08
    %v4286 = vmax.f32 %v4261, 1e-08
    %v4287 = vmax.f32 %v4262, 1e-08
    %v4288 = vmax.f32 %v4263, 1e-08
    %v4289 = vmax.f32 %v4264, 1e-08
    %v4290 = vmax.f32 %v4265, 1e-08
    %v4291 = vmax.f32 %v4266, 1e-08
    %v4292 = vmul.f32 %v4117, %v4117
    %v4293 = vmul.f32 %v4118, %v4118
    %v4294 = vmul.f32 %v4119, %v4119
    %v4295 = vmul.f32 %v4120, %v4120
    %v4296 = vmul.f32 %v4121, %v4121
    %v4297 = vmul.f32 %v4122, %v4122
    %v4298 = vmul.f32 %v4123, %v4123
    %v4299 = vmul.f32 %v4124, %v4124
    %v4300 = vmul.f32 %v4125, %v4125
    %v4301 = vmul.f32 %v4126, %v4126
    %v4302 = vmul.f32 %v4127, %v4127
    %v4303 = vmul.f32 %v4128, %v4128
    %v4304 = vmul.f32 %v4129, %v4129
    %v4305 = vmul.f32 %v4130, %v4130
    %v4306 = vmul.f32 %v4131, %v4131
    %v4307 = vmul.f32 %v4132, %v4132
    %v4308 = vmul.f32 %v4133, %v4133
    %v4309 = vmul.f32 %v4134, %v4134
    %v4310 = vmul.f32 %v4135, %v4135
    %v4311 = vmul.f32 %v4136, %v4136
    %v4312 = vmul.f32 %v4137, %v4137
    %v4313 = vmul.f32 %v4138, %v4138
    %v4314 = vmul.f32 %v4139, %v4139
    %v4315 = vmul.f32 %v4140, %v4140
    %v4316 = vmul.f32 %v4141, %v4141
    %v4317 = vsub.f32 %v4292, 1.0
    %v4318 = vsub.f32 %v4293, 1.0
    %v4319 = vsub.f32 %v4294, 1.0
    %v4320 = vsub.f32 %v4295, 1.0
    %v4321 = vsub.f32 %v4296, 1.0
    %v4322 = vsub.f32 %v4297, 1.0
    %v4323 = vsub.f32 %v4298, 1.0
    %v4324 = vsub.f32 %v4299, 1.0
    %v4325 = vsub.f32 %v4300, 1.0
    %v4326 = vsub.f32 %v4301, 1.0
    %v4327 = vsub.f32 %v4302, 1.0
    %v4328 = vsub.f32 %v4303, 1.0
    %v4329 = vsub.f32 %v4304, 1.0
    %v4330 = vsub.f32 %v4305, 1.0
    %v4331 = vsub.f32 %v4306, 1.0
    %v4332 = vsub.f32 %v4307, 1.0
    %v4333 = vsub.f32 %v4308, 1.0
    %v4334 = vsub.f32 %v4309, 1.0
    %v4335 = vsub.f32 %v4310, 1.0
    %v4336 = vsub.f32 %v4311, 1.0
    %v4337 = vsub.f32 %v4312, 1.0
    %v4338 = vsub.f32 %v4313, 1.0
    %v4339 = vsub.f32 %v4314, 1.0
    %v4340 = vsub.f32 %v4315, 1.0
    %v4341 = vsub.f32 %v4316, 1.0
    %v4342 = vrsqrt.pop %v4317
    %v4343 = vmul.f32 %v4342, %v4317
    %v4344 = vmul.f32 %v4343, %v4342
    %v4345 = vmul.f32 0.5, %v4344
    %v4346 = vsub.f32 1.5, %v4345
    %v4347 = vmul.f32 %v4342, %v4346
    %v4348 = vmul.f32 %v4317, %v4347
    %vm4349 = vcmp.eq.f32.partialorder %v4317, inf
    %v4350 = vsel %vm4349, %v4317, %v4348
    %vm4351 = vcmp.eq.f32.partialorder %v4317, 0.0
    %v4352 = vand.u32 %v4317, 2147483648
    %v4353 = vsel %vm4351, %v4352, %v4350
    %v4354 = vrsqrt.pop %v4318
    %v4355 = vmul.f32 %v4354, %v4318
    %v4356 = vmul.f32 %v4355, %v4354
    %v4357 = vmul.f32 0.5, %v4356
    %v4358 = vsub.f32 1.5, %v4357
    %v4359 = vmul.f32 %v4354, %v4358
    %v4360 = vmul.f32 %v4318, %v4359
    %vm4361 = vcmp.eq.f32.partialorder %v4318, inf
    %v4362 = vsel %vm4361, %v4318, %v4360
    %vm4363 = vcmp.eq.f32.partialorder %v4318, 0.0
    %v4364 = vand.u32 %v4318, 2147483648
    %v4365 = vsel %vm4363, %v4364, %v4362
    %v4366 = vrsqrt.pop %v4319
    %v4367 = vmul.f32 %v4366, %v4319
    %v4368 = vmul.f32 %v4367, %v4366
    %v4369 = vmul.f32 0.5, %v4368
    %v4370 = vsub.f32 1.5, %v4369
    %v4371 = vmul.f32 %v4366, %v4370
    %v4372 = vmul.f32 %v4319, %v4371
    %vm4373 = vcmp.eq.f32.partialorder %v4319, inf
    %v4374 = vsel %vm4373, %v4319, %v4372
    %vm4375 = vcmp.eq.f32.partialorder %v4319, 0.0
    %v4376 = vand.u32 %v4319, 2147483648
    %v4377 = vsel %vm4375, %v4376, %v4374
    %v4378 = vrsqrt.pop %v4320
    %v4379 = vmul.f32 %v4378, %v4320
    %v4380 = vmul.f32 %v4379, %v4378
    %v4381 = vmul.f32 0.5, %v4380
    %v4382 = vsub.f32 1.5, %v4381
    %v4383 = vmul.f32 %v4378, %v4382
    %v4384 = vmul.f32 %v4320, %v4383
    %vm4385 = vcmp.eq.f32.partialorder %v4320, inf
    %v4386 = vsel %vm4385, %v4320, %v4384
    %vm4387 = vcmp.eq.f32.partialorder %v4320, 0.0
    %v4388 = vand.u32 %v4320, 2147483648
    %v4389 = vsel %vm4387, %v4388, %v4386
    %v4390 = vrsqrt.pop %v4321
    %v4391 = vmul.f32 %v4390, %v4321
    %v4392 = vmul.f32 %v4391, %v4390
    %v4393 = vmul.f32 0.5, %v4392
    %v4394 = vsub.f32 1.5, %v4393
    %v4395 = vmul.f32 %v4390, %v4394
    %v4396 = vmul.f32 %v4321, %v4395
    %vm4397 = vcmp.eq.f32.partialorder %v4321, inf
    %v4398 = vsel %vm4397, %v4321, %v4396
    %vm4399 = vcmp.eq.f32.partialorder %v4321, 0.0
    %v4400 = vand.u32 %v4321, 2147483648
    %v4401 = vsel %vm4399, %v4400, %v4398
    %v4402 = vrsqrt.pop %v4322
    %v4403 = vmul.f32 %v4402, %v4322
    %v4404 = vmul.f32 %v4403, %v4402
    %v4405 = vmul.f32 0.5, %v4404
    %v4406 = vsub.f32 1.5, %v4405
    %v4407 = vmul.f32 %v4402, %v4406
    %v4408 = vmul.f32 %v4322, %v4407
    %vm4409 = vcmp.eq.f32.partialorder %v4322, inf
    %v4410 = vsel %vm4409, %v4322, %v4408
    %vm4411 = vcmp.eq.f32.partialorder %v4322, 0.0
    %v4412 = vand.u32 %v4322, 2147483648
    %v4413 = vsel %vm4411, %v4412, %v4410
    %v4414 = vrsqrt.pop %v4323
    %v4415 = vmul.f32 %v4414, %v4323
    %v4416 = vmul.f32 %v4415, %v4414
    %v4417 = vmul.f32 0.5, %v4416
    %v4418 = vsub.f32 1.5, %v4417
    %v4419 = vmul.f32 %v4414, %v4418
    %v4420 = vmul.f32 %v4323, %v4419
    %vm4421 = vcmp.eq.f32.partialorder %v4323, inf
    %v4422 = vsel %vm4421, %v4323, %v4420
    %vm4423 = vcmp.eq.f32.partialorder %v4323, 0.0
    %v4424 = vand.u32 %v4323, 2147483648
    %v4425 = vsel %vm4423, %v4424, %v4422
    %v4426 = vrsqrt.pop %v4324
    %v4427 = vmul.f32 %v4426, %v4324
    %v4428 = vmul.f32 %v4427, %v4426
    %v4429 = vmul.f32 0.5, %v4428
    %v4430 = vsub.f32 1.5, %v4429
    %v4431 = vmul.f32 %v4426, %v4430
    %v4432 = vmul.f32 %v4324, %v4431
    %vm4433 = vcmp.eq.f32.partialorder %v4324, inf
    %v4434 = vsel %vm4433, %v4324, %v4432
    %vm4435 = vcmp.eq.f32.partialorder %v4324, 0.0
    %v4436 = vand.u32 %v4324, 2147483648
    %v4437 = vsel %vm4435, %v4436, %v4434
    %v4438 = vrsqrt.pop %v4325
    %v4439 = vmul.f32 %v4438, %v4325
    %v4440 = vmul.f32 %v4439, %v4438
    %v4441 = vmul.f32 0.5, %v4440
    %v4442 = vsub.f32 1.5, %v4441
    %v4443 = vmul.f32 %v4438, %v4442
    %v4444 = vmul.f32 %v4325, %v4443
    %vm4445 = vcmp.eq.f32.partialorder %v4325, inf
    %v4446 = vsel %vm4445, %v4325, %v4444
    %vm4447 = vcmp.eq.f32.partialorder %v4325, 0.0
    %v4448 = vand.u32 %v4325, 2147483648
    %v4449 = vsel %vm4447, %v4448, %v4446
    %v4450 = vrsqrt.pop %v4326
    %v4451 = vmul.f32 %v4450, %v4326
    %v4452 = vmul.f32 %v4451, %v4450
    %v4453 = vmul.f32 0.5, %v4452
    %v4454 = vsub.f32 1.5, %v4453
    %v4455 = vmul.f32 %v4450, %v4454
    %v4456 = vmul.f32 %v4326, %v4455
    %vm4457 = vcmp.eq.f32.partialorder %v4326, inf
    %v4458 = vsel %vm4457, %v4326, %v4456
    %vm4459 = vcmp.eq.f32.partialorder %v4326, 0.0
    %v4460 = vand.u32 %v4326, 2147483648
    %v4461 = vsel %vm4459, %v4460, %v4458
    %v4462 = vrsqrt.pop %v4327
    %v4463 = vmul.f32 %v4462, %v4327
    %v4464 = vmul.f32 %v4463, %v4462
    %v4465 = vmul.f32 0.5, %v4464
    %v4466 = vsub.f32 1.5, %v4465
    %v4467 = vmul.f32 %v4462, %v4466
    %v4468 = vmul.f32 %v4327, %v4467
    %vm4469 = vcmp.eq.f32.partialorder %v4327, inf
    %v4470 = vsel %vm4469, %v4327, %v4468
    %vm4471 = vcmp.eq.f32.partialorder %v4327, 0.0
    %v4472 = vand.u32 %v4327, 2147483648
    %v4473 = vsel %vm4471, %v4472, %v4470
    %v4474 = vrsqrt.pop %v4328
    %v4475 = vmul.f32 %v4474, %v4328
    %v4476 = vmul.f32 %v4475, %v4474
    %v4477 = vmul.f32 0.5, %v4476
    %v4478 = vsub.f32 1.5, %v4477
    %v4479 = vmul.f32 %v4474, %v4478
    %v4480 = vmul.f32 %v4328, %v4479
    %vm4481 = vcmp.eq.f32.partialorder %v4328, inf
    %v4482 = vsel %vm4481, %v4328, %v4480
    %vm4483 = vcmp.eq.f32.partialorder %v4328, 0.0
    %v4484 = vand.u32 %v4328, 2147483648
    %v4485 = vsel %vm4483, %v4484, %v4482
    %v4486 = vrsqrt.pop %v4329
    %v4487 = vmul.f32 %v4486, %v4329
    %v4488 = vmul.f32 %v4487, %v4486
    %v4489 = vmul.f32 0.5, %v4488
    %v4490 = vsub.f32 1.5, %v4489
    %v4491 = vmul.f32 %v4486, %v4490
    %v4492 = vmul.f32 %v4329, %v4491
    %vm4493 = vcmp.eq.f32.partialorder %v4329, inf
    %v4494 = vsel %vm4493, %v4329, %v4492
    %vm4495 = vcmp.eq.f32.partialorder %v4329, 0.0
    %v4496 = vand.u32 %v4329, 2147483648
    %v4497 = vsel %vm4495, %v4496, %v4494
    %v4498 = vrsqrt.pop %v4330
    %v4499 = vmul.f32 %v4498, %v4330
    %v4500 = vmul.f32 %v4499, %v4498
    %v4501 = vmul.f32 0.5, %v4500
    %v4502 = vsub.f32 1.5, %v4501
    %v4503 = vmul.f32 %v4498, %v4502
    %v4504 = vmul.f32 %v4330, %v4503
    %vm4505 = vcmp.eq.f32.partialorder %v4330, inf
    %v4506 = vsel %vm4505, %v4330, %v4504
    %vm4507 = vcmp.eq.f32.partialorder %v4330, 0.0
    %v4508 = vand.u32 %v4330, 2147483648
    %v4509 = vsel %vm4507, %v4508, %v4506
    %v4510 = vrsqrt.pop %v4331
    %v4511 = vmul.f32 %v4510, %v4331
    %v4512 = vmul.f32 %v4511, %v4510
    %v4513 = vmul.f32 0.5, %v4512
    %v4514 = vsub.f32 1.5, %v4513
    %v4515 = vmul.f32 %v4510, %v4514
    %v4516 = vmul.f32 %v4331, %v4515
    %vm4517 = vcmp.eq.f32.partialorder %v4331, inf
    %v4518 = vsel %vm4517, %v4331, %v4516
    %vm4519 = vcmp.eq.f32.partialorder %v4331, 0.0
    %v4520 = vand.u32 %v4331, 2147483648
    %v4521 = vsel %vm4519, %v4520, %v4518
    %v4522 = vrsqrt.pop %v4332
    %v4523 = vmul.f32 %v4522, %v4332
    %v4524 = vmul.f32 %v4523, %v4522
    %v4525 = vmul.f32 0.5, %v4524
    %v4526 = vsub.f32 1.5, %v4525
    %v4527 = vmul.f32 %v4522, %v4526
    %v4528 = vmul.f32 %v4332, %v4527
    %vm4529 = vcmp.eq.f32.partialorder %v4332, inf
    %v4530 = vsel %vm4529, %v4332, %v4528
    %vm4531 = vcmp.eq.f32.partialorder %v4332, 0.0
    %v4532 = vand.u32 %v4332, 2147483648
    %v4533 = vsel %vm4531, %v4532, %v4530
    %v4534 = vrsqrt.pop %v4333
    %v4535 = vmul.f32 %v4534, %v4333
    %v4536 = vmul.f32 %v4535, %v4534
    %v4537 = vmul.f32 0.5, %v4536
    %v4538 = vsub.f32 1.5, %v4537
    %v4539 = vmul.f32 %v4534, %v4538
    %v4540 = vmul.f32 %v4333, %v4539
    %vm4541 = vcmp.eq.f32.partialorder %v4333, inf
    %v4542 = vsel %vm4541, %v4333, %v4540
    %vm4543 = vcmp.eq.f32.partialorder %v4333, 0.0
    %v4544 = vand.u32 %v4333, 2147483648
    %v4545 = vsel %vm4543, %v4544, %v4542
    %v4546 = vrsqrt.pop %v4334
    %v4547 = vmul.f32 %v4546, %v4334
    %v4548 = vmul.f32 %v4547, %v4546
    %v4549 = vmul.f32 0.5, %v4548
    %v4550 = vsub.f32 1.5, %v4549
    %v4551 = vmul.f32 %v4546, %v4550
    %v4552 = vmul.f32 %v4334, %v4551
    %vm4553 = vcmp.eq.f32.partialorder %v4334, inf
    %v4554 = vsel %vm4553, %v4334, %v4552
    %vm4555 = vcmp.eq.f32.partialorder %v4334, 0.0
    %v4556 = vand.u32 %v4334, 2147483648
    %v4557 = vsel %vm4555, %v4556, %v4554
    %v4558 = vrsqrt.pop %v4335
    %v4559 = vmul.f32 %v4558, %v4335
    %v4560 = vmul.f32 %v4559, %v4558
    %v4561 = vmul.f32 0.5, %v4560
    %v4562 = vsub.f32 1.5, %v4561
    %v4563 = vmul.f32 %v4558, %v4562
    %v4564 = vmul.f32 %v4335, %v4563
    %vm4565 = vcmp.eq.f32.partialorder %v4335, inf
    %v4566 = vsel %vm4565, %v4335, %v4564
    %vm4567 = vcmp.eq.f32.partialorder %v4335, 0.0
    %v4568 = vand.u32 %v4335, 2147483648
    %v4569 = vsel %vm4567, %v4568, %v4566
    %v4570 = vrsqrt.pop %v4336
    %v4571 = vmul.f32 %v4570, %v4336
    %v4572 = vmul.f32 %v4571, %v4570
    %v4573 = vmul.f32 0.5, %v4572
    %v4574 = vsub.f32 1.5, %v4573
    %v4575 = vmul.f32 %v4570, %v4574
    %v4576 = vmul.f32 %v4336, %v4575
    %vm4577 = vcmp.eq.f32.partialorder %v4336, inf
    %v4578 = vsel %vm4577, %v4336, %v4576
    %vm4579 = vcmp.eq.f32.partialorder %v4336, 0.0
    %v4580 = vand.u32 %v4336, 2147483648
    %v4581 = vsel %vm4579, %v4580, %v4578
    %v4582 = vrsqrt.pop %v4337
    %v4583 = vmul.f32 %v4582, %v4337
    %v4584 = vmul.f32 %v4583, %v4582
    %v4585 = vmul.f32 0.5, %v4584
    %v4586 = vsub.f32 1.5, %v4585
    %v4587 = vmul.f32 %v4582, %v4586
    %v4588 = vmul.f32 %v4337, %v4587
    %vm4589 = vcmp.eq.f32.partialorder %v4337, inf
    %v4590 = vsel %vm4589, %v4337, %v4588
    %vm4591 = vcmp.eq.f32.partialorder %v4337, 0.0
    %v4592 = vand.u32 %v4337, 2147483648
    %v4593 = vsel %vm4591, %v4592, %v4590
    %v4594 = vrsqrt.pop %v4338
    %v4595 = vmul.f32 %v4594, %v4338
    %v4596 = vmul.f32 %v4595, %v4594
    %v4597 = vmul.f32 0.5, %v4596
    %v4598 = vsub.f32 1.5, %v4597
    %v4599 = vmul.f32 %v4594, %v4598
    %v4600 = vmul.f32 %v4338, %v4599
    %vm4601 = vcmp.eq.f32.partialorder %v4338, inf
    %v4602 = vsel %vm4601, %v4338, %v4600
    %vm4603 = vcmp.eq.f32.partialorder %v4338, 0.0
    %v4604 = vand.u32 %v4338, 2147483648
    %v4605 = vsel %vm4603, %v4604, %v4602
    %v4606 = vrsqrt.pop %v4339
    %v4607 = vmul.f32 %v4606, %v4339
    %v4608 = vmul.f32 %v4607, %v4606
    %v4609 = vmul.f32 0.5, %v4608
    %v4610 = vsub.f32 1.5, %v4609
    %v4611 = vmul.f32 %v4606, %v4610
    %v4612 = vmul.f32 %v4339, %v4611
    %vm4613 = vcmp.eq.f32.partialorder %v4339, inf
    %v4614 = vsel %vm4613, %v4339, %v4612
    %vm4615 = vcmp.eq.f32.partialorder %v4339, 0.0
    %v4616 = vand.u32 %v4339, 2147483648
    %v4617 = vsel %vm4615, %v4616, %v4614
    %v4618 = vrsqrt.pop %v4340
    %v4619 = vmul.f32 %v4618, %v4340
    %v4620 = vmul.f32 %v4619, %v4618
    %v4621 = vmul.f32 0.5, %v4620
    %v4622 = vsub.f32 1.5, %v4621
    %v4623 = vmul.f32 %v4618, %v4622
    %v4624 = vmul.f32 %v4340, %v4623
    %vm4625 = vcmp.eq.f32.partialorder %v4340, inf
    %v4626 = vsel %vm4625, %v4340, %v4624
    %vm4627 = vcmp.eq.f32.partialorder %v4340, 0.0
    %v4628 = vand.u32 %v4340, 2147483648
    %v4629 = vsel %vm4627, %v4628, %v4626
    %v4630 = vrsqrt.pop %v4341
    %v4631 = vmul.f32 %v4630, %v4341
    %v4632 = vmul.f32 %v4631, %v4630
    %v4633 = vmul.f32 0.5, %v4632
    %v4634 = vsub.f32 1.5, %v4633
    %v4635 = vmul.f32 %v4630, %v4634
    %v4636 = vmul.f32 %v4341, %v4635
    %vm4637 = vcmp.eq.f32.partialorder %v4341, inf
    %v4638 = vsel %vm4637, %v4341, %v4636
    %vm4639 = vcmp.eq.f32.partialorder %v4341, 0.0
    %v4640 = vand.u32 %v4341, 2147483648
    %v4641 = vsel %vm4639, %v4640, %v4638
    %v4642 = vrsqrt.pop %v4267
    %v4643 = vmul.f32 %v4642, %v4267
    %v4644 = vmul.f32 %v4643, %v4642
    %v4645 = vmul.f32 0.5, %v4644
    %v4646 = vsub.f32 1.5, %v4645
    %v4647 = vmul.f32 %v4642, %v4646
    %vm4648 = vweird.f32 %v4267
    %vm4649 = vweird.f32 %v4642
    %vm4650 = vmor %vm4648, %vm4649
    %v4651 = vsel %vm4650, %v4642, %v4647
    %v4652 = vrsqrt.pop %v4268
    %v4653 = vmul.f32 %v4652, %v4268
    %v4654 = vmul.f32 %v4653, %v4652
    %v4655 = vmul.f32 0.5, %v4654
    %v4656 = vsub.f32 1.5, %v4655
    %v4657 = vmul.f32 %v4652, %v4656
    %vm4658 = vweird.f32 %v4268
    %vm4659 = vweird.f32 %v4652
    %vm4660 = vmor %vm4658, %vm4659
    %v4661 = vsel %vm4660, %v4652, %v4657
    %v4662 = vrsqrt.pop %v4269
    %v4663 = vmul.f32 %v4662, %v4269
    %v4664 = vmul.f32 %v4663, %v4662
    %v4665 = vmul.f32 0.5, %v4664
    %v4666 = vsub.f32 1.5, %v4665
    %v4667 = vmul.f32 %v4662, %v4666
    %vm4668 = vweird.f32 %v4269
    %vm4669 = vweird.f32 %v4662
    %vm4670 = vmor %vm4668, %vm4669
    %v4671 = vsel %vm4670, %v4662, %v4667
    %v4672 = vrsqrt.pop %v4270
    %v4673 = vmul.f32 %v4672, %v4270
    %v4674 = vmul.f32 %v4673, %v4672
    %v4675 = vmul.f32 0.5, %v4674
    %v4676 = vsub.f32 1.5, %v4675
    %v4677 = vmul.f32 %v4672, %v4676
    %vm4678 = vweird.f32 %v4270
    %vm4679 = vweird.f32 %v4672
    %vm4680 = vmor %vm4678, %vm4679
    %v4681 = vsel %vm4680, %v4672, %v4677
    %v4682 = vrsqrt.pop %v4271
    %v4683 = vmul.f32 %v4682, %v4271
    %v4684 = vmul.f32 %v4683, %v4682
    %v4685 = vmul.f32 0.5, %v4684
    %v4686 = vsub.f32 1.5, %v4685
    %v4687 = vmul.f32 %v4682, %v4686
    %vm4688 = vweird.f32 %v4271
    %vm4689 = vweird.f32 %v4682
    %vm4690 = vmor %vm4688, %vm4689
    %v4691 = vsel %vm4690, %v4682, %v4687
    %v4692 = vrsqrt.pop %v4272
    %v4693 = vmul.f32 %v4692, %v4272
    %v4694 = vmul.f32 %v4693, %v4692
    %v4695 = vmul.f32 0.5, %v4694
    %v4696 = vsub.f32 1.5, %v4695
    %v4697 = vmul.f32 %v4692, %v4696
    %vm4698 = vweird.f32 %v4272
    %vm4699 = vweird.f32 %v4692
    %vm4700 = vmor %vm4698, %vm4699
    %v4701 = vsel %vm4700, %v4692, %v4697
    %v4702 = vrsqrt.pop %v4273
    %v4703 = vmul.f32 %v4702, %v4273
    %v4704 = vmul.f32 %v4703, %v4702
    %v4705 = vmul.f32 0.5, %v4704
    %v4706 = vsub.f32 1.5, %v4705
    %v4707 = vmul.f32 %v4702, %v4706
    %vm4708 = vweird.f32 %v4273
    %vm4709 = vweird.f32 %v4702
    %vm4710 = vmor %vm4708, %vm4709
    %v4711 = vsel %vm4710, %v4702, %v4707
    %v4712 = vrsqrt.pop %v4274
    %v4713 = vmul.f32 %v4712, %v4274
    %v4714 = vmul.f32 %v4713, %v4712
    %v4715 = vmul.f32 0.5, %v4714
    %v4716 = vsub.f32 1.5, %v4715
    %v4717 = vmul.f32 %v4712, %v4716
    %vm4718 = vweird.f32 %v4274
    %vm4719 = vweird.f32 %v4712
    %vm4720 = vmor %vm4718, %vm4719
    %v4721 = vsel %vm4720, %v4712, %v4717
    %v4722 = vrsqrt.pop %v4275
    %v4723 = vmul.f32 %v4722, %v4275
    %v4724 = vmul.f32 %v4723, %v4722
    %v4725 = vmul.f32 0.5, %v4724
    %v4726 = vsub.f32 1.5, %v4725
    %v4727 = vmul.f32 %v4722, %v4726
    %vm4728 = vweird.f32 %v4275
    %vm4729 = vweird.f32 %v4722
    %vm4730 = vmor %vm4728, %vm4729
    %v4731 = vsel %vm4730, %v4722, %v4727
    %v4732 = vrsqrt.pop %v4276
    %v4733 = vmul.f32 %v4732, %v4276
    %v4734 = vmul.f32 %v4733, %v4732
    %v4735 = vmul.f32 0.5, %v4734
    %v4736 = vsub.f32 1.5, %v4735
    %v4737 = vmul.f32 %v4732, %v4736
    %vm4738 = vweird.f32 %v4276
    %vm4739 = vweird.f32 %v4732
    %vm4740 = vmor %vm4738, %vm4739
    %v4741 = vsel %vm4740, %v4732, %v4737
    %v4742 = vrsqrt.pop %v4277
    %v4743 = vmul.f32 %v4742, %v4277
    %v4744 = vmul.f32 %v4743, %v4742
    %v4745 = vmul.f32 0.5, %v4744
    %v4746 = vsub.f32 1.5, %v4745
    %v4747 = vmul.f32 %v4742, %v4746
    %vm4748 = vweird.f32 %v4277
    %vm4749 = vweird.f32 %v4742
    %vm4750 = vmor %vm4748, %vm4749
    %v4751 = vsel %vm4750, %v4742, %v4747
    %v4752 = vrsqrt.pop %v4278
    %v4753 = vmul.f32 %v4752, %v4278
    %v4754 = vmul.f32 %v4753, %v4752
    %v4755 = vmul.f32 0.5, %v4754
    %v4756 = vsub.f32 1.5, %v4755
    %v4757 = vmul.f32 %v4752, %v4756
    %vm4758 = vweird.f32 %v4278
    %vm4759 = vweird.f32 %v4752
    %vm4760 = vmor %vm4758, %vm4759
    %v4761 = vsel %vm4760, %v4752, %v4757
    %v4762 = vrsqrt.pop %v4279
    %v4763 = vmul.f32 %v4762, %v4279
    %v4764 = vmul.f32 %v4763, %v4762
    %v4765 = vmul.f32 0.5, %v4764
    %v4766 = vsub.f32 1.5, %v4765
    %v4767 = vmul.f32 %v4762, %v4766
    %vm4768 = vweird.f32 %v4279
    %vm4769 = vweird.f32 %v4762
    %vm4770 = vmor %vm4768, %vm4769
    %v4771 = vsel %vm4770, %v4762, %v4767
    %v4772 = vrsqrt.pop %v4280
    %v4773 = vmul.f32 %v4772, %v4280
    %v4774 = vmul.f32 %v4773, %v4772
    %v4775 = vmul.f32 0.5, %v4774
    %v4776 = vsub.f32 1.5, %v4775
    %v4777 = vmul.f32 %v4772, %v4776
    %vm4778 = vweird.f32 %v4280
    %vm4779 = vweird.f32 %v4772
    %vm4780 = vmor %vm4778, %vm4779
    %v4781 = vsel %vm4780, %v4772, %v4777
    %v4782 = vrsqrt.pop %v4281
    %v4783 = vmul.f32 %v4782, %v4281
    %v4784 = vmul.f32 %v4783, %v4782
    %v4785 = vmul.f32 0.5, %v4784
    %v4786 = vsub.f32 1.5, %v4785
    %v4787 = vmul.f32 %v4782, %v4786
    %vm4788 = vweird.f32 %v4281
    %vm4789 = vweird.f32 %v4782
    %vm4790 = vmor %vm4788, %vm4789
    %v4791 = vsel %vm4790, %v4782, %v4787
    %v4792 = vrsqrt.pop %v4282
    %v4793 = vmul.f32 %v4792, %v4282
    %v4794 = vmul.f32 %v4793, %v4792
    %v4795 = vmul.f32 0.5, %v4794
    %v4796 = vsub.f32 1.5, %v4795
    %v4797 = vmul.f32 %v4792, %v4796
    %vm4798 = vweird.f32 %v4282
    %vm4799 = vweird.f32 %v4792
    %vm4800 = vmor %vm4798, %vm4799
    %v4801 = vsel %vm4800, %v4792, %v4797
    %v4802 = vrsqrt.pop %v4283
    %v4803 = vmul.f32 %v4802, %v4283
    %v4804 = vmul.f32 %v4803, %v4802
    %v4805 = vmul.f32 0.5, %v4804
    %v4806 = vsub.f32 1.5, %v4805
    %v4807 = vmul.f32 %v4802, %v4806
    %vm4808 = vweird.f32 %v4283
    %vm4809 = vweird.f32 %v4802
    %vm4810 = vmor %vm4808, %vm4809
    %v4811 = vsel %vm4810, %v4802, %v4807
    %v4812 = vrsqrt.pop %v4284
    %v4813 = vmul.f32 %v4812, %v4284
    %v4814 = vmul.f32 %v4813, %v4812
    %v4815 = vmul.f32 0.5, %v4814
    %v4816 = vsub.f32 1.5, %v4815
    %v4817 = vmul.f32 %v4812, %v4816
    %vm4818 = vweird.f32 %v4284
    %vm4819 = vweird.f32 %v4812
    %vm4820 = vmor %vm4818, %vm4819
    %v4821 = vsel %vm4820, %v4812, %v4817
    %v4822 = vrsqrt.pop %v4285
    %v4823 = vmul.f32 %v4822, %v4285
    %v4824 = vmul.f32 %v4823, %v4822
    %v4825 = vmul.f32 0.5, %v4824
    %v4826 = vsub.f32 1.5, %v4825
    %v4827 = vmul.f32 %v4822, %v4826
    %vm4828 = vweird.f32 %v4285
    %vm4829 = vweird.f32 %v4822
    %vm4830 = vmor %vm4828, %vm4829
    %v4831 = vsel %vm4830, %v4822, %v4827
    %v4832 = vrsqrt.pop %v4286
    %v4833 = vmul.f32 %v4832, %v4286
    %v4834 = vmul.f32 %v4833, %v4832
    %v4835 = vmul.f32 0.5, %v4834
    %v4836 = vsub.f32 1.5, %v4835
    %v4837 = vmul.f32 %v4832, %v4836
    %vm4838 = vweird.f32 %v4286
    %vm4839 = vweird.f32 %v4832
    %vm4840 = vmor %vm4838, %vm4839
    %v4841 = vsel %vm4840, %v4832, %v4837
    %v4842 = vrsqrt.pop %v4287
    %v4843 = vmul.f32 %v4842, %v4287
    %v4844 = vmul.f32 %v4843, %v4842
    %v4845 = vmul.f32 0.5, %v4844
    %v4846 = vsub.f32 1.5, %v4845
    %v4847 = vmul.f32 %v4842, %v4846
    %vm4848 = vweird.f32 %v4287
    %vm4849 = vweird.f32 %v4842
    %vm4850 = vmor %vm4848, %vm4849
    %v4851 = vsel %vm4850, %v4842, %v4847
    %v4852 = vrsqrt.pop %v4288
    %v4853 = vmul.f32 %v4852, %v4288
    %v4854 = vmul.f32 %v4853, %v4852
    %v4855 = vmul.f32 0.5, %v4854
    %v4856 = vsub.f32 1.5, %v4855
    %v4857 = vmul.f32 %v4852, %v4856
    %vm4858 = vweird.f32 %v4288
    %vm4859 = vweird.f32 %v4852
    %vm4860 = vmor %vm4858, %vm4859
    %v4861 = vsel %vm4860, %v4852, %v4857
    %v4862 = vrsqrt.pop %v4289
    %v4863 = vmul.f32 %v4862, %v4289
    %v4864 = vmul.f32 %v4863, %v4862
    %v4865 = vmul.f32 0.5, %v4864
    %v4866 = vsub.f32 1.5, %v4865
    %v4867 = vmul.f32 %v4862, %v4866
    %vm4868 = vweird.f32 %v4289
    %vm4869 = vweird.f32 %v4862
    %vm4870 = vmor %vm4868, %vm4869
    %v4871 = vsel %vm4870, %v4862, %v4867
    %v4872 = vrsqrt.pop %v4290
    %v4873 = vmul.f32 %v4872, %v4290
    %v4874 = vmul.f32 %v4873, %v4872
    %v4875 = vmul.f32 0.5, %v4874
    %v4876 = vsub.f32 1.5, %v4875
    %v4877 = vmul.f32 %v4872, %v4876
    %vm4878 = vweird.f32 %v4290
    %vm4879 = vweird.f32 %v4872
    %vm4880 = vmor %vm4878, %vm4879
    %v4881 = vsel %vm4880, %v4872, %v4877
    %v4882 = vrsqrt.pop %v4291
    %v4883 = vmul.f32 %v4882, %v4291
    %v4884 = vmul.f32 %v4883, %v4882
    %v4885 = vmul.f32 0.5, %v4884
    %v4886 = vsub.f32 1.5, %v4885
    %v4887 = vmul.f32 %v4882, %v4886
    %vm4888 = vweird.f32 %v4291
    %vm4889 = vweird.f32 %v4882
    %vm4890 = vmor %vm4888, %vm4889
    %v4891 = vsel %vm4890, %v4882, %v4887
    %v4892 = vmul.f32 %v4353, %v4651
    %v4893 = vmul.f32 %v4365, %v4661
    %v4894 = vmul.f32 %v4377, %v4671
    %v4895 = vmul.f32 %v4389, %v4681
    %v4896 = vmul.f32 %v4401, %v4691
    %v4897 = vmul.f32 %v4413, %v4701
    %v4898 = vmul.f32 %v4425, %v4711
    %v4899 = vmul.f32 %v4437, %v4721
    %v4900 = vmul.f32 %v4449, %v4731
    %v4901 = vmul.f32 %v4461, %v4741
    %v4902 = vmul.f32 %v4473, %v4751
    %v4903 = vmul.f32 %v4485, %v4761
    %v4904 = vmul.f32 %v4497, %v4771
    %v4905 = vmul.f32 %v4509, %v4781
    %v4906 = vmul.f32 %v4521, %v4791
    %v4907 = vmul.f32 %v4533, %v4801
    %v4908 = vmul.f32 %v4545, %v4811
    %v4909 = vmul.f32 %v4557, %v4821
    %v4910 = vmul.f32 %v4569, %v4831
    %v4911 = vmul.f32 %v4581, %v4841
    %v4912 = vmul.f32 %v4593, %v4851
    %v4913 = vmul.f32 %v4605, %v4861
    %v4914 = vmul.f32 %v4617, %v4871
    %v4915 = vmul.f32 %v4629, %v4881
    %v4916 = vmul.f32 %v4641, %v4891
    %4918 = vset.pattern.permute.xlu0 0
    %4919 = vperm.xlu0 %4918, %v4892
    %v4920 = vpop.permute.xlu0 %4919
    %4923 = vset.pattern.permute.xlu0 0
    %4924 = vperm.xlu0 %4923, %v4893
    %v4925 = vpop.permute.xlu0 %4924
    %4928 = vset.pattern.permute.xlu0 0
    %4929 = vperm.xlu0 %4928, %v4894
    %v4930 = vpop.permute.xlu0 %4929
    %4933 = vset.pattern.permute.xlu0 0
    %4934 = vperm.xlu0 %4933, %v4895
    %v4935 = vpop.permute.xlu0 %4934
    %4938 = vset.pattern.permute.xlu0 0
    %4939 = vperm.xlu0 %4938, %v4896
    %v4940 = vpop.permute.xlu0 %4939
    %4943 = vset.pattern.permute.xlu0 0
    %4944 = vperm.xlu0 %4943, %v4897
    %v4945 = vpop.permute.xlu0 %4944
    %4948 = vset.pattern.permute.xlu0 0
    %4949 = vperm.xlu0 %4948, %v4898
    %v4950 = vpop.permute.xlu0 %4949
    %4953 = vset.pattern.permute.xlu0 0
    %4954 = vperm.xlu0 %4953, %v4899
    %v4955 = vpop.permute.xlu0 %4954
    %4958 = vset.pattern.permute.xlu0 0
    %4959 = vperm.xlu0 %4958, %v4900
    %v4960 = vpop.permute.xlu0 %4959
    %4963 = vset.pattern.permute.xlu0 0
    %4964 = vperm.xlu0 %4963, %v4901
    %v4965 = vpop.permute.xlu0 %4964
    %4968 = vset.pattern.permute.xlu0 0
    %4969 = vperm.xlu0 %4968, %v4902
    %v4970 = vpop.permute.xlu0 %4969
    %4973 = vset.pattern.permute.xlu0 0
    %4974 = vperm.xlu0 %4973, %v4903
    %v4975 = vpop.permute.xlu0 %4974
    %4978 = vset.pattern.permute.xlu0 0
    %4979 = vperm.xlu0 %4978, %v4904
    %v4980 = vpop.permute.xlu0 %4979
    %4983 = vset.pattern.permute.xlu0 0
    %4984 = vperm.xlu0 %4983, %v4905
    %v4985 = vpop.permute.xlu0 %4984
    %4988 = vset.pattern.permute.xlu0 0
    %4989 = vperm.xlu0 %4988, %v4906
    %v4990 = vpop.permute.xlu0 %4989
    %4993 = vset.pattern.permute.xlu0 0
    %4994 = vperm.xlu0 %4993, %v4907
    %v4995 = vpop.permute.xlu0 %4994
    %4998 = vset.pattern.permute.xlu0 0
    %4999 = vperm.xlu0 %4998, %v4908
    %v5000 = vpop.permute.xlu0 %4999
    %5003 = vset.pattern.permute.xlu0 0
    %5004 = vperm.xlu0 %5003, %v4909
    %v5005 = vpop.permute.xlu0 %5004
    %5008 = vset.pattern.permute.xlu0 0
    %5009 = vperm.xlu0 %5008, %v4910
    %v5010 = vpop.permute.xlu0 %5009
    %5013 = vset.pattern.permute.xlu0 0
    %5014 = vperm.xlu0 %5013, %v4911
    %v5015 = vpop.permute.xlu0 %5014
    %5018 = vset.pattern.permute.xlu0 0
    %5019 = vperm.xlu0 %5018, %v4912
    %v5020 = vpop.permute.xlu0 %5019
    %5023 = vset.pattern.permute.xlu0 0
    %5024 = vperm.xlu0 %5023, %v4913
    %v5025 = vpop.permute.xlu0 %5024
    %5028 = vset.pattern.permute.xlu0 0
    %5029 = vperm.xlu0 %5028, %v4914
    %v5030 = vpop.permute.xlu0 %5029
    %5033 = vset.pattern.permute.xlu0 0
    %5034 = vperm.xlu0 %5033, %v4915
    %v5035 = vpop.permute.xlu0 %5034
    %5038 = vset.pattern.permute.xlu0 0
    %5039 = vperm.xlu0 %5038, %v4916
    %v5040 = vpop.permute.xlu0 %5039
    %v5042 = vmul.f32 %v3541, %v4920
    %v5043 = vmul.f32 %v3544, %v4925
    %v5044 = vmul.f32 %v3547, %v4930
    %v5045 = vmul.f32 %v3550, %v4935
    %v5046 = vmul.f32 %v3553, %v4940
    %v5047 = vmul.f32 %v3556, %v4945
    %v5048 = vmul.f32 %v3559, %v4950
    %v5049 = vmul.f32 %v3562, %v4955
    %v5050 = vmul.f32 %v3565, %v4960
    %v5051 = vmul.f32 %v3568, %v4965
    %v5052 = vmul.f32 %v3571, %v4970
    %v5053 = vmul.f32 %v3574, %v4975
    %v5054 = vmul.f32 %v3577, %v4980
    %v5055 = vmul.f32 %v3580, %v4985
    %v5056 = vmul.f32 %v3583, %v4990
    %v5057 = vmul.f32 %v3586, %v4995
    %v5058 = vmul.f32 %v3589, %v5000
    %v5059 = vmul.f32 %v3592, %v5005
    %v5060 = vmul.f32 %v3595, %v5010
    %v5061 = vmul.f32 %v3598, %v5015
    %v5062 = vmul.f32 %v3601, %v5020
    %v5063 = vmul.f32 %v3604, %v5025
    %v5064 = vmul.f32 %v3607, %v5030
    %v5065 = vmul.f32 %v3610, %v5035
    %v5066 = vmul.f32 %v3613, %v5040
    %5067 = vst.msk [vmem:[%s7] sm:$0xff] %vm67, %v5042
    %5068 = vst.msk [vmem:[%s7 + $0x8] sm:$0xff] %vm67, %v5043
    %5069 = vst.msk [vmem:[%s7 + $0x10] sm:$0xff] %vm67, %v5044
    %5070 = vst.msk [vmem:[%s7 + $0x18] sm:$0xff] %vm67, %v5045
    %5071 = vst.msk [vmem:[%s7 + $0x20] sm:$0xff] %vm67, %v5046
    %5072 = vst.msk [vmem:[%s7 + $0x28] sm:$0xff] %vm67, %v5047
    %5073 = vst.msk [vmem:[%s7 + $0x30] sm:$0xff] %vm67, %v5048
    %5074 = vst.msk [vmem:[%s7 + $0x38] sm:$0xff] %vm67, %v5049
    %5075 = vst.msk [vmem:[%s7 + $0x40] sm:$0xff] %vm67, %v5050
    %5076 = vst.msk [vmem:[%s7 + $0x48] sm:$0xff] %vm67, %v5051
    %5077 = vst.msk [vmem:[%s7 + $0x50] sm:$0xff] %vm67, %v5052
    %5078 = vst.msk [vmem:[%s7 + $0x58] sm:$0xff] %vm67, %v5053
    %5079 = vst.msk [vmem:[%s7 + $0x60] sm:$0xff] %vm67, %v5054
    %5080 = vst.msk [vmem:[%s7 + $0x68] sm:$0xff] %vm67, %v5055
    %5081 = vst.msk [vmem:[%s7 + $0x70] sm:$0xff] %vm67, %v5056
    %5082 = vst.msk [vmem:[%s7 + $0x78] sm:$0xff] %vm67, %v5057
    %5083 = vst.msk [vmem:[%s7 + $0x80] sm:$0xff] %vm67, %v5058
    %5084 = vst.msk [vmem:[%s7 + $0x88] sm:$0xff] %vm67, %v5059
    %5085 = vst.msk [vmem:[%s7 + $0x90] sm:$0xff] %vm67, %v5060
    %5086 = vst.msk [vmem:[%s7 + $0x98] sm:$0xff] %vm67, %v5061
    %5087 = vst.msk [vmem:[%s7 + $0xa0] sm:$0xff] %vm67, %v5062
    %5088 = vst.msk [vmem:[%s7 + $0xa8] sm:$0xff] %vm67, %v5063
    %5089 = vst.msk [vmem:[%s7 + $0xb0] sm:$0xff] %vm67, %v5064
    %5090 = vst.msk [vmem:[%s7 + $0xb8] sm:$0xff] %vm67, %v5065
    %5091 = vst.msk [vmem:[%s7 + $0xc0] sm:$0xff] %vm67, %v5066
    %5092 = vst.msk [vmem:[%s7] sm:$0xff] %vm3489, %v4117
    %5093 = vst.msk [vmem:[%s7 + $0x8] sm:$0xff] %vm3489, %v4118
    %5094 = vst.msk [vmem:[%s7 + $0x10] sm:$0xff] %vm3489, %v4119
    %5095 = vst.msk [vmem:[%s7 + $0x18] sm:$0xff] %vm3489, %v4120
    %5096 = vst.msk [vmem:[%s7 + $0x20] sm:$0xff] %vm3489, %v4121
    %5097 = vst.msk [vmem:[%s7 + $0x28] sm:$0xff] %vm3489, %v4122
    %5098 = vst.msk [vmem:[%s7 + $0x30] sm:$0xff] %vm3489, %v4123
    %5099 = vst.msk [vmem:[%s7 + $0x38] sm:$0xff] %vm3489, %v4124
    %5100 = vst.msk [vmem:[%s7 + $0x40] sm:$0xff] %vm3489, %v4125
    %5101 = vst.msk [vmem:[%s7 + $0x48] sm:$0xff] %vm3489, %v4126
    %5102 = vst.msk [vmem:[%s7 + $0x50] sm:$0xff] %vm3489, %v4127
    %5103 = vst.msk [vmem:[%s7 + $0x58] sm:$0xff] %vm3489, %v4128
    %5104 = vst.msk [vmem:[%s7 + $0x60] sm:$0xff] %vm3489, %v4129
    %5105 = vst.msk [vmem:[%s7 + $0x68] sm:$0xff] %vm3489, %v4130
    %5106 = vst.msk [vmem:[%s7 + $0x70] sm:$0xff] %vm3489, %v4131
    %5107 = vst.msk [vmem:[%s7 + $0x78] sm:$0xff] %vm3489, %v4132
    %5108 = vst.msk [vmem:[%s7 + $0x80] sm:$0xff] %vm3489, %v4133
    %5109 = vst.msk [vmem:[%s7 + $0x88] sm:$0xff] %vm3489, %v4134
    %5110 = vst.msk [vmem:[%s7 + $0x90] sm:$0xff] %vm3489, %v4135
    %5111 = vst.msk [vmem:[%s7 + $0x98] sm:$0xff] %vm3489, %v4136
    %5112 = vst.msk [vmem:[%s7 + $0xa0] sm:$0xff] %vm3489, %v4137
    %5113 = vst.msk [vmem:[%s7 + $0xa8] sm:$0xff] %vm3489, %v4138
    %5114 = vst.msk [vmem:[%s7 + $0xb0] sm:$0xff] %vm3489, %v4139
    %5115 = vst.msk [vmem:[%s7 + $0xb8] sm:$0xff] %vm3489, %v4140
    %5116 = vst.msk [vmem:[%s7 + $0xc0] sm:$0xff] %vm3489, %v4141
    // Predicated region
    $region30: #{_lambda_.3} parent=1 // pred_check
      _
    $region31: #{_lambda_.3} parent=1 // pred_check_branch
      %5118 = sbr.rel (0) target = $region33
    $region32: #{_lambda_.3} parent=1 // pred_region
      _
    $region33: #{_lambda_.3} parent=1 // pred_fallthru
      _
    // Predicated region
    $region34: #{_lambda_.3} parent=1 // pred_check
      _
    $region35: #{_lambda_.3} parent=1 // pred_check_branch
      %5120 = sbr.rel (0) target = $region37
    $region36: #{_lambda_.3} parent=1 // pred_region
      _
    $region37: #{_lambda_.3} parent=1 // pred_fallthru
      _
    // Predicated region
    $region38: #{_lambda_.3} parent=1 // pred_check
      _
    $region39: #{_lambda_.3} parent=1 // pred_check_branch
      %5122 = sbr.rel (0) target = $region41
    $region40: #{_lambda_.3} parent=1 // pred_region
      _
    $region41: #{_lambda_.3} parent=1 // pred_fallthru
      _
    // Predicated region
    $region42: #{_lambda_.3} parent=1 // pred_check
      _
    $region43: #{_lambda_.3} parent=1 // pred_check_branch
      %5124 = sbr.rel (0) target = $region45
    $region44: #{_lambda_.3} parent=1 // pred_region
      _
    $region45: #{_lambda_.3} parent=1 // pred_fallthru
      _
    %5125 = vsyncpa [#allocation3], 1

</llo_original>
